<compile_context>
chip_gen: v6e
topology: v6e:2x2x1
jax: 0.10.0
libtpu: 0.0.40
codegen_flags: <defaults>
</compile_context>

<pallas_src>
import functools
import math

import jax
import jax.numpy as jnp
from jax.experimental import pallas as pl
from jax.experimental.pallas import tpu as pltpu


def _axial_attn_kernel(xf_ref, wq_ref, wk_ref, wv_ref, wo_ref, o_ref,
                       kT_ref, vT_ref, *, num_heads, tq, approx_recip):
    """One grid step == (batch element, query tile)."""
    qi = pl.program_id(1)
    C = wq_ref.shape[0]
    hd = C // num_heads
    prec = jax.lax.Precision.DEFAULT  # pin: single bf16 MXU pass for f32 operands

    # K/V projections depend only on the batch index -> compute once per batch
    # element (first query tile) into VMEM scratch; reused for all other tiles.
    @pl.when(qi == 0)
    def _():
        xf = xf_ref[0].astype(jnp.bfloat16)                       # (C, N)
        kT_ref[...] = jnp.dot(wk_ref[...], xf, precision=prec,
                              preferred_element_type=jnp.float32)  # (C, N)
        vT_ref[...] = jnp.dot(wv_ref[...], xf, precision=prec,
                              preferred_element_type=jnp.float32)  # (C, N)

    # Query tile: slice directly from the resident full-N block (no extra DMA
    # stream).  q_start is a multiple of the tile width (lane-aligned).
    q_start = pl.multiple_of(qi * tq, tq)
    xq = xf_ref[0, :, pl.ds(q_start, tq)].astype(jnp.bfloat16)     # (C, TQ)
    qT = jnp.dot(wq_ref[...], xq, precision=prec,
                 preferred_element_type=jnp.float32)               # (C, TQ), scale folded in

    kT = kT_ref[...]                                               # (C, N) f32
    vT = vT_ref[...]                                               # (C, N) f32
    N = kT.shape[1]

    head_outs = []
    for h in range(num_heads):
        qh = qT[h * hd:(h + 1) * hd, :]                            # (hd, TQ) sublane-aligned
        kh = kT[h * hd:(h + 1) * hd, :]                            # (hd, N)
        vh = vT[h * hd:(h + 1) * hd, :]                            # (hd, N)
        # Transposed scores: keys on sublanes, queries on lanes (lane-dense TQ).
        sT = jax.lax.dot_general(kh, qh, (((0,), (0,)), ((), ())),
                                 precision=prec,
                                 preferred_element_type=jnp.float32)   # (N, TQ)
        sT = sT - jnp.max(sT, axis=0, keepdims=True)
        pT = jnp.exp(sT)
        denom = jnp.sum(pT, axis=0, keepdims=True)
        pT = pT * pl.reciprocal(denom, approx=approx_recip)
        # Per-head output rows (hd, TQ): out_proj is applied once at the end.
        head_outs.append(jnp.dot(vh, pT, precision=prec,
                                 preferred_element_type=jnp.float32))
    oT = jnp.concatenate(head_outs, axis=0)                        # (C, TQ) static sublane concat
    out = jnp.dot(wo_ref[...].astype(jnp.float32), oT, precision=prec,
                  preferred_element_type=jnp.float32)              # (C, TQ)
    o_ref[0] = out.astype(o_ref.dtype)


def axial_window_attention(x_nchw, wqkv, win, wout, *, num_heads,
                           window_size=(4, 4), approx_recip=True):
    """Pallas implementation of AxialWindowAttention.forward.

    x_nchw: (B, C, H, W) float32 (PyTorch layout).
    wqkv:   (3C, C)  -- Conv2d(dim, 3*dim, 1, bias=False) weight, squeezed.
    win:    (3C, C)  -- nn.MultiheadAttention in_proj_weight.
    wout:   (C, C)   -- nn.MultiheadAttention out_proj weight.
    """
    # TODO(synk): the reference also evaluates `self.qkv` on the axial-window
    # rearranged tensor (`qkv_pad`), but that result is unused (dead code), so
    # it is not recomputed here.
    del window_size
    B, C, H, W = x_nchw.shape
    N = H * W
    assert C % num_heads == 0
    hd = C // num_heads
    scale = 1.0 / math.sqrt(hd)

    f32 = jnp.float32
    wqkv = wqkv.astype(f32)
    win = win.astype(f32)
    wout = wout.astype(f32)

    # Host-side weight fusion: q = x @ Wqkv_q^T @ Win_q^T  ==>  q^T = Wq_eff @ x^T.
    wq_eff = (win[:C] @ wqkv[:C]) * scale            # scale folded into Q weight
    wk_eff = win[C:2 * C] @ wqkv[C:2 * C]
    wv_eff = win[2 * C:] @ wqkv[2 * C:]

    wq_bf = wq_eff.astype(jnp.bfloat16)
    wk_bf = wk_eff.astype(jnp.bfloat16)
    wv_bf = wv_eff.astype(jnp.bfloat16)
    wo_bf = wout.astype(jnp.bfloat16)

    # Channel-major token layout (C, N) -- a pure reshape of NCHW, no transpose.
    xT = x_nchw.reshape(B, C, N)

    # Query tile: 256 fills the 256-lane MXU on v6e/v7x (and is harmless on
    # v5e's 128-wide MXU), 128 fallback, otherwise the whole row.
    if N % 256 == 0:
        tq = 256
    elif N % 128 == 0:
        tq = 128
    else:
        tq = N
    n_qt = N // tq
    grid = (B, n_qt)

    # TODO(synk): for very large N (esp. on v7x's 64 MiB VMEM) a flash-style KV
    # tiling (online softmax) should replace the full-N key axis and the (C, N)
    # K/V scratch; unnecessary at these sizes.
    steps = B * n_qt
    kv_proj_flops = B * 2 * (2 * C * C * N)                       # K,V proj once per batch elem
    per_step_flops = (2 * C * C * tq                              # Q projection
                      + 2 * C * N * tq                            # scores (all heads)
                      + 2 * C * N * tq                            # PV (all heads)
                      + 2 * C * C * tq)                           # out projection
    trans = steps * num_heads * N * tq                            # exp
    bytes_accessed = (B * C * N * 4                               # xf: one DMA per batch elem
                      + 4 * C * C * 2                             # bf16 weights, once
                      + B * C * N * 4)                            # output tiles
    cost = pl.CostEstimate(flops=int(kv_proj_flops + steps * per_step_flops),
                           transcendentals=int(trans),
                           bytes_accessed=int(bytes_accessed))

    kernel = functools.partial(_axial_attn_kernel, num_heads=num_heads, tq=tq,
                               approx_recip=approx_recip)
    out = pl.pallas_call(
        kernel,
        out_shape=jax.ShapeDtypeStruct((B, C, N), x_nchw.dtype),
        grid_spec=pltpu.PrefetchScalarGridSpec(
            num_scalar_prefetch=0,
            grid=grid,
            in_specs=[
                # Full token block; index constant over qi -> DMA'd once per b.
                pl.BlockSpec((1, C, N), lambda b, qi: (b, 0, 0)),
                # Constant-index (C, C) weights (tiny after out_proj un-folding).
                pl.BlockSpec((C, C), lambda b, qi: (0, 0)),          # fused Q weight
                pl.BlockSpec((C, C), lambda b, qi: (0, 0)),          # fused K weight
                pl.BlockSpec((C, C), lambda b, qi: (0, 0)),          # fused V weight
                pl.BlockSpec((C, C), lambda b, qi: (0, 0)),          # out_proj weight
            ],
            out_specs=pl.BlockSpec((1, C, tq), lambda b, qi: (b, 0, qi)),
            scratch_shapes=[
                pltpu.VMEM((C, N), jnp.float32),   # kT cache (per batch element)
                pltpu.VMEM((C, N), jnp.float32),   # vT cache (per batch element)
            ],
        ),
        compiler_params=pltpu.CompilerParams(
            # qi must be "arbitrary": the @pl.when(qi == 0) K/V-cache init relies
            # on sequential qi per batch element.  B stays "parallel" (megacore).
            dimension_semantics=("parallel", "arbitrary"),
            vmem_limit_bytes=32 * 1024 * 1024,
        ),
        cost_estimate=cost,
    )(xT, wq_bf, wk_bf, wv_bf, wo_bf)

    # Kernel already emits channel-major (B, C, N): just reshape to NCHW.
    return out.reshape(B, C, H, W)


def _reference_forward(x, wqkv, win, wout, num_heads):
    """Plain-JAX reference mirroring the PyTorch forward (for verification)."""
    B, C, H, W = x.shape
    N = H * W
    xt = jnp.transpose(x, (0, 2, 3, 1)).reshape(B, N, C)
    qkv = jnp.einsum("bnc,dc->bnd", xt, wqkv)
    q0, k0, v0 = qkv[..., :C], qkv[..., C:2 * C], qkv[..., 2 * C:]
    q = jnp.einsum("bnc,dc->bnd", q0, win[:C])
    k = jnp.einsum("bnc,dc->bnd", k0, win[C:2 * C])
    v = jnp.einsum("bnc,dc->bnd", v0, win[2 * C:])
    hd = C // num_heads
    qh = q.reshape(B, N, num_heads, hd).transpose(0, 2, 1, 3)
    kh = k.reshape(B, N, num_heads, hd).transpose(0, 2, 1, 3)
    vh = v.reshape(B, N, num_heads, hd).transpose(0, 2, 1, 3)
    s = jnp.einsum("bhqd,bhkd->bhqk", qh, kh) / math.sqrt(hd)
    p = jax.nn.softmax(s, axis=-1)
    o = jnp.einsum("bhqk,bhkd->bhqd", p, vh)
    o = o.transpose(0, 2, 1, 3).reshape(B, N, C)
    o = jnp.einsum("bnc,dc->bnd", o, wout)
    return jnp.transpose(o.reshape(B, H, W, C), (0, 3, 1, 2))


if __name__ == "__main__":
    # Small shapes; H*W = 512 gives two 256-wide query tiles per batch element,
    # exercising the per-batch K/V-projection cache across query tiles.
    B, C, H, W = 2, 32, 16, 32
    num_heads = 4
    window_size = (4, 4)

    key = jax.random.PRNGKey(0)
    kx, k1, k2, k3 = jax.random.split(key, 4)
    x = jax.random.normal(kx, (B, C, H, W), dtype=jnp.float32)
    # Deterministic synthetic parameters (shapes from the module's __init__):
    wqkv = 0.1 * jax.random.normal(k1, (3 * C, C), dtype=jnp.float32)  # Conv2d(dim,3dim,1).weight
    win = 0.1 * jax.random.normal(k2, (3 * C, C), dtype=jnp.float32)   # MHA in_proj_weight
    wout = 0.1 * jax.random.normal(k3, (C, C), dtype=jnp.float32)      # MHA out_proj.weight

    out = axial_window_attention(x, wqkv, win, wout,
                                 num_heads=num_heads, window_size=window_size)
    out = jax.block_until_ready(out)

    ref = _reference_forward(x, wqkv, win, wout, num_heads)
    assert out.shape == (B, C, H, W)
    if not jnp.allclose(out, ref, atol=3e-2, rtol=3e-2):
        max_err = jnp.max(jnp.abs(out - ref))
        raise AssertionError(
            f"Pallas kernel output mismatches JAX reference (max abs err={max_err})")

    print("KERNEL_OK")
</pallas_src>

<mosaic_0001>
module attributes {stable_mosaic.version = 11 : i64} {
  func.func @_axial_attn_kernel(%arg0: i32, %arg1: i32, %arg2: memref<1x32x512xf32, #tpu.memory_space<vmem>>, %arg3: memref<32x32xbf16, #tpu.memory_space<vmem>>, %arg4: memref<32x32xbf16, #tpu.memory_space<vmem>>, %arg5: memref<32x32xbf16, #tpu.memory_space<vmem>>, %arg6: memref<32x32xbf16, #tpu.memory_space<vmem>>, %arg7: memref<1x32x256xf32, #tpu.memory_space<vmem>>, %arg8: memref<32x512xf32, #tpu.memory_space<vmem>>, %arg9: memref<32x512xf32, #tpu.memory_space<vmem>>) attributes {dimension_semantics = [#tpu.dimension_semantics<parallel>, #tpu.dimension_semantics<arbitrary>], iteration_bounds = array<i64: 2, 2>, scalar_prefetch = 0 : i64, scratch_operands = 2 : i64, tpu.core_type = #tpu.core_type<tc>, window_params = [{transform_indices = @transform_0, window_bounds = array<i64: 1, 32, 512>}, {pipeline_mode = #tpu.pipeline_mode<synchronous>, transform_indices = @transform_1, window_bounds = array<i64: 32, 32>}, {pipeline_mode = #tpu.pipeline_mode<synchronous>, transform_indices = @transform_2, window_bounds = array<i64: 32, 32>}, {pipeline_mode = #tpu.pipeline_mode<synchronous>, transform_indices = @transform_3, window_bounds = array<i64: 32, 32>}, {pipeline_mode = #tpu.pipeline_mode<synchronous>, transform_indices = @transform_4, window_bounds = array<i64: 32, 32>}, {transform_indices = @transform_5, window_bounds = array<i64: 1, 32, 256>}]} {
    %c0_i32 = arith.constant 0 : i32
    %0 = arith.cmpi eq, %arg1, %c0_i32 : i32
    %1 = arith.extui %0 : i1 to i32
    %c0_i32_0 = arith.constant 0 : i32
    %2 = arith.cmpi ne, %1, %c0_i32_0 : i32
    scf.if %2 {
      %c0_30 = arith.constant 0 : index
      %c0_31 = arith.constant 0 : index
      %c0_32 = arith.constant 0 : index
      %80 = vector.load %arg2[%c0_30, %c0_31, %c0_32] : memref<1x32x512xf32, #tpu.memory_space<vmem>>, vector<1x32x512xf32>
      %81 = vector.shape_cast %80 : vector<1x32x512xf32> to vector<32x512xf32>
      %82 = arith.truncf %81 : vector<32x512xf32> to vector<32x512xbf16>
      %c0_33 = arith.constant 0 : index
      %c0_34 = arith.constant 0 : index
      %83 = vector.load %arg4[%c0_33, %c0_34] : memref<32x32xbf16, #tpu.memory_space<vmem>>, vector<32x32xbf16>
      %cst_35 = arith.constant dense<0.000000e+00> : vector<32x512xf32>
      %84 = tpu.matmul %83, %82, %cst_35 {dimension_numbers = #tpu.dot_dimension_numbers<[1], [0], [0], [1], [0, 0, 1, 1], [], []>} : vector<32x32xbf16>, vector<32x512xbf16>, vector<32x512xf32> -> vector<32x512xf32>
      %c0_36 = arith.constant 0 : index
      %c0_37 = arith.constant 0 : index
      %85 = vector.load %arg8[%c0_36, %c0_37] : memref<32x512xf32, #tpu.memory_space<vmem>>, vector<32x512xf32>
      tpu.vector_store %arg8[%c0_36, %c0_37], %84 {strides = array<i32>} : memref<32x512xf32, #tpu.memory_space<vmem>>, vector<32x512xf32>,
      %c0_38 = arith.constant 0 : index
      %c0_39 = arith.constant 0 : index
      %86 = vector.load %arg5[%c0_38, %c0_39] : memref<32x32xbf16, #tpu.memory_space<vmem>>, vector<32x32xbf16>
      %cst_40 = arith.constant dense<0.000000e+00> : vector<32x512xf32>
      %87 = tpu.matmul %86, %82, %cst_40 {dimension_numbers = #tpu.dot_dimension_numbers<[1], [0], [0], [1], [0, 0, 1, 1], [], []>} : vector<32x32xbf16>, vector<32x512xbf16>, vector<32x512xf32> -> vector<32x512xf32>
      %c0_41 = arith.constant 0 : index
      %c0_42 = arith.constant 0 : index
      %88 = vector.load %arg9[%c0_41, %c0_42] : memref<32x512xf32, #tpu.memory_space<vmem>>, vector<32x512xf32>
      tpu.vector_store %arg9[%c0_41, %c0_42], %87 {strides = array<i32>} : memref<32x512xf32, #tpu.memory_space<vmem>>, vector<32x512xf32>,
    } else {
    }
    %c256_i32 = arith.constant 256 : i32
    %3 = arith.muli %arg1, %c256_i32 : i32
    %4 = tpu.assume_multiple %3, 256 : i32
    %c0 = arith.constant 0 : index
    %c0_1 = arith.constant 0 : index
    %5 = arith.index_cast %4 : i32 to index
    %6 = vector.load %arg2[%c0, %c0_1, %5] : memref<1x32x512xf32, #tpu.memory_space<vmem>>, vector<1x32x256xf32>
    %7 = vector.shape_cast %6 : vector<1x32x256xf32> to vector<32x256xf32>
    %8 = arith.truncf %7 : vector<32x256xf32> to vector<32x256xbf16>
    %c0_2 = arith.constant 0 : index
    %c0_3 = arith.constant 0 : index
    %9 = vector.load %arg3[%c0_2, %c0_3] : memref<32x32xbf16, #tpu.memory_space<vmem>>, vector<32x32xbf16>
    %cst = arith.constant dense<0.000000e+00> : vector<32x256xf32>
    %10 = tpu.matmul %9, %8, %cst {dimension_numbers = #tpu.dot_dimension_numbers<[1], [0], [0], [1], [0, 0, 1, 1], [], []>} : vector<32x32xbf16>, vector<32x256xbf16>, vector<32x256xf32> -> vector<32x256xf32>
    %c0_4 = arith.constant 0 : index
    %c0_5 = arith.constant 0 : index
    %11 = vector.load %arg8[%c0_4, %c0_5] : memref<32x512xf32, #tpu.memory_space<vmem>>, vector<32x512xf32>
    %c0_6 = arith.constant 0 : index
    %c0_7 = arith.constant 0 : index
    %12 = vector.load %arg9[%c0_6, %c0_7] : memref<32x512xf32, #tpu.memory_space<vmem>>, vector<32x512xf32>
    %13 = vector.extract_strided_slice %10 {offsets = [0, 0], sizes = [8, 256], strides = [1, 1]} : vector<32x256xf32> to vector<8x256xf32>
    %14 = vector.extract_strided_slice %11 {offsets = [0, 0], sizes = [8, 512], strides = [1, 1]} : vector<32x512xf32> to vector<8x512xf32>
    %15 = vector.extract_strided_slice %12 {offsets = [0, 0], sizes = [8, 512], strides = [1, 1]} : vector<32x512xf32> to vector<8x512xf32>
    %cst_8 = arith.constant dense<0.000000e+00> : vector<512x256xf32>
    %16 = tpu.matmul %14, %13, %cst_8 {dimension_numbers = #tpu.dot_dimension_numbers<[0], [0], [1], [1], [0, 1, 1, 1], [], []>} : vector<8x512xf32>, vector<8x256xf32>, vector<512x256xf32> -> vector<512x256xf32>
    %cst_9 = arith.constant dense<0xFF800000> : vector<256xf32>
    %17 = vector.multi_reduction <maximumf>, %16, %cst_9 [0] : vector<512x256xf32> to vector<256xf32>
    %18 = vector.shape_cast %17 : vector<256xf32> to vector<1x256xf32>
    %19 = vector.broadcast %18 : vector<1x256xf32> to vector<512x256xf32>
    %20 = arith.subf %16, %19 : vector<512x256xf32>
    %21 = math.exp %20 : vector<512x256xf32>
    %cst_10 = arith.constant dense<0.000000e+00> : vector<256xf32>
    %22 = vector.multi_reduction <add>, %21, %cst_10 [0] : vector<512x256xf32> to vector<256xf32>
    %23 = vector.shape_cast %22 : vector<256xf32> to vector<1x256xf32>
    %24 = tpu.reciprocal %23 {approx = true} : vector<1x256xf32> -> vector<1x256xf32>
    %25 = vector.broadcast %24 : vector<1x256xf32> to vector<512x256xf32>
    %26 = arith.mulf %21, %25 : vector<512x256xf32>
    %cst_11 = arith.constant dense<0.000000e+00> : vector<8x256xf32>
    %27 = tpu.matmul %15, %26, %cst_11 {dimension_numbers = #tpu.dot_dimension_numbers<[1], [0], [0], [1], [0, 0, 1, 1], [], []>} : vector<8x512xf32>, vector<512x256xf32>, vector<8x256xf32> -> vector<8x256xf32>
    %28 = vector.extract_strided_slice %10 {offsets = [8, 0], sizes = [8, 256], strides = [1, 1]} : vector<32x256xf32> to vector<8x256xf32>
    %29 = vector.extract_strided_slice %11 {offsets = [8, 0], sizes = [8, 512], strides = [1, 1]} : vector<32x512xf32> to vector<8x512xf32>
    %30 = vector.extract_strided_slice %12 {offsets = [8, 0], sizes = [8, 512], strides = [1, 1]} : vector<32x512xf32> to vector<8x512xf32>
    %cst_12 = arith.constant dense<0.000000e+00> : vector<512x256xf32>
    %31 = tpu.matmul %29, %28, %cst_12 {dimension_numbers = #tpu.dot_dimension_numbers<[0], [0], [1], [1], [0, 1, 1, 1], [], []>} : vector<8x512xf32>, vector<8x256xf32>, vector<512x256xf32> -> vector<512x256xf32>
    %cst_13 = arith.constant dense<0xFF800000> : vector<256xf32>
    %32 = vector.multi_reduction <maximumf>, %31, %cst_13 [0] : vector<512x256xf32> to vector<256xf32>
    %33 = vector.shape_cast %32 : vector<256xf32> to vector<1x256xf32>
    %34 = vector.broadcast %33 : vector<1x256xf32> to vector<512x256xf32>
    %35 = arith.subf %31, %34 : vector<512x256xf32>
    %36 = math.exp %35 : vector<512x256xf32>
    %cst_14 = arith.constant dense<0.000000e+00> : vector<256xf32>
    %37 = vector.multi_reduction <add>, %36, %cst_14 [0] : vector<512x256xf32> to vector<256xf32>
    %38 = vector.shape_cast %37 : vector<256xf32> to vector<1x256xf32>
    %39 = tpu.reciprocal %38 {approx = true} : vector<1x256xf32> -> vector<1x256xf32>
    %40 = vector.broadcast %39 : vector<1x256xf32> to vector<512x256xf32>
    %41 = arith.mulf %36, %40 : vector<512x256xf32>
    %cst_15 = arith.constant dense<0.000000e+00> : vector<8x256xf32>
    %42 = tpu.matmul %30, %41, %cst_15 {dimension_numbers = #tpu.dot_dimension_numbers<[1], [0], [0], [1], [0, 0, 1, 1], [], []>} : vector<8x512xf32>, vector<512x256xf32>, vector<8x256xf32> -> vector<8x256xf32>
    %43 = vector.extract_strided_slice %10 {offsets = [16, 0], sizes = [8, 256], strides = [1, 1]} : vector<32x256xf32> to vector<8x256xf32>
    %44 = vector.extract_strided_slice %11 {offsets = [16, 0], sizes = [8, 512], strides = [1, 1]} : vector<32x512xf32> to vector<8x512xf32>
    %45 = vector.extract_strided_slice %12 {offsets = [16, 0], sizes = [8, 512], strides = [1, 1]} : vector<32x512xf32> to vector<8x512xf32>
    %cst_16 = arith.constant dense<0.000000e+00> : vector<512x256xf32>
    %46 = tpu.matmul %44, %43, %cst_16 {dimension_numbers = #tpu.dot_dimension_numbers<[0], [0], [1], [1], [0, 1, 1, 1], [], []>} : vector<8x512xf32>, vector<8x256xf32>, vector<512x256xf32> -> vector<512x256xf32>
    %cst_17 = arith.constant dense<0xFF800000> : vector<256xf32>
    %47 = vector.multi_reduction <maximumf>, %46, %cst_17 [0] : vector<512x256xf32> to vector<256xf32>
    %48 = vector.shape_cast %47 : vector<256xf32> to vector<1x256xf32>
    %49 = vector.broadcast %48 : vector<1x256xf32> to vector<512x256xf32>
    %50 = arith.subf %46, %49 : vector<512x256xf32>
    %51 = math.exp %50 : vector<512x256xf32>
    %cst_18 = arith.constant dense<0.000000e+00> : vector<256xf32>
    %52 = vector.multi_reduction <add>, %51, %cst_18 [0] : vector<512x256xf32> to vector<256xf32>
    %53 = vector.shape_cast %52 : vector<256xf32> to vector<1x256xf32>
    %54 = tpu.reciprocal %53 {approx = true} : vector<1x256xf32> -> vector<1x256xf32>
    %55 = vector.broadcast %54 : vector<1x256xf32> to vector<512x256xf32>
    %56 = arith.mulf %51, %55 : vector<512x256xf32>
    %cst_19 = arith.constant dense<0.000000e+00> : vector<8x256xf32>
    %57 = tpu.matmul %45, %56, %cst_19 {dimension_numbers = #tpu.dot_dimension_numbers<[1], [0], [0], [1], [0, 0, 1, 1], [], []>} : vector<8x512xf32>, vector<512x256xf32>, vector<8x256xf32> -> vector<8x256xf32>
    %58 = vector.extract_strided_slice %10 {offsets = [24, 0], sizes = [8, 256], strides = [1, 1]} : vector<32x256xf32> to vector<8x256xf32>
    %59 = vector.extract_strided_slice %11 {offsets = [24, 0], sizes = [8, 512], strides = [1, 1]} : vector<32x512xf32> to vector<8x512xf32>
    %60 = vector.extract_strided_slice %12 {offsets = [24, 0], sizes = [8, 512], strides = [1, 1]} : vector<32x512xf32> to vector<8x512xf32>
    %cst_20 = arith.constant dense<0.000000e+00> : vector<512x256xf32>
    %61 = tpu.matmul %59, %58, %cst_20 {dimension_numbers = #tpu.dot_dimension_numbers<[0], [0], [1], [1], [0, 1, 1, 1], [], []>} : vector<8x512xf32>, vector<8x256xf32>, vector<512x256xf32> -> vector<512x256xf32>
    %cst_21 = arith.constant dense<0xFF800000> : vector<256xf32>
    %62 = vector.multi_reduction <maximumf>, %61, %cst_21 [0] : vector<512x256xf32> to vector<256xf32>
    %63 = vector.shape_cast %62 : vector<256xf32> to vector<1x256xf32>
    %64 = vector.broadcast %63 : vector<1x256xf32> to vector<512x256xf32>
    %65 = arith.subf %61, %64 : vector<512x256xf32>
    %66 = math.exp %65 : vector<512x256xf32>
    %cst_22 = arith.constant dense<0.000000e+00> : vector<256xf32>
    %67 = vector.multi_reduction <add>, %66, %cst_22 [0] : vector<512x256xf32> to vector<256xf32>
    %68 = vector.shape_cast %67 : vector<256xf32> to vector<1x256xf32>
    %69 = tpu.reciprocal %68 {approx = true} : vector<1x256xf32> -> vector<1x256xf32>
    %70 = vector.broadcast %69 : vector<1x256xf32> to vector<512x256xf32>
    %71 = arith.mulf %66, %70 : vector<512x256xf32>
    %cst_23 = arith.constant dense<0.000000e+00> : vector<8x256xf32>
    %72 = tpu.matmul %60, %71, %cst_23 {dimension_numbers = #tpu.dot_dimension_numbers<[1], [0], [0], [1], [0, 0, 1, 1], [], []>} : vector<8x512xf32>, vector<512x256xf32>, vector<8x256xf32> -> vector<8x256xf32>
    %73 = tpu.concatenate %27, %42, %57, %72 in 0 : vector<8x256xf32>, vector<8x256xf32>, vector<8x256xf32>, vector<8x256xf32> -> vector<32x256xf32>
    %c0_24 = arith.constant 0 : index
    %c0_25 = arith.constant 0 : index
    %74 = vector.load %arg6[%c0_24, %c0_25] : memref<32x32xbf16, #tpu.memory_space<vmem>>, vector<32x32xbf16>
    %75 = arith.extf %74 : vector<32x32xbf16> to vector<32x32xf32>
    %cst_26 = arith.constant dense<0.000000e+00> : vector<32x256xf32>
    %76 = tpu.matmul %75, %73, %cst_26 {dimension_numbers = #tpu.dot_dimension_numbers<[1], [0], [0], [1], [0, 0, 1, 1], [], []>} : vector<32x32xf32>, vector<32x256xf32>, vector<32x256xf32> -> vector<32x256xf32>
    %c0_27 = arith.constant 0 : index
    %c0_28 = arith.constant 0 : index
    %c0_29 = arith.constant 0 : index
    %77 = vector.load %arg7[%c0_27, %c0_28, %c0_29] : memref<1x32x256xf32, #tpu.memory_space<vmem>>, vector<1x32x256xf32>
    %78 = vector.shape_cast %77 : vector<1x32x256xf32> to vector<32x256xf32>
    %79 = vector.shape_cast %76 : vector<32x256xf32> to vector<1x32x256xf32>
    tpu.vector_store %arg7[%c0_27, %c0_28, %c0_29], %79 {strides = array<i32>} : memref<1x32x256xf32, #tpu.memory_space<vmem>>, vector<1x32x256xf32>,
    return
  }
  func.func @transform_0(%arg0: i32, %arg1: i32) -> (i32, i32, i32) {
    %c0_i32 = arith.constant 0 : i32
    %c0_i32_0 = arith.constant 0 : i32
    %c0_i32_1 = arith.constant 0 : i32
    return %arg0, %c0_i32, %c0_i32_0 : i32, i32, i32
  }
  func.func @transform_1(%arg0: i32, %arg1: i32) -> (i32, i32) {
    %c0_i32 = arith.constant 0 : i32
    %c0_i32_0 = arith.constant 0 : i32
    %c0_i32_1 = arith.constant 0 : i32
    return %c0_i32, %c0_i32_0 : i32, i32
  }
  func.func @transform_2(%arg0: i32, %arg1: i32) -> (i32, i32) {
    %c0_i32 = arith.constant 0 : i32
    %c0_i32_0 = arith.constant 0 : i32
    %c0_i32_1 = arith.constant 0 : i32
    return %c0_i32, %c0_i32_0 : i32, i32
  }
  func.func @transform_3(%arg0: i32, %arg1: i32) -> (i32, i32) {
    %c0_i32 = arith.constant 0 : i32
    %c0_i32_0 = arith.constant 0 : i32
    %c0_i32_1 = arith.constant 0 : i32
    return %c0_i32, %c0_i32_0 : i32, i32
  }
  func.func @transform_4(%arg0: i32, %arg1: i32) -> (i32, i32) {
    %c0_i32 = arith.constant 0 : i32
    %c0_i32_0 = arith.constant 0 : i32
    %c0_i32_1 = arith.constant 0 : i32
    return %c0_i32, %c0_i32_0 : i32, i32
  }
  func.func @transform_5(%arg0: i32, %arg1: i32) -> (i32, i32, i32) {
    %c0_i32 = arith.constant 0 : i32
    %c0_i32_0 = arith.constant 0 : i32
    return %arg0, %c0_i32, %arg1 : i32, i32, i32
  }
}

</mosaic_0001>

<llo_original>
// kernel: tpu_custom_call.1
$region0: #{tpu_custom_call.1}
  #allocation0 [shape = 'u32[]', space=smem, size = 0x4, offset = 0x4, fixed_abs, tag = 'smem constant byte address 0x4 - core index']
  #allocation1 [shape = 'u32[144,128]{1,0:T(1,128)}', space=vmem, size = 0x12000, scoped, tag = 'internal scratch']
  #allocation2 [shape = 'f32[32,512]{1,0:T(8,128)}', space=vmem, size = 0x10000, scoped, tag = 'scratch operand']
  #allocation3 [shape = 'f32[32,512]{1,0:T(8,128)}', space=vmem, size = 0x10000, scoped, tag = 'scratch operand']
  %s0 = inlined_call_operand.hbm [shape: f32[2,32,512], index: 0, kind: input, shape index: {}]
  %s1 = inlined_call_operand.hbm [shape: bf16[32,32], index: 1, kind: input, shape index: {}]
  %s2 = inlined_call_operand.hbm [shape: bf16[32,32], index: 2, kind: input, shape index: {}]
  %s3 = inlined_call_operand.hbm [shape: bf16[32,32], index: 3, kind: input, shape index: {}]
  %s4 = inlined_call_operand.hbm [shape: bf16[32,32], index: 4, kind: input, shape index: {}]
  %s5 = inlined_call_operand.hbm [shape: f32[2,32,512], index: 5, kind: output, shape index: {}]
  %s6 = sld [smem:[#allocation0]]
  $region77: #{tpu_custom_call.1} parent=0
    _
  %s8 = ssub.s32 1, %s6
  %s9 = scalar_select 0, %s8, %s6
  $region1: #{tpu_custom_call.1} parent=0
    #allocation4 [shape = 'u8[131072]{0}', space=vmem, size = 0x20000, scoped, tag = 'input window, operand 0']
    #allocation5 [shape = 's32[2]{0}', space=sflag, size = 0x8, scoped, tag = 'scoped memory for tpu_custom_call.1']
    #allocation6 [shape = 's32[2]{0}', space=sflag, size = 0x8, scoped, tag = 'scoped memory for tpu_custom_call.1']
    #allocation7 [shape = 'u8[8192]{0}', space=vmem, size = 0x2000, scoped, tag = 'input window, operand 1, single buffered']
    #allocation8 [shape = 's32[1]{0}', space=sflag, size = 0x4, scoped, tag = 'scoped memory for tpu_custom_call.1']
    #allocation9 [shape = 'u8[8192]{0}', space=vmem, size = 0x2000, scoped, tag = 'input window, operand 2, single buffered']
    #allocation10 [shape = 'u8[8192]{0}', space=vmem, size = 0x2000, scoped, tag = 'input window, operand 3, single buffered']
    #allocation11 [shape = 's32[1]{0}', space=sflag, size = 0x4, scoped, tag = 'scoped memory for tpu_custom_call.1']
    #allocation12 [shape = 'u8[8192]{0}', space=vmem, size = 0x2000, scoped, tag = 'input window, operand 4, single buffered']
    #allocation13 [shape = 'u8[65536]{0}', space=vmem, size = 0x10000, scoped, tag = 'output window, operand 0']
    %10 = vsyncpa [#allocation5], 0
    %s11 = scalar_lea.sflag [#allocation5], 1
    %12 = vsyncpa %s11, 0
    %13 = vsyncpa [#allocation8], 0
    %14 = vsyncpa [#allocation11], 0
    %15 = vsyncpa [#allocation6], 0
    %s16 = scalar_lea.sflag [#allocation6], 1
    %17 = vsyncpa %s16, 0
    loop: start=0, step=1, limit=6
    $region2: #{tpu_custom_call.1} parent=1 // loop_pre_header
      _
    $region3: #{tpu_custom_call.1} parent=1 // loop_header
      %s19 = sphi 0, %s23
      %p20 = scmp.ge.s32.totalorder %s19, 6
      %s26 = sphi 0, %s38
      %s27 = sphi 0, %s34
      %s28 = sphi 0, %s26
      %s29 = sphi 0, %s27
      %s30 = sphi 0, %s28
      %s31 = sphi 0, %s29
      %s41 = sphi 0, %s43
      %s44 = sphi 0, %s41
      %s45 = sphi 0, %s44
      %s61 = sphi 0, %s45
      %s65 = sphi 0, %s65
      %s67 = sphi 0, %s65
      %s68 = sphi 0, %s67
      %s82 = sphi 0, %s68
      %s86 = sphi 0, %s86
      %s88 = sphi 0, %s86
      %s89 = sphi 0, %s88
      %s103 = sphi 0, %s89
      %s107 = sphi 0, %s107
      %s109 = sphi 0, %s107
      %s110 = sphi 0, %s109
      %s124 = sphi 0, %s110
      %s128 = sphi 0, %s128
      %s130 = sphi 0, %s128
      %s131 = sphi 0, %s130
      %s145 = sphi 0, %s131
      %s153 = sphi 0, %s155
      %s156 = sphi 0, %s153
      %s157 = sphi 0, %s156
      %s173 = sphi 0, %s157
    $region4: #{tpu_custom_call.1} parent=1 // loop_header_branch
      %22 = sbr.rel (%p20) target = $region8
    $region5: #{tpu_custom_call.1} parent=1 // loop_body
      %s24 = ssub.s32 %s19, 1
      %s25 = ssub.s32 %s19, 2
      %s32 = sadd.s32 1, %s27
      %p33 = scmp.ge.s32.totalorder %s32, 2
      %s34 = scalar_select %p33, 0, %s32
      %s35 = sadd.s32 1, %s26
      %s36 = scalar_select %p33, %s35, %s26
      %p37 = scmp.ge.s32.totalorder %s36, 2
      %s38 = scalar_select %p37, 0, %s36
      %s39 = ssub.s32 %s26, %s38
      %p40 = scmp.eq.s32.totalorder %s39, 0
      %s42 = sadd.s32 %s41, 1
      %s43 = scalar_select %p40, %s41, %s42
      %p46 = pneg %p40
      %p47 = scmp.eq.s32.totalorder %s19, 3
      %p48 = por %p46, %p47
      %p49 = scmp.ne.s32.totalorder %s41, %s44
      %p50 = scmp.eq.s32.totalorder %s19, 0
      %p51 = por %p49, %p50
      %p52 = scmp.ne.s32.totalorder %s41, %s44
      %p53 = scmp.eq.s32.totalorder %s24, 3
      %p54 = por %p52, %p53
      %p55 = scmp.ne.s32.totalorder %s44, %s45
      %p56 = scmp.eq.s32.totalorder %s24, 0
      %p57 = por %p55, %p56
      %p58 = scmp.ne.s32.totalorder %s44, %s45
      %p59 = scmp.eq.s32.totalorder %s25, 3
      %p60 = por %p58, %p59
      %p62 = scmp.ne.s32.totalorder %s45, %s61
      %p63 = scmp.eq.s32.totalorder %s25, 0
      %p64 = por %p62, %p63
      %s66 = sadd.s32 %s65, 1
      %p69 = scmp.eq.s32.totalorder %s19, 3
      %p70 = scmp.ne.s32.totalorder %s65, %s67
      %p71 = scmp.eq.s32.totalorder %s19, 0
      %p72 = por %p70, %p71
      %p73 = scmp.ne.s32.totalorder %s65, %s67
      %p74 = scmp.eq.s32.totalorder %s24, 3
      %p75 = por %p73, %p74
      %p76 = scmp.ne.s32.totalorder %s67, %s68
      %p77 = scmp.eq.s32.totalorder %s24, 0
      %p78 = por %p76, %p77
      %p79 = scmp.ne.s32.totalorder %s67, %s68
      %p80 = scmp.eq.s32.totalorder %s25, 3
      %p81 = por %p79, %p80
      %p83 = scmp.ne.s32.totalorder %s68, %s82
      %p84 = scmp.eq.s32.totalorder %s25, 0
      %p85 = por %p83, %p84
      %s87 = sadd.s32 %s86, 1
      %p90 = scmp.eq.s32.totalorder %s19, 3
      %p91 = scmp.ne.s32.totalorder %s86, %s88
      %p92 = scmp.eq.s32.totalorder %s19, 0
      %p93 = por %p91, %p92
      %p94 = scmp.ne.s32.totalorder %s86, %s88
      %p95 = scmp.eq.s32.totalorder %s24, 3
      %p96 = por %p94, %p95
      %p97 = scmp.ne.s32.totalorder %s88, %s89
      %p98 = scmp.eq.s32.totalorder %s24, 0
      %p99 = por %p97, %p98
      %p100 = scmp.ne.s32.totalorder %s88, %s89
      %p101 = scmp.eq.s32.totalorder %s25, 3
      %p102 = por %p100, %p101
      %p104 = scmp.ne.s32.totalorder %s89, %s103
      %p105 = scmp.eq.s32.totalorder %s25, 0
      %p106 = por %p104, %p105
      %s108 = sadd.s32 %s107, 1
      %p111 = scmp.eq.s32.totalorder %s19, 3
      %p112 = scmp.ne.s32.totalorder %s107, %s109
      %p113 = scmp.eq.s32.totalorder %s19, 0
      %p114 = por %p112, %p113
      %p115 = scmp.ne.s32.totalorder %s107, %s109
      %p116 = scmp.eq.s32.totalorder %s24, 3
      %p117 = por %p115, %p116
      %p118 = scmp.ne.s32.totalorder %s109, %s110
      %p119 = scmp.eq.s32.totalorder %s24, 0
      %p120 = por %p118, %p119
      %p121 = scmp.ne.s32.totalorder %s109, %s110
      %p122 = scmp.eq.s32.totalorder %s25, 3
      %p123 = por %p121, %p122
      %p125 = scmp.ne.s32.totalorder %s110, %s124
      %p126 = scmp.eq.s32.totalorder %s25, 0
      %p127 = por %p125, %p126
      %s129 = sadd.s32 %s128, 1
      %p132 = scmp.eq.s32.totalorder %s19, 3
      %p133 = scmp.ne.s32.totalorder %s128, %s130
      %p134 = scmp.eq.s32.totalorder %s19, 0
      %p135 = por %p133, %p134
      %p136 = scmp.ne.s32.totalorder %s128, %s130
      %p137 = scmp.eq.s32.totalorder %s24, 3
      %p138 = por %p136, %p137
      %p139 = scmp.ne.s32.totalorder %s130, %s131
      %p140 = scmp.eq.s32.totalorder %s24, 0
      %p141 = por %p139, %p140
      %p142 = scmp.ne.s32.totalorder %s130, %s131
      %p143 = scmp.eq.s32.totalorder %s25, 3
      %p144 = por %p142, %p143
      %p146 = scmp.ne.s32.totalorder %s131, %s145
      %p147 = scmp.eq.s32.totalorder %s25, 0
      %p148 = por %p146, %p147
      %s149 = ssub.s32 %s26, %s38
      %s150 = ssub.s32 %s27, %s34
      %s151 = sor.u32 %s149, %s150
      %p152 = scmp.eq.s32.totalorder %s151, 0
      %s154 = sadd.s32 %s153, 1
      %s155 = scalar_select %p152, %s153, %s154
      %p158 = pneg %p152
      %p159 = scmp.eq.s32.totalorder %s19, 3
      %p160 = por %p158, %p159
      %p161 = scmp.ne.s32.totalorder %s153, %s156
      %p162 = scmp.eq.s32.totalorder %s19, 0
      %p163 = por %p161, %p162
      %p164 = scmp.ne.s32.totalorder %s153, %s156
      %p165 = scmp.eq.s32.totalorder %s24, 3
      %p166 = por %p164, %p165
      %p167 = scmp.ne.s32.totalorder %s156, %s157
      %p168 = scmp.eq.s32.totalorder %s24, 0
      %p169 = por %p167, %p168
      %p170 = scmp.ne.s32.totalorder %s156, %s157
      %p171 = scmp.eq.s32.totalorder %s25, 3
      %p172 = por %p170, %p171
      %p174 = scmp.ne.s32.totalorder %s157, %s173
      %p175 = scmp.eq.s32.totalorder %s25, 0
      %p176 = por %p174, %p175
      %p177 = scmp.le.s32.totalorder 1, %s19
      %p178 = scmp.lt.s32.totalorder %s19, 5
      %p179 = pnand %p177, %p178
      %p180 = pneg %p179
      // Predicated region
      $region9: #{tpu_custom_call.1} parent=5 // pred_check
        _
      $region10: #{tpu_custom_call.1} parent=5 // pred_check_branch
        %182 = sbr.rel (%p179) target = $region12
      $region11: #{tpu_custom_call.1} parent=5 // pred_region
        %s183 = ssub.s32 %s19, 1
        // Predicated region
        $region13: #{tpu_custom_call.1} parent=11 // pred_check
          %p184 = pneg %p78
        $region14: #{tpu_custom_call.1} parent=11 // pred_check_branch
          %186 = sbr.rel (%p184) target = $region16
        $region15: #{tpu_custom_call.1} parent=11 // pred_region
          %s188 = ssub.s32 256, 256
          %189 = vsyncadd [#allocation8], %s188
          %s190 = sshll.u32 [#allocation7], 4
          %s191 = int_to_ptr.vmem [resolvable:$true] %s190
          %196 = dma.hbm_to_vmem [thread:$0]  %s1, 256, %s191, [#allocation8], 64, 64, 4
        $region16: #{tpu_custom_call.1} parent=11 // pred_fallthru
          _
        // Predicated region
        $region17: #{tpu_custom_call.1} parent=11 // pred_check
          %p197 = pneg %p99
        $region18: #{tpu_custom_call.1} parent=11 // pred_check_branch
          %199 = sbr.rel (%p197) target = $region20
        $region19: #{tpu_custom_call.1} parent=11 // pred_region
          %s201 = ssub.s32 256, 256
          %202 = vsyncadd [#allocation8], %s201
          %s203 = sshll.u32 [#allocation9], 4
          %s204 = int_to_ptr.vmem [resolvable:$true] %s203
          %209 = dma.hbm_to_vmem [thread:$0]  %s2, 256, %s204, [#allocation8], 64, 64, 4
        $region20: #{tpu_custom_call.1} parent=11 // pred_fallthru
          _
        // Predicated region
        $region21: #{tpu_custom_call.1} parent=11 // pred_check
          %p210 = pneg %p120
        $region22: #{tpu_custom_call.1} parent=11 // pred_check_branch
          %212 = sbr.rel (%p210) target = $region24
        $region23: #{tpu_custom_call.1} parent=11 // pred_region
          %s214 = ssub.s32 256, 256
          %215 = vsyncadd [#allocation11], %s214
          %s216 = sshll.u32 [#allocation10], 4
          %s217 = int_to_ptr.vmem [resolvable:$true] %s216
          %222 = dma.hbm_to_vmem [thread:$0]  %s3, 256, %s217, [#allocation11], 64, 64, 4
        $region24: #{tpu_custom_call.1} parent=11 // pred_fallthru
          _
        // Predicated region
        $region25: #{tpu_custom_call.1} parent=11 // pred_check
          %p223 = pneg %p141
        $region26: #{tpu_custom_call.1} parent=11 // pred_check_branch
          %225 = sbr.rel (%p223) target = $region28
        $region27: #{tpu_custom_call.1} parent=11 // pred_region
          %s227 = ssub.s32 256, 256
          %228 = vsyncadd [#allocation11], %s227
          %s229 = sshll.u32 [#allocation12], 4
          %s230 = int_to_ptr.vmem [resolvable:$true] %s229
          %235 = dma.hbm_to_vmem [thread:$0]  %s4, 256, %s230, [#allocation11], 64, 64, 4
        $region28: #{tpu_custom_call.1} parent=11 // pred_fallthru
          _
      $region12: #{tpu_custom_call.1} parent=5 // pred_fallthru
        _
      %p236 = scmp.lt.s32.totalorder %s19, 4
      // Predicated region
      $region29: #{tpu_custom_call.1} parent=5 // pred_check
        %p237 = pneg %p236
      $region30: #{tpu_custom_call.1} parent=5 // pred_check_branch
        %239 = sbr.rel (%p237) target = $region32
      $region31: #{tpu_custom_call.1} parent=5 // pred_region
        // Predicated region
        $region33: #{tpu_custom_call.1} parent=31 // pred_check
          %p240 = pneg %p51
        $region34: #{tpu_custom_call.1} parent=31 // pred_check_branch
          %242 = sbr.rel (%p240) target = $region36
        $region35: #{tpu_custom_call.1} parent=31 // pred_region
          %s243 = sand.u32 %s41, 1
          %s244 = scalar_lea.sflag [#allocation5], %s243
          %s245 = sand.u32 %s41, 1
          %s246 = smul.addr %s245, 128
          %s247 = scalar_lea.vmem [#allocation4], %s246
          %s249 = ssub.s32 2048, 2048
          %250 = vsyncadd %s244, %s249
          %s251 = smul.addr %s26, 16
          %s252 = smul.addr %s251, 128
          %s253 = scalar_lea.hbm %s0, %s252
          %s254 = sshll.u32 %s247, 4
          %s255 = int_to_ptr.vmem [resolvable:$true] %s254
          %260 = dma.hbm_to_vmem [thread:$0]  %s253, 2048, %s255, %s244, 512, 512, 32
        $region36: #{tpu_custom_call.1} parent=31 // pred_fallthru
          _
      $region32: #{tpu_custom_call.1} parent=5 // pred_fallthru
        _
      %p261 = scmp.le.s32.totalorder 1, %s19
      %p262 = scmp.lt.s32.totalorder %s19, 5
      %p263 = pnand %p261, %p262
      %p264 = pneg %p263
      // Predicated region
      $region37: #{tpu_custom_call.1} parent=5 // pred_check
        _
      $region38: #{tpu_custom_call.1} parent=5 // pred_check_branch
        %266 = sbr.rel (%p263) target = $region40
      $region39: #{tpu_custom_call.1} parent=5 // pred_region
        %s267 = ssub.s32 %s19, 1
        %s268 = sand.u32 %s44, 1
        %s269 = scalar_lea.sflag [#allocation5], %s268
        %s270 = sand.u32 %s44, 1
        %s271 = smul.addr %s270, 128
        %s272 = scalar_lea.vmem [#allocation4], %s271
        // Predicated region
        $region41: #{tpu_custom_call.1} parent=39 // pred_check
          %p273 = pneg %p57
        $region42: #{tpu_custom_call.1} parent=39 // pred_check_branch
          %275 = sbr.rel (%p273) target = $region44
        $region43: #{tpu_custom_call.1} parent=39 // pred_region
          %276 = dma.done %s269, 2048
        $region44: #{tpu_custom_call.1} parent=39 // pred_fallthru
          _
        // Predicated region
        $region45: #{tpu_custom_call.1} parent=39 // pred_check
          %p277 = pneg %p78
        $region46: #{tpu_custom_call.1} parent=39 // pred_check_branch
          %279 = sbr.rel (%p277) target = $region48
        $region47: #{tpu_custom_call.1} parent=39 // pred_region
          %280 = dma.done [#allocation8], 256
        $region48: #{tpu_custom_call.1} parent=39 // pred_fallthru
          _
        // Predicated region
        $region49: #{tpu_custom_call.1} parent=39 // pred_check
          %p281 = pneg %p99
        $region50: #{tpu_custom_call.1} parent=39 // pred_check_branch
          %283 = sbr.rel (%p281) target = $region52
        $region51: #{tpu_custom_call.1} parent=39 // pred_region
          %284 = dma.done [#allocation8], 256
        $region52: #{tpu_custom_call.1} parent=39 // pred_fallthru
          _
        // Predicated region
        $region53: #{tpu_custom_call.1} parent=39 // pred_check
          %p285 = pneg %p120
        $region54: #{tpu_custom_call.1} parent=39 // pred_check_branch
          %287 = sbr.rel (%p285) target = $region56
        $region55: #{tpu_custom_call.1} parent=39 // pred_region
          %288 = dma.done [#allocation11], 256
        $region56: #{tpu_custom_call.1} parent=39 // pred_fallthru
          _
        // Predicated region
        $region57: #{tpu_custom_call.1} parent=39 // pred_check
          %p289 = pneg %p141
        $region58: #{tpu_custom_call.1} parent=39 // pred_check_branch
          %291 = sbr.rel (%p289) target = $region60
        $region59: #{tpu_custom_call.1} parent=39 // pred_region
          %292 = dma.done [#allocation11], 256
        $region60: #{tpu_custom_call.1} parent=39 // pred_fallthru
          _
        %s293 = sand.u32 %s44, 1
        %s294 = scalar_lea.sflag [#allocation5], %s293
        %s295 = sand.u32 %s44, 1
        %s296 = smul.addr %s295, 128
        %s297 = scalar_lea.vmem [#allocation4], %s296
        %p298 = pneg %p57
        %p299 = pneg %p54
        %p300 = pneg %p78
        %p301 = pneg %p75
        %p302 = pneg %p99
        %p303 = pneg %p96
        %p304 = pneg %p120
        %p305 = pneg %p117
        %p306 = pneg %p141
        %p307 = pneg %p138
        %p308 = pneg %p169
        %p309 = pneg %p166
        %s310 = sand.u32 %s156, 1
        %s311 = scalar_lea.sflag [#allocation6], %s310
        %s312 = sand.u32 %s156, 1
        %s313 = smul.addr %s312, 64
        %s314 = scalar_lea.vmem [#allocation13], %s313
        %s315 = smul.u32 2, %s29
        %p317 = scmp.eq.s32.totalorder %s29, 0
        // Predicated region
        $region61: #{tpu_custom_call.1} parent=39 // pred_check
          %p318 = pneg %p317
        $region62: #{tpu_custom_call.1} parent=39 // pred_check_branch
          %320 = sbr.rel (%p318) target = $region64
        $region63: #{tpu_custom_call.1} parent=39 // pred_region
          %v321 = vld [vmem:[%s272] sm:$0xff]
          %v322 = vld [vmem:[%s272 + $0x8] sm:$0xff]
          %v323 = vld [vmem:[%s272 + $0x10] sm:$0xff]
          %v324 = vld [vmem:[%s272 + $0x18] sm:$0xff]
          %v325 = vld [vmem:[%s272 + $0x20] sm:$0xff]
          %v326 = vld [vmem:[%s272 + $0x28] sm:$0xff]
          %v327 = vld [vmem:[%s272 + $0x30] sm:$0xff]
          %v328 = vld [vmem:[%s272 + $0x38] sm:$0xff]
          %v329 = vld [vmem:[%s272 + $0x40] sm:$0xff]
          %v330 = vld [vmem:[%s272 + $0x48] sm:$0xff]
          %v331 = vld [vmem:[%s272 + $0x50] sm:$0xff]
          %v332 = vld [vmem:[%s272 + $0x58] sm:$0xff]
          %v333 = vld [vmem:[%s272 + $0x60] sm:$0xff]
          %v334 = vld [vmem:[%s272 + $0x68] sm:$0xff]
          %v335 = vld [vmem:[%s272 + $0x70] sm:$0xff]
          %v336 = vld [vmem:[%s272 + $0x78] sm:$0xff]
          %v337 = vpack.c.bf16 %v325, %v321
          %v338 = vpack.c.bf16 %v326, %v322
          %v339 = vpack.c.bf16 %v327, %v323
          %v340 = vpack.c.bf16 %v328, %v324
          %v341 = vpack.c.bf16 %v333, %v329
          %v342 = vpack.c.bf16 %v334, %v330
          %v343 = vpack.c.bf16 %v335, %v331
          %v344 = vpack.c.bf16 %v336, %v332
          %v345 = vld [vmem:[#allocation9] sm:$0xf]
          %v346 = vld [vmem:[#allocation9 + $0x4] sm:$0xf]
          %v347 = vld [vmem:[#allocation9 + $0x8] sm:$0xf]
          %v348 = vld [vmem:[#allocation9 + $0xc] sm:$0xf]
          %v353 = vunpack.c.l.b16 %v345
          %v354 = vunpack.c.l.b16 %v346
          %v355 = vunpack.c.l.b16 %v347
          %v356 = vunpack.c.l.b16 %v348
          %v357 = vpack.c.b16 %v354, %v353
          %v358 = vpack.c.b16 %v356, %v355
          %vm359 = vcmask 261120
          %v361 = vsel %vm359, %v357, 0
          %v364 = vsel %vm359, %v358, 0
          %366 = vmatprep.subr.bf16.mxu0 0
          %367 = vmatpush1.bf16.msra.mxu0 0
          %368 = vmatprep.subr.bf16.mxu0 0
          %369 = vmatpush1.bf16.msra.mxu0 0
          %370 = vmatprep.subr.bf16.mxu0 0
          %371 = vmatpush1.bf16.msra.mxu0 0
          %372 = vmatprep.subr.bf16.mxu0 0
          %373 = vmatpush1.bf16.msra.mxu0 0
          %374 = vmatprep.subr.bf16.mxu0 0
          %375 = vmatpush1.bf16.msra.mxu0 0
          %376 = vmatprep.subr.bf16.mxu0 0
          %377 = vmatpush1.bf16.msra.mxu0 0
          %378 = vmatprep.subr.bf16.mxu0 %v342
          %379 = vmatpush1.bf16.msra.mxu0 %v341
          %380 = vmatprep.subr.bf16.mxu0 %v338
          %381 = vmatpush1.bf16.msra.mxu0 %v337
          %382 = vmatprep.subr.bf16.mxu0 0
          %383 = vmatpush2.bf16.msra.mxu0 0
          %384 = vmatprep.subr.bf16.mxu0 0
          %385 = vmatpush2.bf16.msra.mxu0 0
          %386 = vmatprep.subr.bf16.mxu0 0
          %387 = vmatpush2.bf16.msra.mxu0 0
          %388 = vmatprep.subr.bf16.mxu0 0
          %389 = vmatpush2.bf16.msra.mxu0 0
          %390 = vmatprep.subr.bf16.mxu0 0
          %391 = vmatpush2.bf16.msra.mxu0 0
          %392 = vmatprep.subr.bf16.mxu0 0
          %393 = vmatpush2.bf16.msra.mxu0 0
          %394 = vmatprep.subr.bf16.mxu0 0
          %395 = vmatpush2.bf16.msra.mxu0 0
          %396 = vmatprep.subr.bf16.mxu0 0
          %397 = vmatpush2.bf16.msra.mxu0 0
          %398 = vmatprep.mubr.bf16.mxu0 0
          %399 = vmatmul.mubr.bf16.gmra.mxu0 %v361
          %v400 = vpop.f32.mrf.mxu0
          %v401 = vadd.f32 0.0, %v400
          %v402 = vpop.f32.mrf.mxu0
          %v403 = vadd.f32 0.0, %v402
          %v404 = vpop.f32.mrf.mxu0
          %v405 = vadd.f32 0.0, %v404
          %v406 = vpop.f32.mrf.mxu0
          %v407 = vadd.f32 0.0, %v406
          %408 = vmatprep.mubr.bf16.mxu0 0
          %409 = vmatmul.mubr.bf16.gmra.mxu0 %v364
          %v410 = vpop.f32.mrf.mxu0
          %v411 = vadd.f32 0.0, %v410
          %v412 = vpop.f32.mrf.mxu0
          %v413 = vadd.f32 0.0, %v412
          %v414 = vpop.f32.mrf.mxu0
          %v415 = vadd.f32 0.0, %v414
          %v416 = vpop.f32.mrf.mxu0
          %v417 = vadd.f32 0.0, %v416
          %418 = vdwg.mxu0
          %419 = vmatprep.subr.bf16.mxu0 0
          %420 = vmatpush1.bf16.msra.mxu0 0
          %421 = vmatprep.subr.bf16.mxu0 0
          %422 = vmatpush1.bf16.msra.mxu0 0
          %423 = vmatprep.subr.bf16.mxu0 0
          %424 = vmatpush1.bf16.msra.mxu0 0
          %425 = vmatprep.subr.bf16.mxu0 0
          %426 = vmatpush1.bf16.msra.mxu0 0
          %427 = vmatprep.subr.bf16.mxu0 0
          %428 = vmatpush1.bf16.msra.mxu0 0
          %429 = vmatprep.subr.bf16.mxu0 0
          %430 = vmatpush1.bf16.msra.mxu0 0
          %431 = vmatprep.subr.bf16.mxu0 %v344
          %432 = vmatpush1.bf16.msra.mxu0 %v343
          %433 = vmatprep.subr.bf16.mxu0 %v340
          %434 = vmatpush1.bf16.msra.mxu0 %v339
          %435 = vmatprep.subr.bf16.mxu0 0
          %436 = vmatpush2.bf16.msra.mxu0 0
          %437 = vmatprep.subr.bf16.mxu0 0
          %438 = vmatpush2.bf16.msra.mxu0 0
          %439 = vmatprep.subr.bf16.mxu0 0
          %440 = vmatpush2.bf16.msra.mxu0 0
          %441 = vmatprep.subr.bf16.mxu0 0
          %442 = vmatpush2.bf16.msra.mxu0 0
          %443 = vmatprep.subr.bf16.mxu0 0
          %444 = vmatpush2.bf16.msra.mxu0 0
          %445 = vmatprep.subr.bf16.mxu0 0
          %446 = vmatpush2.bf16.msra.mxu0 0
          %447 = vmatprep.subr.bf16.mxu0 0
          %448 = vmatpush2.bf16.msra.mxu0 0
          %449 = vmatprep.subr.bf16.mxu0 0
          %450 = vmatpush2.bf16.msra.mxu0 0
          %451 = vmatprep.mubr.bf16.mxu0 0
          %452 = vmatmul.mubr.bf16.gmra.mxu0 %v361
          %v453 = vpop.f32.mrf.mxu0
          %v454 = vadd.f32 0.0, %v453
          %v455 = vpop.f32.mrf.mxu0
          %v456 = vadd.f32 0.0, %v455
          %v457 = vpop.f32.mrf.mxu0
          %v458 = vadd.f32 0.0, %v457
          %v459 = vpop.f32.mrf.mxu0
          %v460 = vadd.f32 0.0, %v459
          %461 = vmatprep.mubr.bf16.mxu0 0
          %462 = vmatmul.mubr.bf16.gmra.mxu0 %v364
          %v463 = vpop.f32.mrf.mxu0
          %v464 = vadd.f32 0.0, %v463
          %v465 = vpop.f32.mrf.mxu0
          %v466 = vadd.f32 0.0, %v465
          %v467 = vpop.f32.mrf.mxu0
          %v468 = vadd.f32 0.0, %v467
          %v469 = vpop.f32.mrf.mxu0
          %v470 = vadd.f32 0.0, %v469
          %471 = vdwg.mxu0
          %472 = vst [vmem:[#allocation2] sm:$0xff] %v401
          %473 = vst [vmem:[#allocation2 + $0x8] sm:$0xff] %v403
          %474 = vst [vmem:[#allocation2 + $0x10] sm:$0xff] %v454
          %475 = vst [vmem:[#allocation2 + $0x18] sm:$0xff] %v456
          %476 = vst [vmem:[#allocation2 + $0x20] sm:$0xff] %v405
          %477 = vst [vmem:[#allocation2 + $0x28] sm:$0xff] %v407
          %478 = vst [vmem:[#allocation2 + $0x30] sm:$0xff] %v458
          %479 = vst [vmem:[#allocation2 + $0x38] sm:$0xff] %v460
          %480 = vst [vmem:[#allocation2 + $0x40] sm:$0xff] %v411
          %481 = vst [vmem:[#allocation2 + $0x48] sm:$0xff] %v413
          %482 = vst [vmem:[#allocation2 + $0x50] sm:$0xff] %v464
          %483 = vst [vmem:[#allocation2 + $0x58] sm:$0xff] %v466
          %484 = vst [vmem:[#allocation2 + $0x60] sm:$0xff] %v415
          %485 = vst [vmem:[#allocation2 + $0x68] sm:$0xff] %v417
          %486 = vst [vmem:[#allocation2 + $0x70] sm:$0xff] %v468
          %487 = vst [vmem:[#allocation2 + $0x78] sm:$0xff] %v470
          %v488 = vld [vmem:[#allocation10] sm:$0xf]
          %v489 = vld [vmem:[#allocation10 + $0x4] sm:$0xf]
          %v490 = vld [vmem:[#allocation10 + $0x8] sm:$0xf]
          %v491 = vld [vmem:[#allocation10 + $0xc] sm:$0xf]
          %v496 = vunpack.c.l.b16 %v488
          %v497 = vunpack.c.l.b16 %v489
          %v498 = vunpack.c.l.b16 %v490
          %v499 = vunpack.c.l.b16 %v491
          %v500 = vpack.c.b16 %v497, %v496
          %v501 = vpack.c.b16 %v499, %v498
          %v503 = vsel %vm359, %v500, 0
          %v506 = vsel %vm359, %v501, 0
          %508 = vmatprep.subr.bf16.mxu0 0
          %509 = vmatpush1.bf16.msra.mxu0 0
          %510 = vmatprep.subr.bf16.mxu0 0
          %511 = vmatpush1.bf16.msra.mxu0 0
          %512 = vmatprep.subr.bf16.mxu0 0
          %513 = vmatpush1.bf16.msra.mxu0 0
          %514 = vmatprep.subr.bf16.mxu0 0
          %515 = vmatpush1.bf16.msra.mxu0 0
          %516 = vmatprep.subr.bf16.mxu0 0
          %517 = vmatpush1.bf16.msra.mxu0 0
          %518 = vmatprep.subr.bf16.mxu0 0
          %519 = vmatpush1.bf16.msra.mxu0 0
          %520 = vmatprep.subr.bf16.mxu0 %v342
          %521 = vmatpush1.bf16.msra.mxu0 %v341
          %522 = vmatprep.subr.bf16.mxu0 %v338
          %523 = vmatpush1.bf16.msra.mxu0 %v337
          %524 = vmatprep.subr.bf16.mxu0 0
          %525 = vmatpush2.bf16.msra.mxu0 0
          %526 = vmatprep.subr.bf16.mxu0 0
          %527 = vmatpush2.bf16.msra.mxu0 0
          %528 = vmatprep.subr.bf16.mxu0 0
          %529 = vmatpush2.bf16.msra.mxu0 0
          %530 = vmatprep.subr.bf16.mxu0 0
          %531 = vmatpush2.bf16.msra.mxu0 0
          %532 = vmatprep.subr.bf16.mxu0 0
          %533 = vmatpush2.bf16.msra.mxu0 0
          %534 = vmatprep.subr.bf16.mxu0 0
          %535 = vmatpush2.bf16.msra.mxu0 0
          %536 = vmatprep.subr.bf16.mxu0 0
          %537 = vmatpush2.bf16.msra.mxu0 0
          %538 = vmatprep.subr.bf16.mxu0 0
          %539 = vmatpush2.bf16.msra.mxu0 0
          %540 = vmatprep.mubr.bf16.mxu0 0
          %541 = vmatmul.mubr.bf16.gmra.mxu0 %v503
          %v542 = vpop.f32.mrf.mxu0
          %v543 = vadd.f32 0.0, %v542
          %v544 = vpop.f32.mrf.mxu0
          %v545 = vadd.f32 0.0, %v544
          %v546 = vpop.f32.mrf.mxu0
          %v547 = vadd.f32 0.0, %v546
          %v548 = vpop.f32.mrf.mxu0
          %v549 = vadd.f32 0.0, %v548
          %550 = vmatprep.mubr.bf16.mxu0 0
          %551 = vmatmul.mubr.bf16.gmra.mxu0 %v506
          %v552 = vpop.f32.mrf.mxu0
          %v553 = vadd.f32 0.0, %v552
          %v554 = vpop.f32.mrf.mxu0
          %v555 = vadd.f32 0.0, %v554
          %v556 = vpop.f32.mrf.mxu0
          %v557 = vadd.f32 0.0, %v556
          %v558 = vpop.f32.mrf.mxu0
          %v559 = vadd.f32 0.0, %v558
          %560 = vdwg.mxu0
          %561 = vmatprep.subr.bf16.mxu0 0
          %562 = vmatpush1.bf16.msra.mxu0 0
          %563 = vmatprep.subr.bf16.mxu0 0
          %564 = vmatpush1.bf16.msra.mxu0 0
          %565 = vmatprep.subr.bf16.mxu0 0
          %566 = vmatpush1.bf16.msra.mxu0 0
          %567 = vmatprep.subr.bf16.mxu0 0
          %568 = vmatpush1.bf16.msra.mxu0 0
          %569 = vmatprep.subr.bf16.mxu0 0
          %570 = vmatpush1.bf16.msra.mxu0 0
          %571 = vmatprep.subr.bf16.mxu0 0
          %572 = vmatpush1.bf16.msra.mxu0 0
          %573 = vmatprep.subr.bf16.mxu0 %v344
          %574 = vmatpush1.bf16.msra.mxu0 %v343
          %575 = vmatprep.subr.bf16.mxu0 %v340
          %576 = vmatpush1.bf16.msra.mxu0 %v339
          %577 = vmatprep.subr.bf16.mxu0 0
          %578 = vmatpush2.bf16.msra.mxu0 0
          %579 = vmatprep.subr.bf16.mxu0 0
          %580 = vmatpush2.bf16.msra.mxu0 0
          %581 = vmatprep.subr.bf16.mxu0 0
          %582 = vmatpush2.bf16.msra.mxu0 0
          %583 = vmatprep.subr.bf16.mxu0 0
          %584 = vmatpush2.bf16.msra.mxu0 0
          %585 = vmatprep.subr.bf16.mxu0 0
          %586 = vmatpush2.bf16.msra.mxu0 0
          %587 = vmatprep.subr.bf16.mxu0 0
          %588 = vmatpush2.bf16.msra.mxu0 0
          %589 = vmatprep.subr.bf16.mxu0 0
          %590 = vmatpush2.bf16.msra.mxu0 0
          %591 = vmatprep.subr.bf16.mxu0 0
          %592 = vmatpush2.bf16.msra.mxu0 0
          %593 = vmatprep.mubr.bf16.mxu0 0
          %594 = vmatmul.mubr.bf16.gmra.mxu0 %v503
          %v595 = vpop.f32.mrf.mxu0
          %v596 = vadd.f32 0.0, %v595
          %v597 = vpop.f32.mrf.mxu0
          %v598 = vadd.f32 0.0, %v597
          %v599 = vpop.f32.mrf.mxu0
          %v600 = vadd.f32 0.0, %v599
          %v601 = vpop.f32.mrf.mxu0
          %v602 = vadd.f32 0.0, %v601
          %603 = vmatprep.mubr.bf16.mxu0 0
          %604 = vmatmul.mubr.bf16.gmra.mxu0 %v506
          %v605 = vpop.f32.mrf.mxu0
          %v606 = vadd.f32 0.0, %v605
          %v607 = vpop.f32.mrf.mxu0
          %v608 = vadd.f32 0.0, %v607
          %v609 = vpop.f32.mrf.mxu0
          %v610 = vadd.f32 0.0, %v609
          %v611 = vpop.f32.mrf.mxu0
          %v612 = vadd.f32 0.0, %v611
          %613 = vdwg.mxu0
          %614 = vst [vmem:[#allocation3] sm:$0xff] %v543
          %615 = vst [vmem:[#allocation3 + $0x8] sm:$0xff] %v545
          %616 = vst [vmem:[#allocation3 + $0x10] sm:$0xff] %v596
          %617 = vst [vmem:[#allocation3 + $0x18] sm:$0xff] %v598
          %618 = vst [vmem:[#allocation3 + $0x20] sm:$0xff] %v547
          %619 = vst [vmem:[#allocation3 + $0x28] sm:$0xff] %v549
          %620 = vst [vmem:[#allocation3 + $0x30] sm:$0xff] %v600
          %621 = vst [vmem:[#allocation3 + $0x38] sm:$0xff] %v602
          %622 = vst [vmem:[#allocation3 + $0x40] sm:$0xff] %v553
          %623 = vst [vmem:[#allocation3 + $0x48] sm:$0xff] %v555
          %624 = vst [vmem:[#allocation3 + $0x50] sm:$0xff] %v606
          %625 = vst [vmem:[#allocation3 + $0x58] sm:$0xff] %v608
          %626 = vst [vmem:[#allocation3 + $0x60] sm:$0xff] %v557
          %627 = vst [vmem:[#allocation3 + $0x68] sm:$0xff] %v559
          %628 = vst [vmem:[#allocation3 + $0x70] sm:$0xff] %v610
          %629 = vst [vmem:[#allocation3 + $0x78] sm:$0xff] %v612
        $region64: #{tpu_custom_call.1} parent=39 // pred_fallthru
          _
        %s630 = smul.u32 %s29, 256
        %s631 = sshra.s32 %s630, 7
        %s632 = sand.u32 %s630, 127
        %s633 = smul.addr %s631, 8
        %s634 = scalar_lea.vmem %s272, %s633 [#allocation4]
        %v635 = vld [vmem:[%s634] sm:$0xff]
        %v636 = vld [vmem:[%s634 + $0x8] sm:$0xff]
        %v637 = vld [vmem:[%s634 + $0x20] sm:$0xff]
        %v638 = vld [vmem:[%s634 + $0x28] sm:$0xff]
        %v639 = vld [vmem:[%s634 + $0x40] sm:$0xff]
        %v640 = vld [vmem:[%s634 + $0x48] sm:$0xff]
        %v641 = vld [vmem:[%s634 + $0x60] sm:$0xff]
        %v642 = vld [vmem:[%s634 + $0x68] sm:$0xff]
        %v643 = vpack.c.bf16 %v637, %v635
        %v644 = vpack.c.bf16 %v638, %v636
        %v645 = vpack.c.bf16 %v641, %v639
        %v646 = vpack.c.bf16 %v642, %v640
        %v647 = vld [vmem:[#allocation7] sm:$0xf]
        %v648 = vld [vmem:[#allocation7 + $0x4] sm:$0xf]
        %v649 = vld [vmem:[#allocation7 + $0x8] sm:$0xf]
        %v650 = vld [vmem:[#allocation7 + $0xc] sm:$0xf]
        %v655 = vunpack.c.l.b16 %v647
        %v656 = vunpack.c.l.b16 %v648
        %v657 = vunpack.c.l.b16 %v649
        %v658 = vunpack.c.l.b16 %v650
        %v659 = vpack.c.b16 %v656, %v655
        %v660 = vpack.c.b16 %v658, %v657
        %vm661 = vcmask 261120
        %v663 = vsel %vm661, %v659, 0
        %v666 = vsel %vm661, %v660, 0
        %668 = vmatprep.subr.bf16.mxu0 0
        %669 = vmatpush1.bf16.msra.mxu0 0
        %670 = vmatprep.subr.bf16.mxu0 0
        %671 = vmatpush1.bf16.msra.mxu0 0
        %672 = vmatprep.subr.bf16.mxu0 0
        %673 = vmatpush1.bf16.msra.mxu0 0
        %674 = vmatprep.subr.bf16.mxu0 0
        %675 = vmatpush1.bf16.msra.mxu0 0
        %676 = vmatprep.subr.bf16.mxu0 0
        %677 = vmatpush1.bf16.msra.mxu0 0
        %678 = vmatprep.subr.bf16.mxu0 0
        %679 = vmatpush1.bf16.msra.mxu0 0
        %680 = vmatprep.subr.bf16.mxu0 %v646
        %681 = vmatpush1.bf16.msra.mxu0 %v645
        %682 = vmatprep.subr.bf16.mxu0 %v644
        %683 = vmatpush1.bf16.msra.mxu0 %v643
        %684 = vmatprep.subr.bf16.mxu0 0
        %685 = vmatpush2.bf16.msra.mxu0 0
        %686 = vmatprep.subr.bf16.mxu0 0
        %687 = vmatpush2.bf16.msra.mxu0 0
        %688 = vmatprep.subr.bf16.mxu0 0
        %689 = vmatpush2.bf16.msra.mxu0 0
        %690 = vmatprep.subr.bf16.mxu0 0
        %691 = vmatpush2.bf16.msra.mxu0 0
        %692 = vmatprep.subr.bf16.mxu0 0
        %693 = vmatpush2.bf16.msra.mxu0 0
        %694 = vmatprep.subr.bf16.mxu0 0
        %695 = vmatpush2.bf16.msra.mxu0 0
        %696 = vmatprep.subr.bf16.mxu0 0
        %697 = vmatpush2.bf16.msra.mxu0 0
        %698 = vmatprep.subr.bf16.mxu0 0
        %699 = vmatpush2.bf16.msra.mxu0 0
        %700 = vmatprep.mubr.bf16.mxu0 0
        %701 = vmatmul.mubr.bf16.gmra.mxu0 %v663
        %v702 = vpop.f32.mrf.mxu0
        %v703 = vadd.f32 0.0, %v702
        %v704 = vpop.f32.mrf.mxu0
        %v705 = vadd.f32 0.0, %v704
        %v706 = vpop.f32.mrf.mxu0
        %v707 = vadd.f32 0.0, %v706
        %v708 = vpop.f32.mrf.mxu0
        %v709 = vadd.f32 0.0, %v708
        %710 = vmatprep.mubr.bf16.mxu0 0
        %711 = vmatmul.mubr.bf16.gmra.mxu0 %v666
        %v712 = vpop.f32.mrf.mxu0
        %v713 = vadd.f32 0.0, %v712
        %v714 = vpop.f32.mrf.mxu0
        %v715 = vadd.f32 0.0, %v714
        %v716 = vpop.f32.mrf.mxu0
        %v717 = vadd.f32 0.0, %v716
        %v718 = vpop.f32.mrf.mxu0
        %v719 = vadd.f32 0.0, %v718
        %720 = vdwg.mxu0
        %v721 = vld [vmem:[#allocation2] sm:$0xff]
        %v722 = vld [vmem:[#allocation2 + $0x8] sm:$0xff]
        %v723 = vld [vmem:[#allocation2 + $0x10] sm:$0xff]
        %v724 = vld [vmem:[#allocation2 + $0x18] sm:$0xff]
        %v725 = vld [vmem:[#allocation2 + $0x20] sm:$0xff]
        %v726 = vld [vmem:[#allocation2 + $0x28] sm:$0xff]
        %v727 = vld [vmem:[#allocation2 + $0x30] sm:$0xff]
        %v728 = vld [vmem:[#allocation2 + $0x38] sm:$0xff]
        %v729 = vld [vmem:[#allocation2 + $0x40] sm:$0xff]
        %v730 = vld [vmem:[#allocation2 + $0x48] sm:$0xff]
        %v731 = vld [vmem:[#allocation2 + $0x50] sm:$0xff]
        %v732 = vld [vmem:[#allocation2 + $0x58] sm:$0xff]
        %v733 = vld [vmem:[#allocation2 + $0x60] sm:$0xff]
        %v734 = vld [vmem:[#allocation2 + $0x68] sm:$0xff]
        %v735 = vld [vmem:[#allocation2 + $0x70] sm:$0xff]
        %v736 = vld [vmem:[#allocation2 + $0x78] sm:$0xff]
        %v737 = vld [vmem:[#allocation3] sm:$0xff]
        %v738 = vld [vmem:[#allocation3 + $0x8] sm:$0xff]
        %v739 = vld [vmem:[#allocation3 + $0x10] sm:$0xff]
        %v740 = vld [vmem:[#allocation3 + $0x18] sm:$0xff]
        %v741 = vld [vmem:[#allocation3 + $0x20] sm:$0xff]
        %v742 = vld [vmem:[#allocation3 + $0x28] sm:$0xff]
        %v743 = vld [vmem:[#allocation3 + $0x30] sm:$0xff]
        %v744 = vld [vmem:[#allocation3 + $0x38] sm:$0xff]
        %v745 = vld [vmem:[#allocation3 + $0x40] sm:$0xff]
        %v746 = vld [vmem:[#allocation3 + $0x48] sm:$0xff]
        %v747 = vld [vmem:[#allocation3 + $0x50] sm:$0xff]
        %v748 = vld [vmem:[#allocation3 + $0x58] sm:$0xff]
        %v749 = vld [vmem:[#allocation3 + $0x60] sm:$0xff]
        %v750 = vld [vmem:[#allocation3 + $0x68] sm:$0xff]
        %v751 = vld [vmem:[#allocation3 + $0x70] sm:$0xff]
        %v752 = vld [vmem:[#allocation3 + $0x78] sm:$0xff]
        %753 = vxpose.xlu0.b32.start [1/16] %v721, 128
        %754 = vxpose.xlu0.b32.cont [2/16] 0.0, 128
        %755 = vxpose.xlu0.b32.cont [3/16] 0.0, 128
        %756 = vxpose.xlu0.b32.cont [4/16] 0.0, 128
        %757 = vxpose.xlu0.b32.cont [5/16] 0.0, 128
        %758 = vxpose.xlu0.b32.cont [6/16] 0.0, 128
        %759 = vxpose.xlu0.b32.cont [7/16] 0.0, 128
        %760 = vxpose.xlu0.b32.cont [8/16] 0.0, 128
        %761 = vxpose.xlu0.b32.cont [9/16] 0.0, 128
        %762 = vxpose.xlu0.b32.cont [10/16] 0.0, 128
        %763 = vxpose.xlu0.b32.cont [11/16] 0.0, 128
        %764 = vxpose.xlu0.b32.cont [12/16] 0.0, 128
        %765 = vxpose.xlu0.b32.cont [13/16] 0.0, 128
        %766 = vxpose.xlu0.b32.cont [14/16] 0.0, 128
        %767 = vxpose.xlu0.b32.cont [15/16] 0.0, 128
        %768 = vxpose.xlu0.b32.end [16/16] 0.0, 128
        %v769 = vpop.trf.xlu0
        %v770 = vpop.trf.xlu0
        %v771 = vpop.trf.xlu0
        %v772 = vpop.trf.xlu0
        %v773 = vpop.trf.xlu0
        %v774 = vpop.trf.xlu0
        %v775 = vpop.trf.xlu0
        %v776 = vpop.trf.xlu0
        %v777 = vpop.trf.xlu0
        %v778 = vpop.trf.xlu0
        %v779 = vpop.trf.xlu0
        %v780 = vpop.trf.xlu0
        %v781 = vpop.trf.xlu0
        %v782 = vpop.trf.xlu0
        %v783 = vpop.trf.xlu0
        %v784 = vpop.trf.xlu0
        %785 = vxpose.xlu0.b32.start [1/16] %v722, 128
        %786 = vxpose.xlu0.b32.cont [2/16] 0.0, 128
        %787 = vxpose.xlu0.b32.cont [3/16] 0.0, 128
        %788 = vxpose.xlu0.b32.cont [4/16] 0.0, 128
        %789 = vxpose.xlu0.b32.cont [5/16] 0.0, 128
        %790 = vxpose.xlu0.b32.cont [6/16] 0.0, 128
        %791 = vxpose.xlu0.b32.cont [7/16] 0.0, 128
        %792 = vxpose.xlu0.b32.cont [8/16] 0.0, 128
        %793 = vxpose.xlu0.b32.cont [9/16] 0.0, 128
        %794 = vxpose.xlu0.b32.cont [10/16] 0.0, 128
        %795 = vxpose.xlu0.b32.cont [11/16] 0.0, 128
        %796 = vxpose.xlu0.b32.cont [12/16] 0.0, 128
        %797 = vxpose.xlu0.b32.cont [13/16] 0.0, 128
        %798 = vxpose.xlu0.b32.cont [14/16] 0.0, 128
        %799 = vxpose.xlu0.b32.cont [15/16] 0.0, 128
        %800 = vxpose.xlu0.b32.end [16/16] 0.0, 128
        %v801 = vpop.trf.xlu0
        %v802 = vpop.trf.xlu0
        %v803 = vpop.trf.xlu0
        %v804 = vpop.trf.xlu0
        %v805 = vpop.trf.xlu0
        %v806 = vpop.trf.xlu0
        %v807 = vpop.trf.xlu0
        %v808 = vpop.trf.xlu0
        %v809 = vpop.trf.xlu0
        %v810 = vpop.trf.xlu0
        %v811 = vpop.trf.xlu0
        %v812 = vpop.trf.xlu0
        %v813 = vpop.trf.xlu0
        %v814 = vpop.trf.xlu0
        %v815 = vpop.trf.xlu0
        %v816 = vpop.trf.xlu0
        %817 = vxpose.xlu0.b32.start [1/16] %v723, 128
        %818 = vxpose.xlu0.b32.cont [2/16] 0.0, 128
        %819 = vxpose.xlu0.b32.cont [3/16] 0.0, 128
        %820 = vxpose.xlu0.b32.cont [4/16] 0.0, 128
        %821 = vxpose.xlu0.b32.cont [5/16] 0.0, 128
        %822 = vxpose.xlu0.b32.cont [6/16] 0.0, 128
        %823 = vxpose.xlu0.b32.cont [7/16] 0.0, 128
        %824 = vxpose.xlu0.b32.cont [8/16] 0.0, 128
        %825 = vxpose.xlu0.b32.cont [9/16] 0.0, 128
        %826 = vxpose.xlu0.b32.cont [10/16] 0.0, 128
        %827 = vxpose.xlu0.b32.cont [11/16] 0.0, 128
        %828 = vxpose.xlu0.b32.cont [12/16] 0.0, 128
        %829 = vxpose.xlu0.b32.cont [13/16] 0.0, 128
        %830 = vxpose.xlu0.b32.cont [14/16] 0.0, 128
        %831 = vxpose.xlu0.b32.cont [15/16] 0.0, 128
        %832 = vxpose.xlu0.b32.end [16/16] 0.0, 128
        %v833 = vpop.trf.xlu0
        %v834 = vpop.trf.xlu0
        %v835 = vpop.trf.xlu0
        %v836 = vpop.trf.xlu0
        %v837 = vpop.trf.xlu0
        %v838 = vpop.trf.xlu0
        %v839 = vpop.trf.xlu0
        %v840 = vpop.trf.xlu0
        %v841 = vpop.trf.xlu0
        %v842 = vpop.trf.xlu0
        %v843 = vpop.trf.xlu0
        %v844 = vpop.trf.xlu0
        %v845 = vpop.trf.xlu0
        %v846 = vpop.trf.xlu0
        %v847 = vpop.trf.xlu0
        %v848 = vpop.trf.xlu0
        %849 = vxpose.xlu0.b32.start [1/16] %v724, 128
        %850 = vxpose.xlu0.b32.cont [2/16] 0.0, 128
        %851 = vxpose.xlu0.b32.cont [3/16] 0.0, 128
        %852 = vxpose.xlu0.b32.cont [4/16] 0.0, 128
        %853 = vxpose.xlu0.b32.cont [5/16] 0.0, 128
        %854 = vxpose.xlu0.b32.cont [6/16] 0.0, 128
        %855 = vxpose.xlu0.b32.cont [7/16] 0.0, 128
        %856 = vxpose.xlu0.b32.cont [8/16] 0.0, 128
        %857 = vxpose.xlu0.b32.cont [9/16] 0.0, 128
        %858 = vxpose.xlu0.b32.cont [10/16] 0.0, 128
        %859 = vxpose.xlu0.b32.cont [11/16] 0.0, 128
        %860 = vxpose.xlu0.b32.cont [12/16] 0.0, 128
        %861 = vxpose.xlu0.b32.cont [13/16] 0.0, 128
        %862 = vxpose.xlu0.b32.cont [14/16] 0.0, 128
        %863 = vxpose.xlu0.b32.cont [15/16] 0.0, 128
        %864 = vxpose.xlu0.b32.end [16/16] 0.0, 128
        %v865 = vpop.trf.xlu0
        %v866 = vpop.trf.xlu0
        %v867 = vpop.trf.xlu0
        %v868 = vpop.trf.xlu0
        %v869 = vpop.trf.xlu0
        %v870 = vpop.trf.xlu0
        %v871 = vpop.trf.xlu0
        %v872 = vpop.trf.xlu0
        %v873 = vpop.trf.xlu0
        %v874 = vpop.trf.xlu0
        %v875 = vpop.trf.xlu0
        %v876 = vpop.trf.xlu0
        %v877 = vpop.trf.xlu0
        %v878 = vpop.trf.xlu0
        %v879 = vpop.trf.xlu0
        %v880 = vpop.trf.xlu0
        %vm881 = vcmask 64512
        %v883 = vsel %vm881, %v769, 0
        %v886 = vsel %vm881, %v770, 0
        %v889 = vsel %vm881, %v771, 0
        %v892 = vsel %vm881, %v772, 0
        %v895 = vsel %vm881, %v773, 0
        %v898 = vsel %vm881, %v774, 0
        %v901 = vsel %vm881, %v775, 0
        %v904 = vsel %vm881, %v776, 0
        %v907 = vsel %vm881, %v777, 0
        %v910 = vsel %vm881, %v778, 0
        %v913 = vsel %vm881, %v779, 0
        %v916 = vsel %vm881, %v780, 0
        %v919 = vsel %vm881, %v781, 0
        %v922 = vsel %vm881, %v782, 0
        %v925 = vsel %vm881, %v783, 0
        %v928 = vsel %vm881, %v784, 0
        %v931 = vsel %vm881, %v801, 0
        %v934 = vsel %vm881, %v802, 0
        %v937 = vsel %vm881, %v803, 0
        %v940 = vsel %vm881, %v804, 0
        %v943 = vsel %vm881, %v805, 0
        %v946 = vsel %vm881, %v806, 0
        %v949 = vsel %vm881, %v807, 0
        %v952 = vsel %vm881, %v808, 0
        %v955 = vsel %vm881, %v809, 0
        %v958 = vsel %vm881, %v810, 0
        %v961 = vsel %vm881, %v811, 0
        %v964 = vsel %vm881, %v812, 0
        %v967 = vsel %vm881, %v813, 0
        %v970 = vsel %vm881, %v814, 0
        %v973 = vsel %vm881, %v815, 0
        %v976 = vsel %vm881, %v816, 0
        %v979 = vsel %vm881, %v833, 0
        %v982 = vsel %vm881, %v834, 0
        %v985 = vsel %vm881, %v835, 0
        %v988 = vsel %vm881, %v836, 0
        %v991 = vsel %vm881, %v837, 0
        %v994 = vsel %vm881, %v838, 0
        %v997 = vsel %vm881, %v839, 0
        %v1000 = vsel %vm881, %v840, 0
        %v1003 = vsel %vm881, %v841, 0
        %v1006 = vsel %vm881, %v842, 0
        %v1009 = vsel %vm881, %v843, 0
        %v1012 = vsel %vm881, %v844, 0
        %v1015 = vsel %vm881, %v845, 0
        %v1018 = vsel %vm881, %v846, 0
        %v1021 = vsel %vm881, %v847, 0
        %v1024 = vsel %vm881, %v848, 0
        %v1027 = vsel %vm881, %v865, 0
        %v1030 = vsel %vm881, %v866, 0
        %v1033 = vsel %vm881, %v867, 0
        %v1036 = vsel %vm881, %v868, 0
        %v1039 = vsel %vm881, %v869, 0
        %v1042 = vsel %vm881, %v870, 0
        %v1045 = vsel %vm881, %v871, 0
        %v1048 = vsel %vm881, %v872, 0
        %v1051 = vsel %vm881, %v873, 0
        %v1054 = vsel %vm881, %v874, 0
        %v1057 = vsel %vm881, %v875, 0
        %v1060 = vsel %vm881, %v876, 0
        %v1063 = vsel %vm881, %v877, 0
        %v1066 = vsel %vm881, %v878, 0
        %v1069 = vsel %vm881, %v879, 0
        %v1072 = vsel %vm881, %v880, 0
        %1074 = vmatprep.subr.mxu0 0.0
        %1075 = vmatpush1.msra.mxu0 0.0
        %1076 = vmatprep.subr.mxu0 0.0
        %1077 = vmatpush1.msra.mxu0 0.0
        %1078 = vmatprep.subr.mxu0 0.0
        %1079 = vmatpush1.msra.mxu0 0.0
        %1080 = vmatprep.subr.mxu0 0.0
        %1081 = vmatpush1.msra.mxu0 0.0
        %1082 = vmatprep.subr.mxu0 0.0
        %1083 = vmatpush1.msra.mxu0 0.0
        %1084 = vmatprep.subr.mxu0 0.0
        %1085 = vmatpush1.msra.mxu0 0.0
        %1086 = vmatprep.subr.mxu0 0.0
        %1087 = vmatpush1.msra.mxu0 0.0
        %1088 = vmatprep.subr.mxu0 0.0
        %1089 = vmatpush1.msra.mxu0 0.0
        %1090 = vmatprep.subr.mxu0 0.0
        %1091 = vmatpush1.msra.mxu0 0.0
        %1092 = vmatprep.subr.mxu0 0.0
        %1093 = vmatpush1.msra.mxu0 0.0
        %1094 = vmatprep.subr.mxu0 0.0
        %1095 = vmatpush1.msra.mxu0 0.0
        %1096 = vmatprep.subr.mxu0 0.0
        %1097 = vmatpush1.msra.mxu0 0.0
        %1098 = vmatprep.subr.mxu0 0.0
        %1099 = vmatpush1.msra.mxu0 0.0
        %1100 = vmatprep.subr.mxu0 0.0
        %1101 = vmatpush1.msra.mxu0 0.0
        %1102 = vmatprep.subr.mxu0 0.0
        %1103 = vmatpush1.msra.mxu0 0.0
        %1104 = vmatprep.subr.mxu0 %v705
        %1105 = vmatpush1.msra.mxu0 %v703
        %1106 = vmatprep.subr.mxu0 0.0
        %1107 = vmatpush2.msra.mxu0 0.0
        %1108 = vmatprep.subr.mxu0 0.0
        %1109 = vmatpush2.msra.mxu0 0.0
        %1110 = vmatprep.subr.mxu0 0.0
        %1111 = vmatpush2.msra.mxu0 0.0
        %1112 = vmatprep.subr.mxu0 0.0
        %1113 = vmatpush2.msra.mxu0 0.0
        %1114 = vmatprep.subr.mxu0 0.0
        %1115 = vmatpush2.msra.mxu0 0.0
        %1116 = vmatprep.subr.mxu0 0.0
        %1117 = vmatpush2.msra.mxu0 0.0
        %1118 = vmatprep.subr.mxu0 0.0
        %1119 = vmatpush2.msra.mxu0 0.0
        %1120 = vmatprep.subr.mxu0 0.0
        %1121 = vmatpush2.msra.mxu0 0.0
        %1122 = vmatprep.subr.mxu0 0.0
        %1123 = vmatpush2.msra.mxu0 0.0
        %1124 = vmatprep.subr.mxu0 0.0
        %1125 = vmatpush2.msra.mxu0 0.0
        %1126 = vmatprep.subr.mxu0 0.0
        %1127 = vmatpush2.msra.mxu0 0.0
        %1128 = vmatprep.subr.mxu0 0.0
        %1129 = vmatpush2.msra.mxu0 0.0
        %1130 = vmatprep.subr.mxu0 0.0
        %1131 = vmatpush2.msra.mxu0 0.0
        %1132 = vmatprep.subr.mxu0 0.0
        %1133 = vmatpush2.msra.mxu0 0.0
        %1134 = vmatprep.subr.mxu0 0.0
        %1135 = vmatpush2.msra.mxu0 0.0
        %1136 = vmatprep.subr.mxu0 0.0
        %1137 = vmatpush2.msra.mxu0 0.0
        %1138 = vmatprep.mubr.f32.mxu0 0.0
        %1139 = vmatmul.mubr.f32.gmra.mxu0 %v883
        %v1140 = vpop.f32.mrf.mxu0
        %v1141 = vadd.f32 0.0, %v1140
        %v1142 = vpop.f32.mrf.mxu0
        %v1143 = vadd.f32 0.0, %v1142
        %1144 = vmatprep.mubr.f32.mxu0 0.0
        %1145 = vmatmul.mubr.f32.gmra.mxu0 %v886
        %v1146 = vpop.f32.mrf.mxu0
        %v1147 = vadd.f32 0.0, %v1146
        %v1148 = vpop.f32.mrf.mxu0
        %v1149 = vadd.f32 0.0, %v1148
        %1150 = vmatprep.mubr.f32.mxu0 0.0
        %1151 = vmatmul.mubr.f32.gmra.mxu0 %v889
        %v1152 = vpop.f32.mrf.mxu0
        %v1153 = vadd.f32 0.0, %v1152
        %v1154 = vpop.f32.mrf.mxu0
        %v1155 = vadd.f32 0.0, %v1154
        %1156 = vmatprep.mubr.f32.mxu0 0.0
        %1157 = vmatmul.mubr.f32.gmra.mxu0 %v892
        %v1158 = vpop.f32.mrf.mxu0
        %v1159 = vadd.f32 0.0, %v1158
        %v1160 = vpop.f32.mrf.mxu0
        %v1161 = vadd.f32 0.0, %v1160
        %1162 = vmatprep.mubr.f32.mxu0 0.0
        %1163 = vmatmul.mubr.f32.gmra.mxu0 %v895
        %v1164 = vpop.f32.mrf.mxu0
        %v1165 = vadd.f32 0.0, %v1164
        %v1166 = vpop.f32.mrf.mxu0
        %v1167 = vadd.f32 0.0, %v1166
        %1168 = vmatprep.mubr.f32.mxu0 0.0
        %1169 = vmatmul.mubr.f32.gmra.mxu0 %v898
        %v1170 = vpop.f32.mrf.mxu0
        %v1171 = vadd.f32 0.0, %v1170
        %v1172 = vpop.f32.mrf.mxu0
        %v1173 = vadd.f32 0.0, %v1172
        %1174 = vmatprep.mubr.f32.mxu0 0.0
        %1175 = vmatmul.mubr.f32.gmra.mxu0 %v901
        %v1176 = vpop.f32.mrf.mxu0
        %v1177 = vadd.f32 0.0, %v1176
        %v1178 = vpop.f32.mrf.mxu0
        %v1179 = vadd.f32 0.0, %v1178
        %1180 = vmatprep.mubr.f32.mxu0 0.0
        %1181 = vmatmul.mubr.f32.gmra.mxu0 %v904
        %v1182 = vpop.f32.mrf.mxu0
        %v1183 = vadd.f32 0.0, %v1182
        %v1184 = vpop.f32.mrf.mxu0
        %v1185 = vadd.f32 0.0, %v1184
        %1186 = vmatprep.mubr.f32.mxu0 0.0
        %1187 = vmatmul.mubr.f32.gmra.mxu0 %v907
        %v1188 = vpop.f32.mrf.mxu0
        %v1189 = vadd.f32 0.0, %v1188
        %v1190 = vpop.f32.mrf.mxu0
        %v1191 = vadd.f32 0.0, %v1190
        %1192 = vmatprep.mubr.f32.mxu0 0.0
        %1193 = vmatmul.mubr.f32.gmra.mxu0 %v910
        %v1194 = vpop.f32.mrf.mxu0
        %v1195 = vadd.f32 0.0, %v1194
        %v1196 = vpop.f32.mrf.mxu0
        %v1197 = vadd.f32 0.0, %v1196
        %1198 = vmatprep.mubr.f32.mxu0 0.0
        %1199 = vmatmul.mubr.f32.gmra.mxu0 %v913
        %v1200 = vpop.f32.mrf.mxu0
        %v1201 = vadd.f32 0.0, %v1200
        %v1202 = vpop.f32.mrf.mxu0
        %v1203 = vadd.f32 0.0, %v1202
        %1204 = vmatprep.mubr.f32.mxu0 0.0
        %1205 = vmatmul.mubr.f32.gmra.mxu0 %v916
        %v1206 = vpop.f32.mrf.mxu0
        %v1207 = vadd.f32 0.0, %v1206
        %v1208 = vpop.f32.mrf.mxu0
        %v1209 = vadd.f32 0.0, %v1208
        %1210 = vmatprep.mubr.f32.mxu0 0.0
        %1211 = vmatmul.mubr.f32.gmra.mxu0 %v919
        %v1212 = vpop.f32.mrf.mxu0
        %v1213 = vadd.f32 0.0, %v1212
        %v1214 = vpop.f32.mrf.mxu0
        %v1215 = vadd.f32 0.0, %v1214
        %1216 = vmatprep.mubr.f32.mxu0 0.0
        %1217 = vmatmul.mubr.f32.gmra.mxu0 %v922
        %v1218 = vpop.f32.mrf.mxu0
        %v1219 = vadd.f32 0.0, %v1218
        %v1220 = vpop.f32.mrf.mxu0
        %v1221 = vadd.f32 0.0, %v1220
        %1222 = vmatprep.mubr.f32.mxu0 0.0
        %1223 = vmatmul.mubr.f32.gmra.mxu0 %v925
        %v1224 = vpop.f32.mrf.mxu0
        %v1225 = vadd.f32 0.0, %v1224
        %v1226 = vpop.f32.mrf.mxu0
        %v1227 = vadd.f32 0.0, %v1226
        %1228 = vmatprep.mubr.f32.mxu0 0.0
        %1229 = vmatmul.mubr.f32.gmra.mxu0 %v928
        %v1230 = vpop.f32.mrf.mxu0
        %v1231 = vadd.f32 0.0, %v1230
        %v1232 = vpop.f32.mrf.mxu0
        %v1233 = vadd.f32 0.0, %v1232
        %1234 = vmatprep.mubr.f32.mxu0 0.0
        %1235 = vmatmul.mubr.f32.gmra.mxu0 %v931
        %v1236 = vpop.f32.mrf.mxu0
        %v1237 = vadd.f32 0.0, %v1236
        %v1238 = vpop.f32.mrf.mxu0
        %v1239 = vadd.f32 0.0, %v1238
        %1240 = vmatprep.mubr.f32.mxu0 0.0
        %1241 = vmatmul.mubr.f32.gmra.mxu0 %v934
        %v1242 = vpop.f32.mrf.mxu0
        %v1243 = vadd.f32 0.0, %v1242
        %v1244 = vpop.f32.mrf.mxu0
        %v1245 = vadd.f32 0.0, %v1244
        %1246 = vmatprep.mubr.f32.mxu0 0.0
        %1247 = vmatmul.mubr.f32.gmra.mxu0 %v937
        %v1248 = vpop.f32.mrf.mxu0
        %v1249 = vadd.f32 0.0, %v1248
        %v1250 = vpop.f32.mrf.mxu0
        %v1251 = vadd.f32 0.0, %v1250
        %1252 = vmatprep.mubr.f32.mxu0 0.0
        %1253 = vmatmul.mubr.f32.gmra.mxu0 %v940
        %v1254 = vpop.f32.mrf.mxu0
        %v1255 = vadd.f32 0.0, %v1254
        %v1256 = vpop.f32.mrf.mxu0
        %v1257 = vadd.f32 0.0, %v1256
        %1258 = vmatprep.mubr.f32.mxu0 0.0
        %1259 = vmatmul.mubr.f32.gmra.mxu0 %v943
        %v1260 = vpop.f32.mrf.mxu0
        %v1261 = vadd.f32 0.0, %v1260
        %v1262 = vpop.f32.mrf.mxu0
        %v1263 = vadd.f32 0.0, %v1262
        %1264 = vmatprep.mubr.f32.mxu0 0.0
        %1265 = vmatmul.mubr.f32.gmra.mxu0 %v946
        %v1266 = vpop.f32.mrf.mxu0
        %v1267 = vadd.f32 0.0, %v1266
        %v1268 = vpop.f32.mrf.mxu0
        %v1269 = vadd.f32 0.0, %v1268
        %1270 = vmatprep.mubr.f32.mxu0 0.0
        %1271 = vmatmul.mubr.f32.gmra.mxu0 %v949
        %v1272 = vpop.f32.mrf.mxu0
        %v1273 = vadd.f32 0.0, %v1272
        %v1274 = vpop.f32.mrf.mxu0
        %v1275 = vadd.f32 0.0, %v1274
        %1276 = vmatprep.mubr.f32.mxu0 0.0
        %1277 = vmatmul.mubr.f32.gmra.mxu0 %v952
        %v1278 = vpop.f32.mrf.mxu0
        %v1279 = vadd.f32 0.0, %v1278
        %v1280 = vpop.f32.mrf.mxu0
        %v1281 = vadd.f32 0.0, %v1280
        %1282 = vmatprep.mubr.f32.mxu0 0.0
        %1283 = vmatmul.mubr.f32.gmra.mxu0 %v955
        %v1284 = vpop.f32.mrf.mxu0
        %v1285 = vadd.f32 0.0, %v1284
        %v1286 = vpop.f32.mrf.mxu0
        %v1287 = vadd.f32 0.0, %v1286
        %1288 = vmatprep.mubr.f32.mxu0 0.0
        %1289 = vmatmul.mubr.f32.gmra.mxu0 %v958
        %v1290 = vpop.f32.mrf.mxu0
        %v1291 = vadd.f32 0.0, %v1290
        %v1292 = vpop.f32.mrf.mxu0
        %v1293 = vadd.f32 0.0, %v1292
        %1294 = vmatprep.mubr.f32.mxu0 0.0
        %1295 = vmatmul.mubr.f32.gmra.mxu0 %v961
        %v1296 = vpop.f32.mrf.mxu0
        %v1297 = vadd.f32 0.0, %v1296
        %v1298 = vpop.f32.mrf.mxu0
        %v1299 = vadd.f32 0.0, %v1298
        %1300 = vmatprep.mubr.f32.mxu0 0.0
        %1301 = vmatmul.mubr.f32.gmra.mxu0 %v964
        %v1302 = vpop.f32.mrf.mxu0
        %v1303 = vadd.f32 0.0, %v1302
        %v1304 = vpop.f32.mrf.mxu0
        %v1305 = vadd.f32 0.0, %v1304
        %1306 = vmatprep.mubr.f32.mxu0 0.0
        %1307 = vmatmul.mubr.f32.gmra.mxu0 %v967
        %v1308 = vpop.f32.mrf.mxu0
        %v1309 = vadd.f32 0.0, %v1308
        %v1310 = vpop.f32.mrf.mxu0
        %v1311 = vadd.f32 0.0, %v1310
        %1312 = vmatprep.mubr.f32.mxu0 0.0
        %1313 = vmatmul.mubr.f32.gmra.mxu0 %v970
        %v1314 = vpop.f32.mrf.mxu0
        %v1315 = vadd.f32 0.0, %v1314
        %v1316 = vpop.f32.mrf.mxu0
        %v1317 = vadd.f32 0.0, %v1316
        %1318 = vmatprep.mubr.f32.mxu0 0.0
        %1319 = vmatmul.mubr.f32.gmra.mxu0 %v973
        %v1320 = vpop.f32.mrf.mxu0
        %v1321 = vadd.f32 0.0, %v1320
        %v1322 = vpop.f32.mrf.mxu0
        %v1323 = vadd.f32 0.0, %v1322
        %1324 = vmatprep.mubr.f32.mxu0 0.0
        %1325 = vmatmul.mubr.f32.gmra.mxu0 %v976
        %v1326 = vpop.f32.mrf.mxu0
        %v1327 = vadd.f32 0.0, %v1326
        %v1328 = vpop.f32.mrf.mxu0
        %v1329 = vadd.f32 0.0, %v1328
        %1330 = vmatprep.mubr.f32.mxu0 0.0
        %1331 = vmatmul.mubr.f32.gmra.mxu0 %v979
        %v1332 = vpop.f32.mrf.mxu0
        %v1333 = vadd.f32 0.0, %v1332
        %v1334 = vpop.f32.mrf.mxu0
        %v1335 = vadd.f32 0.0, %v1334
        %1336 = vmatprep.mubr.f32.mxu0 0.0
        %1337 = vmatmul.mubr.f32.gmra.mxu0 %v982
        %v1338 = vpop.f32.mrf.mxu0
        %v1339 = vadd.f32 0.0, %v1338
        %v1340 = vpop.f32.mrf.mxu0
        %v1341 = vadd.f32 0.0, %v1340
        %1342 = vmatprep.mubr.f32.mxu0 0.0
        %1343 = vmatmul.mubr.f32.gmra.mxu0 %v985
        %v1344 = vpop.f32.mrf.mxu0
        %v1345 = vadd.f32 0.0, %v1344
        %v1346 = vpop.f32.mrf.mxu0
        %v1347 = vadd.f32 0.0, %v1346
        %1348 = vmatprep.mubr.f32.mxu0 0.0
        %1349 = vmatmul.mubr.f32.gmra.mxu0 %v988
        %v1350 = vpop.f32.mrf.mxu0
        %v1351 = vadd.f32 0.0, %v1350
        %v1352 = vpop.f32.mrf.mxu0
        %v1353 = vadd.f32 0.0, %v1352
        %1354 = vmatprep.mubr.f32.mxu0 0.0
        %1355 = vmatmul.mubr.f32.gmra.mxu0 %v991
        %v1356 = vpop.f32.mrf.mxu0
        %v1357 = vadd.f32 0.0, %v1356
        %v1358 = vpop.f32.mrf.mxu0
        %v1359 = vadd.f32 0.0, %v1358
        %1360 = vmatprep.mubr.f32.mxu0 0.0
        %1361 = vmatmul.mubr.f32.gmra.mxu0 %v994
        %v1362 = vpop.f32.mrf.mxu0
        %v1363 = vadd.f32 0.0, %v1362
        %v1364 = vpop.f32.mrf.mxu0
        %v1365 = vadd.f32 0.0, %v1364
        %1366 = vmatprep.mubr.f32.mxu0 0.0
        %1367 = vmatmul.mubr.f32.gmra.mxu0 %v997
        %v1368 = vpop.f32.mrf.mxu0
        %v1369 = vadd.f32 0.0, %v1368
        %v1370 = vpop.f32.mrf.mxu0
        %v1371 = vadd.f32 0.0, %v1370
        %1372 = vmatprep.mubr.f32.mxu0 0.0
        %1373 = vmatmul.mubr.f32.gmra.mxu0 %v1000
        %v1374 = vpop.f32.mrf.mxu0
        %v1375 = vadd.f32 0.0, %v1374
        %v1376 = vpop.f32.mrf.mxu0
        %v1377 = vadd.f32 0.0, %v1376
        %1378 = vmatprep.mubr.f32.mxu0 0.0
        %1379 = vmatmul.mubr.f32.gmra.mxu0 %v1003
        %v1380 = vpop.f32.mrf.mxu0
        %v1381 = vadd.f32 0.0, %v1380
        %v1382 = vpop.f32.mrf.mxu0
        %v1383 = vadd.f32 0.0, %v1382
        %1384 = vmatprep.mubr.f32.mxu0 0.0
        %1385 = vmatmul.mubr.f32.gmra.mxu0 %v1006
        %v1386 = vpop.f32.mrf.mxu0
        %v1387 = vadd.f32 0.0, %v1386
        %v1388 = vpop.f32.mrf.mxu0
        %v1389 = vadd.f32 0.0, %v1388
        %1390 = vmatprep.mubr.f32.mxu0 0.0
        %1391 = vmatmul.mubr.f32.gmra.mxu0 %v1009
        %v1392 = vpop.f32.mrf.mxu0
        %v1393 = vadd.f32 0.0, %v1392
        %v1394 = vpop.f32.mrf.mxu0
        %v1395 = vadd.f32 0.0, %v1394
        %1396 = vmatprep.mubr.f32.mxu0 0.0
        %1397 = vmatmul.mubr.f32.gmra.mxu0 %v1012
        %v1398 = vpop.f32.mrf.mxu0
        %v1399 = vadd.f32 0.0, %v1398
        %v1400 = vpop.f32.mrf.mxu0
        %v1401 = vadd.f32 0.0, %v1400
        %1402 = vmatprep.mubr.f32.mxu0 0.0
        %1403 = vmatmul.mubr.f32.gmra.mxu0 %v1015
        %v1404 = vpop.f32.mrf.mxu0
        %v1405 = vadd.f32 0.0, %v1404
        %v1406 = vpop.f32.mrf.mxu0
        %v1407 = vadd.f32 0.0, %v1406
        %1408 = vmatprep.mubr.f32.mxu0 0.0
        %1409 = vmatmul.mubr.f32.gmra.mxu0 %v1018
        %v1410 = vpop.f32.mrf.mxu0
        %v1411 = vadd.f32 0.0, %v1410
        %v1412 = vpop.f32.mrf.mxu0
        %v1413 = vadd.f32 0.0, %v1412
        %1414 = vmatprep.mubr.f32.mxu0 0.0
        %1415 = vmatmul.mubr.f32.gmra.mxu0 %v1021
        %v1416 = vpop.f32.mrf.mxu0
        %v1417 = vadd.f32 0.0, %v1416
        %v1418 = vpop.f32.mrf.mxu0
        %v1419 = vadd.f32 0.0, %v1418
        %1420 = vmatprep.mubr.f32.mxu0 0.0
        %1421 = vmatmul.mubr.f32.gmra.mxu0 %v1024
        %v1422 = vpop.f32.mrf.mxu0
        %v1423 = vadd.f32 0.0, %v1422
        %v1424 = vpop.f32.mrf.mxu0
        %v1425 = vadd.f32 0.0, %v1424
        %1426 = vmatprep.mubr.f32.mxu0 0.0
        %1427 = vmatmul.mubr.f32.gmra.mxu0 %v1027
        %v1428 = vpop.f32.mrf.mxu0
        %v1429 = vadd.f32 0.0, %v1428
        %v1430 = vpop.f32.mrf.mxu0
        %v1431 = vadd.f32 0.0, %v1430
        %1432 = vmatprep.mubr.f32.mxu0 0.0
        %1433 = vmatmul.mubr.f32.gmra.mxu0 %v1030
        %v1434 = vpop.f32.mrf.mxu0
        %v1435 = vadd.f32 0.0, %v1434
        %v1436 = vpop.f32.mrf.mxu0
        %v1437 = vadd.f32 0.0, %v1436
        %1438 = vmatprep.mubr.f32.mxu0 0.0
        %1439 = vmatmul.mubr.f32.gmra.mxu0 %v1033
        %v1440 = vpop.f32.mrf.mxu0
        %v1441 = vadd.f32 0.0, %v1440
        %v1442 = vpop.f32.mrf.mxu0
        %v1443 = vadd.f32 0.0, %v1442
        %1444 = vmatprep.mubr.f32.mxu0 0.0
        %1445 = vmatmul.mubr.f32.gmra.mxu0 %v1036
        %v1446 = vpop.f32.mrf.mxu0
        %v1447 = vadd.f32 0.0, %v1446
        %v1448 = vpop.f32.mrf.mxu0
        %v1449 = vadd.f32 0.0, %v1448
        %1450 = vmatprep.mubr.f32.mxu0 0.0
        %1451 = vmatmul.mubr.f32.gmra.mxu0 %v1039
        %v1452 = vpop.f32.mrf.mxu0
        %v1453 = vadd.f32 0.0, %v1452
        %v1454 = vpop.f32.mrf.mxu0
        %v1455 = vadd.f32 0.0, %v1454
        %1456 = vmatprep.mubr.f32.mxu0 0.0
        %1457 = vmatmul.mubr.f32.gmra.mxu0 %v1042
        %v1458 = vpop.f32.mrf.mxu0
        %v1459 = vadd.f32 0.0, %v1458
        %v1460 = vpop.f32.mrf.mxu0
        %v1461 = vadd.f32 0.0, %v1460
        %1462 = vmatprep.mubr.f32.mxu0 0.0
        %1463 = vmatmul.mubr.f32.gmra.mxu0 %v1045
        %v1464 = vpop.f32.mrf.mxu0
        %v1465 = vadd.f32 0.0, %v1464
        %v1466 = vpop.f32.mrf.mxu0
        %v1467 = vadd.f32 0.0, %v1466
        %1468 = vmatprep.mubr.f32.mxu0 0.0
        %1469 = vmatmul.mubr.f32.gmra.mxu0 %v1048
        %v1470 = vpop.f32.mrf.mxu0
        %v1471 = vadd.f32 0.0, %v1470
        %v1472 = vpop.f32.mrf.mxu0
        %v1473 = vadd.f32 0.0, %v1472
        %1474 = vmatprep.mubr.f32.mxu0 0.0
        %1475 = vmatmul.mubr.f32.gmra.mxu0 %v1051
        %v1476 = vpop.f32.mrf.mxu0
        %v1477 = vadd.f32 0.0, %v1476
        %v1478 = vpop.f32.mrf.mxu0
        %v1479 = vadd.f32 0.0, %v1478
        %1480 = vmatprep.mubr.f32.mxu0 0.0
        %1481 = vmatmul.mubr.f32.gmra.mxu0 %v1054
        %v1482 = vpop.f32.mrf.mxu0
        %v1483 = vadd.f32 0.0, %v1482
        %v1484 = vpop.f32.mrf.mxu0
        %v1485 = vadd.f32 0.0, %v1484
        %1486 = vmatprep.mubr.f32.mxu0 0.0
        %1487 = vmatmul.mubr.f32.gmra.mxu0 %v1057
        %v1488 = vpop.f32.mrf.mxu0
        %v1489 = vadd.f32 0.0, %v1488
        %v1490 = vpop.f32.mrf.mxu0
        %v1491 = vadd.f32 0.0, %v1490
        %1492 = vmatprep.mubr.f32.mxu0 0.0
        %1493 = vmatmul.mubr.f32.gmra.mxu0 %v1060
        %v1494 = vpop.f32.mrf.mxu0
        %v1495 = vadd.f32 0.0, %v1494
        %v1496 = vpop.f32.mrf.mxu0
        %v1497 = vadd.f32 0.0, %v1496
        %1498 = vmatprep.mubr.f32.mxu0 0.0
        %1499 = vmatmul.mubr.f32.gmra.mxu0 %v1063
        %v1500 = vpop.f32.mrf.mxu0
        %v1501 = vadd.f32 0.0, %v1500
        %v1502 = vpop.f32.mrf.mxu0
        %v1503 = vadd.f32 0.0, %v1502
        %1504 = vmatprep.mubr.f32.mxu0 0.0
        %1505 = vmatmul.mubr.f32.gmra.mxu0 %v1066
        %v1506 = vpop.f32.mrf.mxu0
        %v1507 = vadd.f32 0.0, %v1506
        %v1508 = vpop.f32.mrf.mxu0
        %v1509 = vadd.f32 0.0, %v1508
        %1510 = vmatprep.mubr.f32.mxu0 0.0
        %1511 = vmatmul.mubr.f32.gmra.mxu0 %v1069
        %v1512 = vpop.f32.mrf.mxu0
        %v1513 = vadd.f32 0.0, %v1512
        %v1514 = vpop.f32.mrf.mxu0
        %v1515 = vadd.f32 0.0, %v1514
        %1516 = vmatprep.mubr.f32.mxu0 0.0
        %1517 = vmatmul.mubr.f32.gmra.mxu0 %v1072
        %v1518 = vpop.f32.mrf.mxu0
        %v1519 = vadd.f32 0.0, %v1518
        %v1520 = vpop.f32.mrf.mxu0
        %v1521 = vadd.f32 0.0, %v1520
        %1522 = vdwg.mxu0
        %v1523 = vmax.f32 %v1141, %v1153
        %v1524 = vmax.f32 %v1147, %v1159
        %v1525 = vmax.f32 %v1523, %v1165
        %v1526 = vmax.f32 %v1524, %v1171
        %v1527 = vmax.f32 %v1525, %v1177
        %v1528 = vmax.f32 %v1526, %v1183
        %v1529 = vmax.f32 %v1527, %v1189
        %v1530 = vmax.f32 %v1528, %v1195
        %v1531 = vmax.f32 %v1529, %v1201
        %v1532 = vmax.f32 %v1530, %v1207
        %v1533 = vmax.f32 %v1531, %v1213
        %v1534 = vmax.f32 %v1532, %v1219
        %v1535 = vmax.f32 %v1533, %v1225
        %v1536 = vmax.f32 %v1534, %v1231
        %v1537 = vmax.f32 %v1535, %v1237
        %v1538 = vmax.f32 %v1536, %v1243
        %v1539 = vmax.f32 %v1537, %v1249
        %v1540 = vmax.f32 %v1538, %v1255
        %v1541 = vmax.f32 %v1539, %v1261
        %v1542 = vmax.f32 %v1540, %v1267
        %v1543 = vmax.f32 %v1541, %v1273
        %v1544 = vmax.f32 %v1542, %v1279
        %v1545 = vmax.f32 %v1543, %v1285
        %v1546 = vmax.f32 %v1544, %v1291
        %v1547 = vmax.f32 %v1545, %v1297
        %v1548 = vmax.f32 %v1546, %v1303
        %v1549 = vmax.f32 %v1547, %v1309
        %v1550 = vmax.f32 %v1548, %v1315
        %v1551 = vmax.f32 %v1549, %v1321
        %v1552 = vmax.f32 %v1550, %v1327
        %v1553 = vmax.f32 %v1551, %v1333
        %v1554 = vmax.f32 %v1552, %v1339
        %v1555 = vmax.f32 %v1553, %v1345
        %v1556 = vmax.f32 %v1554, %v1351
        %v1557 = vmax.f32 %v1555, %v1357
        %v1558 = vmax.f32 %v1556, %v1363
        %v1559 = vmax.f32 %v1557, %v1369
        %v1560 = vmax.f32 %v1558, %v1375
        %v1561 = vmax.f32 %v1559, %v1381
        %v1562 = vmax.f32 %v1560, %v1387
        %v1563 = vmax.f32 %v1561, %v1393
        %v1564 = vmax.f32 %v1562, %v1399
        %v1565 = vmax.f32 %v1563, %v1405
        %v1566 = vmax.f32 %v1564, %v1411
        %v1567 = vmax.f32 %v1565, %v1417
        %v1568 = vmax.f32 %v1566, %v1423
        %v1569 = vmax.f32 %v1567, %v1429
        %v1570 = vmax.f32 %v1568, %v1435
        %v1571 = vmax.f32 %v1569, %v1441
        %v1572 = vmax.f32 %v1570, %v1447
        %v1573 = vmax.f32 %v1571, %v1453
        %v1574 = vmax.f32 %v1572, %v1459
        %v1575 = vmax.f32 %v1573, %v1465
        %v1576 = vmax.f32 %v1574, %v1471
        %v1577 = vmax.f32 %v1575, %v1477
        %v1578 = vmax.f32 %v1576, %v1483
        %v1579 = vmax.f32 %v1577, %v1489
        %v1580 = vmax.f32 %v1578, %v1495
        %v1581 = vmax.f32 %v1579, %v1501
        %v1582 = vmax.f32 %v1580, %v1507
        %v1583 = vmax.f32 %v1581, %v1513
        %v1584 = vmax.f32 %v1582, %v1519
        %v1585 = vmax.f32 %v1583, %v1584
        %v1586 = vrot.slane %v1585, 4
        %v1587 = vmax.f32 %v1585, %v1586
        %v1588 = vrot.slane %v1587, 2
        %v1589 = vmax.f32 %v1587, %v1588
        %v1590 = vrot.slane %v1589, 1
        %v1591 = vmax.f32 %v1589, %v1590
        %v1592 = vmax.f32 %v1143, %v1155
        %v1593 = vmax.f32 %v1149, %v1161
        %v1594 = vmax.f32 %v1592, %v1167
        %v1595 = vmax.f32 %v1593, %v1173
        %v1596 = vmax.f32 %v1594, %v1179
        %v1597 = vmax.f32 %v1595, %v1185
        %v1598 = vmax.f32 %v1596, %v1191
        %v1599 = vmax.f32 %v1597, %v1197
        %v1600 = vmax.f32 %v1598, %v1203
        %v1601 = vmax.f32 %v1599, %v1209
        %v1602 = vmax.f32 %v1600, %v1215
        %v1603 = vmax.f32 %v1601, %v1221
        %v1604 = vmax.f32 %v1602, %v1227
        %v1605 = vmax.f32 %v1603, %v1233
        %v1606 = vmax.f32 %v1604, %v1239
        %v1607 = vmax.f32 %v1605, %v1245
        %v1608 = vmax.f32 %v1606, %v1251
        %v1609 = vmax.f32 %v1607, %v1257
        %v1610 = vmax.f32 %v1608, %v1263
        %v1611 = vmax.f32 %v1609, %v1269
        %v1612 = vmax.f32 %v1610, %v1275
        %v1613 = vmax.f32 %v1611, %v1281
        %v1614 = vmax.f32 %v1612, %v1287
        %v1615 = vmax.f32 %v1613, %v1293
        %v1616 = vmax.f32 %v1614, %v1299
        %v1617 = vmax.f32 %v1615, %v1305
        %v1618 = vmax.f32 %v1616, %v1311
        %v1619 = vmax.f32 %v1617, %v1317
        %v1620 = vmax.f32 %v1618, %v1323
        %v1621 = vmax.f32 %v1619, %v1329
        %v1622 = vmax.f32 %v1620, %v1335
        %v1623 = vmax.f32 %v1621, %v1341
        %v1624 = vmax.f32 %v1622, %v1347
        %v1625 = vmax.f32 %v1623, %v1353
        %v1626 = vmax.f32 %v1624, %v1359
        %v1627 = vmax.f32 %v1625, %v1365
        %v1628 = vmax.f32 %v1626, %v1371
        %v1629 = vmax.f32 %v1627, %v1377
        %v1630 = vmax.f32 %v1628, %v1383
        %v1631 = vmax.f32 %v1629, %v1389
        %v1632 = vmax.f32 %v1630, %v1395
        %v1633 = vmax.f32 %v1631, %v1401
        %v1634 = vmax.f32 %v1632, %v1407
        %v1635 = vmax.f32 %v1633, %v1413
        %v1636 = vmax.f32 %v1634, %v1419
        %v1637 = vmax.f32 %v1635, %v1425
        %v1638 = vmax.f32 %v1636, %v1431
        %v1639 = vmax.f32 %v1637, %v1437
        %v1640 = vmax.f32 %v1638, %v1443
        %v1641 = vmax.f32 %v1639, %v1449
        %v1642 = vmax.f32 %v1640, %v1455
        %v1643 = vmax.f32 %v1641, %v1461
        %v1644 = vmax.f32 %v1642, %v1467
        %v1645 = vmax.f32 %v1643, %v1473
        %v1646 = vmax.f32 %v1644, %v1479
        %v1647 = vmax.f32 %v1645, %v1485
        %v1648 = vmax.f32 %v1646, %v1491
        %v1649 = vmax.f32 %v1647, %v1497
        %v1650 = vmax.f32 %v1648, %v1503
        %v1651 = vmax.f32 %v1649, %v1509
        %v1652 = vmax.f32 %v1650, %v1515
        %v1653 = vmax.f32 %v1651, %v1521
        %v1654 = vmax.f32 %v1652, %v1653
        %v1655 = vrot.slane %v1654, 4
        %v1656 = vmax.f32 %v1654, %v1655
        %v1657 = vrot.slane %v1656, 2
        %v1658 = vmax.f32 %v1656, %v1657
        %v1659 = vrot.slane %v1658, 1
        %v1660 = vmax.f32 %v1658, %v1659
        %v1661 = vsub.f32 %v1141, %v1591
        %v1662 = vsub.f32 %v1143, %v1660
        %v1663 = vsub.f32 %v1147, %v1591
        %v1664 = vsub.f32 %v1149, %v1660
        %v1665 = vsub.f32 %v1153, %v1591
        %v1666 = vsub.f32 %v1155, %v1660
        %v1667 = vsub.f32 %v1159, %v1591
        %v1668 = vsub.f32 %v1161, %v1660
        %v1669 = vsub.f32 %v1165, %v1591
        %v1670 = vsub.f32 %v1167, %v1660
        %v1671 = vsub.f32 %v1171, %v1591
        %v1672 = vsub.f32 %v1173, %v1660
        %v1673 = vsub.f32 %v1177, %v1591
        %v1674 = vsub.f32 %v1179, %v1660
        %v1675 = vsub.f32 %v1183, %v1591
        %v1676 = vsub.f32 %v1185, %v1660
        %v1677 = vsub.f32 %v1189, %v1591
        %v1678 = vsub.f32 %v1191, %v1660
        %v1679 = vsub.f32 %v1195, %v1591
        %v1680 = vsub.f32 %v1197, %v1660
        %v1681 = vsub.f32 %v1201, %v1591
        %v1682 = vsub.f32 %v1203, %v1660
        %v1683 = vsub.f32 %v1207, %v1591
        %v1684 = vsub.f32 %v1209, %v1660
        %v1685 = vsub.f32 %v1213, %v1591
        %v1686 = vsub.f32 %v1215, %v1660
        %v1687 = vsub.f32 %v1219, %v1591
        %v1688 = vsub.f32 %v1221, %v1660
        %v1689 = vsub.f32 %v1225, %v1591
        %v1690 = vsub.f32 %v1227, %v1660
        %v1691 = vsub.f32 %v1231, %v1591
        %v1692 = vsub.f32 %v1233, %v1660
        %v1693 = vsub.f32 %v1237, %v1591
        %v1694 = vsub.f32 %v1239, %v1660
        %v1695 = vsub.f32 %v1243, %v1591
        %v1696 = vsub.f32 %v1245, %v1660
        %v1697 = vsub.f32 %v1249, %v1591
        %v1698 = vsub.f32 %v1251, %v1660
        %v1699 = vsub.f32 %v1255, %v1591
        %v1700 = vsub.f32 %v1257, %v1660
        %v1701 = vsub.f32 %v1261, %v1591
        %v1702 = vsub.f32 %v1263, %v1660
        %v1703 = vsub.f32 %v1267, %v1591
        %v1704 = vsub.f32 %v1269, %v1660
        %v1705 = vsub.f32 %v1273, %v1591
        %v1706 = vsub.f32 %v1275, %v1660
        %v1707 = vsub.f32 %v1279, %v1591
        %v1708 = vsub.f32 %v1281, %v1660
        %v1709 = vsub.f32 %v1285, %v1591
        %v1710 = vsub.f32 %v1287, %v1660
        %v1711 = vsub.f32 %v1291, %v1591
        %v1712 = vsub.f32 %v1293, %v1660
        %v1713 = vsub.f32 %v1297, %v1591
        %v1714 = vsub.f32 %v1299, %v1660
        %v1715 = vsub.f32 %v1303, %v1591
        %v1716 = vsub.f32 %v1305, %v1660
        %v1717 = vsub.f32 %v1309, %v1591
        %v1718 = vsub.f32 %v1311, %v1660
        %v1719 = vsub.f32 %v1315, %v1591
        %v1720 = vsub.f32 %v1317, %v1660
        %v1721 = vsub.f32 %v1321, %v1591
        %v1722 = vsub.f32 %v1323, %v1660
        %v1723 = vsub.f32 %v1327, %v1591
        %v1724 = vsub.f32 %v1329, %v1660
        %v1725 = vsub.f32 %v1333, %v1591
        %v1726 = vsub.f32 %v1335, %v1660
        %v1727 = vsub.f32 %v1339, %v1591
        %v1728 = vsub.f32 %v1341, %v1660
        %v1729 = vsub.f32 %v1345, %v1591
        %v1730 = vsub.f32 %v1347, %v1660
        %v1731 = vsub.f32 %v1351, %v1591
        %v1732 = vsub.f32 %v1353, %v1660
        %v1733 = vsub.f32 %v1357, %v1591
        %v1734 = vsub.f32 %v1359, %v1660
        %v1735 = vsub.f32 %v1363, %v1591
        %v1736 = vsub.f32 %v1365, %v1660
        %v1737 = vsub.f32 %v1369, %v1591
        %v1738 = vsub.f32 %v1371, %v1660
        %v1739 = vsub.f32 %v1375, %v1591
        %v1740 = vsub.f32 %v1377, %v1660
        %v1741 = vsub.f32 %v1381, %v1591
        %v1742 = vsub.f32 %v1383, %v1660
        %v1743 = vsub.f32 %v1387, %v1591
        %v1744 = vsub.f32 %v1389, %v1660
        %v1745 = vsub.f32 %v1393, %v1591
        %v1746 = vsub.f32 %v1395, %v1660
        %v1747 = vsub.f32 %v1399, %v1591
        %v1748 = vsub.f32 %v1401, %v1660
        %v1749 = vsub.f32 %v1405, %v1591
        %v1750 = vsub.f32 %v1407, %v1660
        %v1751 = vsub.f32 %v1411, %v1591
        %v1752 = vsub.f32 %v1413, %v1660
        %v1753 = vsub.f32 %v1417, %v1591
        %v1754 = vsub.f32 %v1419, %v1660
        %v1755 = vsub.f32 %v1423, %v1591
        %v1756 = vsub.f32 %v1425, %v1660
        %v1757 = vsub.f32 %v1429, %v1591
        %v1758 = vsub.f32 %v1431, %v1660
        %v1759 = vsub.f32 %v1435, %v1591
        %v1760 = vsub.f32 %v1437, %v1660
        %v1761 = vsub.f32 %v1441, %v1591
        %v1762 = vsub.f32 %v1443, %v1660
        %v1763 = vsub.f32 %v1447, %v1591
        %v1764 = vsub.f32 %v1449, %v1660
        %v1765 = vsub.f32 %v1453, %v1591
        %v1766 = vsub.f32 %v1455, %v1660
        %v1767 = vsub.f32 %v1459, %v1591
        %v1768 = vsub.f32 %v1461, %v1660
        %v1769 = vsub.f32 %v1465, %v1591
        %v1770 = vsub.f32 %v1467, %v1660
        %v1771 = vsub.f32 %v1471, %v1591
        %v1772 = vsub.f32 %v1473, %v1660
        %v1773 = vsub.f32 %v1477, %v1591
        %v1774 = vsub.f32 %v1479, %v1660
        %v1775 = vsub.f32 %v1483, %v1591
        %v1776 = vsub.f32 %v1485, %v1660
        %v1777 = vsub.f32 %v1489, %v1591
        %v1778 = vsub.f32 %v1491, %v1660
        %v1779 = vsub.f32 %v1495, %v1591
        %v1780 = vsub.f32 %v1497, %v1660
        %v1781 = vsub.f32 %v1501, %v1591
        %v1782 = vsub.f32 %v1503, %v1660
        %v1783 = vsub.f32 %v1507, %v1591
        %v1784 = vsub.f32 %v1509, %v1660
        %v1785 = vsub.f32 %v1513, %v1591
        %v1786 = vsub.f32 %v1515, %v1660
        %v1787 = vsub.f32 %v1519, %v1591
        %v1788 = vsub.f32 %v1521, %v1660
        %v1789 = vmul.f32 %v1661, 1.442695
        %v1790 = vpow.pop %v1789
        %v1791 = vmul.f32 %v1662, 1.442695
        %v1792 = vpow.pop %v1791
        %v1793 = vmul.f32 %v1663, 1.442695
        %v1794 = vpow.pop %v1793
        %v1795 = vmul.f32 %v1664, 1.442695
        %v1796 = vpow.pop %v1795
        %v1797 = vmul.f32 %v1665, 1.442695
        %v1798 = vpow.pop %v1797
        %v1799 = vmul.f32 %v1666, 1.442695
        %v1800 = vpow.pop %v1799
        %v1801 = vmul.f32 %v1667, 1.442695
        %v1802 = vpow.pop %v1801
        %v1803 = vmul.f32 %v1668, 1.442695
        %v1804 = vpow.pop %v1803
        %v1805 = vmul.f32 %v1669, 1.442695
        %v1806 = vpow.pop %v1805
        %v1807 = vmul.f32 %v1670, 1.442695
        %v1808 = vpow.pop %v1807
        %v1809 = vmul.f32 %v1671, 1.442695
        %v1810 = vpow.pop %v1809
        %v1811 = vmul.f32 %v1672, 1.442695
        %v1812 = vpow.pop %v1811
        %v1813 = vmul.f32 %v1673, 1.442695
        %v1814 = vpow.pop %v1813
        %v1815 = vmul.f32 %v1674, 1.442695
        %v1816 = vpow.pop %v1815
        %v1817 = vmul.f32 %v1675, 1.442695
        %v1818 = vpow.pop %v1817
        %v1819 = vmul.f32 %v1676, 1.442695
        %v1820 = vpow.pop %v1819
        %v1821 = vmul.f32 %v1677, 1.442695
        %v1822 = vpow.pop %v1821
        %v1823 = vmul.f32 %v1678, 1.442695
        %v1824 = vpow.pop %v1823
        %v1825 = vmul.f32 %v1679, 1.442695
        %v1826 = vpow.pop %v1825
        %v1827 = vmul.f32 %v1680, 1.442695
        %v1828 = vpow.pop %v1827
        %v1829 = vmul.f32 %v1681, 1.442695
        %v1830 = vpow.pop %v1829
        %v1831 = vmul.f32 %v1682, 1.442695
        %v1832 = vpow.pop %v1831
        %v1833 = vmul.f32 %v1683, 1.442695
        %v1834 = vpow.pop %v1833
        %v1835 = vmul.f32 %v1684, 1.442695
        %v1836 = vpow.pop %v1835
        %v1837 = vmul.f32 %v1685, 1.442695
        %v1838 = vpow.pop %v1837
        %v1839 = vmul.f32 %v1686, 1.442695
        %v1840 = vpow.pop %v1839
        %v1841 = vmul.f32 %v1687, 1.442695
        %v1842 = vpow.pop %v1841
        %v1843 = vmul.f32 %v1688, 1.442695
        %v1844 = vpow.pop %v1843
        %v1845 = vmul.f32 %v1689, 1.442695
        %v1846 = vpow.pop %v1845
        %v1847 = vmul.f32 %v1690, 1.442695
        %v1848 = vpow.pop %v1847
        %v1849 = vmul.f32 %v1691, 1.442695
        %v1850 = vpow.pop %v1849
        %v1851 = vmul.f32 %v1692, 1.442695
        %v1852 = vpow.pop %v1851
        %v1853 = vmul.f32 %v1693, 1.442695
        %v1854 = vpow.pop %v1853
        %v1855 = vmul.f32 %v1694, 1.442695
        %v1856 = vpow.pop %v1855
        %v1857 = vmul.f32 %v1695, 1.442695
        %v1858 = vpow.pop %v1857
        %v1859 = vmul.f32 %v1696, 1.442695
        %v1860 = vpow.pop %v1859
        %v1861 = vmul.f32 %v1697, 1.442695
        %v1862 = vpow.pop %v1861
        %v1863 = vmul.f32 %v1698, 1.442695
        %v1864 = vpow.pop %v1863
        %v1865 = vmul.f32 %v1699, 1.442695
        %v1866 = vpow.pop %v1865
        %v1867 = vmul.f32 %v1700, 1.442695
        %v1868 = vpow.pop %v1867
        %v1869 = vmul.f32 %v1701, 1.442695
        %v1870 = vpow.pop %v1869
        %v1871 = vmul.f32 %v1702, 1.442695
        %v1872 = vpow.pop %v1871
        %v1873 = vmul.f32 %v1703, 1.442695
        %v1874 = vpow.pop %v1873
        %v1875 = vmul.f32 %v1704, 1.442695
        %v1876 = vpow.pop %v1875
        %v1877 = vmul.f32 %v1705, 1.442695
        %v1878 = vpow.pop %v1877
        %v1879 = vmul.f32 %v1706, 1.442695
        %v1880 = vpow.pop %v1879
        %v1881 = vmul.f32 %v1707, 1.442695
        %v1882 = vpow.pop %v1881
        %v1883 = vmul.f32 %v1708, 1.442695
        %v1884 = vpow.pop %v1883
        %v1885 = vmul.f32 %v1709, 1.442695
        %v1886 = vpow.pop %v1885
        %v1887 = vmul.f32 %v1710, 1.442695
        %v1888 = vpow.pop %v1887
        %v1889 = vmul.f32 %v1711, 1.442695
        %v1890 = vpow.pop %v1889
        %v1891 = vmul.f32 %v1712, 1.442695
        %v1892 = vpow.pop %v1891
        %v1893 = vmul.f32 %v1713, 1.442695
        %v1894 = vpow.pop %v1893
        %v1895 = vmul.f32 %v1714, 1.442695
        %v1896 = vpow.pop %v1895
        %v1897 = vmul.f32 %v1715, 1.442695
        %v1898 = vpow.pop %v1897
        %v1899 = vmul.f32 %v1716, 1.442695
        %v1900 = vpow.pop %v1899
        %v1901 = vmul.f32 %v1717, 1.442695
        %v1902 = vpow.pop %v1901
        %v1903 = vmul.f32 %v1718, 1.442695
        %v1904 = vpow.pop %v1903
        %v1905 = vmul.f32 %v1719, 1.442695
        %v1906 = vpow.pop %v1905
        %v1907 = vmul.f32 %v1720, 1.442695
        %v1908 = vpow.pop %v1907
        %v1909 = vmul.f32 %v1721, 1.442695
        %v1910 = vpow.pop %v1909
        %v1911 = vmul.f32 %v1722, 1.442695
        %v1912 = vpow.pop %v1911
        %v1913 = vmul.f32 %v1723, 1.442695
        %v1914 = vpow.pop %v1913
        %v1915 = vmul.f32 %v1724, 1.442695
        %v1916 = vpow.pop %v1915
        %v1917 = vmul.f32 %v1725, 1.442695
        %v1918 = vpow.pop %v1917
        %v1919 = vmul.f32 %v1726, 1.442695
        %v1920 = vpow.pop %v1919
        %v1921 = vmul.f32 %v1727, 1.442695
        %v1922 = vpow.pop %v1921
        %v1923 = vmul.f32 %v1728, 1.442695
        %v1924 = vpow.pop %v1923
        %v1925 = vmul.f32 %v1729, 1.442695
        %v1926 = vpow.pop %v1925
        %v1927 = vmul.f32 %v1730, 1.442695
        %v1928 = vpow.pop %v1927
        %v1929 = vmul.f32 %v1731, 1.442695
        %v1930 = vpow.pop %v1929
        %v1931 = vmul.f32 %v1732, 1.442695
        %v1932 = vpow.pop %v1931
        %v1933 = vmul.f32 %v1733, 1.442695
        %v1934 = vpow.pop %v1933
        %v1935 = vmul.f32 %v1734, 1.442695
        %v1936 = vpow.pop %v1935
        %v1937 = vmul.f32 %v1735, 1.442695
        %v1938 = vpow.pop %v1937
        %v1939 = vmul.f32 %v1736, 1.442695
        %v1940 = vpow.pop %v1939
        %v1941 = vmul.f32 %v1737, 1.442695
        %v1942 = vpow.pop %v1941
        %v1943 = vmul.f32 %v1738, 1.442695
        %v1944 = vpow.pop %v1943
        %v1945 = vmul.f32 %v1739, 1.442695
        %v1946 = vpow.pop %v1945
        %v1947 = vmul.f32 %v1740, 1.442695
        %v1948 = vpow.pop %v1947
        %v1949 = vmul.f32 %v1741, 1.442695
        %v1950 = vpow.pop %v1949
        %v1951 = vmul.f32 %v1742, 1.442695
        %v1952 = vpow.pop %v1951
        %v1953 = vmul.f32 %v1743, 1.442695
        %v1954 = vpow.pop %v1953
        %v1955 = vmul.f32 %v1744, 1.442695
        %v1956 = vpow.pop %v1955
        %v1957 = vmul.f32 %v1745, 1.442695
        %v1958 = vpow.pop %v1957
        %v1959 = vmul.f32 %v1746, 1.442695
        %v1960 = vpow.pop %v1959
        %v1961 = vmul.f32 %v1747, 1.442695
        %v1962 = vpow.pop %v1961
        %v1963 = vmul.f32 %v1748, 1.442695
        %v1964 = vpow.pop %v1963
        %v1965 = vmul.f32 %v1749, 1.442695
        %v1966 = vpow.pop %v1965
        %v1967 = vmul.f32 %v1750, 1.442695
        %v1968 = vpow.pop %v1967
        %v1969 = vmul.f32 %v1751, 1.442695
        %v1970 = vpow.pop %v1969
        %v1971 = vmul.f32 %v1752, 1.442695
        %v1972 = vpow.pop %v1971
        %v1973 = vmul.f32 %v1753, 1.442695
        %v1974 = vpow.pop %v1973
        %v1975 = vmul.f32 %v1754, 1.442695
        %v1976 = vpow.pop %v1975
        %v1977 = vmul.f32 %v1755, 1.442695
        %v1978 = vpow.pop %v1977
        %v1979 = vmul.f32 %v1756, 1.442695
        %v1980 = vpow.pop %v1979
        %v1981 = vmul.f32 %v1757, 1.442695
        %v1982 = vpow.pop %v1981
        %v1983 = vmul.f32 %v1758, 1.442695
        %v1984 = vpow.pop %v1983
        %v1985 = vmul.f32 %v1759, 1.442695
        %v1986 = vpow.pop %v1985
        %v1987 = vmul.f32 %v1760, 1.442695
        %v1988 = vpow.pop %v1987
        %v1989 = vmul.f32 %v1761, 1.442695
        %v1990 = vpow.pop %v1989
        %v1991 = vmul.f32 %v1762, 1.442695
        %v1992 = vpow.pop %v1991
        %v1993 = vmul.f32 %v1763, 1.442695
        %v1994 = vpow.pop %v1993
        %v1995 = vmul.f32 %v1764, 1.442695
        %v1996 = vpow.pop %v1995
        %v1997 = vmul.f32 %v1765, 1.442695
        %v1998 = vpow.pop %v1997
        %v1999 = vmul.f32 %v1766, 1.442695
        %v2000 = vpow.pop %v1999
        %v2001 = vmul.f32 %v1767, 1.442695
        %v2002 = vpow.pop %v2001
        %v2003 = vmul.f32 %v1768, 1.442695
        %v2004 = vpow.pop %v2003
        %v2005 = vmul.f32 %v1769, 1.442695
        %v2006 = vpow.pop %v2005
        %v2007 = vmul.f32 %v1770, 1.442695
        %v2008 = vpow.pop %v2007
        %v2009 = vmul.f32 %v1771, 1.442695
        %v2010 = vpow.pop %v2009
        %v2011 = vmul.f32 %v1772, 1.442695
        %v2012 = vpow.pop %v2011
        %v2013 = vmul.f32 %v1773, 1.442695
        %v2014 = vpow.pop %v2013
        %v2015 = vmul.f32 %v1774, 1.442695
        %v2016 = vpow.pop %v2015
        %v2017 = vmul.f32 %v1775, 1.442695
        %v2018 = vpow.pop %v2017
        %v2019 = vmul.f32 %v1776, 1.442695
        %v2020 = vpow.pop %v2019
        %v2021 = vmul.f32 %v1777, 1.442695
        %v2022 = vpow.pop %v2021
        %v2023 = vmul.f32 %v1778, 1.442695
        %v2024 = vpow.pop %v2023
        %v2025 = vmul.f32 %v1779, 1.442695
        %v2026 = vpow.pop %v2025
        %v2027 = vmul.f32 %v1780, 1.442695
        %v2028 = vpow.pop %v2027
        %v2029 = vmul.f32 %v1781, 1.442695
        %v2030 = vpow.pop %v2029
        %v2031 = vmul.f32 %v1782, 1.442695
        %v2032 = vpow.pop %v2031
        %v2033 = vmul.f32 %v1783, 1.442695
        %v2034 = vpow.pop %v2033
        %v2035 = vmul.f32 %v1784, 1.442695
        %v2036 = vpow.pop %v2035
        %v2037 = vmul.f32 %v1785, 1.442695
        %v2038 = vpow.pop %v2037
        %v2039 = vmul.f32 %v1786, 1.442695
        %v2040 = vpow.pop %v2039
        %v2041 = vmul.f32 %v1787, 1.442695
        %v2042 = vpow.pop %v2041
        %v2043 = vmul.f32 %v1788, 1.442695
        %v2044 = vpow.pop %v2043
        %v2045 = vadd.f32 %v1790, %v1794
        %v2046 = vadd.f32 %v2045, %v1798
        %v2047 = vadd.f32 %v2046, %v1802
        %v2048 = vadd.f32 %v2047, %v1806
        %v2049 = vadd.f32 %v2048, %v1810
        %v2050 = vadd.f32 %v2049, %v1814
        %v2051 = vadd.f32 %v2050, %v1818
        %v2052 = vadd.f32 %v2051, %v1822
        %v2053 = vadd.f32 %v2052, %v1826
        %v2054 = vadd.f32 %v2053, %v1830
        %v2055 = vadd.f32 %v2054, %v1834
        %v2056 = vadd.f32 %v2055, %v1838
        %v2057 = vadd.f32 %v2056, %v1842
        %v2058 = vadd.f32 %v2057, %v1846
        %v2059 = vadd.f32 %v2058, %v1850
        %v2060 = vadd.f32 %v2059, %v1854
        %v2061 = vadd.f32 %v2060, %v1858
        %v2062 = vadd.f32 %v2061, %v1862
        %v2063 = vadd.f32 %v2062, %v1866
        %v2064 = vadd.f32 %v2063, %v1870
        %v2065 = vadd.f32 %v2064, %v1874
        %v2066 = vadd.f32 %v2065, %v1878
        %v2067 = vadd.f32 %v2066, %v1882
        %v2068 = vadd.f32 %v2067, %v1886
        %v2069 = vadd.f32 %v2068, %v1890
        %v2070 = vadd.f32 %v2069, %v1894
        %v2071 = vadd.f32 %v2070, %v1898
        %v2072 = vadd.f32 %v2071, %v1902
        %v2073 = vadd.f32 %v2072, %v1906
        %v2074 = vadd.f32 %v2073, %v1910
        %v2075 = vadd.f32 %v2074, %v1914
        %v2076 = vadd.f32 %v2075, %v1918
        %v2077 = vadd.f32 %v2076, %v1922
        %v2078 = vadd.f32 %v2077, %v1926
        %v2079 = vadd.f32 %v2078, %v1930
        %v2080 = vadd.f32 %v2079, %v1934
        %v2081 = vadd.f32 %v2080, %v1938
        %v2082 = vadd.f32 %v2081, %v1942
        %v2083 = vadd.f32 %v2082, %v1946
        %v2084 = vadd.f32 %v2083, %v1950
        %v2085 = vadd.f32 %v2084, %v1954
        %v2086 = vadd.f32 %v2085, %v1958
        %v2087 = vadd.f32 %v2086, %v1962
        %v2088 = vadd.f32 %v2087, %v1966
        %v2089 = vadd.f32 %v2088, %v1970
        %v2090 = vadd.f32 %v2089, %v1974
        %v2091 = vadd.f32 %v2090, %v1978
        %v2092 = vadd.f32 %v2091, %v1982
        %v2093 = vadd.f32 %v2092, %v1986
        %v2094 = vadd.f32 %v2093, %v1990
        %v2095 = vadd.f32 %v2094, %v1994
        %v2096 = vadd.f32 %v2095, %v1998
        %v2097 = vadd.f32 %v2096, %v2002
        %v2098 = vadd.f32 %v2097, %v2006
        %v2099 = vadd.f32 %v2098, %v2010
        %v2100 = vadd.f32 %v2099, %v2014
        %v2101 = vadd.f32 %v2100, %v2018
        %v2102 = vadd.f32 %v2101, %v2022
        %v2103 = vadd.f32 %v2102, %v2026
        %v2104 = vadd.f32 %v2103, %v2030
        %v2105 = vadd.f32 %v2104, %v2034
        %v2106 = vadd.f32 %v2105, %v2038
        %v2107 = vadd.f32 %v2106, %v2042
        %v2108 = vrot.slane %v2107, 4
        %v2109 = vadd.f32 %v2107, %v2108
        %v2110 = vrot.slane %v2109, 2
        %v2111 = vadd.f32 %v2109, %v2110
        %v2112 = vrot.slane %v2111, 1
        %v2113 = vadd.f32 %v2111, %v2112
        %v2114 = vadd.f32 %v1792, %v1796
        %v2115 = vadd.f32 %v2114, %v1800
        %v2116 = vadd.f32 %v2115, %v1804
        %v2117 = vadd.f32 %v2116, %v1808
        %v2118 = vadd.f32 %v2117, %v1812
        %v2119 = vadd.f32 %v2118, %v1816
        %v2120 = vadd.f32 %v2119, %v1820
        %v2121 = vadd.f32 %v2120, %v1824
        %v2122 = vadd.f32 %v2121, %v1828
        %v2123 = vadd.f32 %v2122, %v1832
        %v2124 = vadd.f32 %v2123, %v1836
        %v2125 = vadd.f32 %v2124, %v1840
        %v2126 = vadd.f32 %v2125, %v1844
        %v2127 = vadd.f32 %v2126, %v1848
        %v2128 = vadd.f32 %v2127, %v1852
        %v2129 = vadd.f32 %v2128, %v1856
        %v2130 = vadd.f32 %v2129, %v1860
        %v2131 = vadd.f32 %v2130, %v1864
        %v2132 = vadd.f32 %v2131, %v1868
        %v2133 = vadd.f32 %v2132, %v1872
        %v2134 = vadd.f32 %v2133, %v1876
        %v2135 = vadd.f32 %v2134, %v1880
        %v2136 = vadd.f32 %v2135, %v1884
        %v2137 = vadd.f32 %v2136, %v1888
        %v2138 = vadd.f32 %v2137, %v1892
        %v2139 = vadd.f32 %v2138, %v1896
        %v2140 = vadd.f32 %v2139, %v1900
        %v2141 = vadd.f32 %v2140, %v1904
        %v2142 = vadd.f32 %v2141, %v1908
        %v2143 = vadd.f32 %v2142, %v1912
        %v2144 = vadd.f32 %v2143, %v1916
        %v2145 = vadd.f32 %v2144, %v1920
        %v2146 = vadd.f32 %v2145, %v1924
        %v2147 = vadd.f32 %v2146, %v1928
        %v2148 = vadd.f32 %v2147, %v1932
        %v2149 = vadd.f32 %v2148, %v1936
        %v2150 = vadd.f32 %v2149, %v1940
        %v2151 = vadd.f32 %v2150, %v1944
        %v2152 = vadd.f32 %v2151, %v1948
        %v2153 = vadd.f32 %v2152, %v1952
        %v2154 = vadd.f32 %v2153, %v1956
        %v2155 = vadd.f32 %v2154, %v1960
        %v2156 = vadd.f32 %v2155, %v1964
        %v2157 = vadd.f32 %v2156, %v1968
        %v2158 = vadd.f32 %v2157, %v1972
        %v2159 = vadd.f32 %v2158, %v1976
        %v2160 = vadd.f32 %v2159, %v1980
        %v2161 = vadd.f32 %v2160, %v1984
        %v2162 = vadd.f32 %v2161, %v1988
        %v2163 = vadd.f32 %v2162, %v1992
        %v2164 = vadd.f32 %v2163, %v1996
        %v2165 = vadd.f32 %v2164, %v2000
        %v2166 = vadd.f32 %v2165, %v2004
        %v2167 = vadd.f32 %v2166, %v2008
        %v2168 = vadd.f32 %v2167, %v2012
        %v2169 = vadd.f32 %v2168, %v2016
        %v2170 = vadd.f32 %v2169, %v2020
        %v2171 = vadd.f32 %v2170, %v2024
        %v2172 = vadd.f32 %v2171, %v2028
        %v2173 = vadd.f32 %v2172, %v2032
        %v2174 = vadd.f32 %v2173, %v2036
        %v2175 = vadd.f32 %v2174, %v2040
        %v2176 = vadd.f32 %v2175, %v2044
        %v2177 = vrot.slane %v2176, 4
        %v2178 = vadd.f32 %v2176, %v2177
        %v2179 = vrot.slane %v2178, 2
        %v2180 = vadd.f32 %v2178, %v2179
        %v2181 = vrot.slane %v2180, 1
        %v2182 = vadd.f32 %v2180, %v2181
        %v2183 = vrcp.pop %v2113
        %v2184 = vrcp.pop %v2182
        %v2185 = vmul.f32 %v1790, %v2183
        %v2186 = vmul.f32 %v1792, %v2184
        %v2187 = vmul.f32 %v1794, %v2183
        %v2188 = vmul.f32 %v1796, %v2184
        %v2189 = vmul.f32 %v1798, %v2183
        %v2190 = vmul.f32 %v1800, %v2184
        %v2191 = vmul.f32 %v1802, %v2183
        %v2192 = vmul.f32 %v1804, %v2184
        %v2193 = vmul.f32 %v1806, %v2183
        %v2194 = vmul.f32 %v1808, %v2184
        %v2195 = vmul.f32 %v1810, %v2183
        %v2196 = vmul.f32 %v1812, %v2184
        %v2197 = vmul.f32 %v1814, %v2183
        %v2198 = vmul.f32 %v1816, %v2184
        %v2199 = vmul.f32 %v1818, %v2183
        %v2200 = vmul.f32 %v1820, %v2184
        %v2201 = vmul.f32 %v1822, %v2183
        %v2202 = vmul.f32 %v1824, %v2184
        %v2203 = vmul.f32 %v1826, %v2183
        %v2204 = vmul.f32 %v1828, %v2184
        %v2205 = vmul.f32 %v1830, %v2183
        %v2206 = vmul.f32 %v1832, %v2184
        %v2207 = vmul.f32 %v1834, %v2183
        %v2208 = vmul.f32 %v1836, %v2184
        %v2209 = vmul.f32 %v1838, %v2183
        %v2210 = vmul.f32 %v1840, %v2184
        %v2211 = vmul.f32 %v1842, %v2183
        %v2212 = vmul.f32 %v1844, %v2184
        %v2213 = vmul.f32 %v1846, %v2183
        %v2214 = vmul.f32 %v1848, %v2184
        %v2215 = vmul.f32 %v1850, %v2183
        %v2216 = vmul.f32 %v1852, %v2184
        %v2217 = vmul.f32 %v1854, %v2183
        %v2218 = vmul.f32 %v1856, %v2184
        %v2219 = vmul.f32 %v1858, %v2183
        %v2220 = vmul.f32 %v1860, %v2184
        %v2221 = vmul.f32 %v1862, %v2183
        %v2222 = vmul.f32 %v1864, %v2184
        %v2223 = vmul.f32 %v1866, %v2183
        %v2224 = vmul.f32 %v1868, %v2184
        %v2225 = vmul.f32 %v1870, %v2183
        %v2226 = vmul.f32 %v1872, %v2184
        %v2227 = vmul.f32 %v1874, %v2183
        %v2228 = vmul.f32 %v1876, %v2184
        %v2229 = vmul.f32 %v1878, %v2183
        %v2230 = vmul.f32 %v1880, %v2184
        %v2231 = vmul.f32 %v1882, %v2183
        %v2232 = vmul.f32 %v1884, %v2184
        %v2233 = vmul.f32 %v1886, %v2183
        %v2234 = vmul.f32 %v1888, %v2184
        %v2235 = vmul.f32 %v1890, %v2183
        %v2236 = vmul.f32 %v1892, %v2184
        %v2237 = vmul.f32 %v1894, %v2183
        %v2238 = vmul.f32 %v1896, %v2184
        %v2239 = vmul.f32 %v1898, %v2183
        %v2240 = vmul.f32 %v1900, %v2184
        %v2241 = vmul.f32 %v1902, %v2183
        %v2242 = vmul.f32 %v1904, %v2184
        %v2243 = vmul.f32 %v1906, %v2183
        %v2244 = vmul.f32 %v1908, %v2184
        %v2245 = vmul.f32 %v1910, %v2183
        %v2246 = vmul.f32 %v1912, %v2184
        %v2247 = vmul.f32 %v1914, %v2183
        %v2248 = vmul.f32 %v1916, %v2184
        %v2249 = vmul.f32 %v1918, %v2183
        %v2250 = vmul.f32 %v1920, %v2184
        %v2251 = vmul.f32 %v1922, %v2183
        %v2252 = vmul.f32 %v1924, %v2184
        %v2253 = vmul.f32 %v1926, %v2183
        %v2254 = vmul.f32 %v1928, %v2184
        %v2255 = vmul.f32 %v1930, %v2183
        %v2256 = vmul.f32 %v1932, %v2184
        %v2257 = vmul.f32 %v1934, %v2183
        %v2258 = vmul.f32 %v1936, %v2184
        %v2259 = vmul.f32 %v1938, %v2183
        %v2260 = vmul.f32 %v1940, %v2184
        %v2261 = vmul.f32 %v1942, %v2183
        %v2262 = vmul.f32 %v1944, %v2184
        %v2263 = vmul.f32 %v1946, %v2183
        %v2264 = vmul.f32 %v1948, %v2184
        %v2265 = vmul.f32 %v1950, %v2183
        %v2266 = vmul.f32 %v1952, %v2184
        %v2267 = vmul.f32 %v1954, %v2183
        %v2268 = vmul.f32 %v1956, %v2184
        %v2269 = vmul.f32 %v1958, %v2183
        %v2270 = vmul.f32 %v1960, %v2184
        %v2271 = vmul.f32 %v1962, %v2183
        %v2272 = vmul.f32 %v1964, %v2184
        %v2273 = vmul.f32 %v1966, %v2183
        %v2274 = vmul.f32 %v1968, %v2184
        %v2275 = vmul.f32 %v1970, %v2183
        %v2276 = vmul.f32 %v1972, %v2184
        %v2277 = vmul.f32 %v1974, %v2183
        %v2278 = vmul.f32 %v1976, %v2184
        %v2279 = vmul.f32 %v1978, %v2183
        %v2280 = vmul.f32 %v1980, %v2184
        %v2281 = vmul.f32 %v1982, %v2183
        %v2282 = vmul.f32 %v1984, %v2184
        %v2283 = vmul.f32 %v1986, %v2183
        %v2284 = vmul.f32 %v1988, %v2184
        %v2285 = vmul.f32 %v1990, %v2183
        %v2286 = vmul.f32 %v1992, %v2184
        %v2287 = vmul.f32 %v1994, %v2183
        %v2288 = vmul.f32 %v1996, %v2184
        %v2289 = vmul.f32 %v1998, %v2183
        %v2290 = vmul.f32 %v2000, %v2184
        %v2291 = vmul.f32 %v2002, %v2183
        %v2292 = vmul.f32 %v2004, %v2184
        %v2293 = vmul.f32 %v2006, %v2183
        %v2294 = vmul.f32 %v2008, %v2184
        %v2295 = vmul.f32 %v2010, %v2183
        %v2296 = vmul.f32 %v2012, %v2184
        %v2297 = vmul.f32 %v2014, %v2183
        %v2298 = vmul.f32 %v2016, %v2184
        %v2299 = vmul.f32 %v2018, %v2183
        %v2300 = vmul.f32 %v2020, %v2184
        %v2301 = vmul.f32 %v2022, %v2183
        %v2302 = vmul.f32 %v2024, %v2184
        %v2303 = vmul.f32 %v2026, %v2183
        %v2304 = vmul.f32 %v2028, %v2184
        %v2305 = vmul.f32 %v2030, %v2183
        %v2306 = vmul.f32 %v2032, %v2184
        %v2307 = vmul.f32 %v2034, %v2183
        %v2308 = vmul.f32 %v2036, %v2184
        %v2309 = vmul.f32 %v2038, %v2183
        %v2310 = vmul.f32 %v2040, %v2184
        %v2311 = vmul.f32 %v2042, %v2183
        %v2312 = vmul.f32 %v2044, %v2184
        %2313 = vmatprep.subr.mxu0 %v2216
        %2314 = vmatpush1.msra.mxu0 %v2215
        %2315 = vmatprep.subr.mxu0 %v2214
        %2316 = vmatpush1.msra.mxu0 %v2213
        %2317 = vmatprep.subr.mxu0 %v2212
        %2318 = vmatpush1.msra.mxu0 %v2211
        %2319 = vmatprep.subr.mxu0 %v2210
        %2320 = vmatpush1.msra.mxu0 %v2209
        %2321 = vmatprep.subr.mxu0 %v2208
        %2322 = vmatpush1.msra.mxu0 %v2207
        %2323 = vmatprep.subr.mxu0 %v2206
        %2324 = vmatpush1.msra.mxu0 %v2205
        %2325 = vmatprep.subr.mxu0 %v2204
        %2326 = vmatpush1.msra.mxu0 %v2203
        %2327 = vmatprep.subr.mxu0 %v2202
        %2328 = vmatpush1.msra.mxu0 %v2201
        %2329 = vmatprep.subr.mxu0 %v2200
        %2330 = vmatpush1.msra.mxu0 %v2199
        %2331 = vmatprep.subr.mxu0 %v2198
        %2332 = vmatpush1.msra.mxu0 %v2197
        %2333 = vmatprep.subr.mxu0 %v2196
        %2334 = vmatpush1.msra.mxu0 %v2195
        %2335 = vmatprep.subr.mxu0 %v2194
        %2336 = vmatpush1.msra.mxu0 %v2193
        %2337 = vmatprep.subr.mxu0 %v2192
        %2338 = vmatpush1.msra.mxu0 %v2191
        %2339 = vmatprep.subr.mxu0 %v2190
        %2340 = vmatpush1.msra.mxu0 %v2189
        %2341 = vmatprep.subr.mxu0 %v2188
        %2342 = vmatpush1.msra.mxu0 %v2187
        %2343 = vmatprep.subr.mxu0 %v2186
        %2344 = vmatpush1.msra.mxu0 %v2185
        %2345 = vmatprep.subr.mxu0 %v2248
        %2346 = vmatpush2.msra.mxu0 %v2247
        %2347 = vmatprep.subr.mxu0 %v2246
        %2348 = vmatpush2.msra.mxu0 %v2245
        %2349 = vmatprep.subr.mxu0 %v2244
        %2350 = vmatpush2.msra.mxu0 %v2243
        %2351 = vmatprep.subr.mxu0 %v2242
        %2352 = vmatpush2.msra.mxu0 %v2241
        %2353 = vmatprep.subr.mxu0 %v2240
        %2354 = vmatpush2.msra.mxu0 %v2239
        %2355 = vmatprep.subr.mxu0 %v2238
        %2356 = vmatpush2.msra.mxu0 %v2237
        %2357 = vmatprep.subr.mxu0 %v2236
        %2358 = vmatpush2.msra.mxu0 %v2235
        %2359 = vmatprep.subr.mxu0 %v2234
        %2360 = vmatpush2.msra.mxu0 %v2233
        %2361 = vmatprep.subr.mxu0 %v2232
        %2362 = vmatpush2.msra.mxu0 %v2231
        %2363 = vmatprep.subr.mxu0 %v2230
        %2364 = vmatpush2.msra.mxu0 %v2229
        %2365 = vmatprep.subr.mxu0 %v2228
        %2366 = vmatpush2.msra.mxu0 %v2227
        %2367 = vmatprep.subr.mxu0 %v2226
        %2368 = vmatpush2.msra.mxu0 %v2225
        %2369 = vmatprep.subr.mxu0 %v2224
        %2370 = vmatpush2.msra.mxu0 %v2223
        %2371 = vmatprep.subr.mxu0 %v2222
        %2372 = vmatpush2.msra.mxu0 %v2221
        %2373 = vmatprep.subr.mxu0 %v2220
        %2374 = vmatpush2.msra.mxu0 %v2219
        %2375 = vmatprep.subr.mxu0 %v2218
        %2376 = vmatpush2.msra.mxu0 %v2217
        %2377 = vmatprep.mubr.f32.mxu0 %v738
        %2378 = vmatmul.mubr.f32.gmra.mxu0 %v737
        %v2379 = vpop.f32.mrf.mxu0
        %v2380 = vadd.f32 0.0, %v2379
        %v2381 = vpop.f32.mrf.mxu0
        %v2382 = vadd.f32 0.0, %v2381
        %2383 = vdwg.mxu0
        %2384 = vmatprep.subr.mxu0 %v2280
        %2385 = vmatpush1.msra.mxu0 %v2279
        %2386 = vmatprep.subr.mxu0 %v2278
        %2387 = vmatpush1.msra.mxu0 %v2277
        %2388 = vmatprep.subr.mxu0 %v2276
        %2389 = vmatpush1.msra.mxu0 %v2275
        %2390 = vmatprep.subr.mxu0 %v2274
        %2391 = vmatpush1.msra.mxu0 %v2273
        %2392 = vmatprep.subr.mxu0 %v2272
        %2393 = vmatpush1.msra.mxu0 %v2271
        %2394 = vmatprep.subr.mxu0 %v2270
        %2395 = vmatpush1.msra.mxu0 %v2269
        %2396 = vmatprep.subr.mxu0 %v2268
        %2397 = vmatpush1.msra.mxu0 %v2267
        %2398 = vmatprep.subr.mxu0 %v2266
        %2399 = vmatpush1.msra.mxu0 %v2265
        %2400 = vmatprep.subr.mxu0 %v2264
        %2401 = vmatpush1.msra.mxu0 %v2263
        %2402 = vmatprep.subr.mxu0 %v2262
        %2403 = vmatpush1.msra.mxu0 %v2261
        %2404 = vmatprep.subr.mxu0 %v2260
        %2405 = vmatpush1.msra.mxu0 %v2259
        %2406 = vmatprep.subr.mxu0 %v2258
        %2407 = vmatpush1.msra.mxu0 %v2257
        %2408 = vmatprep.subr.mxu0 %v2256
        %2409 = vmatpush1.msra.mxu0 %v2255
        %2410 = vmatprep.subr.mxu0 %v2254
        %2411 = vmatpush1.msra.mxu0 %v2253
        %2412 = vmatprep.subr.mxu0 %v2252
        %2413 = vmatpush1.msra.mxu0 %v2251
        %2414 = vmatprep.subr.mxu0 %v2250
        %2415 = vmatpush1.msra.mxu0 %v2249
        %2416 = vmatprep.subr.mxu0 %v2312
        %2417 = vmatpush2.msra.mxu0 %v2311
        %2418 = vmatprep.subr.mxu0 %v2310
        %2419 = vmatpush2.msra.mxu0 %v2309
        %2420 = vmatprep.subr.mxu0 %v2308
        %2421 = vmatpush2.msra.mxu0 %v2307
        %2422 = vmatprep.subr.mxu0 %v2306
        %2423 = vmatpush2.msra.mxu0 %v2305
        %2424 = vmatprep.subr.mxu0 %v2304
        %2425 = vmatpush2.msra.mxu0 %v2303
        %2426 = vmatprep.subr.mxu0 %v2302
        %2427 = vmatpush2.msra.mxu0 %v2301
        %2428 = vmatprep.subr.mxu0 %v2300
        %2429 = vmatpush2.msra.mxu0 %v2299
        %2430 = vmatprep.subr.mxu0 %v2298
        %2431 = vmatpush2.msra.mxu0 %v2297
        %2432 = vmatprep.subr.mxu0 %v2296
        %2433 = vmatpush2.msra.mxu0 %v2295
        %2434 = vmatprep.subr.mxu0 %v2294
        %2435 = vmatpush2.msra.mxu0 %v2293
        %2436 = vmatprep.subr.mxu0 %v2292
        %2437 = vmatpush2.msra.mxu0 %v2291
        %2438 = vmatprep.subr.mxu0 %v2290
        %2439 = vmatpush2.msra.mxu0 %v2289
        %2440 = vmatprep.subr.mxu0 %v2288
        %2441 = vmatpush2.msra.mxu0 %v2287
        %2442 = vmatprep.subr.mxu0 %v2286
        %2443 = vmatpush2.msra.mxu0 %v2285
        %2444 = vmatprep.subr.mxu0 %v2284
        %2445 = vmatpush2.msra.mxu0 %v2283
        %2446 = vmatprep.subr.mxu0 %v2282
        %2447 = vmatpush2.msra.mxu0 %v2281
        %2448 = vmatprep.mubr.f32.mxu0 %v740
        %2449 = vmatmul.mubr.f32.gmra.mxu0 %v739
        %v2450 = vpop.f32.mrf.mxu0
        %v2451 = vadd.f32 %v2380, %v2450
        %v2452 = vpop.f32.mrf.mxu0
        %v2453 = vadd.f32 %v2382, %v2452
        %2454 = vdwg.mxu0
        %2455 = vxpose.xlu0.b32.start [1/16] %v725, 128
        %2456 = vxpose.xlu0.b32.cont [2/16] 0.0, 128
        %2457 = vxpose.xlu0.b32.cont [3/16] 0.0, 128
        %2458 = vxpose.xlu0.b32.cont [4/16] 0.0, 128
        %2459 = vxpose.xlu0.b32.cont [5/16] 0.0, 128
        %2460 = vxpose.xlu0.b32.cont [6/16] 0.0, 128
        %2461 = vxpose.xlu0.b32.cont [7/16] 0.0, 128
        %2462 = vxpose.xlu0.b32.cont [8/16] 0.0, 128
        %2463 = vxpose.xlu0.b32.cont [9/16] 0.0, 128
        %2464 = vxpose.xlu0.b32.cont [10/16] 0.0, 128
        %2465 = vxpose.xlu0.b32.cont [11/16] 0.0, 128
        %2466 = vxpose.xlu0.b32.cont [12/16] 0.0, 128
        %2467 = vxpose.xlu0.b32.cont [13/16] 0.0, 128
        %2468 = vxpose.xlu0.b32.cont [14/16] 0.0, 128
        %2469 = vxpose.xlu0.b32.cont [15/16] 0.0, 128
        %2470 = vxpose.xlu0.b32.end [16/16] 0.0, 128
        %v2471 = vpop.trf.xlu0
        %v2472 = vpop.trf.xlu0
        %v2473 = vpop.trf.xlu0
        %v2474 = vpop.trf.xlu0
        %v2475 = vpop.trf.xlu0
        %v2476 = vpop.trf.xlu0
        %v2477 = vpop.trf.xlu0
        %v2478 = vpop.trf.xlu0
        %v2479 = vpop.trf.xlu0
        %v2480 = vpop.trf.xlu0
        %v2481 = vpop.trf.xlu0
        %v2482 = vpop.trf.xlu0
        %v2483 = vpop.trf.xlu0
        %v2484 = vpop.trf.xlu0
        %v2485 = vpop.trf.xlu0
        %v2486 = vpop.trf.xlu0
        %2487 = vxpose.xlu0.b32.start [1/16] %v726, 128
        %2488 = vxpose.xlu0.b32.cont [2/16] 0.0, 128
        %2489 = vxpose.xlu0.b32.cont [3/16] 0.0, 128
        %2490 = vxpose.xlu0.b32.cont [4/16] 0.0, 128
        %2491 = vxpose.xlu0.b32.cont [5/16] 0.0, 128
        %2492 = vxpose.xlu0.b32.cont [6/16] 0.0, 128
        %2493 = vxpose.xlu0.b32.cont [7/16] 0.0, 128
        %2494 = vxpose.xlu0.b32.cont [8/16] 0.0, 128
        %2495 = vxpose.xlu0.b32.cont [9/16] 0.0, 128
        %2496 = vxpose.xlu0.b32.cont [10/16] 0.0, 128
        %2497 = vxpose.xlu0.b32.cont [11/16] 0.0, 128
        %2498 = vxpose.xlu0.b32.cont [12/16] 0.0, 128
        %2499 = vxpose.xlu0.b32.cont [13/16] 0.0, 128
        %2500 = vxpose.xlu0.b32.cont [14/16] 0.0, 128
        %2501 = vxpose.xlu0.b32.cont [15/16] 0.0, 128
        %2502 = vxpose.xlu0.b32.end [16/16] 0.0, 128
        %v2503 = vpop.trf.xlu0
        %v2504 = vpop.trf.xlu0
        %v2505 = vpop.trf.xlu0
        %v2506 = vpop.trf.xlu0
        %v2507 = vpop.trf.xlu0
        %v2508 = vpop.trf.xlu0
        %v2509 = vpop.trf.xlu0
        %v2510 = vpop.trf.xlu0
        %v2511 = vpop.trf.xlu0
        %v2512 = vpop.trf.xlu0
        %v2513 = vpop.trf.xlu0
        %v2514 = vpop.trf.xlu0
        %v2515 = vpop.trf.xlu0
        %v2516 = vpop.trf.xlu0
        %v2517 = vpop.trf.xlu0
        %v2518 = vpop.trf.xlu0
        %2519 = vxpose.xlu0.b32.start [1/16] %v727, 128
        %2520 = vxpose.xlu0.b32.cont [2/16] 0.0, 128
        %2521 = vxpose.xlu0.b32.cont [3/16] 0.0, 128
        %2522 = vxpose.xlu0.b32.cont [4/16] 0.0, 128
        %2523 = vxpose.xlu0.b32.cont [5/16] 0.0, 128
        %2524 = vxpose.xlu0.b32.cont [6/16] 0.0, 128
        %2525 = vxpose.xlu0.b32.cont [7/16] 0.0, 128
        %2526 = vxpose.xlu0.b32.cont [8/16] 0.0, 128
        %2527 = vxpose.xlu0.b32.cont [9/16] 0.0, 128
        %2528 = vxpose.xlu0.b32.cont [10/16] 0.0, 128
        %2529 = vxpose.xlu0.b32.cont [11/16] 0.0, 128
        %2530 = vxpose.xlu0.b32.cont [12/16] 0.0, 128
        %2531 = vxpose.xlu0.b32.cont [13/16] 0.0, 128
        %2532 = vxpose.xlu0.b32.cont [14/16] 0.0, 128
        %2533 = vxpose.xlu0.b32.cont [15/16] 0.0, 128
        %2534 = vxpose.xlu0.b32.end [16/16] 0.0, 128
        %v2535 = vpop.trf.xlu0
        %v2536 = vpop.trf.xlu0
        %v2537 = vpop.trf.xlu0
        %v2538 = vpop.trf.xlu0
        %v2539 = vpop.trf.xlu0
        %v2540 = vpop.trf.xlu0
        %v2541 = vpop.trf.xlu0
        %v2542 = vpop.trf.xlu0
        %v2543 = vpop.trf.xlu0
        %v2544 = vpop.trf.xlu0
        %v2545 = vpop.trf.xlu0
        %v2546 = vpop.trf.xlu0
        %v2547 = vpop.trf.xlu0
        %v2548 = vpop.trf.xlu0
        %v2549 = vpop.trf.xlu0
        %v2550 = vpop.trf.xlu0
        %2551 = vxpose.xlu0.b32.start [1/16] %v728, 128
        %2552 = vxpose.xlu0.b32.cont [2/16] 0.0, 128
        %2553 = vxpose.xlu0.b32.cont [3/16] 0.0, 128
        %2554 = vxpose.xlu0.b32.cont [4/16] 0.0, 128
        %2555 = vxpose.xlu0.b32.cont [5/16] 0.0, 128
        %2556 = vxpose.xlu0.b32.cont [6/16] 0.0, 128
        %2557 = vxpose.xlu0.b32.cont [7/16] 0.0, 128
        %2558 = vxpose.xlu0.b32.cont [8/16] 0.0, 128
        %2559 = vxpose.xlu0.b32.cont [9/16] 0.0, 128
        %2560 = vxpose.xlu0.b32.cont [10/16] 0.0, 128
        %2561 = vxpose.xlu0.b32.cont [11/16] 0.0, 128
        %2562 = vxpose.xlu0.b32.cont [12/16] 0.0, 128
        %2563 = vxpose.xlu0.b32.cont [13/16] 0.0, 128
        %2564 = vxpose.xlu0.b32.cont [14/16] 0.0, 128
        %2565 = vxpose.xlu0.b32.cont [15/16] 0.0, 128
        %2566 = vxpose.xlu0.b32.end [16/16] 0.0, 128
        %v2567 = vpop.trf.xlu0
        %v2568 = vpop.trf.xlu0
        %v2569 = vpop.trf.xlu0
        %v2570 = vpop.trf.xlu0
        %v2571 = vpop.trf.xlu0
        %v2572 = vpop.trf.xlu0
        %v2573 = vpop.trf.xlu0
        %v2574 = vpop.trf.xlu0
        %v2575 = vpop.trf.xlu0
        %v2576 = vpop.trf.xlu0
        %v2577 = vpop.trf.xlu0
        %v2578 = vpop.trf.xlu0
        %v2579 = vpop.trf.xlu0
        %v2580 = vpop.trf.xlu0
        %v2581 = vpop.trf.xlu0
        %v2582 = vpop.trf.xlu0
        %v2584 = vsel %vm881, %v2471, 0
        %v2587 = vsel %vm881, %v2472, 0
        %v2590 = vsel %vm881, %v2473, 0
        %v2593 = vsel %vm881, %v2474, 0
        %v2596 = vsel %vm881, %v2475, 0
        %v2599 = vsel %vm881, %v2476, 0
        %v2602 = vsel %vm881, %v2477, 0
        %v2605 = vsel %vm881, %v2478, 0
        %v2608 = vsel %vm881, %v2479, 0
        %v2611 = vsel %vm881, %v2480, 0
        %v2614 = vsel %vm881, %v2481, 0
        %v2617 = vsel %vm881, %v2482, 0
        %v2620 = vsel %vm881, %v2483, 0
        %v2623 = vsel %vm881, %v2484, 0
        %v2626 = vsel %vm881, %v2485, 0
        %v2629 = vsel %vm881, %v2486, 0
        %v2632 = vsel %vm881, %v2503, 0
        %v2635 = vsel %vm881, %v2504, 0
        %v2638 = vsel %vm881, %v2505, 0
        %v2641 = vsel %vm881, %v2506, 0
        %v2644 = vsel %vm881, %v2507, 0
        %v2647 = vsel %vm881, %v2508, 0
        %v2650 = vsel %vm881, %v2509, 0
        %v2653 = vsel %vm881, %v2510, 0
        %v2656 = vsel %vm881, %v2511, 0
        %v2659 = vsel %vm881, %v2512, 0
        %v2662 = vsel %vm881, %v2513, 0
        %v2665 = vsel %vm881, %v2514, 0
        %v2668 = vsel %vm881, %v2515, 0
        %v2671 = vsel %vm881, %v2516, 0
        %v2674 = vsel %vm881, %v2517, 0
        %v2677 = vsel %vm881, %v2518, 0
        %v2680 = vsel %vm881, %v2535, 0
        %v2683 = vsel %vm881, %v2536, 0
        %v2686 = vsel %vm881, %v2537, 0
        %v2689 = vsel %vm881, %v2538, 0
        %v2692 = vsel %vm881, %v2539, 0
        %v2695 = vsel %vm881, %v2540, 0
        %v2698 = vsel %vm881, %v2541, 0
        %v2701 = vsel %vm881, %v2542, 0
        %v2704 = vsel %vm881, %v2543, 0
        %v2707 = vsel %vm881, %v2544, 0
        %v2710 = vsel %vm881, %v2545, 0
        %v2713 = vsel %vm881, %v2546, 0
        %v2716 = vsel %vm881, %v2547, 0
        %v2719 = vsel %vm881, %v2548, 0
        %v2722 = vsel %vm881, %v2549, 0
        %v2725 = vsel %vm881, %v2550, 0
        %v2728 = vsel %vm881, %v2567, 0
        %v2731 = vsel %vm881, %v2568, 0
        %v2734 = vsel %vm881, %v2569, 0
        %v2737 = vsel %vm881, %v2570, 0
        %v2740 = vsel %vm881, %v2571, 0
        %v2743 = vsel %vm881, %v2572, 0
        %v2746 = vsel %vm881, %v2573, 0
        %v2749 = vsel %vm881, %v2574, 0
        %v2752 = vsel %vm881, %v2575, 0
        %v2755 = vsel %vm881, %v2576, 0
        %v2758 = vsel %vm881, %v2577, 0
        %v2761 = vsel %vm881, %v2578, 0
        %v2764 = vsel %vm881, %v2579, 0
        %v2767 = vsel %vm881, %v2580, 0
        %v2770 = vsel %vm881, %v2581, 0
        %v2773 = vsel %vm881, %v2582, 0
        %2775 = vmatprep.subr.mxu0 0.0
        %2776 = vmatpush1.msra.mxu0 0.0
        %2777 = vmatprep.subr.mxu0 0.0
        %2778 = vmatpush1.msra.mxu0 0.0
        %2779 = vmatprep.subr.mxu0 0.0
        %2780 = vmatpush1.msra.mxu0 0.0
        %2781 = vmatprep.subr.mxu0 0.0
        %2782 = vmatpush1.msra.mxu0 0.0
        %2783 = vmatprep.subr.mxu0 0.0
        %2784 = vmatpush1.msra.mxu0 0.0
        %2785 = vmatprep.subr.mxu0 0.0
        %2786 = vmatpush1.msra.mxu0 0.0
        %2787 = vmatprep.subr.mxu0 0.0
        %2788 = vmatpush1.msra.mxu0 0.0
        %2789 = vmatprep.subr.mxu0 0.0
        %2790 = vmatpush1.msra.mxu0 0.0
        %2791 = vmatprep.subr.mxu0 0.0
        %2792 = vmatpush1.msra.mxu0 0.0
        %2793 = vmatprep.subr.mxu0 0.0
        %2794 = vmatpush1.msra.mxu0 0.0
        %2795 = vmatprep.subr.mxu0 0.0
        %2796 = vmatpush1.msra.mxu0 0.0
        %2797 = vmatprep.subr.mxu0 0.0
        %2798 = vmatpush1.msra.mxu0 0.0
        %2799 = vmatprep.subr.mxu0 0.0
        %2800 = vmatpush1.msra.mxu0 0.0
        %2801 = vmatprep.subr.mxu0 0.0
        %2802 = vmatpush1.msra.mxu0 0.0
        %2803 = vmatprep.subr.mxu0 0.0
        %2804 = vmatpush1.msra.mxu0 0.0
        %2805 = vmatprep.subr.mxu0 %v709
        %2806 = vmatpush1.msra.mxu0 %v707
        %2807 = vmatprep.subr.mxu0 0.0
        %2808 = vmatpush2.msra.mxu0 0.0
        %2809 = vmatprep.subr.mxu0 0.0
        %2810 = vmatpush2.msra.mxu0 0.0
        %2811 = vmatprep.subr.mxu0 0.0
        %2812 = vmatpush2.msra.mxu0 0.0
        %2813 = vmatprep.subr.mxu0 0.0
        %2814 = vmatpush2.msra.mxu0 0.0
        %2815 = vmatprep.subr.mxu0 0.0
        %2816 = vmatpush2.msra.mxu0 0.0
        %2817 = vmatprep.subr.mxu0 0.0
        %2818 = vmatpush2.msra.mxu0 0.0
        %2819 = vmatprep.subr.mxu0 0.0
        %2820 = vmatpush2.msra.mxu0 0.0
        %2821 = vmatprep.subr.mxu0 0.0
        %2822 = vmatpush2.msra.mxu0 0.0
        %2823 = vmatprep.subr.mxu0 0.0
        %2824 = vmatpush2.msra.mxu0 0.0
        %2825 = vmatprep.subr.mxu0 0.0
        %2826 = vmatpush2.msra.mxu0 0.0
        %2827 = vmatprep.subr.mxu0 0.0
        %2828 = vmatpush2.msra.mxu0 0.0
        %2829 = vmatprep.subr.mxu0 0.0
        %2830 = vmatpush2.msra.mxu0 0.0
        %2831 = vmatprep.subr.mxu0 0.0
        %2832 = vmatpush2.msra.mxu0 0.0
        %2833 = vmatprep.subr.mxu0 0.0
        %2834 = vmatpush2.msra.mxu0 0.0
        %2835 = vmatprep.subr.mxu0 0.0
        %2836 = vmatpush2.msra.mxu0 0.0
        %2837 = vmatprep.subr.mxu0 0.0
        %2838 = vmatpush2.msra.mxu0 0.0
        %2839 = vmatprep.mubr.f32.mxu0 0.0
        %2840 = vmatmul.mubr.f32.gmra.mxu0 %v2584
        %v2841 = vpop.f32.mrf.mxu0
        %v2842 = vadd.f32 0.0, %v2841
        %v2843 = vpop.f32.mrf.mxu0
        %v2844 = vadd.f32 0.0, %v2843
        %2845 = vmatprep.mubr.f32.mxu0 0.0
        %2846 = vmatmul.mubr.f32.gmra.mxu0 %v2587
        %v2847 = vpop.f32.mrf.mxu0
        %v2848 = vadd.f32 0.0, %v2847
        %v2849 = vpop.f32.mrf.mxu0
        %v2850 = vadd.f32 0.0, %v2849
        %2851 = vmatprep.mubr.f32.mxu0 0.0
        %2852 = vmatmul.mubr.f32.gmra.mxu0 %v2590
        %v2853 = vpop.f32.mrf.mxu0
        %v2854 = vadd.f32 0.0, %v2853
        %v2855 = vpop.f32.mrf.mxu0
        %v2856 = vadd.f32 0.0, %v2855
        %2857 = vmatprep.mubr.f32.mxu0 0.0
        %2858 = vmatmul.mubr.f32.gmra.mxu0 %v2593
        %v2859 = vpop.f32.mrf.mxu0
        %v2860 = vadd.f32 0.0, %v2859
        %v2861 = vpop.f32.mrf.mxu0
        %v2862 = vadd.f32 0.0, %v2861
        %2863 = vmatprep.mubr.f32.mxu0 0.0
        %2864 = vmatmul.mubr.f32.gmra.mxu0 %v2596
        %v2865 = vpop.f32.mrf.mxu0
        %v2866 = vadd.f32 0.0, %v2865
        %v2867 = vpop.f32.mrf.mxu0
        %v2868 = vadd.f32 0.0, %v2867
        %2869 = vmatprep.mubr.f32.mxu0 0.0
        %2870 = vmatmul.mubr.f32.gmra.mxu0 %v2599
        %v2871 = vpop.f32.mrf.mxu0
        %v2872 = vadd.f32 0.0, %v2871
        %v2873 = vpop.f32.mrf.mxu0
        %v2874 = vadd.f32 0.0, %v2873
        %2875 = vmatprep.mubr.f32.mxu0 0.0
        %2876 = vmatmul.mubr.f32.gmra.mxu0 %v2602
        %v2877 = vpop.f32.mrf.mxu0
        %v2878 = vadd.f32 0.0, %v2877
        %v2879 = vpop.f32.mrf.mxu0
        %v2880 = vadd.f32 0.0, %v2879
        %2881 = vmatprep.mubr.f32.mxu0 0.0
        %2882 = vmatmul.mubr.f32.gmra.mxu0 %v2605
        %v2883 = vpop.f32.mrf.mxu0
        %v2884 = vadd.f32 0.0, %v2883
        %v2885 = vpop.f32.mrf.mxu0
        %v2886 = vadd.f32 0.0, %v2885
        %2887 = vmatprep.mubr.f32.mxu0 0.0
        %2888 = vmatmul.mubr.f32.gmra.mxu0 %v2608
        %v2889 = vpop.f32.mrf.mxu0
        %v2890 = vadd.f32 0.0, %v2889
        %v2891 = vpop.f32.mrf.mxu0
        %v2892 = vadd.f32 0.0, %v2891
        %2893 = vmatprep.mubr.f32.mxu0 0.0
        %2894 = vmatmul.mubr.f32.gmra.mxu0 %v2611
        %v2895 = vpop.f32.mrf.mxu0
        %v2896 = vadd.f32 0.0, %v2895
        %v2897 = vpop.f32.mrf.mxu0
        %v2898 = vadd.f32 0.0, %v2897
        %2899 = vmatprep.mubr.f32.mxu0 0.0
        %2900 = vmatmul.mubr.f32.gmra.mxu0 %v2614
        %v2901 = vpop.f32.mrf.mxu0
        %v2902 = vadd.f32 0.0, %v2901
        %v2903 = vpop.f32.mrf.mxu0
        %v2904 = vadd.f32 0.0, %v2903
        %2905 = vmatprep.mubr.f32.mxu0 0.0
        %2906 = vmatmul.mubr.f32.gmra.mxu0 %v2617
        %v2907 = vpop.f32.mrf.mxu0
        %v2908 = vadd.f32 0.0, %v2907
        %v2909 = vpop.f32.mrf.mxu0
        %v2910 = vadd.f32 0.0, %v2909
        %2911 = vmatprep.mubr.f32.mxu0 0.0
        %2912 = vmatmul.mubr.f32.gmra.mxu0 %v2620
        %v2913 = vpop.f32.mrf.mxu0
        %v2914 = vadd.f32 0.0, %v2913
        %v2915 = vpop.f32.mrf.mxu0
        %v2916 = vadd.f32 0.0, %v2915
        %2917 = vmatprep.mubr.f32.mxu0 0.0
        %2918 = vmatmul.mubr.f32.gmra.mxu0 %v2623
        %v2919 = vpop.f32.mrf.mxu0
        %v2920 = vadd.f32 0.0, %v2919
        %v2921 = vpop.f32.mrf.mxu0
        %v2922 = vadd.f32 0.0, %v2921
        %2923 = vmatprep.mubr.f32.mxu0 0.0
        %2924 = vmatmul.mubr.f32.gmra.mxu0 %v2626
        %v2925 = vpop.f32.mrf.mxu0
        %v2926 = vadd.f32 0.0, %v2925
        %v2927 = vpop.f32.mrf.mxu0
        %v2928 = vadd.f32 0.0, %v2927
        %2929 = vmatprep.mubr.f32.mxu0 0.0
        %2930 = vmatmul.mubr.f32.gmra.mxu0 %v2629
        %v2931 = vpop.f32.mrf.mxu0
        %v2932 = vadd.f32 0.0, %v2931
        %v2933 = vpop.f32.mrf.mxu0
        %v2934 = vadd.f32 0.0, %v2933
        %2935 = vmatprep.mubr.f32.mxu0 0.0
        %2936 = vmatmul.mubr.f32.gmra.mxu0 %v2632
        %v2937 = vpop.f32.mrf.mxu0
        %v2938 = vadd.f32 0.0, %v2937
        %v2939 = vpop.f32.mrf.mxu0
        %v2940 = vadd.f32 0.0, %v2939
        %2941 = vmatprep.mubr.f32.mxu0 0.0
        %2942 = vmatmul.mubr.f32.gmra.mxu0 %v2635
        %v2943 = vpop.f32.mrf.mxu0
        %v2944 = vadd.f32 0.0, %v2943
        %v2945 = vpop.f32.mrf.mxu0
        %v2946 = vadd.f32 0.0, %v2945
        %2947 = vmatprep.mubr.f32.mxu0 0.0
        %2948 = vmatmul.mubr.f32.gmra.mxu0 %v2638
        %v2949 = vpop.f32.mrf.mxu0
        %v2950 = vadd.f32 0.0, %v2949
        %v2951 = vpop.f32.mrf.mxu0
        %v2952 = vadd.f32 0.0, %v2951
        %2953 = vmatprep.mubr.f32.mxu0 0.0
        %2954 = vmatmul.mubr.f32.gmra.mxu0 %v2641
        %v2955 = vpop.f32.mrf.mxu0
        %v2956 = vadd.f32 0.0, %v2955
        %v2957 = vpop.f32.mrf.mxu0
        %v2958 = vadd.f32 0.0, %v2957
        %2959 = vmatprep.mubr.f32.mxu0 0.0
        %2960 = vmatmul.mubr.f32.gmra.mxu0 %v2644
        %v2961 = vpop.f32.mrf.mxu0
        %v2962 = vadd.f32 0.0, %v2961
        %v2963 = vpop.f32.mrf.mxu0
        %v2964 = vadd.f32 0.0, %v2963
        %2965 = vmatprep.mubr.f32.mxu0 0.0
        %2966 = vmatmul.mubr.f32.gmra.mxu0 %v2647
        %v2967 = vpop.f32.mrf.mxu0
        %v2968 = vadd.f32 0.0, %v2967
        %v2969 = vpop.f32.mrf.mxu0
        %v2970 = vadd.f32 0.0, %v2969
        %2971 = vmatprep.mubr.f32.mxu0 0.0
        %2972 = vmatmul.mubr.f32.gmra.mxu0 %v2650
        %v2973 = vpop.f32.mrf.mxu0
        %v2974 = vadd.f32 0.0, %v2973
        %v2975 = vpop.f32.mrf.mxu0
        %v2976 = vadd.f32 0.0, %v2975
        %2977 = vmatprep.mubr.f32.mxu0 0.0
        %2978 = vmatmul.mubr.f32.gmra.mxu0 %v2653
        %v2979 = vpop.f32.mrf.mxu0
        %v2980 = vadd.f32 0.0, %v2979
        %v2981 = vpop.f32.mrf.mxu0
        %v2982 = vadd.f32 0.0, %v2981
        %2983 = vmatprep.mubr.f32.mxu0 0.0
        %2984 = vmatmul.mubr.f32.gmra.mxu0 %v2656
        %v2985 = vpop.f32.mrf.mxu0
        %v2986 = vadd.f32 0.0, %v2985
        %v2987 = vpop.f32.mrf.mxu0
        %v2988 = vadd.f32 0.0, %v2987
        %2989 = vmatprep.mubr.f32.mxu0 0.0
        %2990 = vmatmul.mubr.f32.gmra.mxu0 %v2659
        %v2991 = vpop.f32.mrf.mxu0
        %v2992 = vadd.f32 0.0, %v2991
        %v2993 = vpop.f32.mrf.mxu0
        %v2994 = vadd.f32 0.0, %v2993
        %2995 = vmatprep.mubr.f32.mxu0 0.0
        %2996 = vmatmul.mubr.f32.gmra.mxu0 %v2662
        %v2997 = vpop.f32.mrf.mxu0
        %v2998 = vadd.f32 0.0, %v2997
        %v2999 = vpop.f32.mrf.mxu0
        %v3000 = vadd.f32 0.0, %v2999
        %3001 = vmatprep.mubr.f32.mxu0 0.0
        %3002 = vmatmul.mubr.f32.gmra.mxu0 %v2665
        %v3003 = vpop.f32.mrf.mxu0
        %v3004 = vadd.f32 0.0, %v3003
        %v3005 = vpop.f32.mrf.mxu0
        %v3006 = vadd.f32 0.0, %v3005
        %3007 = vmatprep.mubr.f32.mxu0 0.0
        %3008 = vmatmul.mubr.f32.gmra.mxu0 %v2668
        %v3009 = vpop.f32.mrf.mxu0
        %v3010 = vadd.f32 0.0, %v3009
        %v3011 = vpop.f32.mrf.mxu0
        %v3012 = vadd.f32 0.0, %v3011
        %3013 = vmatprep.mubr.f32.mxu0 0.0
        %3014 = vmatmul.mubr.f32.gmra.mxu0 %v2671
        %v3015 = vpop.f32.mrf.mxu0
        %v3016 = vadd.f32 0.0, %v3015
        %v3017 = vpop.f32.mrf.mxu0
        %v3018 = vadd.f32 0.0, %v3017
        %3019 = vmatprep.mubr.f32.mxu0 0.0
        %3020 = vmatmul.mubr.f32.gmra.mxu0 %v2674
        %v3021 = vpop.f32.mrf.mxu0
        %v3022 = vadd.f32 0.0, %v3021
        %v3023 = vpop.f32.mrf.mxu0
        %v3024 = vadd.f32 0.0, %v3023
        %3025 = vmatprep.mubr.f32.mxu0 0.0
        %3026 = vmatmul.mubr.f32.gmra.mxu0 %v2677
        %v3027 = vpop.f32.mrf.mxu0
        %v3028 = vadd.f32 0.0, %v3027
        %v3029 = vpop.f32.mrf.mxu0
        %v3030 = vadd.f32 0.0, %v3029
        %3031 = vmatprep.mubr.f32.mxu0 0.0
        %3032 = vmatmul.mubr.f32.gmra.mxu0 %v2680
        %v3033 = vpop.f32.mrf.mxu0
        %v3034 = vadd.f32 0.0, %v3033
        %v3035 = vpop.f32.mrf.mxu0
        %v3036 = vadd.f32 0.0, %v3035
        %3037 = vmatprep.mubr.f32.mxu0 0.0
        %3038 = vmatmul.mubr.f32.gmra.mxu0 %v2683
        %v3039 = vpop.f32.mrf.mxu0
        %v3040 = vadd.f32 0.0, %v3039
        %v3041 = vpop.f32.mrf.mxu0
        %v3042 = vadd.f32 0.0, %v3041
        %3043 = vmatprep.mubr.f32.mxu0 0.0
        %3044 = vmatmul.mubr.f32.gmra.mxu0 %v2686
        %v3045 = vpop.f32.mrf.mxu0
        %v3046 = vadd.f32 0.0, %v3045
        %v3047 = vpop.f32.mrf.mxu0
        %v3048 = vadd.f32 0.0, %v3047
        %3049 = vmatprep.mubr.f32.mxu0 0.0
        %3050 = vmatmul.mubr.f32.gmra.mxu0 %v2689
        %v3051 = vpop.f32.mrf.mxu0
        %v3052 = vadd.f32 0.0, %v3051
        %v3053 = vpop.f32.mrf.mxu0
        %v3054 = vadd.f32 0.0, %v3053
        %3055 = vmatprep.mubr.f32.mxu0 0.0
        %3056 = vmatmul.mubr.f32.gmra.mxu0 %v2692
        %v3057 = vpop.f32.mrf.mxu0
        %v3058 = vadd.f32 0.0, %v3057
        %v3059 = vpop.f32.mrf.mxu0
        %v3060 = vadd.f32 0.0, %v3059
        %3061 = vmatprep.mubr.f32.mxu0 0.0
        %3062 = vmatmul.mubr.f32.gmra.mxu0 %v2695
        %v3063 = vpop.f32.mrf.mxu0
        %v3064 = vadd.f32 0.0, %v3063
        %v3065 = vpop.f32.mrf.mxu0
        %v3066 = vadd.f32 0.0, %v3065
        %3067 = vmatprep.mubr.f32.mxu0 0.0
        %3068 = vmatmul.mubr.f32.gmra.mxu0 %v2698
        %v3069 = vpop.f32.mrf.mxu0
        %v3070 = vadd.f32 0.0, %v3069
        %v3071 = vpop.f32.mrf.mxu0
        %v3072 = vadd.f32 0.0, %v3071
        %3073 = vmatprep.mubr.f32.mxu0 0.0
        %3074 = vmatmul.mubr.f32.gmra.mxu0 %v2701
        %v3075 = vpop.f32.mrf.mxu0
        %v3076 = vadd.f32 0.0, %v3075
        %v3077 = vpop.f32.mrf.mxu0
        %v3078 = vadd.f32 0.0, %v3077
        %3079 = vmatprep.mubr.f32.mxu0 0.0
        %3080 = vmatmul.mubr.f32.gmra.mxu0 %v2704
        %v3081 = vpop.f32.mrf.mxu0
        %v3082 = vadd.f32 0.0, %v3081
        %v3083 = vpop.f32.mrf.mxu0
        %v3084 = vadd.f32 0.0, %v3083
        %3085 = vmatprep.mubr.f32.mxu0 0.0
        %3086 = vmatmul.mubr.f32.gmra.mxu0 %v2707
        %v3087 = vpop.f32.mrf.mxu0
        %v3088 = vadd.f32 0.0, %v3087
        %v3089 = vpop.f32.mrf.mxu0
        %v3090 = vadd.f32 0.0, %v3089
        %3091 = vmatprep.mubr.f32.mxu0 0.0
        %3092 = vmatmul.mubr.f32.gmra.mxu0 %v2710
        %v3093 = vpop.f32.mrf.mxu0
        %v3094 = vadd.f32 0.0, %v3093
        %v3095 = vpop.f32.mrf.mxu0
        %v3096 = vadd.f32 0.0, %v3095
        %3097 = vmatprep.mubr.f32.mxu0 0.0
        %3098 = vmatmul.mubr.f32.gmra.mxu0 %v2713
        %v3099 = vpop.f32.mrf.mxu0
        %v3100 = vadd.f32 0.0, %v3099
        %v3101 = vpop.f32.mrf.mxu0
        %v3102 = vadd.f32 0.0, %v3101
        %3103 = vmatprep.mubr.f32.mxu0 0.0
        %3104 = vmatmul.mubr.f32.gmra.mxu0 %v2716
        %v3105 = vpop.f32.mrf.mxu0
        %v3106 = vadd.f32 0.0, %v3105
        %v3107 = vpop.f32.mrf.mxu0
        %v3108 = vadd.f32 0.0, %v3107
        %3109 = vmatprep.mubr.f32.mxu0 0.0
        %3110 = vmatmul.mubr.f32.gmra.mxu0 %v2719
        %v3111 = vpop.f32.mrf.mxu0
        %v3112 = vadd.f32 0.0, %v3111
        %v3113 = vpop.f32.mrf.mxu0
        %v3114 = vadd.f32 0.0, %v3113
        %3115 = vmatprep.mubr.f32.mxu0 0.0
        %3116 = vmatmul.mubr.f32.gmra.mxu0 %v2722
        %v3117 = vpop.f32.mrf.mxu0
        %v3118 = vadd.f32 0.0, %v3117
        %v3119 = vpop.f32.mrf.mxu0
        %v3120 = vadd.f32 0.0, %v3119
        %3121 = vmatprep.mubr.f32.mxu0 0.0
        %3122 = vmatmul.mubr.f32.gmra.mxu0 %v2725
        %v3123 = vpop.f32.mrf.mxu0
        %v3124 = vadd.f32 0.0, %v3123
        %v3125 = vpop.f32.mrf.mxu0
        %v3126 = vadd.f32 0.0, %v3125
        %3127 = vmatprep.mubr.f32.mxu0 0.0
        %3128 = vmatmul.mubr.f32.gmra.mxu0 %v2728
        %v3129 = vpop.f32.mrf.mxu0
        %v3130 = vadd.f32 0.0, %v3129
        %v3131 = vpop.f32.mrf.mxu0
        %v3132 = vadd.f32 0.0, %v3131
        %3133 = vmatprep.mubr.f32.mxu0 0.0
        %3134 = vmatmul.mubr.f32.gmra.mxu0 %v2731
        %v3135 = vpop.f32.mrf.mxu0
        %v3136 = vadd.f32 0.0, %v3135
        %v3137 = vpop.f32.mrf.mxu0
        %v3138 = vadd.f32 0.0, %v3137
        %3139 = vmatprep.mubr.f32.mxu0 0.0
        %3140 = vmatmul.mubr.f32.gmra.mxu0 %v2734
        %v3141 = vpop.f32.mrf.mxu0
        %v3142 = vadd.f32 0.0, %v3141
        %v3143 = vpop.f32.mrf.mxu0
        %v3144 = vadd.f32 0.0, %v3143
        %3145 = vmatprep.mubr.f32.mxu0 0.0
        %3146 = vmatmul.mubr.f32.gmra.mxu0 %v2737
        %v3147 = vpop.f32.mrf.mxu0
        %v3148 = vadd.f32 0.0, %v3147
        %v3149 = vpop.f32.mrf.mxu0
        %v3150 = vadd.f32 0.0, %v3149
        %3151 = vmatprep.mubr.f32.mxu0 0.0
        %3152 = vmatmul.mubr.f32.gmra.mxu0 %v2740
        %v3153 = vpop.f32.mrf.mxu0
        %v3154 = vadd.f32 0.0, %v3153
        %v3155 = vpop.f32.mrf.mxu0
        %v3156 = vadd.f32 0.0, %v3155
        %3157 = vmatprep.mubr.f32.mxu0 0.0
        %3158 = vmatmul.mubr.f32.gmra.mxu0 %v2743
        %v3159 = vpop.f32.mrf.mxu0
        %v3160 = vadd.f32 0.0, %v3159
        %v3161 = vpop.f32.mrf.mxu0
        %v3162 = vadd.f32 0.0, %v3161
        %3163 = vmatprep.mubr.f32.mxu0 0.0
        %3164 = vmatmul.mubr.f32.gmra.mxu0 %v2746
        %v3165 = vpop.f32.mrf.mxu0
        %v3166 = vadd.f32 0.0, %v3165
        %v3167 = vpop.f32.mrf.mxu0
        %v3168 = vadd.f32 0.0, %v3167
        %3169 = vmatprep.mubr.f32.mxu0 0.0
        %3170 = vmatmul.mubr.f32.gmra.mxu0 %v2749
        %v3171 = vpop.f32.mrf.mxu0
        %v3172 = vadd.f32 0.0, %v3171
        %v3173 = vpop.f32.mrf.mxu0
        %v3174 = vadd.f32 0.0, %v3173
        %3175 = vmatprep.mubr.f32.mxu0 0.0
        %3176 = vmatmul.mubr.f32.gmra.mxu0 %v2752
        %v3177 = vpop.f32.mrf.mxu0
        %v3178 = vadd.f32 0.0, %v3177
        %v3179 = vpop.f32.mrf.mxu0
        %v3180 = vadd.f32 0.0, %v3179
        %3181 = vmatprep.mubr.f32.mxu0 0.0
        %3182 = vmatmul.mubr.f32.gmra.mxu0 %v2755
        %v3183 = vpop.f32.mrf.mxu0
        %v3184 = vadd.f32 0.0, %v3183
        %v3185 = vpop.f32.mrf.mxu0
        %v3186 = vadd.f32 0.0, %v3185
        %3187 = vmatprep.mubr.f32.mxu0 0.0
        %3188 = vmatmul.mubr.f32.gmra.mxu0 %v2758
        %v3189 = vpop.f32.mrf.mxu0
        %v3190 = vadd.f32 0.0, %v3189
        %v3191 = vpop.f32.mrf.mxu0
        %v3192 = vadd.f32 0.0, %v3191
        %3193 = vmatprep.mubr.f32.mxu0 0.0
        %3194 = vmatmul.mubr.f32.gmra.mxu0 %v2761
        %v3195 = vpop.f32.mrf.mxu0
        %v3196 = vadd.f32 0.0, %v3195
        %v3197 = vpop.f32.mrf.mxu0
        %v3198 = vadd.f32 0.0, %v3197
        %3199 = vmatprep.mubr.f32.mxu0 0.0
        %3200 = vmatmul.mubr.f32.gmra.mxu0 %v2764
        %v3201 = vpop.f32.mrf.mxu0
        %v3202 = vadd.f32 0.0, %v3201
        %v3203 = vpop.f32.mrf.mxu0
        %v3204 = vadd.f32 0.0, %v3203
        %3205 = vmatprep.mubr.f32.mxu0 0.0
        %3206 = vmatmul.mubr.f32.gmra.mxu0 %v2767
        %v3207 = vpop.f32.mrf.mxu0
        %v3208 = vadd.f32 0.0, %v3207
        %v3209 = vpop.f32.mrf.mxu0
        %v3210 = vadd.f32 0.0, %v3209
        %3211 = vmatprep.mubr.f32.mxu0 0.0
        %3212 = vmatmul.mubr.f32.gmra.mxu0 %v2770
        %v3213 = vpop.f32.mrf.mxu0
        %v3214 = vadd.f32 0.0, %v3213
        %v3215 = vpop.f32.mrf.mxu0
        %v3216 = vadd.f32 0.0, %v3215
        %3217 = vmatprep.mubr.f32.mxu0 0.0
        %3218 = vmatmul.mubr.f32.gmra.mxu0 %v2773
        %v3219 = vpop.f32.mrf.mxu0
        %v3220 = vadd.f32 0.0, %v3219
        %v3221 = vpop.f32.mrf.mxu0
        %v3222 = vadd.f32 0.0, %v3221
        %3223 = vdwg.mxu0
        %v3224 = vmax.f32 %v2842, %v2854
        %v3225 = vmax.f32 %v2848, %v2860
        %v3226 = vmax.f32 %v3224, %v2866
        %v3227 = vmax.f32 %v3225, %v2872
        %v3228 = vmax.f32 %v3226, %v2878
        %v3229 = vmax.f32 %v3227, %v2884
        %v3230 = vmax.f32 %v3228, %v2890
        %v3231 = vmax.f32 %v3229, %v2896
        %v3232 = vmax.f32 %v3230, %v2902
        %v3233 = vmax.f32 %v3231, %v2908
        %v3234 = vmax.f32 %v3232, %v2914
        %v3235 = vmax.f32 %v3233, %v2920
        %v3236 = vmax.f32 %v3234, %v2926
        %v3237 = vmax.f32 %v3235, %v2932
        %v3238 = vmax.f32 %v3236, %v2938
        %v3239 = vmax.f32 %v3237, %v2944
        %v3240 = vmax.f32 %v3238, %v2950
        %v3241 = vmax.f32 %v3239, %v2956
        %v3242 = vmax.f32 %v3240, %v2962
        %v3243 = vmax.f32 %v3241, %v2968
        %v3244 = vmax.f32 %v3242, %v2974
        %v3245 = vmax.f32 %v3243, %v2980
        %v3246 = vmax.f32 %v3244, %v2986
        %v3247 = vmax.f32 %v3245, %v2992
        %v3248 = vmax.f32 %v3246, %v2998
        %v3249 = vmax.f32 %v3247, %v3004
        %v3250 = vmax.f32 %v3248, %v3010
        %v3251 = vmax.f32 %v3249, %v3016
        %v3252 = vmax.f32 %v3250, %v3022
        %v3253 = vmax.f32 %v3251, %v3028
        %v3254 = vmax.f32 %v3252, %v3034
        %v3255 = vmax.f32 %v3253, %v3040
        %v3256 = vmax.f32 %v3254, %v3046
        %v3257 = vmax.f32 %v3255, %v3052
        %v3258 = vmax.f32 %v3256, %v3058
        %v3259 = vmax.f32 %v3257, %v3064
        %v3260 = vmax.f32 %v3258, %v3070
        %v3261 = vmax.f32 %v3259, %v3076
        %v3262 = vmax.f32 %v3260, %v3082
        %v3263 = vmax.f32 %v3261, %v3088
        %v3264 = vmax.f32 %v3262, %v3094
        %v3265 = vmax.f32 %v3263, %v3100
        %v3266 = vmax.f32 %v3264, %v3106
        %v3267 = vmax.f32 %v3265, %v3112
        %v3268 = vmax.f32 %v3266, %v3118
        %v3269 = vmax.f32 %v3267, %v3124
        %v3270 = vmax.f32 %v3268, %v3130
        %v3271 = vmax.f32 %v3269, %v3136
        %v3272 = vmax.f32 %v3270, %v3142
        %v3273 = vmax.f32 %v3271, %v3148
        %v3274 = vmax.f32 %v3272, %v3154
        %v3275 = vmax.f32 %v3273, %v3160
        %v3276 = vmax.f32 %v3274, %v3166
        %v3277 = vmax.f32 %v3275, %v3172
        %v3278 = vmax.f32 %v3276, %v3178
        %v3279 = vmax.f32 %v3277, %v3184
        %v3280 = vmax.f32 %v3278, %v3190
        %v3281 = vmax.f32 %v3279, %v3196
        %v3282 = vmax.f32 %v3280, %v3202
        %v3283 = vmax.f32 %v3281, %v3208
        %v3284 = vmax.f32 %v3282, %v3214
        %v3285 = vmax.f32 %v3283, %v3220
        %v3286 = vmax.f32 %v3284, %v3285
        %v3287 = vrot.slane %v3286, 4
        %v3288 = vmax.f32 %v3286, %v3287
        %v3289 = vrot.slane %v3288, 2
        %v3290 = vmax.f32 %v3288, %v3289
        %v3291 = vrot.slane %v3290, 1
        %v3292 = vmax.f32 %v3290, %v3291
        %v3293 = vmax.f32 %v2844, %v2856
        %v3294 = vmax.f32 %v2850, %v2862
        %v3295 = vmax.f32 %v3293, %v2868
        %v3296 = vmax.f32 %v3294, %v2874
        %v3297 = vmax.f32 %v3295, %v2880
        %v3298 = vmax.f32 %v3296, %v2886
        %v3299 = vmax.f32 %v3297, %v2892
        %v3300 = vmax.f32 %v3298, %v2898
        %v3301 = vmax.f32 %v3299, %v2904
        %v3302 = vmax.f32 %v3300, %v2910
        %v3303 = vmax.f32 %v3301, %v2916
        %v3304 = vmax.f32 %v3302, %v2922
        %v3305 = vmax.f32 %v3303, %v2928
        %v3306 = vmax.f32 %v3304, %v2934
        %v3307 = vmax.f32 %v3305, %v2940
        %v3308 = vmax.f32 %v3306, %v2946
        %v3309 = vmax.f32 %v3307, %v2952
        %v3310 = vmax.f32 %v3308, %v2958
        %v3311 = vmax.f32 %v3309, %v2964
        %v3312 = vmax.f32 %v3310, %v2970
        %v3313 = vmax.f32 %v3311, %v2976
        %v3314 = vmax.f32 %v3312, %v2982
        %v3315 = vmax.f32 %v3313, %v2988
        %v3316 = vmax.f32 %v3314, %v2994
        %v3317 = vmax.f32 %v3315, %v3000
        %v3318 = vmax.f32 %v3316, %v3006
        %v3319 = vmax.f32 %v3317, %v3012
        %v3320 = vmax.f32 %v3318, %v3018
        %v3321 = vmax.f32 %v3319, %v3024
        %v3322 = vmax.f32 %v3320, %v3030
        %v3323 = vmax.f32 %v3321, %v3036
        %v3324 = vmax.f32 %v3322, %v3042
        %v3325 = vmax.f32 %v3323, %v3048
        %v3326 = vmax.f32 %v3324, %v3054
        %v3327 = vmax.f32 %v3325, %v3060
        %v3328 = vmax.f32 %v3326, %v3066
        %v3329 = vmax.f32 %v3327, %v3072
        %v3330 = vmax.f32 %v3328, %v3078
        %v3331 = vmax.f32 %v3329, %v3084
        %v3332 = vmax.f32 %v3330, %v3090
        %v3333 = vmax.f32 %v3331, %v3096
        %v3334 = vmax.f32 %v3332, %v3102
        %v3335 = vmax.f32 %v3333, %v3108
        %v3336 = vmax.f32 %v3334, %v3114
        %v3337 = vmax.f32 %v3335, %v3120
        %v3338 = vmax.f32 %v3336, %v3126
        %v3339 = vmax.f32 %v3337, %v3132
        %v3340 = vmax.f32 %v3338, %v3138
        %v3341 = vmax.f32 %v3339, %v3144
        %v3342 = vmax.f32 %v3340, %v3150
        %v3343 = vmax.f32 %v3341, %v3156
        %v3344 = vmax.f32 %v3342, %v3162
        %v3345 = vmax.f32 %v3343, %v3168
        %v3346 = vmax.f32 %v3344, %v3174
        %v3347 = vmax.f32 %v3345, %v3180
        %v3348 = vmax.f32 %v3346, %v3186
        %v3349 = vmax.f32 %v3347, %v3192
        %v3350 = vmax.f32 %v3348, %v3198
        %v3351 = vmax.f32 %v3349, %v3204
        %v3352 = vmax.f32 %v3350, %v3210
        %v3353 = vmax.f32 %v3351, %v3216
        %v3354 = vmax.f32 %v3352, %v3222
        %v3355 = vmax.f32 %v3353, %v3354
        %v3356 = vrot.slane %v3355, 4
        %v3357 = vmax.f32 %v3355, %v3356
        %v3358 = vrot.slane %v3357, 2
        %v3359 = vmax.f32 %v3357, %v3358
        %v3360 = vrot.slane %v3359, 1
        %v3361 = vmax.f32 %v3359, %v3360
        %v3362 = vsub.f32 %v2842, %v3292
        %v3363 = vsub.f32 %v2844, %v3361
        %v3364 = vsub.f32 %v2848, %v3292
        %v3365 = vsub.f32 %v2850, %v3361
        %v3366 = vsub.f32 %v2854, %v3292
        %v3367 = vsub.f32 %v2856, %v3361
        %v3368 = vsub.f32 %v2860, %v3292
        %v3369 = vsub.f32 %v2862, %v3361
        %v3370 = vsub.f32 %v2866, %v3292
        %v3371 = vsub.f32 %v2868, %v3361
        %v3372 = vsub.f32 %v2872, %v3292
        %v3373 = vsub.f32 %v2874, %v3361
        %v3374 = vsub.f32 %v2878, %v3292
        %v3375 = vsub.f32 %v2880, %v3361
        %v3376 = vsub.f32 %v2884, %v3292
        %v3377 = vsub.f32 %v2886, %v3361
        %v3378 = vsub.f32 %v2890, %v3292
        %v3379 = vsub.f32 %v2892, %v3361
        %v3380 = vsub.f32 %v2896, %v3292
        %v3381 = vsub.f32 %v2898, %v3361
        %v3382 = vsub.f32 %v2902, %v3292
        %v3383 = vsub.f32 %v2904, %v3361
        %v3384 = vsub.f32 %v2908, %v3292
        %v3385 = vsub.f32 %v2910, %v3361
        %v3386 = vsub.f32 %v2914, %v3292
        %v3387 = vsub.f32 %v2916, %v3361
        %v3388 = vsub.f32 %v2920, %v3292
        %v3389 = vsub.f32 %v2922, %v3361
        %v3390 = vsub.f32 %v2926, %v3292
        %v3391 = vsub.f32 %v2928, %v3361
        %v3392 = vsub.f32 %v2932, %v3292
        %v3393 = vsub.f32 %v2934, %v3361
        %v3394 = vsub.f32 %v2938, %v3292
        %v3395 = vsub.f32 %v2940, %v3361
        %v3396 = vsub.f32 %v2944, %v3292
        %v3397 = vsub.f32 %v2946, %v3361
        %v3398 = vsub.f32 %v2950, %v3292
        %v3399 = vsub.f32 %v2952, %v3361
        %v3400 = vsub.f32 %v2956, %v3292
        %v3401 = vsub.f32 %v2958, %v3361
        %v3402 = vsub.f32 %v2962, %v3292
        %v3403 = vsub.f32 %v2964, %v3361
        %v3404 = vsub.f32 %v2968, %v3292
        %v3405 = vsub.f32 %v2970, %v3361
        %v3406 = vsub.f32 %v2974, %v3292
        %v3407 = vsub.f32 %v2976, %v3361
        %v3408 = vsub.f32 %v2980, %v3292
        %v3409 = vsub.f32 %v2982, %v3361
        %v3410 = vsub.f32 %v2986, %v3292
        %v3411 = vsub.f32 %v2988, %v3361
        %v3412 = vsub.f32 %v2992, %v3292
        %v3413 = vsub.f32 %v2994, %v3361
        %v3414 = vsub.f32 %v2998, %v3292
        %v3415 = vsub.f32 %v3000, %v3361
        %v3416 = vsub.f32 %v3004, %v3292
        %v3417 = vsub.f32 %v3006, %v3361
        %v3418 = vsub.f32 %v3010, %v3292
        %v3419 = vsub.f32 %v3012, %v3361
        %v3420 = vsub.f32 %v3016, %v3292
        %v3421 = vsub.f32 %v3018, %v3361
        %v3422 = vsub.f32 %v3022, %v3292
        %v3423 = vsub.f32 %v3024, %v3361
        %v3424 = vsub.f32 %v3028, %v3292
        %v3425 = vsub.f32 %v3030, %v3361
        %v3426 = vsub.f32 %v3034, %v3292
        %v3427 = vsub.f32 %v3036, %v3361
        %v3428 = vsub.f32 %v3040, %v3292
        %v3429 = vsub.f32 %v3042, %v3361
        %v3430 = vsub.f32 %v3046, %v3292
        %v3431 = vsub.f32 %v3048, %v3361
        %v3432 = vsub.f32 %v3052, %v3292
        %v3433 = vsub.f32 %v3054, %v3361
        %v3434 = vsub.f32 %v3058, %v3292
        %v3435 = vsub.f32 %v3060, %v3361
        %v3436 = vsub.f32 %v3064, %v3292
        %v3437 = vsub.f32 %v3066, %v3361
        %v3438 = vsub.f32 %v3070, %v3292
        %v3439 = vsub.f32 %v3072, %v3361
        %v3440 = vsub.f32 %v3076, %v3292
        %v3441 = vsub.f32 %v3078, %v3361
        %v3442 = vsub.f32 %v3082, %v3292
        %v3443 = vsub.f32 %v3084, %v3361
        %v3444 = vsub.f32 %v3088, %v3292
        %v3445 = vsub.f32 %v3090, %v3361
        %v3446 = vsub.f32 %v3094, %v3292
        %v3447 = vsub.f32 %v3096, %v3361
        %v3448 = vsub.f32 %v3100, %v3292
        %v3449 = vsub.f32 %v3102, %v3361
        %v3450 = vsub.f32 %v3106, %v3292
        %v3451 = vsub.f32 %v3108, %v3361
        %v3452 = vsub.f32 %v3112, %v3292
        %v3453 = vsub.f32 %v3114, %v3361
        %v3454 = vsub.f32 %v3118, %v3292
        %v3455 = vsub.f32 %v3120, %v3361
        %v3456 = vsub.f32 %v3124, %v3292
        %v3457 = vsub.f32 %v3126, %v3361
        %v3458 = vsub.f32 %v3130, %v3292
        %v3459 = vsub.f32 %v3132, %v3361
        %v3460 = vsub.f32 %v3136, %v3292
        %v3461 = vsub.f32 %v3138, %v3361
        %v3462 = vsub.f32 %v3142, %v3292
        %v3463 = vsub.f32 %v3144, %v3361
        %v3464 = vsub.f32 %v3148, %v3292
        %v3465 = vsub.f32 %v3150, %v3361
        %v3466 = vsub.f32 %v3154, %v3292
        %v3467 = vsub.f32 %v3156, %v3361
        %v3468 = vsub.f32 %v3160, %v3292
        %v3469 = vsub.f32 %v3162, %v3361
        %v3470 = vsub.f32 %v3166, %v3292
        %v3471 = vsub.f32 %v3168, %v3361
        %v3472 = vsub.f32 %v3172, %v3292
        %v3473 = vsub.f32 %v3174, %v3361
        %v3474 = vsub.f32 %v3178, %v3292
        %v3475 = vsub.f32 %v3180, %v3361
        %v3476 = vsub.f32 %v3184, %v3292
        %v3477 = vsub.f32 %v3186, %v3361
        %v3478 = vsub.f32 %v3190, %v3292
        %v3479 = vsub.f32 %v3192, %v3361
        %v3480 = vsub.f32 %v3196, %v3292
        %v3481 = vsub.f32 %v3198, %v3361
        %v3482 = vsub.f32 %v3202, %v3292
        %v3483 = vsub.f32 %v3204, %v3361
        %v3484 = vsub.f32 %v3208, %v3292
        %v3485 = vsub.f32 %v3210, %v3361
        %v3486 = vsub.f32 %v3214, %v3292
        %v3487 = vsub.f32 %v3216, %v3361
        %v3488 = vsub.f32 %v3220, %v3292
        %v3489 = vsub.f32 %v3222, %v3361
        %v3490 = vmul.f32 %v3362, 1.442695
        %v3491 = vpow.pop %v3490
        %v3492 = vmul.f32 %v3363, 1.442695
        %v3493 = vpow.pop %v3492
        %v3494 = vmul.f32 %v3364, 1.442695
        %v3495 = vpow.pop %v3494
        %v3496 = vmul.f32 %v3365, 1.442695
        %v3497 = vpow.pop %v3496
        %v3498 = vmul.f32 %v3366, 1.442695
        %v3499 = vpow.pop %v3498
        %v3500 = vmul.f32 %v3367, 1.442695
        %v3501 = vpow.pop %v3500
        %v3502 = vmul.f32 %v3368, 1.442695
        %v3503 = vpow.pop %v3502
        %v3504 = vmul.f32 %v3369, 1.442695
        %v3505 = vpow.pop %v3504
        %v3506 = vmul.f32 %v3370, 1.442695
        %v3507 = vpow.pop %v3506
        %v3508 = vmul.f32 %v3371, 1.442695
        %v3509 = vpow.pop %v3508
        %v3510 = vmul.f32 %v3372, 1.442695
        %v3511 = vpow.pop %v3510
        %v3512 = vmul.f32 %v3373, 1.442695
        %v3513 = vpow.pop %v3512
        %v3514 = vmul.f32 %v3374, 1.442695
        %v3515 = vpow.pop %v3514
        %v3516 = vmul.f32 %v3375, 1.442695
        %v3517 = vpow.pop %v3516
        %v3518 = vmul.f32 %v3376, 1.442695
        %v3519 = vpow.pop %v3518
        %v3520 = vmul.f32 %v3377, 1.442695
        %v3521 = vpow.pop %v3520
        %v3522 = vmul.f32 %v3378, 1.442695
        %v3523 = vpow.pop %v3522
        %v3524 = vmul.f32 %v3379, 1.442695
        %v3525 = vpow.pop %v3524
        %v3526 = vmul.f32 %v3380, 1.442695
        %v3527 = vpow.pop %v3526
        %v3528 = vmul.f32 %v3381, 1.442695
        %v3529 = vpow.pop %v3528
        %v3530 = vmul.f32 %v3382, 1.442695
        %v3531 = vpow.pop %v3530
        %v3532 = vmul.f32 %v3383, 1.442695
        %v3533 = vpow.pop %v3532
        %v3534 = vmul.f32 %v3384, 1.442695
        %v3535 = vpow.pop %v3534
        %v3536 = vmul.f32 %v3385, 1.442695
        %v3537 = vpow.pop %v3536
        %v3538 = vmul.f32 %v3386, 1.442695
        %v3539 = vpow.pop %v3538
        %v3540 = vmul.f32 %v3387, 1.442695
        %v3541 = vpow.pop %v3540
        %v3542 = vmul.f32 %v3388, 1.442695
        %v3543 = vpow.pop %v3542
        %v3544 = vmul.f32 %v3389, 1.442695
        %v3545 = vpow.pop %v3544
        %v3546 = vmul.f32 %v3390, 1.442695
        %v3547 = vpow.pop %v3546
        %v3548 = vmul.f32 %v3391, 1.442695
        %v3549 = vpow.pop %v3548
        %v3550 = vmul.f32 %v3392, 1.442695
        %v3551 = vpow.pop %v3550
        %v3552 = vmul.f32 %v3393, 1.442695
        %v3553 = vpow.pop %v3552
        %v3554 = vmul.f32 %v3394, 1.442695
        %v3555 = vpow.pop %v3554
        %v3556 = vmul.f32 %v3395, 1.442695
        %v3557 = vpow.pop %v3556
        %v3558 = vmul.f32 %v3396, 1.442695
        %v3559 = vpow.pop %v3558
        %v3560 = vmul.f32 %v3397, 1.442695
        %v3561 = vpow.pop %v3560
        %v3562 = vmul.f32 %v3398, 1.442695
        %v3563 = vpow.pop %v3562
        %v3564 = vmul.f32 %v3399, 1.442695
        %v3565 = vpow.pop %v3564
        %v3566 = vmul.f32 %v3400, 1.442695
        %v3567 = vpow.pop %v3566
        %v3568 = vmul.f32 %v3401, 1.442695
        %v3569 = vpow.pop %v3568
        %v3570 = vmul.f32 %v3402, 1.442695
        %v3571 = vpow.pop %v3570
        %v3572 = vmul.f32 %v3403, 1.442695
        %v3573 = vpow.pop %v3572
        %v3574 = vmul.f32 %v3404, 1.442695
        %v3575 = vpow.pop %v3574
        %v3576 = vmul.f32 %v3405, 1.442695
        %v3577 = vpow.pop %v3576
        %v3578 = vmul.f32 %v3406, 1.442695
        %v3579 = vpow.pop %v3578
        %v3580 = vmul.f32 %v3407, 1.442695
        %v3581 = vpow.pop %v3580
        %v3582 = vmul.f32 %v3408, 1.442695
        %v3583 = vpow.pop %v3582
        %v3584 = vmul.f32 %v3409, 1.442695
        %v3585 = vpow.pop %v3584
        %v3586 = vmul.f32 %v3410, 1.442695
        %v3587 = vpow.pop %v3586
        %v3588 = vmul.f32 %v3411, 1.442695
        %v3589 = vpow.pop %v3588
        %v3590 = vmul.f32 %v3412, 1.442695
        %v3591 = vpow.pop %v3590
        %v3592 = vmul.f32 %v3413, 1.442695
        %v3593 = vpow.pop %v3592
        %v3594 = vmul.f32 %v3414, 1.442695
        %v3595 = vpow.pop %v3594
        %v3596 = vmul.f32 %v3415, 1.442695
        %v3597 = vpow.pop %v3596
        %v3598 = vmul.f32 %v3416, 1.442695
        %v3599 = vpow.pop %v3598
        %v3600 = vmul.f32 %v3417, 1.442695
        %v3601 = vpow.pop %v3600
        %v3602 = vmul.f32 %v3418, 1.442695
        %v3603 = vpow.pop %v3602
        %v3604 = vmul.f32 %v3419, 1.442695
        %v3605 = vpow.pop %v3604
        %v3606 = vmul.f32 %v3420, 1.442695
        %v3607 = vpow.pop %v3606
        %v3608 = vmul.f32 %v3421, 1.442695
        %v3609 = vpow.pop %v3608
        %v3610 = vmul.f32 %v3422, 1.442695
        %v3611 = vpow.pop %v3610
        %v3612 = vmul.f32 %v3423, 1.442695
        %v3613 = vpow.pop %v3612
        %v3614 = vmul.f32 %v3424, 1.442695
        %v3615 = vpow.pop %v3614
        %v3616 = vmul.f32 %v3425, 1.442695
        %v3617 = vpow.pop %v3616
        %v3618 = vmul.f32 %v3426, 1.442695
        %v3619 = vpow.pop %v3618
        %v3620 = vmul.f32 %v3427, 1.442695
        %v3621 = vpow.pop %v3620
        %v3622 = vmul.f32 %v3428, 1.442695
        %v3623 = vpow.pop %v3622
        %v3624 = vmul.f32 %v3429, 1.442695
        %v3625 = vpow.pop %v3624
        %v3626 = vmul.f32 %v3430, 1.442695
        %v3627 = vpow.pop %v3626
        %v3628 = vmul.f32 %v3431, 1.442695
        %v3629 = vpow.pop %v3628
        %v3630 = vmul.f32 %v3432, 1.442695
        %v3631 = vpow.pop %v3630
        %v3632 = vmul.f32 %v3433, 1.442695
        %v3633 = vpow.pop %v3632
        %v3634 = vmul.f32 %v3434, 1.442695
        %v3635 = vpow.pop %v3634
        %v3636 = vmul.f32 %v3435, 1.442695
        %v3637 = vpow.pop %v3636
        %v3638 = vmul.f32 %v3436, 1.442695
        %v3639 = vpow.pop %v3638
        %v3640 = vmul.f32 %v3437, 1.442695
        %v3641 = vpow.pop %v3640
        %v3642 = vmul.f32 %v3438, 1.442695
        %v3643 = vpow.pop %v3642
        %v3644 = vmul.f32 %v3439, 1.442695
        %v3645 = vpow.pop %v3644
        %v3646 = vmul.f32 %v3440, 1.442695
        %v3647 = vpow.pop %v3646
        %v3648 = vmul.f32 %v3441, 1.442695
        %v3649 = vpow.pop %v3648
        %v3650 = vmul.f32 %v3442, 1.442695
        %v3651 = vpow.pop %v3650
        %v3652 = vmul.f32 %v3443, 1.442695
        %v3653 = vpow.pop %v3652
        %v3654 = vmul.f32 %v3444, 1.442695
        %v3655 = vpow.pop %v3654
        %v3656 = vmul.f32 %v3445, 1.442695
        %v3657 = vpow.pop %v3656
        %v3658 = vmul.f32 %v3446, 1.442695
        %v3659 = vpow.pop %v3658
        %v3660 = vmul.f32 %v3447, 1.442695
        %v3661 = vpow.pop %v3660
        %v3662 = vmul.f32 %v3448, 1.442695
        %v3663 = vpow.pop %v3662
        %v3664 = vmul.f32 %v3449, 1.442695
        %v3665 = vpow.pop %v3664
        %v3666 = vmul.f32 %v3450, 1.442695
        %v3667 = vpow.pop %v3666
        %v3668 = vmul.f32 %v3451, 1.442695
        %v3669 = vpow.pop %v3668
        %v3670 = vmul.f32 %v3452, 1.442695
        %v3671 = vpow.pop %v3670
        %v3672 = vmul.f32 %v3453, 1.442695
        %v3673 = vpow.pop %v3672
        %v3674 = vmul.f32 %v3454, 1.442695
        %v3675 = vpow.pop %v3674
        %v3676 = vmul.f32 %v3455, 1.442695
        %v3677 = vpow.pop %v3676
        %v3678 = vmul.f32 %v3456, 1.442695
        %v3679 = vpow.pop %v3678
        %v3680 = vmul.f32 %v3457, 1.442695
        %v3681 = vpow.pop %v3680
        %v3682 = vmul.f32 %v3458, 1.442695
        %v3683 = vpow.pop %v3682
        %v3684 = vmul.f32 %v3459, 1.442695
        %v3685 = vpow.pop %v3684
        %v3686 = vmul.f32 %v3460, 1.442695
        %v3687 = vpow.pop %v3686
        %v3688 = vmul.f32 %v3461, 1.442695
        %v3689 = vpow.pop %v3688
        %v3690 = vmul.f32 %v3462, 1.442695
        %v3691 = vpow.pop %v3690
        %v3692 = vmul.f32 %v3463, 1.442695
        %v3693 = vpow.pop %v3692
        %v3694 = vmul.f32 %v3464, 1.442695
        %v3695 = vpow.pop %v3694
        %v3696 = vmul.f32 %v3465, 1.442695
        %v3697 = vpow.pop %v3696
        %v3698 = vmul.f32 %v3466, 1.442695
        %v3699 = vpow.pop %v3698
        %v3700 = vmul.f32 %v3467, 1.442695
        %v3701 = vpow.pop %v3700
        %v3702 = vmul.f32 %v3468, 1.442695
        %v3703 = vpow.pop %v3702
        %v3704 = vmul.f32 %v3469, 1.442695
        %v3705 = vpow.pop %v3704
        %v3706 = vmul.f32 %v3470, 1.442695
        %v3707 = vpow.pop %v3706
        %v3708 = vmul.f32 %v3471, 1.442695
        %v3709 = vpow.pop %v3708
        %v3710 = vmul.f32 %v3472, 1.442695
        %v3711 = vpow.pop %v3710
        %v3712 = vmul.f32 %v3473, 1.442695
        %v3713 = vpow.pop %v3712
        %v3714 = vmul.f32 %v3474, 1.442695
        %v3715 = vpow.pop %v3714
        %v3716 = vmul.f32 %v3475, 1.442695
        %v3717 = vpow.pop %v3716
        %v3718 = vmul.f32 %v3476, 1.442695
        %v3719 = vpow.pop %v3718
        %v3720 = vmul.f32 %v3477, 1.442695
        %v3721 = vpow.pop %v3720
        %v3722 = vmul.f32 %v3478, 1.442695
        %v3723 = vpow.pop %v3722
        %v3724 = vmul.f32 %v3479, 1.442695
        %v3725 = vpow.pop %v3724
        %v3726 = vmul.f32 %v3480, 1.442695
        %v3727 = vpow.pop %v3726
        %v3728 = vmul.f32 %v3481, 1.442695
        %v3729 = vpow.pop %v3728
        %v3730 = vmul.f32 %v3482, 1.442695
        %v3731 = vpow.pop %v3730
        %v3732 = vmul.f32 %v3483, 1.442695
        %v3733 = vpow.pop %v3732
        %v3734 = vmul.f32 %v3484, 1.442695
        %v3735 = vpow.pop %v3734
        %v3736 = vmul.f32 %v3485, 1.442695
        %v3737 = vpow.pop %v3736
        %v3738 = vmul.f32 %v3486, 1.442695
        %v3739 = vpow.pop %v3738
        %v3740 = vmul.f32 %v3487, 1.442695
        %v3741 = vpow.pop %v3740
        %v3742 = vmul.f32 %v3488, 1.442695
        %v3743 = vpow.pop %v3742
        %v3744 = vmul.f32 %v3489, 1.442695
        %v3745 = vpow.pop %v3744
        %v3746 = vadd.f32 %v3491, %v3495
        %v3747 = vadd.f32 %v3746, %v3499
        %v3748 = vadd.f32 %v3747, %v3503
        %v3749 = vadd.f32 %v3748, %v3507
        %v3750 = vadd.f32 %v3749, %v3511
        %v3751 = vadd.f32 %v3750, %v3515
        %v3752 = vadd.f32 %v3751, %v3519
        %v3753 = vadd.f32 %v3752, %v3523
        %v3754 = vadd.f32 %v3753, %v3527
        %v3755 = vadd.f32 %v3754, %v3531
        %v3756 = vadd.f32 %v3755, %v3535
        %v3757 = vadd.f32 %v3756, %v3539
        %v3758 = vadd.f32 %v3757, %v3543
        %v3759 = vadd.f32 %v3758, %v3547
        %v3760 = vadd.f32 %v3759, %v3551
        %v3761 = vadd.f32 %v3760, %v3555
        %v3762 = vadd.f32 %v3761, %v3559
        %v3763 = vadd.f32 %v3762, %v3563
        %v3764 = vadd.f32 %v3763, %v3567
        %v3765 = vadd.f32 %v3764, %v3571
        %v3766 = vadd.f32 %v3765, %v3575
        %v3767 = vadd.f32 %v3766, %v3579
        %v3768 = vadd.f32 %v3767, %v3583
        %v3769 = vadd.f32 %v3768, %v3587
        %v3770 = vadd.f32 %v3769, %v3591
        %v3771 = vadd.f32 %v3770, %v3595
        %v3772 = vadd.f32 %v3771, %v3599
        %v3773 = vadd.f32 %v3772, %v3603
        %v3774 = vadd.f32 %v3773, %v3607
        %v3775 = vadd.f32 %v3774, %v3611
        %v3776 = vadd.f32 %v3775, %v3615
        %v3777 = vadd.f32 %v3776, %v3619
        %v3778 = vadd.f32 %v3777, %v3623
        %v3779 = vadd.f32 %v3778, %v3627
        %v3780 = vadd.f32 %v3779, %v3631
        %v3781 = vadd.f32 %v3780, %v3635
        %v3782 = vadd.f32 %v3781, %v3639
        %v3783 = vadd.f32 %v3782, %v3643
        %v3784 = vadd.f32 %v3783, %v3647
        %v3785 = vadd.f32 %v3784, %v3651
        %v3786 = vadd.f32 %v3785, %v3655
        %v3787 = vadd.f32 %v3786, %v3659
        %v3788 = vadd.f32 %v3787, %v3663
        %v3789 = vadd.f32 %v3788, %v3667
        %v3790 = vadd.f32 %v3789, %v3671
        %v3791 = vadd.f32 %v3790, %v3675
        %v3792 = vadd.f32 %v3791, %v3679
        %v3793 = vadd.f32 %v3792, %v3683
        %v3794 = vadd.f32 %v3793, %v3687
        %v3795 = vadd.f32 %v3794, %v3691
        %v3796 = vadd.f32 %v3795, %v3695
        %v3797 = vadd.f32 %v3796, %v3699
        %v3798 = vadd.f32 %v3797, %v3703
        %v3799 = vadd.f32 %v3798, %v3707
        %v3800 = vadd.f32 %v3799, %v3711
        %v3801 = vadd.f32 %v3800, %v3715
        %v3802 = vadd.f32 %v3801, %v3719
        %v3803 = vadd.f32 %v3802, %v3723
        %v3804 = vadd.f32 %v3803, %v3727
        %v3805 = vadd.f32 %v3804, %v3731
        %v3806 = vadd.f32 %v3805, %v3735
        %v3807 = vadd.f32 %v3806, %v3739
        %v3808 = vadd.f32 %v3807, %v3743
        %v3809 = vrot.slane %v3808, 4
        %v3810 = vadd.f32 %v3808, %v3809
        %v3811 = vrot.slane %v3810, 2
        %v3812 = vadd.f32 %v3810, %v3811
        %v3813 = vrot.slane %v3812, 1
        %v3814 = vadd.f32 %v3812, %v3813
        %v3815 = vadd.f32 %v3493, %v3497
        %v3816 = vadd.f32 %v3815, %v3501
        %v3817 = vadd.f32 %v3816, %v3505
        %v3818 = vadd.f32 %v3817, %v3509
        %v3819 = vadd.f32 %v3818, %v3513
        %v3820 = vadd.f32 %v3819, %v3517
        %v3821 = vadd.f32 %v3820, %v3521
        %v3822 = vadd.f32 %v3821, %v3525
        %v3823 = vadd.f32 %v3822, %v3529
        %v3824 = vadd.f32 %v3823, %v3533
        %v3825 = vadd.f32 %v3824, %v3537
        %v3826 = vadd.f32 %v3825, %v3541
        %v3827 = vadd.f32 %v3826, %v3545
        %v3828 = vadd.f32 %v3827, %v3549
        %v3829 = vadd.f32 %v3828, %v3553
        %v3830 = vadd.f32 %v3829, %v3557
        %v3831 = vadd.f32 %v3830, %v3561
        %v3832 = vadd.f32 %v3831, %v3565
        %v3833 = vadd.f32 %v3832, %v3569
        %v3834 = vadd.f32 %v3833, %v3573
        %v3835 = vadd.f32 %v3834, %v3577
        %v3836 = vadd.f32 %v3835, %v3581
        %v3837 = vadd.f32 %v3836, %v3585
        %v3838 = vadd.f32 %v3837, %v3589
        %v3839 = vadd.f32 %v3838, %v3593
        %v3840 = vadd.f32 %v3839, %v3597
        %v3841 = vadd.f32 %v3840, %v3601
        %v3842 = vadd.f32 %v3841, %v3605
        %v3843 = vadd.f32 %v3842, %v3609
        %v3844 = vadd.f32 %v3843, %v3613
        %v3845 = vadd.f32 %v3844, %v3617
        %v3846 = vadd.f32 %v3845, %v3621
        %v3847 = vadd.f32 %v3846, %v3625
        %v3848 = vadd.f32 %v3847, %v3629
        %v3849 = vadd.f32 %v3848, %v3633
        %v3850 = vadd.f32 %v3849, %v3637
        %v3851 = vadd.f32 %v3850, %v3641
        %v3852 = vadd.f32 %v3851, %v3645
        %v3853 = vadd.f32 %v3852, %v3649
        %v3854 = vadd.f32 %v3853, %v3653
        %v3855 = vadd.f32 %v3854, %v3657
        %v3856 = vadd.f32 %v3855, %v3661
        %v3857 = vadd.f32 %v3856, %v3665
        %v3858 = vadd.f32 %v3857, %v3669
        %v3859 = vadd.f32 %v3858, %v3673
        %v3860 = vadd.f32 %v3859, %v3677
        %v3861 = vadd.f32 %v3860, %v3681
        %v3862 = vadd.f32 %v3861, %v3685
        %v3863 = vadd.f32 %v3862, %v3689
        %v3864 = vadd.f32 %v3863, %v3693
        %v3865 = vadd.f32 %v3864, %v3697
        %v3866 = vadd.f32 %v3865, %v3701
        %v3867 = vadd.f32 %v3866, %v3705
        %v3868 = vadd.f32 %v3867, %v3709
        %v3869 = vadd.f32 %v3868, %v3713
        %v3870 = vadd.f32 %v3869, %v3717
        %v3871 = vadd.f32 %v3870, %v3721
        %v3872 = vadd.f32 %v3871, %v3725
        %v3873 = vadd.f32 %v3872, %v3729
        %v3874 = vadd.f32 %v3873, %v3733
        %v3875 = vadd.f32 %v3874, %v3737
        %v3876 = vadd.f32 %v3875, %v3741
        %v3877 = vadd.f32 %v3876, %v3745
        %v3878 = vrot.slane %v3877, 4
        %v3879 = vadd.f32 %v3877, %v3878
        %v3880 = vrot.slane %v3879, 2
        %v3881 = vadd.f32 %v3879, %v3880
        %v3882 = vrot.slane %v3881, 1
        %v3883 = vadd.f32 %v3881, %v3882
        %v3884 = vrcp.pop %v3814
        %v3885 = vrcp.pop %v3883
        %v3886 = vmul.f32 %v3491, %v3884
        %v3887 = vmul.f32 %v3493, %v3885
        %v3888 = vmul.f32 %v3495, %v3884
        %v3889 = vmul.f32 %v3497, %v3885
        %v3890 = vmul.f32 %v3499, %v3884
        %v3891 = vmul.f32 %v3501, %v3885
        %v3892 = vmul.f32 %v3503, %v3884
        %v3893 = vmul.f32 %v3505, %v3885
        %v3894 = vmul.f32 %v3507, %v3884
        %v3895 = vmul.f32 %v3509, %v3885
        %v3896 = vmul.f32 %v3511, %v3884
        %v3897 = vmul.f32 %v3513, %v3885
        %v3898 = vmul.f32 %v3515, %v3884
        %v3899 = vmul.f32 %v3517, %v3885
        %v3900 = vmul.f32 %v3519, %v3884
        %v3901 = vmul.f32 %v3521, %v3885
        %v3902 = vmul.f32 %v3523, %v3884
        %v3903 = vmul.f32 %v3525, %v3885
        %v3904 = vmul.f32 %v3527, %v3884
        %v3905 = vmul.f32 %v3529, %v3885
        %v3906 = vmul.f32 %v3531, %v3884
        %v3907 = vmul.f32 %v3533, %v3885
        %v3908 = vmul.f32 %v3535, %v3884
        %v3909 = vmul.f32 %v3537, %v3885
        %v3910 = vmul.f32 %v3539, %v3884
        %v3911 = vmul.f32 %v3541, %v3885
        %v3912 = vmul.f32 %v3543, %v3884
        %v3913 = vmul.f32 %v3545, %v3885
        %v3914 = vmul.f32 %v3547, %v3884
        %v3915 = vmul.f32 %v3549, %v3885
        %v3916 = vmul.f32 %v3551, %v3884
        %v3917 = vmul.f32 %v3553, %v3885
        %v3918 = vmul.f32 %v3555, %v3884
        %v3919 = vmul.f32 %v3557, %v3885
        %v3920 = vmul.f32 %v3559, %v3884
        %v3921 = vmul.f32 %v3561, %v3885
        %v3922 = vmul.f32 %v3563, %v3884
        %v3923 = vmul.f32 %v3565, %v3885
        %v3924 = vmul.f32 %v3567, %v3884
        %v3925 = vmul.f32 %v3569, %v3885
        %v3926 = vmul.f32 %v3571, %v3884
        %v3927 = vmul.f32 %v3573, %v3885
        %v3928 = vmul.f32 %v3575, %v3884
        %v3929 = vmul.f32 %v3577, %v3885
        %v3930 = vmul.f32 %v3579, %v3884
        %v3931 = vmul.f32 %v3581, %v3885
        %v3932 = vmul.f32 %v3583, %v3884
        %v3933 = vmul.f32 %v3585, %v3885
        %v3934 = vmul.f32 %v3587, %v3884
        %v3935 = vmul.f32 %v3589, %v3885
        %v3936 = vmul.f32 %v3591, %v3884
        %v3937 = vmul.f32 %v3593, %v3885
        %v3938 = vmul.f32 %v3595, %v3884
        %v3939 = vmul.f32 %v3597, %v3885
        %v3940 = vmul.f32 %v3599, %v3884
        %v3941 = vmul.f32 %v3601, %v3885
        %v3942 = vmul.f32 %v3603, %v3884
        %v3943 = vmul.f32 %v3605, %v3885
        %v3944 = vmul.f32 %v3607, %v3884
        %v3945 = vmul.f32 %v3609, %v3885
        %v3946 = vmul.f32 %v3611, %v3884
        %v3947 = vmul.f32 %v3613, %v3885
        %v3948 = vmul.f32 %v3615, %v3884
        %v3949 = vmul.f32 %v3617, %v3885
        %v3950 = vmul.f32 %v3619, %v3884
        %v3951 = vmul.f32 %v3621, %v3885
        %v3952 = vmul.f32 %v3623, %v3884
        %v3953 = vmul.f32 %v3625, %v3885
        %v3954 = vmul.f32 %v3627, %v3884
        %v3955 = vmul.f32 %v3629, %v3885
        %v3956 = vmul.f32 %v3631, %v3884
        %v3957 = vmul.f32 %v3633, %v3885
        %v3958 = vmul.f32 %v3635, %v3884
        %v3959 = vmul.f32 %v3637, %v3885
        %v3960 = vmul.f32 %v3639, %v3884
        %v3961 = vmul.f32 %v3641, %v3885
        %v3962 = vmul.f32 %v3643, %v3884
        %v3963 = vmul.f32 %v3645, %v3885
        %v3964 = vmul.f32 %v3647, %v3884
        %v3965 = vmul.f32 %v3649, %v3885
        %v3966 = vmul.f32 %v3651, %v3884
        %v3967 = vmul.f32 %v3653, %v3885
        %v3968 = vmul.f32 %v3655, %v3884
        %v3969 = vmul.f32 %v3657, %v3885
        %v3970 = vmul.f32 %v3659, %v3884
        %v3971 = vmul.f32 %v3661, %v3885
        %v3972 = vmul.f32 %v3663, %v3884
        %v3973 = vmul.f32 %v3665, %v3885
        %v3974 = vmul.f32 %v3667, %v3884
        %v3975 = vmul.f32 %v3669, %v3885
        %v3976 = vmul.f32 %v3671, %v3884
        %v3977 = vmul.f32 %v3673, %v3885
        %v3978 = vmul.f32 %v3675, %v3884
        %v3979 = vmul.f32 %v3677, %v3885
        %v3980 = vmul.f32 %v3679, %v3884
        %v3981 = vmul.f32 %v3681, %v3885
        %v3982 = vmul.f32 %v3683, %v3884
        %v3983 = vmul.f32 %v3685, %v3885
        %v3984 = vmul.f32 %v3687, %v3884
        %v3985 = vmul.f32 %v3689, %v3885
        %v3986 = vmul.f32 %v3691, %v3884
        %v3987 = vmul.f32 %v3693, %v3885
        %v3988 = vmul.f32 %v3695, %v3884
        %v3989 = vmul.f32 %v3697, %v3885
        %v3990 = vmul.f32 %v3699, %v3884
        %v3991 = vmul.f32 %v3701, %v3885
        %v3992 = vmul.f32 %v3703, %v3884
        %v3993 = vmul.f32 %v3705, %v3885
        %v3994 = vmul.f32 %v3707, %v3884
        %v3995 = vmul.f32 %v3709, %v3885
        %v3996 = vmul.f32 %v3711, %v3884
        %v3997 = vmul.f32 %v3713, %v3885
        %v3998 = vmul.f32 %v3715, %v3884
        %v3999 = vmul.f32 %v3717, %v3885
        %v4000 = vmul.f32 %v3719, %v3884
        %v4001 = vmul.f32 %v3721, %v3885
        %v4002 = vmul.f32 %v3723, %v3884
        %v4003 = vmul.f32 %v3725, %v3885
        %v4004 = vmul.f32 %v3727, %v3884
        %v4005 = vmul.f32 %v3729, %v3885
        %v4006 = vmul.f32 %v3731, %v3884
        %v4007 = vmul.f32 %v3733, %v3885
        %v4008 = vmul.f32 %v3735, %v3884
        %v4009 = vmul.f32 %v3737, %v3885
        %v4010 = vmul.f32 %v3739, %v3884
        %v4011 = vmul.f32 %v3741, %v3885
        %v4012 = vmul.f32 %v3743, %v3884
        %v4013 = vmul.f32 %v3745, %v3885
        %4014 = vmatprep.subr.mxu0 %v3917
        %4015 = vmatpush1.msra.mxu0 %v3916
        %4016 = vmatprep.subr.mxu0 %v3915
        %4017 = vmatpush1.msra.mxu0 %v3914
        %4018 = vmatprep.subr.mxu0 %v3913
        %4019 = vmatpush1.msra.mxu0 %v3912
        %4020 = vmatprep.subr.mxu0 %v3911
        %4021 = vmatpush1.msra.mxu0 %v3910
        %4022 = vmatprep.subr.mxu0 %v3909
        %4023 = vmatpush1.msra.mxu0 %v3908
        %4024 = vmatprep.subr.mxu0 %v3907
        %4025 = vmatpush1.msra.mxu0 %v3906
        %4026 = vmatprep.subr.mxu0 %v3905
        %4027 = vmatpush1.msra.mxu0 %v3904
        %4028 = vmatprep.subr.mxu0 %v3903
        %4029 = vmatpush1.msra.mxu0 %v3902
        %4030 = vmatprep.subr.mxu0 %v3901
        %4031 = vmatpush1.msra.mxu0 %v3900
        %4032 = vmatprep.subr.mxu0 %v3899
        %4033 = vmatpush1.msra.mxu0 %v3898
        %4034 = vmatprep.subr.mxu0 %v3897
        %4035 = vmatpush1.msra.mxu0 %v3896
        %4036 = vmatprep.subr.mxu0 %v3895
        %4037 = vmatpush1.msra.mxu0 %v3894
        %4038 = vmatprep.subr.mxu0 %v3893
        %4039 = vmatpush1.msra.mxu0 %v3892
        %4040 = vmatprep.subr.mxu0 %v3891
        %4041 = vmatpush1.msra.mxu0 %v3890
        %4042 = vmatprep.subr.mxu0 %v3889
        %4043 = vmatpush1.msra.mxu0 %v3888
        %4044 = vmatprep.subr.mxu0 %v3887
        %4045 = vmatpush1.msra.mxu0 %v3886
        %4046 = vmatprep.subr.mxu0 %v3949
        %4047 = vmatpush2.msra.mxu0 %v3948
        %4048 = vmatprep.subr.mxu0 %v3947
        %4049 = vmatpush2.msra.mxu0 %v3946
        %4050 = vmatprep.subr.mxu0 %v3945
        %4051 = vmatpush2.msra.mxu0 %v3944
        %4052 = vmatprep.subr.mxu0 %v3943
        %4053 = vmatpush2.msra.mxu0 %v3942
        %4054 = vmatprep.subr.mxu0 %v3941
        %4055 = vmatpush2.msra.mxu0 %v3940
        %4056 = vmatprep.subr.mxu0 %v3939
        %4057 = vmatpush2.msra.mxu0 %v3938
        %4058 = vmatprep.subr.mxu0 %v3937
        %4059 = vmatpush2.msra.mxu0 %v3936
        %4060 = vmatprep.subr.mxu0 %v3935
        %4061 = vmatpush2.msra.mxu0 %v3934
        %4062 = vmatprep.subr.mxu0 %v3933
        %4063 = vmatpush2.msra.mxu0 %v3932
        %4064 = vmatprep.subr.mxu0 %v3931
        %4065 = vmatpush2.msra.mxu0 %v3930
        %4066 = vmatprep.subr.mxu0 %v3929
        %4067 = vmatpush2.msra.mxu0 %v3928
        %4068 = vmatprep.subr.mxu0 %v3927
        %4069 = vmatpush2.msra.mxu0 %v3926
        %4070 = vmatprep.subr.mxu0 %v3925
        %4071 = vmatpush2.msra.mxu0 %v3924
        %4072 = vmatprep.subr.mxu0 %v3923
        %4073 = vmatpush2.msra.mxu0 %v3922
        %4074 = vmatprep.subr.mxu0 %v3921
        %4075 = vmatpush2.msra.mxu0 %v3920
        %4076 = vmatprep.subr.mxu0 %v3919
        %4077 = vmatpush2.msra.mxu0 %v3918
        %4078 = vmatprep.mubr.f32.mxu0 %v742
        %4079 = vmatmul.mubr.f32.gmra.mxu0 %v741
        %v4080 = vpop.f32.mrf.mxu0
        %v4081 = vadd.f32 0.0, %v4080
        %v4082 = vpop.f32.mrf.mxu0
        %v4083 = vadd.f32 0.0, %v4082
        %4084 = vdwg.mxu0
        %4085 = vmatprep.subr.mxu0 %v3981
        %4086 = vmatpush1.msra.mxu0 %v3980
        %4087 = vmatprep.subr.mxu0 %v3979
        %4088 = vmatpush1.msra.mxu0 %v3978
        %4089 = vmatprep.subr.mxu0 %v3977
        %4090 = vmatpush1.msra.mxu0 %v3976
        %4091 = vmatprep.subr.mxu0 %v3975
        %4092 = vmatpush1.msra.mxu0 %v3974
        %4093 = vmatprep.subr.mxu0 %v3973
        %4094 = vmatpush1.msra.mxu0 %v3972
        %4095 = vmatprep.subr.mxu0 %v3971
        %4096 = vmatpush1.msra.mxu0 %v3970
        %4097 = vmatprep.subr.mxu0 %v3969
        %4098 = vmatpush1.msra.mxu0 %v3968
        %4099 = vmatprep.subr.mxu0 %v3967
        %4100 = vmatpush1.msra.mxu0 %v3966
        %4101 = vmatprep.subr.mxu0 %v3965
        %4102 = vmatpush1.msra.mxu0 %v3964
        %4103 = vmatprep.subr.mxu0 %v3963
        %4104 = vmatpush1.msra.mxu0 %v3962
        %4105 = vmatprep.subr.mxu0 %v3961
        %4106 = vmatpush1.msra.mxu0 %v3960
        %4107 = vmatprep.subr.mxu0 %v3959
        %4108 = vmatpush1.msra.mxu0 %v3958
        %4109 = vmatprep.subr.mxu0 %v3957
        %4110 = vmatpush1.msra.mxu0 %v3956
        %4111 = vmatprep.subr.mxu0 %v3955
        %4112 = vmatpush1.msra.mxu0 %v3954
        %4113 = vmatprep.subr.mxu0 %v3953
        %4114 = vmatpush1.msra.mxu0 %v3952
        %4115 = vmatprep.subr.mxu0 %v3951
        %4116 = vmatpush1.msra.mxu0 %v3950
        %4117 = vmatprep.subr.mxu0 %v4013
        %4118 = vmatpush2.msra.mxu0 %v4012
        %4119 = vmatprep.subr.mxu0 %v4011
        %4120 = vmatpush2.msra.mxu0 %v4010
        %4121 = vmatprep.subr.mxu0 %v4009
        %4122 = vmatpush2.msra.mxu0 %v4008
        %4123 = vmatprep.subr.mxu0 %v4007
        %4124 = vmatpush2.msra.mxu0 %v4006
        %4125 = vmatprep.subr.mxu0 %v4005
        %4126 = vmatpush2.msra.mxu0 %v4004
        %4127 = vmatprep.subr.mxu0 %v4003
        %4128 = vmatpush2.msra.mxu0 %v4002
        %4129 = vmatprep.subr.mxu0 %v4001
        %4130 = vmatpush2.msra.mxu0 %v4000
        %4131 = vmatprep.subr.mxu0 %v3999
        %4132 = vmatpush2.msra.mxu0 %v3998
        %4133 = vmatprep.subr.mxu0 %v3997
        %4134 = vmatpush2.msra.mxu0 %v3996
        %4135 = vmatprep.subr.mxu0 %v3995
        %4136 = vmatpush2.msra.mxu0 %v3994
        %4137 = vmatprep.subr.mxu0 %v3993
        %4138 = vmatpush2.msra.mxu0 %v3992
        %4139 = vmatprep.subr.mxu0 %v3991
        %4140 = vmatpush2.msra.mxu0 %v3990
        %4141 = vmatprep.subr.mxu0 %v3989
        %4142 = vmatpush2.msra.mxu0 %v3988
        %4143 = vmatprep.subr.mxu0 %v3987
        %4144 = vmatpush2.msra.mxu0 %v3986
        %4145 = vmatprep.subr.mxu0 %v3985
        %4146 = vmatpush2.msra.mxu0 %v3984
        %4147 = vmatprep.subr.mxu0 %v3983
        %4148 = vmatpush2.msra.mxu0 %v3982
        %4149 = vmatprep.mubr.f32.mxu0 %v744
        %4150 = vmatmul.mubr.f32.gmra.mxu0 %v743
        %v4151 = vpop.f32.mrf.mxu0
        %v4152 = vadd.f32 %v4081, %v4151
        %v4153 = vpop.f32.mrf.mxu0
        %v4154 = vadd.f32 %v4083, %v4153
        %4155 = vdwg.mxu0
        %4156 = vxpose.xlu0.b32.start [1/16] %v729, 128
        %4157 = vxpose.xlu0.b32.cont [2/16] 0.0, 128
        %4158 = vxpose.xlu0.b32.cont [3/16] 0.0, 128
        %4159 = vxpose.xlu0.b32.cont [4/16] 0.0, 128
        %4160 = vxpose.xlu0.b32.cont [5/16] 0.0, 128
        %4161 = vxpose.xlu0.b32.cont [6/16] 0.0, 128
        %4162 = vxpose.xlu0.b32.cont [7/16] 0.0, 128
        %4163 = vxpose.xlu0.b32.cont [8/16] 0.0, 128
        %4164 = vxpose.xlu0.b32.cont [9/16] 0.0, 128
        %4165 = vxpose.xlu0.b32.cont [10/16] 0.0, 128
        %4166 = vxpose.xlu0.b32.cont [11/16] 0.0, 128
        %4167 = vxpose.xlu0.b32.cont [12/16] 0.0, 128
        %4168 = vxpose.xlu0.b32.cont [13/16] 0.0, 128
        %4169 = vxpose.xlu0.b32.cont [14/16] 0.0, 128
        %4170 = vxpose.xlu0.b32.cont [15/16] 0.0, 128
        %4171 = vxpose.xlu0.b32.end [16/16] 0.0, 128
        %v4172 = vpop.trf.xlu0
        %v4173 = vpop.trf.xlu0
        %v4174 = vpop.trf.xlu0
        %v4175 = vpop.trf.xlu0
        %v4176 = vpop.trf.xlu0
        %v4177 = vpop.trf.xlu0
        %v4178 = vpop.trf.xlu0
        %v4179 = vpop.trf.xlu0
        %v4180 = vpop.trf.xlu0
        %v4181 = vpop.trf.xlu0
        %v4182 = vpop.trf.xlu0
        %v4183 = vpop.trf.xlu0
        %v4184 = vpop.trf.xlu0
        %v4185 = vpop.trf.xlu0
        %v4186 = vpop.trf.xlu0
        %v4187 = vpop.trf.xlu0
        %4188 = vxpose.xlu0.b32.start [1/16] %v730, 128
        %4189 = vxpose.xlu0.b32.cont [2/16] 0.0, 128
        %4190 = vxpose.xlu0.b32.cont [3/16] 0.0, 128
        %4191 = vxpose.xlu0.b32.cont [4/16] 0.0, 128
        %4192 = vxpose.xlu0.b32.cont [5/16] 0.0, 128
        %4193 = vxpose.xlu0.b32.cont [6/16] 0.0, 128
        %4194 = vxpose.xlu0.b32.cont [7/16] 0.0, 128
        %4195 = vxpose.xlu0.b32.cont [8/16] 0.0, 128
        %4196 = vxpose.xlu0.b32.cont [9/16] 0.0, 128
        %4197 = vxpose.xlu0.b32.cont [10/16] 0.0, 128
        %4198 = vxpose.xlu0.b32.cont [11/16] 0.0, 128
        %4199 = vxpose.xlu0.b32.cont [12/16] 0.0, 128
        %4200 = vxpose.xlu0.b32.cont [13/16] 0.0, 128
        %4201 = vxpose.xlu0.b32.cont [14/16] 0.0, 128
        %4202 = vxpose.xlu0.b32.cont [15/16] 0.0, 128
        %4203 = vxpose.xlu0.b32.end [16/16] 0.0, 128
        %v4204 = vpop.trf.xlu0
        %v4205 = vpop.trf.xlu0
        %v4206 = vpop.trf.xlu0
        %v4207 = vpop.trf.xlu0
        %v4208 = vpop.trf.xlu0
        %v4209 = vpop.trf.xlu0
        %v4210 = vpop.trf.xlu0
        %v4211 = vpop.trf.xlu0
        %v4212 = vpop.trf.xlu0
        %v4213 = vpop.trf.xlu0
        %v4214 = vpop.trf.xlu0
        %v4215 = vpop.trf.xlu0
        %v4216 = vpop.trf.xlu0
        %v4217 = vpop.trf.xlu0
        %v4218 = vpop.trf.xlu0
        %v4219 = vpop.trf.xlu0
        %4220 = vxpose.xlu0.b32.start [1/16] %v731, 128
        %4221 = vxpose.xlu0.b32.cont [2/16] 0.0, 128
        %4222 = vxpose.xlu0.b32.cont [3/16] 0.0, 128
        %4223 = vxpose.xlu0.b32.cont [4/16] 0.0, 128
        %4224 = vxpose.xlu0.b32.cont [5/16] 0.0, 128
        %4225 = vxpose.xlu0.b32.cont [6/16] 0.0, 128
        %4226 = vxpose.xlu0.b32.cont [7/16] 0.0, 128
        %4227 = vxpose.xlu0.b32.cont [8/16] 0.0, 128
        %4228 = vxpose.xlu0.b32.cont [9/16] 0.0, 128
        %4229 = vxpose.xlu0.b32.cont [10/16] 0.0, 128
        %4230 = vxpose.xlu0.b32.cont [11/16] 0.0, 128
        %4231 = vxpose.xlu0.b32.cont [12/16] 0.0, 128
        %4232 = vxpose.xlu0.b32.cont [13/16] 0.0, 128
        %4233 = vxpose.xlu0.b32.cont [14/16] 0.0, 128
        %4234 = vxpose.xlu0.b32.cont [15/16] 0.0, 128
        %4235 = vxpose.xlu0.b32.end [16/16] 0.0, 128
        %v4236 = vpop.trf.xlu0
        %v4237 = vpop.trf.xlu0
        %v4238 = vpop.trf.xlu0
        %v4239 = vpop.trf.xlu0
        %v4240 = vpop.trf.xlu0
        %v4241 = vpop.trf.xlu0
        %v4242 = vpop.trf.xlu0
        %v4243 = vpop.trf.xlu0
        %v4244 = vpop.trf.xlu0
        %v4245 = vpop.trf.xlu0
        %v4246 = vpop.trf.xlu0
        %v4247 = vpop.trf.xlu0
        %v4248 = vpop.trf.xlu0
        %v4249 = vpop.trf.xlu0
        %v4250 = vpop.trf.xlu0
        %v4251 = vpop.trf.xlu0
        %4252 = vxpose.xlu0.b32.start [1/16] %v732, 128
        %4253 = vxpose.xlu0.b32.cont [2/16] 0.0, 128
        %4254 = vxpose.xlu0.b32.cont [3/16] 0.0, 128
        %4255 = vxpose.xlu0.b32.cont [4/16] 0.0, 128
        %4256 = vxpose.xlu0.b32.cont [5/16] 0.0, 128
        %4257 = vxpose.xlu0.b32.cont [6/16] 0.0, 128
        %4258 = vxpose.xlu0.b32.cont [7/16] 0.0, 128
        %4259 = vxpose.xlu0.b32.cont [8/16] 0.0, 128
        %4260 = vxpose.xlu0.b32.cont [9/16] 0.0, 128
        %4261 = vxpose.xlu0.b32.cont [10/16] 0.0, 128
        %4262 = vxpose.xlu0.b32.cont [11/16] 0.0, 128
        %4263 = vxpose.xlu0.b32.cont [12/16] 0.0, 128
        %4264 = vxpose.xlu0.b32.cont [13/16] 0.0, 128
        %4265 = vxpose.xlu0.b32.cont [14/16] 0.0, 128
        %4266 = vxpose.xlu0.b32.cont [15/16] 0.0, 128
        %4267 = vxpose.xlu0.b32.end [16/16] 0.0, 128
        %v4268 = vpop.trf.xlu0
        %v4269 = vpop.trf.xlu0
        %v4270 = vpop.trf.xlu0
        %v4271 = vpop.trf.xlu0
        %v4272 = vpop.trf.xlu0
        %v4273 = vpop.trf.xlu0
        %v4274 = vpop.trf.xlu0
        %v4275 = vpop.trf.xlu0
        %v4276 = vpop.trf.xlu0
        %v4277 = vpop.trf.xlu0
        %v4278 = vpop.trf.xlu0
        %v4279 = vpop.trf.xlu0
        %v4280 = vpop.trf.xlu0
        %v4281 = vpop.trf.xlu0
        %v4282 = vpop.trf.xlu0
        %v4283 = vpop.trf.xlu0
        %v4285 = vsel %vm881, %v4172, 0
        %v4288 = vsel %vm881, %v4173, 0
        %v4291 = vsel %vm881, %v4174, 0
        %v4294 = vsel %vm881, %v4175, 0
        %v4297 = vsel %vm881, %v4176, 0
        %v4300 = vsel %vm881, %v4177, 0
        %v4303 = vsel %vm881, %v4178, 0
        %v4306 = vsel %vm881, %v4179, 0
        %v4309 = vsel %vm881, %v4180, 0
        %v4312 = vsel %vm881, %v4181, 0
        %v4315 = vsel %vm881, %v4182, 0
        %v4318 = vsel %vm881, %v4183, 0
        %v4321 = vsel %vm881, %v4184, 0
        %v4324 = vsel %vm881, %v4185, 0
        %v4327 = vsel %vm881, %v4186, 0
        %v4330 = vsel %vm881, %v4187, 0
        %v4333 = vsel %vm881, %v4204, 0
        %v4336 = vsel %vm881, %v4205, 0
        %v4339 = vsel %vm881, %v4206, 0
        %v4342 = vsel %vm881, %v4207, 0
        %v4345 = vsel %vm881, %v4208, 0
        %v4348 = vsel %vm881, %v4209, 0
        %v4351 = vsel %vm881, %v4210, 0
        %v4354 = vsel %vm881, %v4211, 0
        %v4357 = vsel %vm881, %v4212, 0
        %v4360 = vsel %vm881, %v4213, 0
        %v4363 = vsel %vm881, %v4214, 0
        %v4366 = vsel %vm881, %v4215, 0
        %v4369 = vsel %vm881, %v4216, 0
        %v4372 = vsel %vm881, %v4217, 0
        %v4375 = vsel %vm881, %v4218, 0
        %v4378 = vsel %vm881, %v4219, 0
        %v4381 = vsel %vm881, %v4236, 0
        %v4384 = vsel %vm881, %v4237, 0
        %v4387 = vsel %vm881, %v4238, 0
        %v4390 = vsel %vm881, %v4239, 0
        %v4393 = vsel %vm881, %v4240, 0
        %v4396 = vsel %vm881, %v4241, 0
        %v4399 = vsel %vm881, %v4242, 0
        %v4402 = vsel %vm881, %v4243, 0
        %v4405 = vsel %vm881, %v4244, 0
        %v4408 = vsel %vm881, %v4245, 0
        %v4411 = vsel %vm881, %v4246, 0
        %v4414 = vsel %vm881, %v4247, 0
        %v4417 = vsel %vm881, %v4248, 0
        %v4420 = vsel %vm881, %v4249, 0
        %v4423 = vsel %vm881, %v4250, 0
        %v4426 = vsel %vm881, %v4251, 0
        %v4429 = vsel %vm881, %v4268, 0
        %v4432 = vsel %vm881, %v4269, 0
        %v4435 = vsel %vm881, %v4270, 0
        %v4438 = vsel %vm881, %v4271, 0
        %v4441 = vsel %vm881, %v4272, 0
        %v4444 = vsel %vm881, %v4273, 0
        %v4447 = vsel %vm881, %v4274, 0
        %v4450 = vsel %vm881, %v4275, 0
        %v4453 = vsel %vm881, %v4276, 0
        %v4456 = vsel %vm881, %v4277, 0
        %v4459 = vsel %vm881, %v4278, 0
        %v4462 = vsel %vm881, %v4279, 0
        %v4465 = vsel %vm881, %v4280, 0
        %v4468 = vsel %vm881, %v4281, 0
        %v4471 = vsel %vm881, %v4282, 0
        %v4474 = vsel %vm881, %v4283, 0
        %4476 = vmatprep.subr.mxu0 0.0
        %4477 = vmatpush1.msra.mxu0 0.0
        %4478 = vmatprep.subr.mxu0 0.0
        %4479 = vmatpush1.msra.mxu0 0.0
        %4480 = vmatprep.subr.mxu0 0.0
        %4481 = vmatpush1.msra.mxu0 0.0
        %4482 = vmatprep.subr.mxu0 0.0
        %4483 = vmatpush1.msra.mxu0 0.0
        %4484 = vmatprep.subr.mxu0 0.0
        %4485 = vmatpush1.msra.mxu0 0.0
        %4486 = vmatprep.subr.mxu0 0.0
        %4487 = vmatpush1.msra.mxu0 0.0
        %4488 = vmatprep.subr.mxu0 0.0
        %4489 = vmatpush1.msra.mxu0 0.0
        %4490 = vmatprep.subr.mxu0 0.0
        %4491 = vmatpush1.msra.mxu0 0.0
        %4492 = vmatprep.subr.mxu0 0.0
        %4493 = vmatpush1.msra.mxu0 0.0
        %4494 = vmatprep.subr.mxu0 0.0
        %4495 = vmatpush1.msra.mxu0 0.0
        %4496 = vmatprep.subr.mxu0 0.0
        %4497 = vmatpush1.msra.mxu0 0.0
        %4498 = vmatprep.subr.mxu0 0.0
        %4499 = vmatpush1.msra.mxu0 0.0
        %4500 = vmatprep.subr.mxu0 0.0
        %4501 = vmatpush1.msra.mxu0 0.0
        %4502 = vmatprep.subr.mxu0 0.0
        %4503 = vmatpush1.msra.mxu0 0.0
        %4504 = vmatprep.subr.mxu0 0.0
        %4505 = vmatpush1.msra.mxu0 0.0
        %4506 = vmatprep.subr.mxu0 %v715
        %4507 = vmatpush1.msra.mxu0 %v713
        %4508 = vmatprep.subr.mxu0 0.0
        %4509 = vmatpush2.msra.mxu0 0.0
        %4510 = vmatprep.subr.mxu0 0.0
        %4511 = vmatpush2.msra.mxu0 0.0
        %4512 = vmatprep.subr.mxu0 0.0
        %4513 = vmatpush2.msra.mxu0 0.0
        %4514 = vmatprep.subr.mxu0 0.0
        %4515 = vmatpush2.msra.mxu0 0.0
        %4516 = vmatprep.subr.mxu0 0.0
        %4517 = vmatpush2.msra.mxu0 0.0
        %4518 = vmatprep.subr.mxu0 0.0
        %4519 = vmatpush2.msra.mxu0 0.0
        %4520 = vmatprep.subr.mxu0 0.0
        %4521 = vmatpush2.msra.mxu0 0.0
        %4522 = vmatprep.subr.mxu0 0.0
        %4523 = vmatpush2.msra.mxu0 0.0
        %4524 = vmatprep.subr.mxu0 0.0
        %4525 = vmatpush2.msra.mxu0 0.0
        %4526 = vmatprep.subr.mxu0 0.0
        %4527 = vmatpush2.msra.mxu0 0.0
        %4528 = vmatprep.subr.mxu0 0.0
        %4529 = vmatpush2.msra.mxu0 0.0
        %4530 = vmatprep.subr.mxu0 0.0
        %4531 = vmatpush2.msra.mxu0 0.0
        %4532 = vmatprep.subr.mxu0 0.0
        %4533 = vmatpush2.msra.mxu0 0.0
        %4534 = vmatprep.subr.mxu0 0.0
        %4535 = vmatpush2.msra.mxu0 0.0
        %4536 = vmatprep.subr.mxu0 0.0
        %4537 = vmatpush2.msra.mxu0 0.0
        %4538 = vmatprep.subr.mxu0 0.0
        %4539 = vmatpush2.msra.mxu0 0.0
        %4540 = vmatprep.mubr.f32.mxu0 0.0
        %4541 = vmatmul.mubr.f32.gmra.mxu0 %v4285
        %v4542 = vpop.f32.mrf.mxu0
        %v4543 = vadd.f32 0.0, %v4542
        %v4544 = vpop.f32.mrf.mxu0
        %v4545 = vadd.f32 0.0, %v4544
        %4546 = vmatprep.mubr.f32.mxu0 0.0
        %4547 = vmatmul.mubr.f32.gmra.mxu0 %v4288
        %v4548 = vpop.f32.mrf.mxu0
        %v4549 = vadd.f32 0.0, %v4548
        %v4550 = vpop.f32.mrf.mxu0
        %v4551 = vadd.f32 0.0, %v4550
        %4552 = vmatprep.mubr.f32.mxu0 0.0
        %4553 = vmatmul.mubr.f32.gmra.mxu0 %v4291
        %v4554 = vpop.f32.mrf.mxu0
        %v4555 = vadd.f32 0.0, %v4554
        %v4556 = vpop.f32.mrf.mxu0
        %v4557 = vadd.f32 0.0, %v4556
        %4558 = vmatprep.mubr.f32.mxu0 0.0
        %4559 = vmatmul.mubr.f32.gmra.mxu0 %v4294
        %v4560 = vpop.f32.mrf.mxu0
        %v4561 = vadd.f32 0.0, %v4560
        %v4562 = vpop.f32.mrf.mxu0
        %v4563 = vadd.f32 0.0, %v4562
        %4564 = vmatprep.mubr.f32.mxu0 0.0
        %4565 = vmatmul.mubr.f32.gmra.mxu0 %v4297
        %v4566 = vpop.f32.mrf.mxu0
        %v4567 = vadd.f32 0.0, %v4566
        %v4568 = vpop.f32.mrf.mxu0
        %v4569 = vadd.f32 0.0, %v4568
        %4570 = vmatprep.mubr.f32.mxu0 0.0
        %4571 = vmatmul.mubr.f32.gmra.mxu0 %v4300
        %v4572 = vpop.f32.mrf.mxu0
        %v4573 = vadd.f32 0.0, %v4572
        %v4574 = vpop.f32.mrf.mxu0
        %v4575 = vadd.f32 0.0, %v4574
        %4576 = vmatprep.mubr.f32.mxu0 0.0
        %4577 = vmatmul.mubr.f32.gmra.mxu0 %v4303
        %v4578 = vpop.f32.mrf.mxu0
        %v4579 = vadd.f32 0.0, %v4578
        %v4580 = vpop.f32.mrf.mxu0
        %v4581 = vadd.f32 0.0, %v4580
        %4582 = vmatprep.mubr.f32.mxu0 0.0
        %4583 = vmatmul.mubr.f32.gmra.mxu0 %v4306
        %v4584 = vpop.f32.mrf.mxu0
        %v4585 = vadd.f32 0.0, %v4584
        %v4586 = vpop.f32.mrf.mxu0
        %v4587 = vadd.f32 0.0, %v4586
        %4588 = vmatprep.mubr.f32.mxu0 0.0
        %4589 = vmatmul.mubr.f32.gmra.mxu0 %v4309
        %v4590 = vpop.f32.mrf.mxu0
        %v4591 = vadd.f32 0.0, %v4590
        %v4592 = vpop.f32.mrf.mxu0
        %v4593 = vadd.f32 0.0, %v4592
        %4594 = vmatprep.mubr.f32.mxu0 0.0
        %4595 = vmatmul.mubr.f32.gmra.mxu0 %v4312
        %v4596 = vpop.f32.mrf.mxu0
        %v4597 = vadd.f32 0.0, %v4596
        %v4598 = vpop.f32.mrf.mxu0
        %v4599 = vadd.f32 0.0, %v4598
        %4600 = vmatprep.mubr.f32.mxu0 0.0
        %4601 = vmatmul.mubr.f32.gmra.mxu0 %v4315
        %v4602 = vpop.f32.mrf.mxu0
        %v4603 = vadd.f32 0.0, %v4602
        %v4604 = vpop.f32.mrf.mxu0
        %v4605 = vadd.f32 0.0, %v4604
        %4606 = vmatprep.mubr.f32.mxu0 0.0
        %4607 = vmatmul.mubr.f32.gmra.mxu0 %v4318
        %v4608 = vpop.f32.mrf.mxu0
        %v4609 = vadd.f32 0.0, %v4608
        %v4610 = vpop.f32.mrf.mxu0
        %v4611 = vadd.f32 0.0, %v4610
        %4612 = vmatprep.mubr.f32.mxu0 0.0
        %4613 = vmatmul.mubr.f32.gmra.mxu0 %v4321
        %v4614 = vpop.f32.mrf.mxu0
        %v4615 = vadd.f32 0.0, %v4614
        %v4616 = vpop.f32.mrf.mxu0
        %v4617 = vadd.f32 0.0, %v4616
        %4618 = vmatprep.mubr.f32.mxu0 0.0
        %4619 = vmatmul.mubr.f32.gmra.mxu0 %v4324
        %v4620 = vpop.f32.mrf.mxu0
        %v4621 = vadd.f32 0.0, %v4620
        %v4622 = vpop.f32.mrf.mxu0
        %v4623 = vadd.f32 0.0, %v4622
        %4624 = vmatprep.mubr.f32.mxu0 0.0
        %4625 = vmatmul.mubr.f32.gmra.mxu0 %v4327
        %v4626 = vpop.f32.mrf.mxu0
        %v4627 = vadd.f32 0.0, %v4626
        %v4628 = vpop.f32.mrf.mxu0
        %v4629 = vadd.f32 0.0, %v4628
        %4630 = vmatprep.mubr.f32.mxu0 0.0
        %4631 = vmatmul.mubr.f32.gmra.mxu0 %v4330
        %v4632 = vpop.f32.mrf.mxu0
        %v4633 = vadd.f32 0.0, %v4632
        %v4634 = vpop.f32.mrf.mxu0
        %v4635 = vadd.f32 0.0, %v4634
        %4636 = vmatprep.mubr.f32.mxu0 0.0
        %4637 = vmatmul.mubr.f32.gmra.mxu0 %v4333
        %v4638 = vpop.f32.mrf.mxu0
        %v4639 = vadd.f32 0.0, %v4638
        %v4640 = vpop.f32.mrf.mxu0
        %v4641 = vadd.f32 0.0, %v4640
        %4642 = vmatprep.mubr.f32.mxu0 0.0
        %4643 = vmatmul.mubr.f32.gmra.mxu0 %v4336
        %v4644 = vpop.f32.mrf.mxu0
        %v4645 = vadd.f32 0.0, %v4644
        %v4646 = vpop.f32.mrf.mxu0
        %v4647 = vadd.f32 0.0, %v4646
        %4648 = vmatprep.mubr.f32.mxu0 0.0
        %4649 = vmatmul.mubr.f32.gmra.mxu0 %v4339
        %v4650 = vpop.f32.mrf.mxu0
        %v4651 = vadd.f32 0.0, %v4650
        %v4652 = vpop.f32.mrf.mxu0
        %v4653 = vadd.f32 0.0, %v4652
        %4654 = vmatprep.mubr.f32.mxu0 0.0
        %4655 = vmatmul.mubr.f32.gmra.mxu0 %v4342
        %v4656 = vpop.f32.mrf.mxu0
        %v4657 = vadd.f32 0.0, %v4656
        %v4658 = vpop.f32.mrf.mxu0
        %v4659 = vadd.f32 0.0, %v4658
        %4660 = vmatprep.mubr.f32.mxu0 0.0
        %4661 = vmatmul.mubr.f32.gmra.mxu0 %v4345
        %v4662 = vpop.f32.mrf.mxu0
        %v4663 = vadd.f32 0.0, %v4662
        %v4664 = vpop.f32.mrf.mxu0
        %v4665 = vadd.f32 0.0, %v4664
        %4666 = vmatprep.mubr.f32.mxu0 0.0
        %4667 = vmatmul.mubr.f32.gmra.mxu0 %v4348
        %v4668 = vpop.f32.mrf.mxu0
        %v4669 = vadd.f32 0.0, %v4668
        %v4670 = vpop.f32.mrf.mxu0
        %v4671 = vadd.f32 0.0, %v4670
        %4672 = vmatprep.mubr.f32.mxu0 0.0
        %4673 = vmatmul.mubr.f32.gmra.mxu0 %v4351
        %v4674 = vpop.f32.mrf.mxu0
        %v4675 = vadd.f32 0.0, %v4674
        %v4676 = vpop.f32.mrf.mxu0
        %v4677 = vadd.f32 0.0, %v4676
        %4678 = vmatprep.mubr.f32.mxu0 0.0
        %4679 = vmatmul.mubr.f32.gmra.mxu0 %v4354
        %v4680 = vpop.f32.mrf.mxu0
        %v4681 = vadd.f32 0.0, %v4680
        %v4682 = vpop.f32.mrf.mxu0
        %v4683 = vadd.f32 0.0, %v4682
        %4684 = vmatprep.mubr.f32.mxu0 0.0
        %4685 = vmatmul.mubr.f32.gmra.mxu0 %v4357
        %v4686 = vpop.f32.mrf.mxu0
        %v4687 = vadd.f32 0.0, %v4686
        %v4688 = vpop.f32.mrf.mxu0
        %v4689 = vadd.f32 0.0, %v4688
        %4690 = vmatprep.mubr.f32.mxu0 0.0
        %4691 = vmatmul.mubr.f32.gmra.mxu0 %v4360
        %v4692 = vpop.f32.mrf.mxu0
        %v4693 = vadd.f32 0.0, %v4692
        %v4694 = vpop.f32.mrf.mxu0
        %v4695 = vadd.f32 0.0, %v4694
        %4696 = vmatprep.mubr.f32.mxu0 0.0
        %4697 = vmatmul.mubr.f32.gmra.mxu0 %v4363
        %v4698 = vpop.f32.mrf.mxu0
        %v4699 = vadd.f32 0.0, %v4698
        %v4700 = vpop.f32.mrf.mxu0
        %v4701 = vadd.f32 0.0, %v4700
        %4702 = vmatprep.mubr.f32.mxu0 0.0
        %4703 = vmatmul.mubr.f32.gmra.mxu0 %v4366
        %v4704 = vpop.f32.mrf.mxu0
        %v4705 = vadd.f32 0.0, %v4704
        %v4706 = vpop.f32.mrf.mxu0
        %v4707 = vadd.f32 0.0, %v4706
        %4708 = vmatprep.mubr.f32.mxu0 0.0
        %4709 = vmatmul.mubr.f32.gmra.mxu0 %v4369
        %v4710 = vpop.f32.mrf.mxu0
        %v4711 = vadd.f32 0.0, %v4710
        %v4712 = vpop.f32.mrf.mxu0
        %v4713 = vadd.f32 0.0, %v4712
        %4714 = vmatprep.mubr.f32.mxu0 0.0
        %4715 = vmatmul.mubr.f32.gmra.mxu0 %v4372
        %v4716 = vpop.f32.mrf.mxu0
        %v4717 = vadd.f32 0.0, %v4716
        %v4718 = vpop.f32.mrf.mxu0
        %v4719 = vadd.f32 0.0, %v4718
        %4720 = vmatprep.mubr.f32.mxu0 0.0
        %4721 = vmatmul.mubr.f32.gmra.mxu0 %v4375
        %v4722 = vpop.f32.mrf.mxu0
        %v4723 = vadd.f32 0.0, %v4722
        %v4724 = vpop.f32.mrf.mxu0
        %v4725 = vadd.f32 0.0, %v4724
        %4726 = vmatprep.mubr.f32.mxu0 0.0
        %4727 = vmatmul.mubr.f32.gmra.mxu0 %v4378
        %v4728 = vpop.f32.mrf.mxu0
        %v4729 = vadd.f32 0.0, %v4728
        %v4730 = vpop.f32.mrf.mxu0
        %v4731 = vadd.f32 0.0, %v4730
        %4732 = vmatprep.mubr.f32.mxu0 0.0
        %4733 = vmatmul.mubr.f32.gmra.mxu0 %v4381
        %v4734 = vpop.f32.mrf.mxu0
        %v4735 = vadd.f32 0.0, %v4734
        %v4736 = vpop.f32.mrf.mxu0
        %v4737 = vadd.f32 0.0, %v4736
        %4738 = vmatprep.mubr.f32.mxu0 0.0
        %4739 = vmatmul.mubr.f32.gmra.mxu0 %v4384
        %v4740 = vpop.f32.mrf.mxu0
        %v4741 = vadd.f32 0.0, %v4740
        %v4742 = vpop.f32.mrf.mxu0
        %v4743 = vadd.f32 0.0, %v4742
        %4744 = vmatprep.mubr.f32.mxu0 0.0
        %4745 = vmatmul.mubr.f32.gmra.mxu0 %v4387
        %v4746 = vpop.f32.mrf.mxu0
        %v4747 = vadd.f32 0.0, %v4746
        %v4748 = vpop.f32.mrf.mxu0
        %v4749 = vadd.f32 0.0, %v4748
        %4750 = vmatprep.mubr.f32.mxu0 0.0
        %4751 = vmatmul.mubr.f32.gmra.mxu0 %v4390
        %v4752 = vpop.f32.mrf.mxu0
        %v4753 = vadd.f32 0.0, %v4752
        %v4754 = vpop.f32.mrf.mxu0
        %v4755 = vadd.f32 0.0, %v4754
        %4756 = vmatprep.mubr.f32.mxu0 0.0
        %4757 = vmatmul.mubr.f32.gmra.mxu0 %v4393
        %v4758 = vpop.f32.mrf.mxu0
        %v4759 = vadd.f32 0.0, %v4758
        %v4760 = vpop.f32.mrf.mxu0
        %v4761 = vadd.f32 0.0, %v4760
        %4762 = vmatprep.mubr.f32.mxu0 0.0
        %4763 = vmatmul.mubr.f32.gmra.mxu0 %v4396
        %v4764 = vpop.f32.mrf.mxu0
        %v4765 = vadd.f32 0.0, %v4764
        %v4766 = vpop.f32.mrf.mxu0
        %v4767 = vadd.f32 0.0, %v4766
        %4768 = vmatprep.mubr.f32.mxu0 0.0
        %4769 = vmatmul.mubr.f32.gmra.mxu0 %v4399
        %v4770 = vpop.f32.mrf.mxu0
        %v4771 = vadd.f32 0.0, %v4770
        %v4772 = vpop.f32.mrf.mxu0
        %v4773 = vadd.f32 0.0, %v4772
        %4774 = vmatprep.mubr.f32.mxu0 0.0
        %4775 = vmatmul.mubr.f32.gmra.mxu0 %v4402
        %v4776 = vpop.f32.mrf.mxu0
        %v4777 = vadd.f32 0.0, %v4776
        %v4778 = vpop.f32.mrf.mxu0
        %v4779 = vadd.f32 0.0, %v4778
        %4780 = vmatprep.mubr.f32.mxu0 0.0
        %4781 = vmatmul.mubr.f32.gmra.mxu0 %v4405
        %v4782 = vpop.f32.mrf.mxu0
        %v4783 = vadd.f32 0.0, %v4782
        %v4784 = vpop.f32.mrf.mxu0
        %v4785 = vadd.f32 0.0, %v4784
        %4786 = vmatprep.mubr.f32.mxu0 0.0
        %4787 = vmatmul.mubr.f32.gmra.mxu0 %v4408
        %v4788 = vpop.f32.mrf.mxu0
        %v4789 = vadd.f32 0.0, %v4788
        %v4790 = vpop.f32.mrf.mxu0
        %v4791 = vadd.f32 0.0, %v4790
        %4792 = vmatprep.mubr.f32.mxu0 0.0
        %4793 = vmatmul.mubr.f32.gmra.mxu0 %v4411
        %v4794 = vpop.f32.mrf.mxu0
        %v4795 = vadd.f32 0.0, %v4794
        %v4796 = vpop.f32.mrf.mxu0
        %v4797 = vadd.f32 0.0, %v4796
        %4798 = vmatprep.mubr.f32.mxu0 0.0
        %4799 = vmatmul.mubr.f32.gmra.mxu0 %v4414
        %v4800 = vpop.f32.mrf.mxu0
        %v4801 = vadd.f32 0.0, %v4800
        %v4802 = vpop.f32.mrf.mxu0
        %v4803 = vadd.f32 0.0, %v4802
        %4804 = vmatprep.mubr.f32.mxu0 0.0
        %4805 = vmatmul.mubr.f32.gmra.mxu0 %v4417
        %v4806 = vpop.f32.mrf.mxu0
        %v4807 = vadd.f32 0.0, %v4806
        %v4808 = vpop.f32.mrf.mxu0
        %v4809 = vadd.f32 0.0, %v4808
        %4810 = vmatprep.mubr.f32.mxu0 0.0
        %4811 = vmatmul.mubr.f32.gmra.mxu0 %v4420
        %v4812 = vpop.f32.mrf.mxu0
        %v4813 = vadd.f32 0.0, %v4812
        %v4814 = vpop.f32.mrf.mxu0
        %v4815 = vadd.f32 0.0, %v4814
        %4816 = vmatprep.mubr.f32.mxu0 0.0
        %4817 = vmatmul.mubr.f32.gmra.mxu0 %v4423
        %v4818 = vpop.f32.mrf.mxu0
        %v4819 = vadd.f32 0.0, %v4818
        %v4820 = vpop.f32.mrf.mxu0
        %v4821 = vadd.f32 0.0, %v4820
        %4822 = vmatprep.mubr.f32.mxu0 0.0
        %4823 = vmatmul.mubr.f32.gmra.mxu0 %v4426
        %v4824 = vpop.f32.mrf.mxu0
        %v4825 = vadd.f32 0.0, %v4824
        %v4826 = vpop.f32.mrf.mxu0
        %v4827 = vadd.f32 0.0, %v4826
        %4828 = vmatprep.mubr.f32.mxu0 0.0
        %4829 = vmatmul.mubr.f32.gmra.mxu0 %v4429
        %v4830 = vpop.f32.mrf.mxu0
        %v4831 = vadd.f32 0.0, %v4830
        %v4832 = vpop.f32.mrf.mxu0
        %v4833 = vadd.f32 0.0, %v4832
        %4834 = vmatprep.mubr.f32.mxu0 0.0
        %4835 = vmatmul.mubr.f32.gmra.mxu0 %v4432
        %v4836 = vpop.f32.mrf.mxu0
        %v4837 = vadd.f32 0.0, %v4836
        %v4838 = vpop.f32.mrf.mxu0
        %v4839 = vadd.f32 0.0, %v4838
        %4840 = vmatprep.mubr.f32.mxu0 0.0
        %4841 = vmatmul.mubr.f32.gmra.mxu0 %v4435
        %v4842 = vpop.f32.mrf.mxu0
        %v4843 = vadd.f32 0.0, %v4842
        %v4844 = vpop.f32.mrf.mxu0
        %v4845 = vadd.f32 0.0, %v4844
        %4846 = vmatprep.mubr.f32.mxu0 0.0
        %4847 = vmatmul.mubr.f32.gmra.mxu0 %v4438
        %v4848 = vpop.f32.mrf.mxu0
        %v4849 = vadd.f32 0.0, %v4848
        %v4850 = vpop.f32.mrf.mxu0
        %v4851 = vadd.f32 0.0, %v4850
        %4852 = vmatprep.mubr.f32.mxu0 0.0
        %4853 = vmatmul.mubr.f32.gmra.mxu0 %v4441
        %v4854 = vpop.f32.mrf.mxu0
        %v4855 = vadd.f32 0.0, %v4854
        %v4856 = vpop.f32.mrf.mxu0
        %v4857 = vadd.f32 0.0, %v4856
        %4858 = vmatprep.mubr.f32.mxu0 0.0
        %4859 = vmatmul.mubr.f32.gmra.mxu0 %v4444
        %v4860 = vpop.f32.mrf.mxu0
        %v4861 = vadd.f32 0.0, %v4860
        %v4862 = vpop.f32.mrf.mxu0
        %v4863 = vadd.f32 0.0, %v4862
        %4864 = vmatprep.mubr.f32.mxu0 0.0
        %4865 = vmatmul.mubr.f32.gmra.mxu0 %v4447
        %v4866 = vpop.f32.mrf.mxu0
        %v4867 = vadd.f32 0.0, %v4866
        %v4868 = vpop.f32.mrf.mxu0
        %v4869 = vadd.f32 0.0, %v4868
        %4870 = vmatprep.mubr.f32.mxu0 0.0
        %4871 = vmatmul.mubr.f32.gmra.mxu0 %v4450
        %v4872 = vpop.f32.mrf.mxu0
        %v4873 = vadd.f32 0.0, %v4872
        %v4874 = vpop.f32.mrf.mxu0
        %v4875 = vadd.f32 0.0, %v4874
        %4876 = vmatprep.mubr.f32.mxu0 0.0
        %4877 = vmatmul.mubr.f32.gmra.mxu0 %v4453
        %v4878 = vpop.f32.mrf.mxu0
        %v4879 = vadd.f32 0.0, %v4878
        %v4880 = vpop.f32.mrf.mxu0
        %v4881 = vadd.f32 0.0, %v4880
        %4882 = vmatprep.mubr.f32.mxu0 0.0
        %4883 = vmatmul.mubr.f32.gmra.mxu0 %v4456
        %v4884 = vpop.f32.mrf.mxu0
        %v4885 = vadd.f32 0.0, %v4884
        %v4886 = vpop.f32.mrf.mxu0
        %v4887 = vadd.f32 0.0, %v4886
        %4888 = vmatprep.mubr.f32.mxu0 0.0
        %4889 = vmatmul.mubr.f32.gmra.mxu0 %v4459
        %v4890 = vpop.f32.mrf.mxu0
        %v4891 = vadd.f32 0.0, %v4890
        %v4892 = vpop.f32.mrf.mxu0
        %v4893 = vadd.f32 0.0, %v4892
        %4894 = vmatprep.mubr.f32.mxu0 0.0
        %4895 = vmatmul.mubr.f32.gmra.mxu0 %v4462
        %v4896 = vpop.f32.mrf.mxu0
        %v4897 = vadd.f32 0.0, %v4896
        %v4898 = vpop.f32.mrf.mxu0
        %v4899 = vadd.f32 0.0, %v4898
        %4900 = vmatprep.mubr.f32.mxu0 0.0
        %4901 = vmatmul.mubr.f32.gmra.mxu0 %v4465
        %v4902 = vpop.f32.mrf.mxu0
        %v4903 = vadd.f32 0.0, %v4902
        %v4904 = vpop.f32.mrf.mxu0
        %v4905 = vadd.f32 0.0, %v4904
        %4906 = vmatprep.mubr.f32.mxu0 0.0
        %4907 = vmatmul.mubr.f32.gmra.mxu0 %v4468
        %v4908 = vpop.f32.mrf.mxu0
        %v4909 = vadd.f32 0.0, %v4908
        %v4910 = vpop.f32.mrf.mxu0
        %v4911 = vadd.f32 0.0, %v4910
        %4912 = vmatprep.mubr.f32.mxu0 0.0
        %4913 = vmatmul.mubr.f32.gmra.mxu0 %v4471
        %v4914 = vpop.f32.mrf.mxu0
        %v4915 = vadd.f32 0.0, %v4914
        %v4916 = vpop.f32.mrf.mxu0
        %v4917 = vadd.f32 0.0, %v4916
        %4918 = vmatprep.mubr.f32.mxu0 0.0
        %4919 = vmatmul.mubr.f32.gmra.mxu0 %v4474
        %v4920 = vpop.f32.mrf.mxu0
        %v4921 = vadd.f32 0.0, %v4920
        %v4922 = vpop.f32.mrf.mxu0
        %v4923 = vadd.f32 0.0, %v4922
        %4924 = vdwg.mxu0
        %v4925 = vmax.f32 %v4543, %v4555
        %v4926 = vmax.f32 %v4549, %v4561
        %v4927 = vmax.f32 %v4925, %v4567
        %v4928 = vmax.f32 %v4926, %v4573
        %v4929 = vmax.f32 %v4927, %v4579
        %v4930 = vmax.f32 %v4928, %v4585
        %v4931 = vmax.f32 %v4929, %v4591
        %v4932 = vmax.f32 %v4930, %v4597
        %v4933 = vmax.f32 %v4931, %v4603
        %v4934 = vmax.f32 %v4932, %v4609
        %v4935 = vmax.f32 %v4933, %v4615
        %v4936 = vmax.f32 %v4934, %v4621
        %v4937 = vmax.f32 %v4935, %v4627
        %v4938 = vmax.f32 %v4936, %v4633
        %v4939 = vmax.f32 %v4937, %v4639
        %v4940 = vmax.f32 %v4938, %v4645
        %v4941 = vmax.f32 %v4939, %v4651
        %v4942 = vmax.f32 %v4940, %v4657
        %v4943 = vmax.f32 %v4941, %v4663
        %v4944 = vmax.f32 %v4942, %v4669
        %v4945 = vmax.f32 %v4943, %v4675
        %v4946 = vmax.f32 %v4944, %v4681
        %v4947 = vmax.f32 %v4945, %v4687
        %v4948 = vmax.f32 %v4946, %v4693
        %v4949 = vmax.f32 %v4947, %v4699
        %v4950 = vmax.f32 %v4948, %v4705
        %v4951 = vmax.f32 %v4949, %v4711
        %v4952 = vmax.f32 %v4950, %v4717
        %v4953 = vmax.f32 %v4951, %v4723
        %v4954 = vmax.f32 %v4952, %v4729
        %v4955 = vmax.f32 %v4953, %v4735
        %v4956 = vmax.f32 %v4954, %v4741
        %v4957 = vmax.f32 %v4955, %v4747
        %v4958 = vmax.f32 %v4956, %v4753
        %v4959 = vmax.f32 %v4957, %v4759
        %v4960 = vmax.f32 %v4958, %v4765
        %v4961 = vmax.f32 %v4959, %v4771
        %v4962 = vmax.f32 %v4960, %v4777
        %v4963 = vmax.f32 %v4961, %v4783
        %v4964 = vmax.f32 %v4962, %v4789
        %v4965 = vmax.f32 %v4963, %v4795
        %v4966 = vmax.f32 %v4964, %v4801
        %v4967 = vmax.f32 %v4965, %v4807
        %v4968 = vmax.f32 %v4966, %v4813
        %v4969 = vmax.f32 %v4967, %v4819
        %v4970 = vmax.f32 %v4968, %v4825
        %v4971 = vmax.f32 %v4969, %v4831
        %v4972 = vmax.f32 %v4970, %v4837
        %v4973 = vmax.f32 %v4971, %v4843
        %v4974 = vmax.f32 %v4972, %v4849
        %v4975 = vmax.f32 %v4973, %v4855
        %v4976 = vmax.f32 %v4974, %v4861
        %v4977 = vmax.f32 %v4975, %v4867
        %v4978 = vmax.f32 %v4976, %v4873
        %v4979 = vmax.f32 %v4977, %v4879
        %v4980 = vmax.f32 %v4978, %v4885
        %v4981 = vmax.f32 %v4979, %v4891
        %v4982 = vmax.f32 %v4980, %v4897
        %v4983 = vmax.f32 %v4981, %v4903
        %v4984 = vmax.f32 %v4982, %v4909
        %v4985 = vmax.f32 %v4983, %v4915
        %v4986 = vmax.f32 %v4984, %v4921
        %v4987 = vmax.f32 %v4985, %v4986
        %v4988 = vrot.slane %v4987, 4
        %v4989 = vmax.f32 %v4987, %v4988
        %v4990 = vrot.slane %v4989, 2
        %v4991 = vmax.f32 %v4989, %v4990
        %v4992 = vrot.slane %v4991, 1
        %v4993 = vmax.f32 %v4991, %v4992
        %v4994 = vmax.f32 %v4545, %v4557
        %v4995 = vmax.f32 %v4551, %v4563
        %v4996 = vmax.f32 %v4994, %v4569
        %v4997 = vmax.f32 %v4995, %v4575
        %v4998 = vmax.f32 %v4996, %v4581
        %v4999 = vmax.f32 %v4997, %v4587
        %v5000 = vmax.f32 %v4998, %v4593
        %v5001 = vmax.f32 %v4999, %v4599
        %v5002 = vmax.f32 %v5000, %v4605
        %v5003 = vmax.f32 %v5001, %v4611
        %v5004 = vmax.f32 %v5002, %v4617
        %v5005 = vmax.f32 %v5003, %v4623
        %v5006 = vmax.f32 %v5004, %v4629
        %v5007 = vmax.f32 %v5005, %v4635
        %v5008 = vmax.f32 %v5006, %v4641
        %v5009 = vmax.f32 %v5007, %v4647
        %v5010 = vmax.f32 %v5008, %v4653
        %v5011 = vmax.f32 %v5009, %v4659
        %v5012 = vmax.f32 %v5010, %v4665
        %v5013 = vmax.f32 %v5011, %v4671
        %v5014 = vmax.f32 %v5012, %v4677
        %v5015 = vmax.f32 %v5013, %v4683
        %v5016 = vmax.f32 %v5014, %v4689
        %v5017 = vmax.f32 %v5015, %v4695
        %v5018 = vmax.f32 %v5016, %v4701
        %v5019 = vmax.f32 %v5017, %v4707
        %v5020 = vmax.f32 %v5018, %v4713
        %v5021 = vmax.f32 %v5019, %v4719
        %v5022 = vmax.f32 %v5020, %v4725
        %v5023 = vmax.f32 %v5021, %v4731
        %v5024 = vmax.f32 %v5022, %v4737
        %v5025 = vmax.f32 %v5023, %v4743
        %v5026 = vmax.f32 %v5024, %v4749
        %v5027 = vmax.f32 %v5025, %v4755
        %v5028 = vmax.f32 %v5026, %v4761
        %v5029 = vmax.f32 %v5027, %v4767
        %v5030 = vmax.f32 %v5028, %v4773
        %v5031 = vmax.f32 %v5029, %v4779
        %v5032 = vmax.f32 %v5030, %v4785
        %v5033 = vmax.f32 %v5031, %v4791
        %v5034 = vmax.f32 %v5032, %v4797
        %v5035 = vmax.f32 %v5033, %v4803
        %v5036 = vmax.f32 %v5034, %v4809
        %v5037 = vmax.f32 %v5035, %v4815
        %v5038 = vmax.f32 %v5036, %v4821
        %v5039 = vmax.f32 %v5037, %v4827
        %v5040 = vmax.f32 %v5038, %v4833
        %v5041 = vmax.f32 %v5039, %v4839
        %v5042 = vmax.f32 %v5040, %v4845
        %v5043 = vmax.f32 %v5041, %v4851
        %v5044 = vmax.f32 %v5042, %v4857
        %v5045 = vmax.f32 %v5043, %v4863
        %v5046 = vmax.f32 %v5044, %v4869
        %v5047 = vmax.f32 %v5045, %v4875
        %v5048 = vmax.f32 %v5046, %v4881
        %v5049 = vmax.f32 %v5047, %v4887
        %v5050 = vmax.f32 %v5048, %v4893
        %v5051 = vmax.f32 %v5049, %v4899
        %v5052 = vmax.f32 %v5050, %v4905
        %v5053 = vmax.f32 %v5051, %v4911
        %v5054 = vmax.f32 %v5052, %v4917
        %v5055 = vmax.f32 %v5053, %v4923
        %v5056 = vmax.f32 %v5054, %v5055
        %v5057 = vrot.slane %v5056, 4
        %v5058 = vmax.f32 %v5056, %v5057
        %v5059 = vrot.slane %v5058, 2
        %v5060 = vmax.f32 %v5058, %v5059
        %v5061 = vrot.slane %v5060, 1
        %v5062 = vmax.f32 %v5060, %v5061
        %v5063 = vsub.f32 %v4543, %v4993
        %v5064 = vsub.f32 %v4545, %v5062
        %v5065 = vsub.f32 %v4549, %v4993
        %v5066 = vsub.f32 %v4551, %v5062
        %v5067 = vsub.f32 %v4555, %v4993
        %v5068 = vsub.f32 %v4557, %v5062
        %v5069 = vsub.f32 %v4561, %v4993
        %v5070 = vsub.f32 %v4563, %v5062
        %v5071 = vsub.f32 %v4567, %v4993
        %v5072 = vsub.f32 %v4569, %v5062
        %v5073 = vsub.f32 %v4573, %v4993
        %v5074 = vsub.f32 %v4575, %v5062
        %v5075 = vsub.f32 %v4579, %v4993
        %v5076 = vsub.f32 %v4581, %v5062
        %v5077 = vsub.f32 %v4585, %v4993
        %v5078 = vsub.f32 %v4587, %v5062
        %v5079 = vsub.f32 %v4591, %v4993
        %v5080 = vsub.f32 %v4593, %v5062
        %v5081 = vsub.f32 %v4597, %v4993
        %v5082 = vsub.f32 %v4599, %v5062
        %v5083 = vsub.f32 %v4603, %v4993
        %v5084 = vsub.f32 %v4605, %v5062
        %v5085 = vsub.f32 %v4609, %v4993
        %v5086 = vsub.f32 %v4611, %v5062
        %v5087 = vsub.f32 %v4615, %v4993
        %v5088 = vsub.f32 %v4617, %v5062
        %v5089 = vsub.f32 %v4621, %v4993
        %v5090 = vsub.f32 %v4623, %v5062
        %v5091 = vsub.f32 %v4627, %v4993
        %v5092 = vsub.f32 %v4629, %v5062
        %v5093 = vsub.f32 %v4633, %v4993
        %v5094 = vsub.f32 %v4635, %v5062
        %v5095 = vsub.f32 %v4639, %v4993
        %v5096 = vsub.f32 %v4641, %v5062
        %v5097 = vsub.f32 %v4645, %v4993
        %v5098 = vsub.f32 %v4647, %v5062
        %v5099 = vsub.f32 %v4651, %v4993
        %v5100 = vsub.f32 %v4653, %v5062
        %v5101 = vsub.f32 %v4657, %v4993
        %v5102 = vsub.f32 %v4659, %v5062
        %v5103 = vsub.f32 %v4663, %v4993
        %v5104 = vsub.f32 %v4665, %v5062
        %v5105 = vsub.f32 %v4669, %v4993
        %v5106 = vsub.f32 %v4671, %v5062
        %v5107 = vsub.f32 %v4675, %v4993
        %v5108 = vsub.f32 %v4677, %v5062
        %v5109 = vsub.f32 %v4681, %v4993
        %v5110 = vsub.f32 %v4683, %v5062
        %v5111 = vsub.f32 %v4687, %v4993
        %v5112 = vsub.f32 %v4689, %v5062
        %v5113 = vsub.f32 %v4693, %v4993
        %v5114 = vsub.f32 %v4695, %v5062
        %v5115 = vsub.f32 %v4699, %v4993
        %v5116 = vsub.f32 %v4701, %v5062
        %v5117 = vsub.f32 %v4705, %v4993
        %v5118 = vsub.f32 %v4707, %v5062
        %v5119 = vsub.f32 %v4711, %v4993
        %v5120 = vsub.f32 %v4713, %v5062
        %v5121 = vsub.f32 %v4717, %v4993
        %v5122 = vsub.f32 %v4719, %v5062
        %v5123 = vsub.f32 %v4723, %v4993
        %v5124 = vsub.f32 %v4725, %v5062
        %v5125 = vsub.f32 %v4729, %v4993
        %v5126 = vsub.f32 %v4731, %v5062
        %v5127 = vsub.f32 %v4735, %v4993
        %v5128 = vsub.f32 %v4737, %v5062
        %v5129 = vsub.f32 %v4741, %v4993
        %v5130 = vsub.f32 %v4743, %v5062
        %v5131 = vsub.f32 %v4747, %v4993
        %v5132 = vsub.f32 %v4749, %v5062
        %v5133 = vsub.f32 %v4753, %v4993
        %v5134 = vsub.f32 %v4755, %v5062
        %v5135 = vsub.f32 %v4759, %v4993
        %v5136 = vsub.f32 %v4761, %v5062
        %v5137 = vsub.f32 %v4765, %v4993
        %v5138 = vsub.f32 %v4767, %v5062
        %v5139 = vsub.f32 %v4771, %v4993
        %v5140 = vsub.f32 %v4773, %v5062
        %v5141 = vsub.f32 %v4777, %v4993
        %v5142 = vsub.f32 %v4779, %v5062
        %v5143 = vsub.f32 %v4783, %v4993
        %v5144 = vsub.f32 %v4785, %v5062
        %v5145 = vsub.f32 %v4789, %v4993
        %v5146 = vsub.f32 %v4791, %v5062
        %v5147 = vsub.f32 %v4795, %v4993
        %v5148 = vsub.f32 %v4797, %v5062
        %v5149 = vsub.f32 %v4801, %v4993
        %v5150 = vsub.f32 %v4803, %v5062
        %v5151 = vsub.f32 %v4807, %v4993
        %v5152 = vsub.f32 %v4809, %v5062
        %v5153 = vsub.f32 %v4813, %v4993
        %v5154 = vsub.f32 %v4815, %v5062
        %v5155 = vsub.f32 %v4819, %v4993
        %v5156 = vsub.f32 %v4821, %v5062
        %v5157 = vsub.f32 %v4825, %v4993
        %v5158 = vsub.f32 %v4827, %v5062
        %v5159 = vsub.f32 %v4831, %v4993
        %v5160 = vsub.f32 %v4833, %v5062
        %v5161 = vsub.f32 %v4837, %v4993
        %v5162 = vsub.f32 %v4839, %v5062
        %v5163 = vsub.f32 %v4843, %v4993
        %v5164 = vsub.f32 %v4845, %v5062
        %v5165 = vsub.f32 %v4849, %v4993
        %v5166 = vsub.f32 %v4851, %v5062
        %v5167 = vsub.f32 %v4855, %v4993
        %v5168 = vsub.f32 %v4857, %v5062
        %v5169 = vsub.f32 %v4861, %v4993
        %v5170 = vsub.f32 %v4863, %v5062
        %v5171 = vsub.f32 %v4867, %v4993
        %v5172 = vsub.f32 %v4869, %v5062
        %v5173 = vsub.f32 %v4873, %v4993
        %v5174 = vsub.f32 %v4875, %v5062
        %v5175 = vsub.f32 %v4879, %v4993
        %v5176 = vsub.f32 %v4881, %v5062
        %v5177 = vsub.f32 %v4885, %v4993
        %v5178 = vsub.f32 %v4887, %v5062
        %v5179 = vsub.f32 %v4891, %v4993
        %v5180 = vsub.f32 %v4893, %v5062
        %v5181 = vsub.f32 %v4897, %v4993
        %v5182 = vsub.f32 %v4899, %v5062
        %v5183 = vsub.f32 %v4903, %v4993
        %v5184 = vsub.f32 %v4905, %v5062
        %v5185 = vsub.f32 %v4909, %v4993
        %v5186 = vsub.f32 %v4911, %v5062
        %v5187 = vsub.f32 %v4915, %v4993
        %v5188 = vsub.f32 %v4917, %v5062
        %v5189 = vsub.f32 %v4921, %v4993
        %v5190 = vsub.f32 %v4923, %v5062
        %v5191 = vmul.f32 %v5063, 1.442695
        %v5192 = vpow.pop %v5191
        %v5193 = vmul.f32 %v5064, 1.442695
        %v5194 = vpow.pop %v5193
        %v5195 = vmul.f32 %v5065, 1.442695
        %v5196 = vpow.pop %v5195
        %v5197 = vmul.f32 %v5066, 1.442695
        %v5198 = vpow.pop %v5197
        %v5199 = vmul.f32 %v5067, 1.442695
        %v5200 = vpow.pop %v5199
        %v5201 = vmul.f32 %v5068, 1.442695
        %v5202 = vpow.pop %v5201
        %v5203 = vmul.f32 %v5069, 1.442695
        %v5204 = vpow.pop %v5203
        %v5205 = vmul.f32 %v5070, 1.442695
        %v5206 = vpow.pop %v5205
        %v5207 = vmul.f32 %v5071, 1.442695
        %v5208 = vpow.pop %v5207
        %v5209 = vmul.f32 %v5072, 1.442695
        %v5210 = vpow.pop %v5209
        %v5211 = vmul.f32 %v5073, 1.442695
        %v5212 = vpow.pop %v5211
        %v5213 = vmul.f32 %v5074, 1.442695
        %v5214 = vpow.pop %v5213
        %v5215 = vmul.f32 %v5075, 1.442695
        %v5216 = vpow.pop %v5215
        %v5217 = vmul.f32 %v5076, 1.442695
        %v5218 = vpow.pop %v5217
        %v5219 = vmul.f32 %v5077, 1.442695
        %v5220 = vpow.pop %v5219
        %v5221 = vmul.f32 %v5078, 1.442695
        %v5222 = vpow.pop %v5221
        %v5223 = vmul.f32 %v5079, 1.442695
        %v5224 = vpow.pop %v5223
        %v5225 = vmul.f32 %v5080, 1.442695
        %v5226 = vpow.pop %v5225
        %v5227 = vmul.f32 %v5081, 1.442695
        %v5228 = vpow.pop %v5227
        %v5229 = vmul.f32 %v5082, 1.442695
        %v5230 = vpow.pop %v5229
        %v5231 = vmul.f32 %v5083, 1.442695
        %v5232 = vpow.pop %v5231
        %v5233 = vmul.f32 %v5084, 1.442695
        %v5234 = vpow.pop %v5233
        %v5235 = vmul.f32 %v5085, 1.442695
        %v5236 = vpow.pop %v5235
        %v5237 = vmul.f32 %v5086, 1.442695
        %v5238 = vpow.pop %v5237
        %v5239 = vmul.f32 %v5087, 1.442695
        %v5240 = vpow.pop %v5239
        %v5241 = vmul.f32 %v5088, 1.442695
        %v5242 = vpow.pop %v5241
        %v5243 = vmul.f32 %v5089, 1.442695
        %v5244 = vpow.pop %v5243
        %v5245 = vmul.f32 %v5090, 1.442695
        %v5246 = vpow.pop %v5245
        %v5247 = vmul.f32 %v5091, 1.442695
        %v5248 = vpow.pop %v5247
        %v5249 = vmul.f32 %v5092, 1.442695
        %v5250 = vpow.pop %v5249
        %v5251 = vmul.f32 %v5093, 1.442695
        %v5252 = vpow.pop %v5251
        %v5253 = vmul.f32 %v5094, 1.442695
        %v5254 = vpow.pop %v5253
        %v5255 = vmul.f32 %v5095, 1.442695
        %v5256 = vpow.pop %v5255
        %v5257 = vmul.f32 %v5096, 1.442695
        %v5258 = vpow.pop %v5257
        %v5259 = vmul.f32 %v5097, 1.442695
        %v5260 = vpow.pop %v5259
        %v5261 = vmul.f32 %v5098, 1.442695
        %v5262 = vpow.pop %v5261
        %v5263 = vmul.f32 %v5099, 1.442695
        %v5264 = vpow.pop %v5263
        %v5265 = vmul.f32 %v5100, 1.442695
        %v5266 = vpow.pop %v5265
        %v5267 = vmul.f32 %v5101, 1.442695
        %v5268 = vpow.pop %v5267
        %v5269 = vmul.f32 %v5102, 1.442695
        %v5270 = vpow.pop %v5269
        %v5271 = vmul.f32 %v5103, 1.442695
        %v5272 = vpow.pop %v5271
        %v5273 = vmul.f32 %v5104, 1.442695
        %v5274 = vpow.pop %v5273
        %v5275 = vmul.f32 %v5105, 1.442695
        %v5276 = vpow.pop %v5275
        %v5277 = vmul.f32 %v5106, 1.442695
        %v5278 = vpow.pop %v5277
        %v5279 = vmul.f32 %v5107, 1.442695
        %v5280 = vpow.pop %v5279
        %v5281 = vmul.f32 %v5108, 1.442695
        %v5282 = vpow.pop %v5281
        %v5283 = vmul.f32 %v5109, 1.442695
        %v5284 = vpow.pop %v5283
        %v5285 = vmul.f32 %v5110, 1.442695
        %v5286 = vpow.pop %v5285
        %v5287 = vmul.f32 %v5111, 1.442695
        %v5288 = vpow.pop %v5287
        %v5289 = vmul.f32 %v5112, 1.442695
        %v5290 = vpow.pop %v5289
        %v5291 = vmul.f32 %v5113, 1.442695
        %v5292 = vpow.pop %v5291
        %v5293 = vmul.f32 %v5114, 1.442695
        %v5294 = vpow.pop %v5293
        %v5295 = vmul.f32 %v5115, 1.442695
        %v5296 = vpow.pop %v5295
        %v5297 = vmul.f32 %v5116, 1.442695
        %v5298 = vpow.pop %v5297
        %v5299 = vmul.f32 %v5117, 1.442695
        %v5300 = vpow.pop %v5299
        %v5301 = vmul.f32 %v5118, 1.442695
        %v5302 = vpow.pop %v5301
        %v5303 = vmul.f32 %v5119, 1.442695
        %v5304 = vpow.pop %v5303
        %v5305 = vmul.f32 %v5120, 1.442695
        %v5306 = vpow.pop %v5305
        %v5307 = vmul.f32 %v5121, 1.442695
        %v5308 = vpow.pop %v5307
        %v5309 = vmul.f32 %v5122, 1.442695
        %v5310 = vpow.pop %v5309
        %v5311 = vmul.f32 %v5123, 1.442695
        %v5312 = vpow.pop %v5311
        %v5313 = vmul.f32 %v5124, 1.442695
        %v5314 = vpow.pop %v5313
        %v5315 = vmul.f32 %v5125, 1.442695
        %v5316 = vpow.pop %v5315
        %v5317 = vmul.f32 %v5126, 1.442695
        %v5318 = vpow.pop %v5317
        %v5319 = vmul.f32 %v5127, 1.442695
        %v5320 = vpow.pop %v5319
        %v5321 = vmul.f32 %v5128, 1.442695
        %v5322 = vpow.pop %v5321
        %v5323 = vmul.f32 %v5129, 1.442695
        %v5324 = vpow.pop %v5323
        %v5325 = vmul.f32 %v5130, 1.442695
        %v5326 = vpow.pop %v5325
        %v5327 = vmul.f32 %v5131, 1.442695
        %v5328 = vpow.pop %v5327
        %v5329 = vmul.f32 %v5132, 1.442695
        %v5330 = vpow.pop %v5329
        %v5331 = vmul.f32 %v5133, 1.442695
        %v5332 = vpow.pop %v5331
        %v5333 = vmul.f32 %v5134, 1.442695
        %v5334 = vpow.pop %v5333
        %v5335 = vmul.f32 %v5135, 1.442695
        %v5336 = vpow.pop %v5335
        %v5337 = vmul.f32 %v5136, 1.442695
        %v5338 = vpow.pop %v5337
        %v5339 = vmul.f32 %v5137, 1.442695
        %v5340 = vpow.pop %v5339
        %v5341 = vmul.f32 %v5138, 1.442695
        %v5342 = vpow.pop %v5341
        %v5343 = vmul.f32 %v5139, 1.442695
        %v5344 = vpow.pop %v5343
        %v5345 = vmul.f32 %v5140, 1.442695
        %v5346 = vpow.pop %v5345
        %v5347 = vmul.f32 %v5141, 1.442695
        %v5348 = vpow.pop %v5347
        %v5349 = vmul.f32 %v5142, 1.442695
        %v5350 = vpow.pop %v5349
        %v5351 = vmul.f32 %v5143, 1.442695
        %v5352 = vpow.pop %v5351
        %v5353 = vmul.f32 %v5144, 1.442695
        %v5354 = vpow.pop %v5353
        %v5355 = vmul.f32 %v5145, 1.442695
        %v5356 = vpow.pop %v5355
        %v5357 = vmul.f32 %v5146, 1.442695
        %v5358 = vpow.pop %v5357
        %v5359 = vmul.f32 %v5147, 1.442695
        %v5360 = vpow.pop %v5359
        %v5361 = vmul.f32 %v5148, 1.442695
        %v5362 = vpow.pop %v5361
        %v5363 = vmul.f32 %v5149, 1.442695
        %v5364 = vpow.pop %v5363
        %v5365 = vmul.f32 %v5150, 1.442695
        %v5366 = vpow.pop %v5365
        %v5367 = vmul.f32 %v5151, 1.442695
        %v5368 = vpow.pop %v5367
        %v5369 = vmul.f32 %v5152, 1.442695
        %v5370 = vpow.pop %v5369
        %v5371 = vmul.f32 %v5153, 1.442695
        %v5372 = vpow.pop %v5371
        %v5373 = vmul.f32 %v5154, 1.442695
        %v5374 = vpow.pop %v5373
        %v5375 = vmul.f32 %v5155, 1.442695
        %v5376 = vpow.pop %v5375
        %v5377 = vmul.f32 %v5156, 1.442695
        %v5378 = vpow.pop %v5377
        %v5379 = vmul.f32 %v5157, 1.442695
        %v5380 = vpow.pop %v5379
        %v5381 = vmul.f32 %v5158, 1.442695
        %v5382 = vpow.pop %v5381
        %v5383 = vmul.f32 %v5159, 1.442695
        %v5384 = vpow.pop %v5383
        %v5385 = vmul.f32 %v5160, 1.442695
        %v5386 = vpow.pop %v5385
        %v5387 = vmul.f32 %v5161, 1.442695
        %v5388 = vpow.pop %v5387
        %v5389 = vmul.f32 %v5162, 1.442695
        %v5390 = vpow.pop %v5389
        %v5391 = vmul.f32 %v5163, 1.442695
        %v5392 = vpow.pop %v5391
        %v5393 = vmul.f32 %v5164, 1.442695
        %v5394 = vpow.pop %v5393
        %v5395 = vmul.f32 %v5165, 1.442695
        %v5396 = vpow.pop %v5395
        %v5397 = vmul.f32 %v5166, 1.442695
        %v5398 = vpow.pop %v5397
        %v5399 = vmul.f32 %v5167, 1.442695
        %v5400 = vpow.pop %v5399
        %v5401 = vmul.f32 %v5168, 1.442695
        %v5402 = vpow.pop %v5401
        %v5403 = vmul.f32 %v5169, 1.442695
        %v5404 = vpow.pop %v5403
        %v5405 = vmul.f32 %v5170, 1.442695
        %v5406 = vpow.pop %v5405
        %v5407 = vmul.f32 %v5171, 1.442695
        %v5408 = vpow.pop %v5407
        %v5409 = vmul.f32 %v5172, 1.442695
        %v5410 = vpow.pop %v5409
        %v5411 = vmul.f32 %v5173, 1.442695
        %v5412 = vpow.pop %v5411
        %v5413 = vmul.f32 %v5174, 1.442695
        %v5414 = vpow.pop %v5413
        %v5415 = vmul.f32 %v5175, 1.442695
        %v5416 = vpow.pop %v5415
        %v5417 = vmul.f32 %v5176, 1.442695
        %v5418 = vpow.pop %v5417
        %v5419 = vmul.f32 %v5177, 1.442695
        %v5420 = vpow.pop %v5419
        %v5421 = vmul.f32 %v5178, 1.442695
        %v5422 = vpow.pop %v5421
        %v5423 = vmul.f32 %v5179, 1.442695
        %v5424 = vpow.pop %v5423
        %v5425 = vmul.f32 %v5180, 1.442695
        %v5426 = vpow.pop %v5425
        %v5427 = vmul.f32 %v5181, 1.442695
        %v5428 = vpow.pop %v5427
        %v5429 = vmul.f32 %v5182, 1.442695
        %v5430 = vpow.pop %v5429
        %v5431 = vmul.f32 %v5183, 1.442695
        %v5432 = vpow.pop %v5431
        %v5433 = vmul.f32 %v5184, 1.442695
        %v5434 = vpow.pop %v5433
        %v5435 = vmul.f32 %v5185, 1.442695
        %v5436 = vpow.pop %v5435
        %v5437 = vmul.f32 %v5186, 1.442695
        %v5438 = vpow.pop %v5437
        %v5439 = vmul.f32 %v5187, 1.442695
        %v5440 = vpow.pop %v5439
        %v5441 = vmul.f32 %v5188, 1.442695
        %v5442 = vpow.pop %v5441
        %v5443 = vmul.f32 %v5189, 1.442695
        %v5444 = vpow.pop %v5443
        %v5445 = vmul.f32 %v5190, 1.442695
        %v5446 = vpow.pop %v5445
        %v5447 = vadd.f32 %v5192, %v5196
        %v5448 = vadd.f32 %v5447, %v5200
        %v5449 = vadd.f32 %v5448, %v5204
        %v5450 = vadd.f32 %v5449, %v5208
        %v5451 = vadd.f32 %v5450, %v5212
        %v5452 = vadd.f32 %v5451, %v5216
        %v5453 = vadd.f32 %v5452, %v5220
        %v5454 = vadd.f32 %v5453, %v5224
        %v5455 = vadd.f32 %v5454, %v5228
        %v5456 = vadd.f32 %v5455, %v5232
        %v5457 = vadd.f32 %v5456, %v5236
        %v5458 = vadd.f32 %v5457, %v5240
        %v5459 = vadd.f32 %v5458, %v5244
        %v5460 = vadd.f32 %v5459, %v5248
        %v5461 = vadd.f32 %v5460, %v5252
        %v5462 = vadd.f32 %v5461, %v5256
        %v5463 = vadd.f32 %v5462, %v5260
        %v5464 = vadd.f32 %v5463, %v5264
        %v5465 = vadd.f32 %v5464, %v5268
        %v5466 = vadd.f32 %v5465, %v5272
        %v5467 = vadd.f32 %v5466, %v5276
        %v5468 = vadd.f32 %v5467, %v5280
        %v5469 = vadd.f32 %v5468, %v5284
        %v5470 = vadd.f32 %v5469, %v5288
        %v5471 = vadd.f32 %v5470, %v5292
        %v5472 = vadd.f32 %v5471, %v5296
        %v5473 = vadd.f32 %v5472, %v5300
        %v5474 = vadd.f32 %v5473, %v5304
        %v5475 = vadd.f32 %v5474, %v5308
        %v5476 = vadd.f32 %v5475, %v5312
        %v5477 = vadd.f32 %v5476, %v5316
        %v5478 = vadd.f32 %v5477, %v5320
        %v5479 = vadd.f32 %v5478, %v5324
        %v5480 = vadd.f32 %v5479, %v5328
        %v5481 = vadd.f32 %v5480, %v5332
        %v5482 = vadd.f32 %v5481, %v5336
        %v5483 = vadd.f32 %v5482, %v5340
        %v5484 = vadd.f32 %v5483, %v5344
        %v5485 = vadd.f32 %v5484, %v5348
        %v5486 = vadd.f32 %v5485, %v5352
        %v5487 = vadd.f32 %v5486, %v5356
        %v5488 = vadd.f32 %v5487, %v5360
        %v5489 = vadd.f32 %v5488, %v5364
        %v5490 = vadd.f32 %v5489, %v5368
        %v5491 = vadd.f32 %v5490, %v5372
        %v5492 = vadd.f32 %v5491, %v5376
        %v5493 = vadd.f32 %v5492, %v5380
        %v5494 = vadd.f32 %v5493, %v5384
        %v5495 = vadd.f32 %v5494, %v5388
        %v5496 = vadd.f32 %v5495, %v5392
        %v5497 = vadd.f32 %v5496, %v5396
        %v5498 = vadd.f32 %v5497, %v5400
        %v5499 = vadd.f32 %v5498, %v5404
        %v5500 = vadd.f32 %v5499, %v5408
        %v5501 = vadd.f32 %v5500, %v5412
        %v5502 = vadd.f32 %v5501, %v5416
        %v5503 = vadd.f32 %v5502, %v5420
        %v5504 = vadd.f32 %v5503, %v5424
        %v5505 = vadd.f32 %v5504, %v5428
        %v5506 = vadd.f32 %v5505, %v5432
        %v5507 = vadd.f32 %v5506, %v5436
        %v5508 = vadd.f32 %v5507, %v5440
        %v5509 = vadd.f32 %v5508, %v5444
        %v5510 = vrot.slane %v5509, 4
        %v5511 = vadd.f32 %v5509, %v5510
        %v5512 = vrot.slane %v5511, 2
        %v5513 = vadd.f32 %v5511, %v5512
        %v5514 = vrot.slane %v5513, 1
        %v5515 = vadd.f32 %v5513, %v5514
        %v5516 = vadd.f32 %v5194, %v5198
        %v5517 = vadd.f32 %v5516, %v5202
        %v5518 = vadd.f32 %v5517, %v5206
        %v5519 = vadd.f32 %v5518, %v5210
        %v5520 = vadd.f32 %v5519, %v5214
        %v5521 = vadd.f32 %v5520, %v5218
        %v5522 = vadd.f32 %v5521, %v5222
        %v5523 = vadd.f32 %v5522, %v5226
        %v5524 = vadd.f32 %v5523, %v5230
        %v5525 = vadd.f32 %v5524, %v5234
        %v5526 = vadd.f32 %v5525, %v5238
        %v5527 = vadd.f32 %v5526, %v5242
        %v5528 = vadd.f32 %v5527, %v5246
        %v5529 = vadd.f32 %v5528, %v5250
        %v5530 = vadd.f32 %v5529, %v5254
        %v5531 = vadd.f32 %v5530, %v5258
        %v5532 = vadd.f32 %v5531, %v5262
        %v5533 = vadd.f32 %v5532, %v5266
        %v5534 = vadd.f32 %v5533, %v5270
        %v5535 = vadd.f32 %v5534, %v5274
        %v5536 = vadd.f32 %v5535, %v5278
        %v5537 = vadd.f32 %v5536, %v5282
        %v5538 = vadd.f32 %v5537, %v5286
        %v5539 = vadd.f32 %v5538, %v5290
        %v5540 = vadd.f32 %v5539, %v5294
        %v5541 = vadd.f32 %v5540, %v5298
        %v5542 = vadd.f32 %v5541, %v5302
        %v5543 = vadd.f32 %v5542, %v5306
        %v5544 = vadd.f32 %v5543, %v5310
        %v5545 = vadd.f32 %v5544, %v5314
        %v5546 = vadd.f32 %v5545, %v5318
        %v5547 = vadd.f32 %v5546, %v5322
        %v5548 = vadd.f32 %v5547, %v5326
        %v5549 = vadd.f32 %v5548, %v5330
        %v5550 = vadd.f32 %v5549, %v5334
        %v5551 = vadd.f32 %v5550, %v5338
        %v5552 = vadd.f32 %v5551, %v5342
        %v5553 = vadd.f32 %v5552, %v5346
        %v5554 = vadd.f32 %v5553, %v5350
        %v5555 = vadd.f32 %v5554, %v5354
        %v5556 = vadd.f32 %v5555, %v5358
        %v5557 = vadd.f32 %v5556, %v5362
        %v5558 = vadd.f32 %v5557, %v5366
        %v5559 = vadd.f32 %v5558, %v5370
        %v5560 = vadd.f32 %v5559, %v5374
        %v5561 = vadd.f32 %v5560, %v5378
        %v5562 = vadd.f32 %v5561, %v5382
        %v5563 = vadd.f32 %v5562, %v5386
        %v5564 = vadd.f32 %v5563, %v5390
        %v5565 = vadd.f32 %v5564, %v5394
        %v5566 = vadd.f32 %v5565, %v5398
        %v5567 = vadd.f32 %v5566, %v5402
        %v5568 = vadd.f32 %v5567, %v5406
        %v5569 = vadd.f32 %v5568, %v5410
        %v5570 = vadd.f32 %v5569, %v5414
        %v5571 = vadd.f32 %v5570, %v5418
        %v5572 = vadd.f32 %v5571, %v5422
        %v5573 = vadd.f32 %v5572, %v5426
        %v5574 = vadd.f32 %v5573, %v5430
        %v5575 = vadd.f32 %v5574, %v5434
        %v5576 = vadd.f32 %v5575, %v5438
        %v5577 = vadd.f32 %v5576, %v5442
        %v5578 = vadd.f32 %v5577, %v5446
        %v5579 = vrot.slane %v5578, 4
        %v5580 = vadd.f32 %v5578, %v5579
        %v5581 = vrot.slane %v5580, 2
        %v5582 = vadd.f32 %v5580, %v5581
        %v5583 = vrot.slane %v5582, 1
        %v5584 = vadd.f32 %v5582, %v5583
        %v5585 = vrcp.pop %v5515
        %v5586 = vrcp.pop %v5584
        %v5587 = vmul.f32 %v5192, %v5585
        %v5588 = vmul.f32 %v5194, %v5586
        %v5589 = vmul.f32 %v5196, %v5585
        %v5590 = vmul.f32 %v5198, %v5586
        %v5591 = vmul.f32 %v5200, %v5585
        %v5592 = vmul.f32 %v5202, %v5586
        %v5593 = vmul.f32 %v5204, %v5585
        %v5594 = vmul.f32 %v5206, %v5586
        %v5595 = vmul.f32 %v5208, %v5585
        %v5596 = vmul.f32 %v5210, %v5586
        %v5597 = vmul.f32 %v5212, %v5585
        %v5598 = vmul.f32 %v5214, %v5586
        %v5599 = vmul.f32 %v5216, %v5585
        %v5600 = vmul.f32 %v5218, %v5586
        %v5601 = vmul.f32 %v5220, %v5585
        %v5602 = vmul.f32 %v5222, %v5586
        %v5603 = vmul.f32 %v5224, %v5585
        %v5604 = vmul.f32 %v5226, %v5586
        %v5605 = vmul.f32 %v5228, %v5585
        %v5606 = vmul.f32 %v5230, %v5586
        %v5607 = vmul.f32 %v5232, %v5585
        %v5608 = vmul.f32 %v5234, %v5586
        %v5609 = vmul.f32 %v5236, %v5585
        %v5610 = vmul.f32 %v5238, %v5586
        %v5611 = vmul.f32 %v5240, %v5585
        %v5612 = vmul.f32 %v5242, %v5586
        %v5613 = vmul.f32 %v5244, %v5585
        %v5614 = vmul.f32 %v5246, %v5586
        %v5615 = vmul.f32 %v5248, %v5585
        %v5616 = vmul.f32 %v5250, %v5586
        %v5617 = vmul.f32 %v5252, %v5585
        %v5618 = vmul.f32 %v5254, %v5586
        %v5619 = vmul.f32 %v5256, %v5585
        %v5620 = vmul.f32 %v5258, %v5586
        %v5621 = vmul.f32 %v5260, %v5585
        %v5622 = vmul.f32 %v5262, %v5586
        %v5623 = vmul.f32 %v5264, %v5585
        %v5624 = vmul.f32 %v5266, %v5586
        %v5625 = vmul.f32 %v5268, %v5585
        %v5626 = vmul.f32 %v5270, %v5586
        %v5627 = vmul.f32 %v5272, %v5585
        %v5628 = vmul.f32 %v5274, %v5586
        %v5629 = vmul.f32 %v5276, %v5585
        %v5630 = vmul.f32 %v5278, %v5586
        %v5631 = vmul.f32 %v5280, %v5585
        %v5632 = vmul.f32 %v5282, %v5586
        %v5633 = vmul.f32 %v5284, %v5585
        %v5634 = vmul.f32 %v5286, %v5586
        %v5635 = vmul.f32 %v5288, %v5585
        %v5636 = vmul.f32 %v5290, %v5586
        %v5637 = vmul.f32 %v5292, %v5585
        %v5638 = vmul.f32 %v5294, %v5586
        %v5639 = vmul.f32 %v5296, %v5585
        %v5640 = vmul.f32 %v5298, %v5586
        %v5641 = vmul.f32 %v5300, %v5585
        %v5642 = vmul.f32 %v5302, %v5586
        %v5643 = vmul.f32 %v5304, %v5585
        %v5644 = vmul.f32 %v5306, %v5586
        %v5645 = vmul.f32 %v5308, %v5585
        %v5646 = vmul.f32 %v5310, %v5586
        %v5647 = vmul.f32 %v5312, %v5585
        %v5648 = vmul.f32 %v5314, %v5586
        %v5649 = vmul.f32 %v5316, %v5585
        %v5650 = vmul.f32 %v5318, %v5586
        %v5651 = vmul.f32 %v5320, %v5585
        %v5652 = vmul.f32 %v5322, %v5586
        %v5653 = vmul.f32 %v5324, %v5585
        %v5654 = vmul.f32 %v5326, %v5586
        %v5655 = vmul.f32 %v5328, %v5585
        %v5656 = vmul.f32 %v5330, %v5586
        %v5657 = vmul.f32 %v5332, %v5585
        %v5658 = vmul.f32 %v5334, %v5586
        %v5659 = vmul.f32 %v5336, %v5585
        %v5660 = vmul.f32 %v5338, %v5586
        %v5661 = vmul.f32 %v5340, %v5585
        %v5662 = vmul.f32 %v5342, %v5586
        %v5663 = vmul.f32 %v5344, %v5585
        %v5664 = vmul.f32 %v5346, %v5586
        %v5665 = vmul.f32 %v5348, %v5585
        %v5666 = vmul.f32 %v5350, %v5586
        %v5667 = vmul.f32 %v5352, %v5585
        %v5668 = vmul.f32 %v5354, %v5586
        %v5669 = vmul.f32 %v5356, %v5585
        %v5670 = vmul.f32 %v5358, %v5586
        %v5671 = vmul.f32 %v5360, %v5585
        %v5672 = vmul.f32 %v5362, %v5586
        %v5673 = vmul.f32 %v5364, %v5585
        %v5674 = vmul.f32 %v5366, %v5586
        %v5675 = vmul.f32 %v5368, %v5585
        %v5676 = vmul.f32 %v5370, %v5586
        %v5677 = vmul.f32 %v5372, %v5585
        %v5678 = vmul.f32 %v5374, %v5586
        %v5679 = vmul.f32 %v5376, %v5585
        %v5680 = vmul.f32 %v5378, %v5586
        %v5681 = vmul.f32 %v5380, %v5585
        %v5682 = vmul.f32 %v5382, %v5586
        %v5683 = vmul.f32 %v5384, %v5585
        %v5684 = vmul.f32 %v5386, %v5586
        %v5685 = vmul.f32 %v5388, %v5585
        %v5686 = vmul.f32 %v5390, %v5586
        %v5687 = vmul.f32 %v5392, %v5585
        %v5688 = vmul.f32 %v5394, %v5586
        %v5689 = vmul.f32 %v5396, %v5585
        %v5690 = vmul.f32 %v5398, %v5586
        %v5691 = vmul.f32 %v5400, %v5585
        %v5692 = vmul.f32 %v5402, %v5586
        %v5693 = vmul.f32 %v5404, %v5585
        %v5694 = vmul.f32 %v5406, %v5586
        %v5695 = vmul.f32 %v5408, %v5585
        %v5696 = vmul.f32 %v5410, %v5586
        %v5697 = vmul.f32 %v5412, %v5585
        %v5698 = vmul.f32 %v5414, %v5586
        %v5699 = vmul.f32 %v5416, %v5585
        %v5700 = vmul.f32 %v5418, %v5586
        %v5701 = vmul.f32 %v5420, %v5585
        %v5702 = vmul.f32 %v5422, %v5586
        %v5703 = vmul.f32 %v5424, %v5585
        %v5704 = vmul.f32 %v5426, %v5586
        %v5705 = vmul.f32 %v5428, %v5585
        %v5706 = vmul.f32 %v5430, %v5586
        %v5707 = vmul.f32 %v5432, %v5585
        %v5708 = vmul.f32 %v5434, %v5586
        %v5709 = vmul.f32 %v5436, %v5585
        %v5710 = vmul.f32 %v5438, %v5586
        %v5711 = vmul.f32 %v5440, %v5585
        %v5712 = vmul.f32 %v5442, %v5586
        %v5713 = vmul.f32 %v5444, %v5585
        %v5714 = vmul.f32 %v5446, %v5586
        %5715 = vmatprep.subr.mxu0 %v5618
        %5716 = vmatpush1.msra.mxu0 %v5617
        %5717 = vmatprep.subr.mxu0 %v5616
        %5718 = vmatpush1.msra.mxu0 %v5615
        %5719 = vmatprep.subr.mxu0 %v5614
        %5720 = vmatpush1.msra.mxu0 %v5613
        %5721 = vmatprep.subr.mxu0 %v5612
        %5722 = vmatpush1.msra.mxu0 %v5611
        %5723 = vmatprep.subr.mxu0 %v5610
        %5724 = vmatpush1.msra.mxu0 %v5609
        %5725 = vmatprep.subr.mxu0 %v5608
        %5726 = vmatpush1.msra.mxu0 %v5607
        %5727 = vmatprep.subr.mxu0 %v5606
        %5728 = vmatpush1.msra.mxu0 %v5605
        %5729 = vmatprep.subr.mxu0 %v5604
        %5730 = vmatpush1.msra.mxu0 %v5603
        %5731 = vmatprep.subr.mxu0 %v5602
        %5732 = vmatpush1.msra.mxu0 %v5601
        %5733 = vmatprep.subr.mxu0 %v5600
        %5734 = vmatpush1.msra.mxu0 %v5599
        %5735 = vmatprep.subr.mxu0 %v5598
        %5736 = vmatpush1.msra.mxu0 %v5597
        %5737 = vmatprep.subr.mxu0 %v5596
        %5738 = vmatpush1.msra.mxu0 %v5595
        %5739 = vmatprep.subr.mxu0 %v5594
        %5740 = vmatpush1.msra.mxu0 %v5593
        %5741 = vmatprep.subr.mxu0 %v5592
        %5742 = vmatpush1.msra.mxu0 %v5591
        %5743 = vmatprep.subr.mxu0 %v5590
        %5744 = vmatpush1.msra.mxu0 %v5589
        %5745 = vmatprep.subr.mxu0 %v5588
        %5746 = vmatpush1.msra.mxu0 %v5587
        %5747 = vmatprep.subr.mxu0 %v5650
        %5748 = vmatpush2.msra.mxu0 %v5649
        %5749 = vmatprep.subr.mxu0 %v5648
        %5750 = vmatpush2.msra.mxu0 %v5647
        %5751 = vmatprep.subr.mxu0 %v5646
        %5752 = vmatpush2.msra.mxu0 %v5645
        %5753 = vmatprep.subr.mxu0 %v5644
        %5754 = vmatpush2.msra.mxu0 %v5643
        %5755 = vmatprep.subr.mxu0 %v5642
        %5756 = vmatpush2.msra.mxu0 %v5641
        %5757 = vmatprep.subr.mxu0 %v5640
        %5758 = vmatpush2.msra.mxu0 %v5639
        %5759 = vmatprep.subr.mxu0 %v5638
        %5760 = vmatpush2.msra.mxu0 %v5637
        %5761 = vmatprep.subr.mxu0 %v5636
        %5762 = vmatpush2.msra.mxu0 %v5635
        %5763 = vmatprep.subr.mxu0 %v5634
        %5764 = vmatpush2.msra.mxu0 %v5633
        %5765 = vmatprep.subr.mxu0 %v5632
        %5766 = vmatpush2.msra.mxu0 %v5631
        %5767 = vmatprep.subr.mxu0 %v5630
        %5768 = vmatpush2.msra.mxu0 %v5629
        %5769 = vmatprep.subr.mxu0 %v5628
        %5770 = vmatpush2.msra.mxu0 %v5627
        %5771 = vmatprep.subr.mxu0 %v5626
        %5772 = vmatpush2.msra.mxu0 %v5625
        %5773 = vmatprep.subr.mxu0 %v5624
        %5774 = vmatpush2.msra.mxu0 %v5623
        %5775 = vmatprep.subr.mxu0 %v5622
        %5776 = vmatpush2.msra.mxu0 %v5621
        %5777 = vmatprep.subr.mxu0 %v5620
        %5778 = vmatpush2.msra.mxu0 %v5619
        %5779 = vmatprep.mubr.f32.mxu0 %v746
        %5780 = vmatmul.mubr.f32.gmra.mxu0 %v745
        %v5781 = vpop.f32.mrf.mxu0
        %v5782 = vadd.f32 0.0, %v5781
        %v5783 = vpop.f32.mrf.mxu0
        %v5784 = vadd.f32 0.0, %v5783
        %5785 = vdwg.mxu0
        %5786 = vmatprep.subr.mxu0 %v5682
        %5787 = vmatpush1.msra.mxu0 %v5681
        %5788 = vmatprep.subr.mxu0 %v5680
        %5789 = vmatpush1.msra.mxu0 %v5679
        %5790 = vmatprep.subr.mxu0 %v5678
        %5791 = vmatpush1.msra.mxu0 %v5677
        %5792 = vmatprep.subr.mxu0 %v5676
        %5793 = vmatpush1.msra.mxu0 %v5675
        %5794 = vmatprep.subr.mxu0 %v5674
        %5795 = vmatpush1.msra.mxu0 %v5673
        %5796 = vmatprep.subr.mxu0 %v5672
        %5797 = vmatpush1.msra.mxu0 %v5671
        %5798 = vmatprep.subr.mxu0 %v5670
        %5799 = vmatpush1.msra.mxu0 %v5669
        %5800 = vmatprep.subr.mxu0 %v5668
        %5801 = vmatpush1.msra.mxu0 %v5667
        %5802 = vmatprep.subr.mxu0 %v5666
        %5803 = vmatpush1.msra.mxu0 %v5665
        %5804 = vmatprep.subr.mxu0 %v5664
        %5805 = vmatpush1.msra.mxu0 %v5663
        %5806 = vmatprep.subr.mxu0 %v5662
        %5807 = vmatpush1.msra.mxu0 %v5661
        %5808 = vmatprep.subr.mxu0 %v5660
        %5809 = vmatpush1.msra.mxu0 %v5659
        %5810 = vmatprep.subr.mxu0 %v5658
        %5811 = vmatpush1.msra.mxu0 %v5657
        %5812 = vmatprep.subr.mxu0 %v5656
        %5813 = vmatpush1.msra.mxu0 %v5655
        %5814 = vmatprep.subr.mxu0 %v5654
        %5815 = vmatpush1.msra.mxu0 %v5653
        %5816 = vmatprep.subr.mxu0 %v5652
        %5817 = vmatpush1.msra.mxu0 %v5651
        %5818 = vmatprep.subr.mxu0 %v5714
        %5819 = vmatpush2.msra.mxu0 %v5713
        %5820 = vmatprep.subr.mxu0 %v5712
        %5821 = vmatpush2.msra.mxu0 %v5711
        %5822 = vmatprep.subr.mxu0 %v5710
        %5823 = vmatpush2.msra.mxu0 %v5709
        %5824 = vmatprep.subr.mxu0 %v5708
        %5825 = vmatpush2.msra.mxu0 %v5707
        %5826 = vmatprep.subr.mxu0 %v5706
        %5827 = vmatpush2.msra.mxu0 %v5705
        %5828 = vmatprep.subr.mxu0 %v5704
        %5829 = vmatpush2.msra.mxu0 %v5703
        %5830 = vmatprep.subr.mxu0 %v5702
        %5831 = vmatpush2.msra.mxu0 %v5701
        %5832 = vmatprep.subr.mxu0 %v5700
        %5833 = vmatpush2.msra.mxu0 %v5699
        %5834 = vmatprep.subr.mxu0 %v5698
        %5835 = vmatpush2.msra.mxu0 %v5697
        %5836 = vmatprep.subr.mxu0 %v5696
        %5837 = vmatpush2.msra.mxu0 %v5695
        %5838 = vmatprep.subr.mxu0 %v5694
        %5839 = vmatpush2.msra.mxu0 %v5693
        %5840 = vmatprep.subr.mxu0 %v5692
        %5841 = vmatpush2.msra.mxu0 %v5691
        %5842 = vmatprep.subr.mxu0 %v5690
        %5843 = vmatpush2.msra.mxu0 %v5689
        %5844 = vmatprep.subr.mxu0 %v5688
        %5845 = vmatpush2.msra.mxu0 %v5687
        %5846 = vmatprep.subr.mxu0 %v5686
        %5847 = vmatpush2.msra.mxu0 %v5685
        %5848 = vmatprep.subr.mxu0 %v5684
        %5849 = vmatpush2.msra.mxu0 %v5683
        %5850 = vmatprep.mubr.f32.mxu0 %v748
        %5851 = vmatmul.mubr.f32.gmra.mxu0 %v747
        %v5852 = vpop.f32.mrf.mxu0
        %v5853 = vadd.f32 %v5782, %v5852
        %v5854 = vpop.f32.mrf.mxu0
        %v5855 = vadd.f32 %v5784, %v5854
        %5856 = vdwg.mxu0
        %5857 = vxpose.xlu0.b32.start [1/16] %v733, 128
        %5858 = vxpose.xlu0.b32.cont [2/16] 0.0, 128
        %5859 = vxpose.xlu0.b32.cont [3/16] 0.0, 128
        %5860 = vxpose.xlu0.b32.cont [4/16] 0.0, 128
        %5861 = vxpose.xlu0.b32.cont [5/16] 0.0, 128
        %5862 = vxpose.xlu0.b32.cont [6/16] 0.0, 128
        %5863 = vxpose.xlu0.b32.cont [7/16] 0.0, 128
        %5864 = vxpose.xlu0.b32.cont [8/16] 0.0, 128
        %5865 = vxpose.xlu0.b32.cont [9/16] 0.0, 128
        %5866 = vxpose.xlu0.b32.cont [10/16] 0.0, 128
        %5867 = vxpose.xlu0.b32.cont [11/16] 0.0, 128
        %5868 = vxpose.xlu0.b32.cont [12/16] 0.0, 128
        %5869 = vxpose.xlu0.b32.cont [13/16] 0.0, 128
        %5870 = vxpose.xlu0.b32.cont [14/16] 0.0, 128
        %5871 = vxpose.xlu0.b32.cont [15/16] 0.0, 128
        %5872 = vxpose.xlu0.b32.end [16/16] 0.0, 128
        %v5873 = vpop.trf.xlu0
        %v5874 = vpop.trf.xlu0
        %v5875 = vpop.trf.xlu0
        %v5876 = vpop.trf.xlu0
        %v5877 = vpop.trf.xlu0
        %v5878 = vpop.trf.xlu0
        %v5879 = vpop.trf.xlu0
        %v5880 = vpop.trf.xlu0
        %v5881 = vpop.trf.xlu0
        %v5882 = vpop.trf.xlu0
        %v5883 = vpop.trf.xlu0
        %v5884 = vpop.trf.xlu0
        %v5885 = vpop.trf.xlu0
        %v5886 = vpop.trf.xlu0
        %v5887 = vpop.trf.xlu0
        %v5888 = vpop.trf.xlu0
        %5889 = vxpose.xlu0.b32.start [1/16] %v734, 128
        %5890 = vxpose.xlu0.b32.cont [2/16] 0.0, 128
        %5891 = vxpose.xlu0.b32.cont [3/16] 0.0, 128
        %5892 = vxpose.xlu0.b32.cont [4/16] 0.0, 128
        %5893 = vxpose.xlu0.b32.cont [5/16] 0.0, 128
        %5894 = vxpose.xlu0.b32.cont [6/16] 0.0, 128
        %5895 = vxpose.xlu0.b32.cont [7/16] 0.0, 128
        %5896 = vxpose.xlu0.b32.cont [8/16] 0.0, 128
        %5897 = vxpose.xlu0.b32.cont [9/16] 0.0, 128
        %5898 = vxpose.xlu0.b32.cont [10/16] 0.0, 128
        %5899 = vxpose.xlu0.b32.cont [11/16] 0.0, 128
        %5900 = vxpose.xlu0.b32.cont [12/16] 0.0, 128
        %5901 = vxpose.xlu0.b32.cont [13/16] 0.0, 128
        %5902 = vxpose.xlu0.b32.cont [14/16] 0.0, 128
        %5903 = vxpose.xlu0.b32.cont [15/16] 0.0, 128
        %5904 = vxpose.xlu0.b32.end [16/16] 0.0, 128
        %v5905 = vpop.trf.xlu0
        %v5906 = vpop.trf.xlu0
        %v5907 = vpop.trf.xlu0
        %v5908 = vpop.trf.xlu0
        %v5909 = vpop.trf.xlu0
        %v5910 = vpop.trf.xlu0
        %v5911 = vpop.trf.xlu0
        %v5912 = vpop.trf.xlu0
        %v5913 = vpop.trf.xlu0
        %v5914 = vpop.trf.xlu0
        %v5915 = vpop.trf.xlu0
        %v5916 = vpop.trf.xlu0
        %v5917 = vpop.trf.xlu0
        %v5918 = vpop.trf.xlu0
        %v5919 = vpop.trf.xlu0
        %v5920 = vpop.trf.xlu0
        %5921 = vxpose.xlu0.b32.start [1/16] %v735, 128
        %5922 = vxpose.xlu0.b32.cont [2/16] 0.0, 128
        %5923 = vxpose.xlu0.b32.cont [3/16] 0.0, 128
        %5924 = vxpose.xlu0.b32.cont [4/16] 0.0, 128
        %5925 = vxpose.xlu0.b32.cont [5/16] 0.0, 128
        %5926 = vxpose.xlu0.b32.cont [6/16] 0.0, 128
        %5927 = vxpose.xlu0.b32.cont [7/16] 0.0, 128
        %5928 = vxpose.xlu0.b32.cont [8/16] 0.0, 128
        %5929 = vxpose.xlu0.b32.cont [9/16] 0.0, 128
        %5930 = vxpose.xlu0.b32.cont [10/16] 0.0, 128
        %5931 = vxpose.xlu0.b32.cont [11/16] 0.0, 128
        %5932 = vxpose.xlu0.b32.cont [12/16] 0.0, 128
        %5933 = vxpose.xlu0.b32.cont [13/16] 0.0, 128
        %5934 = vxpose.xlu0.b32.cont [14/16] 0.0, 128
        %5935 = vxpose.xlu0.b32.cont [15/16] 0.0, 128
        %5936 = vxpose.xlu0.b32.end [16/16] 0.0, 128
        %v5937 = vpop.trf.xlu0
        %v5938 = vpop.trf.xlu0
        %v5939 = vpop.trf.xlu0
        %v5940 = vpop.trf.xlu0
        %v5941 = vpop.trf.xlu0
        %v5942 = vpop.trf.xlu0
        %v5943 = vpop.trf.xlu0
        %v5944 = vpop.trf.xlu0
        %v5945 = vpop.trf.xlu0
        %v5946 = vpop.trf.xlu0
        %v5947 = vpop.trf.xlu0
        %v5948 = vpop.trf.xlu0
        %v5949 = vpop.trf.xlu0
        %v5950 = vpop.trf.xlu0
        %v5951 = vpop.trf.xlu0
        %v5952 = vpop.trf.xlu0
        %5953 = vxpose.xlu0.b32.start [1/16] %v736, 128
        %5954 = vxpose.xlu0.b32.cont [2/16] 0.0, 128
        %5955 = vxpose.xlu0.b32.cont [3/16] 0.0, 128
        %5956 = vxpose.xlu0.b32.cont [4/16] 0.0, 128
        %5957 = vxpose.xlu0.b32.cont [5/16] 0.0, 128
        %5958 = vxpose.xlu0.b32.cont [6/16] 0.0, 128
        %5959 = vxpose.xlu0.b32.cont [7/16] 0.0, 128
        %5960 = vxpose.xlu0.b32.cont [8/16] 0.0, 128
        %5961 = vxpose.xlu0.b32.cont [9/16] 0.0, 128
        %5962 = vxpose.xlu0.b32.cont [10/16] 0.0, 128
        %5963 = vxpose.xlu0.b32.cont [11/16] 0.0, 128
        %5964 = vxpose.xlu0.b32.cont [12/16] 0.0, 128
        %5965 = vxpose.xlu0.b32.cont [13/16] 0.0, 128
        %5966 = vxpose.xlu0.b32.cont [14/16] 0.0, 128
        %5967 = vxpose.xlu0.b32.cont [15/16] 0.0, 128
        %5968 = vxpose.xlu0.b32.end [16/16] 0.0, 128
        %v5969 = vpop.trf.xlu0
        %v5970 = vpop.trf.xlu0
        %v5971 = vpop.trf.xlu0
        %v5972 = vpop.trf.xlu0
        %v5973 = vpop.trf.xlu0
        %v5974 = vpop.trf.xlu0
        %v5975 = vpop.trf.xlu0
        %v5976 = vpop.trf.xlu0
        %v5977 = vpop.trf.xlu0
        %v5978 = vpop.trf.xlu0
        %v5979 = vpop.trf.xlu0
        %v5980 = vpop.trf.xlu0
        %v5981 = vpop.trf.xlu0
        %v5982 = vpop.trf.xlu0
        %v5983 = vpop.trf.xlu0
        %v5984 = vpop.trf.xlu0
        %v5986 = vsel %vm881, %v5873, 0
        %v5989 = vsel %vm881, %v5874, 0
        %v5992 = vsel %vm881, %v5875, 0
        %v5995 = vsel %vm881, %v5876, 0
        %v5998 = vsel %vm881, %v5877, 0
        %v6001 = vsel %vm881, %v5878, 0
        %v6004 = vsel %vm881, %v5879, 0
        %v6007 = vsel %vm881, %v5880, 0
        %v6010 = vsel %vm881, %v5881, 0
        %v6013 = vsel %vm881, %v5882, 0
        %v6016 = vsel %vm881, %v5883, 0
        %v6019 = vsel %vm881, %v5884, 0
        %v6022 = vsel %vm881, %v5885, 0
        %v6025 = vsel %vm881, %v5886, 0
        %v6028 = vsel %vm881, %v5887, 0
        %v6031 = vsel %vm881, %v5888, 0
        %v6034 = vsel %vm881, %v5905, 0
        %v6037 = vsel %vm881, %v5906, 0
        %v6040 = vsel %vm881, %v5907, 0
        %v6043 = vsel %vm881, %v5908, 0
        %v6046 = vsel %vm881, %v5909, 0
        %v6049 = vsel %vm881, %v5910, 0
        %v6052 = vsel %vm881, %v5911, 0
        %v6055 = vsel %vm881, %v5912, 0
        %v6058 = vsel %vm881, %v5913, 0
        %v6061 = vsel %vm881, %v5914, 0
        %v6064 = vsel %vm881, %v5915, 0
        %v6067 = vsel %vm881, %v5916, 0
        %v6070 = vsel %vm881, %v5917, 0
        %v6073 = vsel %vm881, %v5918, 0
        %v6076 = vsel %vm881, %v5919, 0
        %v6079 = vsel %vm881, %v5920, 0
        %v6082 = vsel %vm881, %v5937, 0
        %v6085 = vsel %vm881, %v5938, 0
        %v6088 = vsel %vm881, %v5939, 0
        %v6091 = vsel %vm881, %v5940, 0
        %v6094 = vsel %vm881, %v5941, 0
        %v6097 = vsel %vm881, %v5942, 0
        %v6100 = vsel %vm881, %v5943, 0
        %v6103 = vsel %vm881, %v5944, 0
        %v6106 = vsel %vm881, %v5945, 0
        %v6109 = vsel %vm881, %v5946, 0
        %v6112 = vsel %vm881, %v5947, 0
        %v6115 = vsel %vm881, %v5948, 0
        %v6118 = vsel %vm881, %v5949, 0
        %v6121 = vsel %vm881, %v5950, 0
        %v6124 = vsel %vm881, %v5951, 0
        %v6127 = vsel %vm881, %v5952, 0
        %v6130 = vsel %vm881, %v5969, 0
        %v6133 = vsel %vm881, %v5970, 0
        %v6136 = vsel %vm881, %v5971, 0
        %v6139 = vsel %vm881, %v5972, 0
        %v6142 = vsel %vm881, %v5973, 0
        %v6145 = vsel %vm881, %v5974, 0
        %v6148 = vsel %vm881, %v5975, 0
        %v6151 = vsel %vm881, %v5976, 0
        %v6154 = vsel %vm881, %v5977, 0
        %v6157 = vsel %vm881, %v5978, 0
        %v6160 = vsel %vm881, %v5979, 0
        %v6163 = vsel %vm881, %v5980, 0
        %v6166 = vsel %vm881, %v5981, 0
        %v6169 = vsel %vm881, %v5982, 0
        %v6172 = vsel %vm881, %v5983, 0
        %v6175 = vsel %vm881, %v5984, 0
        %6177 = vmatprep.subr.mxu0 0.0
        %6178 = vmatpush1.msra.mxu0 0.0
        %6179 = vmatprep.subr.mxu0 0.0
        %6180 = vmatpush1.msra.mxu0 0.0
        %6181 = vmatprep.subr.mxu0 0.0
        %6182 = vmatpush1.msra.mxu0 0.0
        %6183 = vmatprep.subr.mxu0 0.0
        %6184 = vmatpush1.msra.mxu0 0.0
        %6185 = vmatprep.subr.mxu0 0.0
        %6186 = vmatpush1.msra.mxu0 0.0
        %6187 = vmatprep.subr.mxu0 0.0
        %6188 = vmatpush1.msra.mxu0 0.0
        %6189 = vmatprep.subr.mxu0 0.0
        %6190 = vmatpush1.msra.mxu0 0.0
        %6191 = vmatprep.subr.mxu0 0.0
        %6192 = vmatpush1.msra.mxu0 0.0
        %6193 = vmatprep.subr.mxu0 0.0
        %6194 = vmatpush1.msra.mxu0 0.0
        %6195 = vmatprep.subr.mxu0 0.0
        %6196 = vmatpush1.msra.mxu0 0.0
        %6197 = vmatprep.subr.mxu0 0.0
        %6198 = vmatpush1.msra.mxu0 0.0
        %6199 = vmatprep.subr.mxu0 0.0
        %6200 = vmatpush1.msra.mxu0 0.0
        %6201 = vmatprep.subr.mxu0 0.0
        %6202 = vmatpush1.msra.mxu0 0.0
        %6203 = vmatprep.subr.mxu0 0.0
        %6204 = vmatpush1.msra.mxu0 0.0
        %6205 = vmatprep.subr.mxu0 0.0
        %6206 = vmatpush1.msra.mxu0 0.0
        %6207 = vmatprep.subr.mxu0 %v719
        %6208 = vmatpush1.msra.mxu0 %v717
        %6209 = vmatprep.subr.mxu0 0.0
        %6210 = vmatpush2.msra.mxu0 0.0
        %6211 = vmatprep.subr.mxu0 0.0
        %6212 = vmatpush2.msra.mxu0 0.0
        %6213 = vmatprep.subr.mxu0 0.0
        %6214 = vmatpush2.msra.mxu0 0.0
        %6215 = vmatprep.subr.mxu0 0.0
        %6216 = vmatpush2.msra.mxu0 0.0
        %6217 = vmatprep.subr.mxu0 0.0
        %6218 = vmatpush2.msra.mxu0 0.0
        %6219 = vmatprep.subr.mxu0 0.0
        %6220 = vmatpush2.msra.mxu0 0.0
        %6221 = vmatprep.subr.mxu0 0.0
        %6222 = vmatpush2.msra.mxu0 0.0
        %6223 = vmatprep.subr.mxu0 0.0
        %6224 = vmatpush2.msra.mxu0 0.0
        %6225 = vmatprep.subr.mxu0 0.0
        %6226 = vmatpush2.msra.mxu0 0.0
        %6227 = vmatprep.subr.mxu0 0.0
        %6228 = vmatpush2.msra.mxu0 0.0
        %6229 = vmatprep.subr.mxu0 0.0
        %6230 = vmatpush2.msra.mxu0 0.0
        %6231 = vmatprep.subr.mxu0 0.0
        %6232 = vmatpush2.msra.mxu0 0.0
        %6233 = vmatprep.subr.mxu0 0.0
        %6234 = vmatpush2.msra.mxu0 0.0
        %6235 = vmatprep.subr.mxu0 0.0
        %6236 = vmatpush2.msra.mxu0 0.0
        %6237 = vmatprep.subr.mxu0 0.0
        %6238 = vmatpush2.msra.mxu0 0.0
        %6239 = vmatprep.subr.mxu0 0.0
        %6240 = vmatpush2.msra.mxu0 0.0
        %6241 = vmatprep.mubr.f32.mxu0 0.0
        %6242 = vmatmul.mubr.f32.gmra.mxu0 %v5986
        %v6243 = vpop.f32.mrf.mxu0
        %v6244 = vadd.f32 0.0, %v6243
        %v6245 = vpop.f32.mrf.mxu0
        %v6246 = vadd.f32 0.0, %v6245
        %6247 = vmatprep.mubr.f32.mxu0 0.0
        %6248 = vmatmul.mubr.f32.gmra.mxu0 %v5989
        %v6249 = vpop.f32.mrf.mxu0
        %v6250 = vadd.f32 0.0, %v6249
        %v6251 = vpop.f32.mrf.mxu0
        %v6252 = vadd.f32 0.0, %v6251
        %6253 = vmatprep.mubr.f32.mxu0 0.0
        %6254 = vmatmul.mubr.f32.gmra.mxu0 %v5992
        %v6255 = vpop.f32.mrf.mxu0
        %v6256 = vadd.f32 0.0, %v6255
        %v6257 = vpop.f32.mrf.mxu0
        %v6258 = vadd.f32 0.0, %v6257
        %6259 = vmatprep.mubr.f32.mxu0 0.0
        %6260 = vmatmul.mubr.f32.gmra.mxu0 %v5995
        %v6261 = vpop.f32.mrf.mxu0
        %v6262 = vadd.f32 0.0, %v6261
        %v6263 = vpop.f32.mrf.mxu0
        %v6264 = vadd.f32 0.0, %v6263
        %6265 = vmatprep.mubr.f32.mxu0 0.0
        %6266 = vmatmul.mubr.f32.gmra.mxu0 %v5998
        %v6267 = vpop.f32.mrf.mxu0
        %v6268 = vadd.f32 0.0, %v6267
        %v6269 = vpop.f32.mrf.mxu0
        %v6270 = vadd.f32 0.0, %v6269
        %6271 = vmatprep.mubr.f32.mxu0 0.0
        %6272 = vmatmul.mubr.f32.gmra.mxu0 %v6001
        %v6273 = vpop.f32.mrf.mxu0
        %v6274 = vadd.f32 0.0, %v6273
        %v6275 = vpop.f32.mrf.mxu0
        %v6276 = vadd.f32 0.0, %v6275
        %6277 = vmatprep.mubr.f32.mxu0 0.0
        %6278 = vmatmul.mubr.f32.gmra.mxu0 %v6004
        %v6279 = vpop.f32.mrf.mxu0
        %v6280 = vadd.f32 0.0, %v6279
        %v6281 = vpop.f32.mrf.mxu0
        %v6282 = vadd.f32 0.0, %v6281
        %6283 = vmatprep.mubr.f32.mxu0 0.0
        %6284 = vmatmul.mubr.f32.gmra.mxu0 %v6007
        %v6285 = vpop.f32.mrf.mxu0
        %v6286 = vadd.f32 0.0, %v6285
        %v6287 = vpop.f32.mrf.mxu0
        %v6288 = vadd.f32 0.0, %v6287
        %6289 = vmatprep.mubr.f32.mxu0 0.0
        %6290 = vmatmul.mubr.f32.gmra.mxu0 %v6010
        %v6291 = vpop.f32.mrf.mxu0
        %v6292 = vadd.f32 0.0, %v6291
        %v6293 = vpop.f32.mrf.mxu0
        %v6294 = vadd.f32 0.0, %v6293
        %6295 = vmatprep.mubr.f32.mxu0 0.0
        %6296 = vmatmul.mubr.f32.gmra.mxu0 %v6013
        %v6297 = vpop.f32.mrf.mxu0
        %v6298 = vadd.f32 0.0, %v6297
        %v6299 = vpop.f32.mrf.mxu0
        %v6300 = vadd.f32 0.0, %v6299
        %6301 = vmatprep.mubr.f32.mxu0 0.0
        %6302 = vmatmul.mubr.f32.gmra.mxu0 %v6016
        %v6303 = vpop.f32.mrf.mxu0
        %v6304 = vadd.f32 0.0, %v6303
        %v6305 = vpop.f32.mrf.mxu0
        %v6306 = vadd.f32 0.0, %v6305
        %6307 = vmatprep.mubr.f32.mxu0 0.0
        %6308 = vmatmul.mubr.f32.gmra.mxu0 %v6019
        %v6309 = vpop.f32.mrf.mxu0
        %v6310 = vadd.f32 0.0, %v6309
        %v6311 = vpop.f32.mrf.mxu0
        %v6312 = vadd.f32 0.0, %v6311
        %6313 = vmatprep.mubr.f32.mxu0 0.0
        %6314 = vmatmul.mubr.f32.gmra.mxu0 %v6022
        %v6315 = vpop.f32.mrf.mxu0
        %v6316 = vadd.f32 0.0, %v6315
        %v6317 = vpop.f32.mrf.mxu0
        %v6318 = vadd.f32 0.0, %v6317
        %6319 = vmatprep.mubr.f32.mxu0 0.0
        %6320 = vmatmul.mubr.f32.gmra.mxu0 %v6025
        %v6321 = vpop.f32.mrf.mxu0
        %v6322 = vadd.f32 0.0, %v6321
        %v6323 = vpop.f32.mrf.mxu0
        %v6324 = vadd.f32 0.0, %v6323
        %6325 = vmatprep.mubr.f32.mxu0 0.0
        %6326 = vmatmul.mubr.f32.gmra.mxu0 %v6028
        %v6327 = vpop.f32.mrf.mxu0
        %v6328 = vadd.f32 0.0, %v6327
        %v6329 = vpop.f32.mrf.mxu0
        %v6330 = vadd.f32 0.0, %v6329
        %6331 = vmatprep.mubr.f32.mxu0 0.0
        %6332 = vmatmul.mubr.f32.gmra.mxu0 %v6031
        %v6333 = vpop.f32.mrf.mxu0
        %v6334 = vadd.f32 0.0, %v6333
        %v6335 = vpop.f32.mrf.mxu0
        %v6336 = vadd.f32 0.0, %v6335
        %6337 = vmatprep.mubr.f32.mxu0 0.0
        %6338 = vmatmul.mubr.f32.gmra.mxu0 %v6034
        %v6339 = vpop.f32.mrf.mxu0
        %v6340 = vadd.f32 0.0, %v6339
        %v6341 = vpop.f32.mrf.mxu0
        %v6342 = vadd.f32 0.0, %v6341
        %6343 = vmatprep.mubr.f32.mxu0 0.0
        %6344 = vmatmul.mubr.f32.gmra.mxu0 %v6037
        %v6345 = vpop.f32.mrf.mxu0
        %v6346 = vadd.f32 0.0, %v6345
        %v6347 = vpop.f32.mrf.mxu0
        %v6348 = vadd.f32 0.0, %v6347
        %6349 = vmatprep.mubr.f32.mxu0 0.0
        %6350 = vmatmul.mubr.f32.gmra.mxu0 %v6040
        %v6351 = vpop.f32.mrf.mxu0
        %v6352 = vadd.f32 0.0, %v6351
        %v6353 = vpop.f32.mrf.mxu0
        %v6354 = vadd.f32 0.0, %v6353
        %6355 = vmatprep.mubr.f32.mxu0 0.0
        %6356 = vmatmul.mubr.f32.gmra.mxu0 %v6043
        %v6357 = vpop.f32.mrf.mxu0
        %v6358 = vadd.f32 0.0, %v6357
        %v6359 = vpop.f32.mrf.mxu0
        %v6360 = vadd.f32 0.0, %v6359
        %6361 = vmatprep.mubr.f32.mxu0 0.0
        %6362 = vmatmul.mubr.f32.gmra.mxu0 %v6046
        %v6363 = vpop.f32.mrf.mxu0
        %v6364 = vadd.f32 0.0, %v6363
        %v6365 = vpop.f32.mrf.mxu0
        %v6366 = vadd.f32 0.0, %v6365
        %6367 = vmatprep.mubr.f32.mxu0 0.0
        %6368 = vmatmul.mubr.f32.gmra.mxu0 %v6049
        %v6369 = vpop.f32.mrf.mxu0
        %v6370 = vadd.f32 0.0, %v6369
        %v6371 = vpop.f32.mrf.mxu0
        %v6372 = vadd.f32 0.0, %v6371
        %6373 = vmatprep.mubr.f32.mxu0 0.0
        %6374 = vmatmul.mubr.f32.gmra.mxu0 %v6052
        %v6375 = vpop.f32.mrf.mxu0
        %v6376 = vadd.f32 0.0, %v6375
        %v6377 = vpop.f32.mrf.mxu0
        %v6378 = vadd.f32 0.0, %v6377
        %6379 = vmatprep.mubr.f32.mxu0 0.0
        %6380 = vmatmul.mubr.f32.gmra.mxu0 %v6055
        %v6381 = vpop.f32.mrf.mxu0
        %v6382 = vadd.f32 0.0, %v6381
        %v6383 = vpop.f32.mrf.mxu0
        %v6384 = vadd.f32 0.0, %v6383
        %6385 = vmatprep.mubr.f32.mxu0 0.0
        %6386 = vmatmul.mubr.f32.gmra.mxu0 %v6058
        %v6387 = vpop.f32.mrf.mxu0
        %v6388 = vadd.f32 0.0, %v6387
        %v6389 = vpop.f32.mrf.mxu0
        %v6390 = vadd.f32 0.0, %v6389
        %6391 = vmatprep.mubr.f32.mxu0 0.0
        %6392 = vmatmul.mubr.f32.gmra.mxu0 %v6061
        %v6393 = vpop.f32.mrf.mxu0
        %v6394 = vadd.f32 0.0, %v6393
        %v6395 = vpop.f32.mrf.mxu0
        %v6396 = vadd.f32 0.0, %v6395
        %6397 = vmatprep.mubr.f32.mxu0 0.0
        %6398 = vmatmul.mubr.f32.gmra.mxu0 %v6064
        %v6399 = vpop.f32.mrf.mxu0
        %v6400 = vadd.f32 0.0, %v6399
        %v6401 = vpop.f32.mrf.mxu0
        %v6402 = vadd.f32 0.0, %v6401
        %6403 = vmatprep.mubr.f32.mxu0 0.0
        %6404 = vmatmul.mubr.f32.gmra.mxu0 %v6067
        %v6405 = vpop.f32.mrf.mxu0
        %v6406 = vadd.f32 0.0, %v6405
        %v6407 = vpop.f32.mrf.mxu0
        %v6408 = vadd.f32 0.0, %v6407
        %6409 = vmatprep.mubr.f32.mxu0 0.0
        %6410 = vmatmul.mubr.f32.gmra.mxu0 %v6070
        %v6411 = vpop.f32.mrf.mxu0
        %v6412 = vadd.f32 0.0, %v6411
        %v6413 = vpop.f32.mrf.mxu0
        %v6414 = vadd.f32 0.0, %v6413
        %6415 = vmatprep.mubr.f32.mxu0 0.0
        %6416 = vmatmul.mubr.f32.gmra.mxu0 %v6073
        %v6417 = vpop.f32.mrf.mxu0
        %v6418 = vadd.f32 0.0, %v6417
        %v6419 = vpop.f32.mrf.mxu0
        %v6420 = vadd.f32 0.0, %v6419
        %6421 = vmatprep.mubr.f32.mxu0 0.0
        %6422 = vmatmul.mubr.f32.gmra.mxu0 %v6076
        %v6423 = vpop.f32.mrf.mxu0
        %v6424 = vadd.f32 0.0, %v6423
        %v6425 = vpop.f32.mrf.mxu0
        %v6426 = vadd.f32 0.0, %v6425
        %6427 = vmatprep.mubr.f32.mxu0 0.0
        %6428 = vmatmul.mubr.f32.gmra.mxu0 %v6079
        %v6429 = vpop.f32.mrf.mxu0
        %v6430 = vadd.f32 0.0, %v6429
        %v6431 = vpop.f32.mrf.mxu0
        %v6432 = vadd.f32 0.0, %v6431
        %6433 = vmatprep.mubr.f32.mxu0 0.0
        %6434 = vmatmul.mubr.f32.gmra.mxu0 %v6082
        %v6435 = vpop.f32.mrf.mxu0
        %v6436 = vadd.f32 0.0, %v6435
        %v6437 = vpop.f32.mrf.mxu0
        %v6438 = vadd.f32 0.0, %v6437
        %6439 = vmatprep.mubr.f32.mxu0 0.0
        %6440 = vmatmul.mubr.f32.gmra.mxu0 %v6085
        %v6441 = vpop.f32.mrf.mxu0
        %v6442 = vadd.f32 0.0, %v6441
        %v6443 = vpop.f32.mrf.mxu0
        %v6444 = vadd.f32 0.0, %v6443
        %6445 = vmatprep.mubr.f32.mxu0 0.0
        %6446 = vmatmul.mubr.f32.gmra.mxu0 %v6088
        %v6447 = vpop.f32.mrf.mxu0
        %v6448 = vadd.f32 0.0, %v6447
        %v6449 = vpop.f32.mrf.mxu0
        %v6450 = vadd.f32 0.0, %v6449
        %6451 = vmatprep.mubr.f32.mxu0 0.0
        %6452 = vmatmul.mubr.f32.gmra.mxu0 %v6091
        %v6453 = vpop.f32.mrf.mxu0
        %v6454 = vadd.f32 0.0, %v6453
        %v6455 = vpop.f32.mrf.mxu0
        %v6456 = vadd.f32 0.0, %v6455
        %6457 = vmatprep.mubr.f32.mxu0 0.0
        %6458 = vmatmul.mubr.f32.gmra.mxu0 %v6094
        %v6459 = vpop.f32.mrf.mxu0
        %v6460 = vadd.f32 0.0, %v6459
        %v6461 = vpop.f32.mrf.mxu0
        %v6462 = vadd.f32 0.0, %v6461
        %6463 = vmatprep.mubr.f32.mxu0 0.0
        %6464 = vmatmul.mubr.f32.gmra.mxu0 %v6097
        %v6465 = vpop.f32.mrf.mxu0
        %v6466 = vadd.f32 0.0, %v6465
        %v6467 = vpop.f32.mrf.mxu0
        %v6468 = vadd.f32 0.0, %v6467
        %6469 = vmatprep.mubr.f32.mxu0 0.0
        %6470 = vmatmul.mubr.f32.gmra.mxu0 %v6100
        %v6471 = vpop.f32.mrf.mxu0
        %v6472 = vadd.f32 0.0, %v6471
        %v6473 = vpop.f32.mrf.mxu0
        %v6474 = vadd.f32 0.0, %v6473
        %6475 = vmatprep.mubr.f32.mxu0 0.0
        %6476 = vmatmul.mubr.f32.gmra.mxu0 %v6103
        %v6477 = vpop.f32.mrf.mxu0
        %v6478 = vadd.f32 0.0, %v6477
        %v6479 = vpop.f32.mrf.mxu0
        %v6480 = vadd.f32 0.0, %v6479
        %6481 = vmatprep.mubr.f32.mxu0 0.0
        %6482 = vmatmul.mubr.f32.gmra.mxu0 %v6106
        %v6483 = vpop.f32.mrf.mxu0
        %v6484 = vadd.f32 0.0, %v6483
        %v6485 = vpop.f32.mrf.mxu0
        %v6486 = vadd.f32 0.0, %v6485
        %6487 = vmatprep.mubr.f32.mxu0 0.0
        %6488 = vmatmul.mubr.f32.gmra.mxu0 %v6109
        %v6489 = vpop.f32.mrf.mxu0
        %v6490 = vadd.f32 0.0, %v6489
        %v6491 = vpop.f32.mrf.mxu0
        %v6492 = vadd.f32 0.0, %v6491
        %6493 = vmatprep.mubr.f32.mxu0 0.0
        %6494 = vmatmul.mubr.f32.gmra.mxu0 %v6112
        %v6495 = vpop.f32.mrf.mxu0
        %v6496 = vadd.f32 0.0, %v6495
        %v6497 = vpop.f32.mrf.mxu0
        %v6498 = vadd.f32 0.0, %v6497
        %6499 = vmatprep.mubr.f32.mxu0 0.0
        %6500 = vmatmul.mubr.f32.gmra.mxu0 %v6115
        %v6501 = vpop.f32.mrf.mxu0
        %v6502 = vadd.f32 0.0, %v6501
        %v6503 = vpop.f32.mrf.mxu0
        %v6504 = vadd.f32 0.0, %v6503
        %6505 = vmatprep.mubr.f32.mxu0 0.0
        %6506 = vmatmul.mubr.f32.gmra.mxu0 %v6118
        %v6507 = vpop.f32.mrf.mxu0
        %v6508 = vadd.f32 0.0, %v6507
        %v6509 = vpop.f32.mrf.mxu0
        %v6510 = vadd.f32 0.0, %v6509
        %6511 = vmatprep.mubr.f32.mxu0 0.0
        %6512 = vmatmul.mubr.f32.gmra.mxu0 %v6121
        %v6513 = vpop.f32.mrf.mxu0
        %v6514 = vadd.f32 0.0, %v6513
        %v6515 = vpop.f32.mrf.mxu0
        %v6516 = vadd.f32 0.0, %v6515
        %6517 = vmatprep.mubr.f32.mxu0 0.0
        %6518 = vmatmul.mubr.f32.gmra.mxu0 %v6124
        %v6519 = vpop.f32.mrf.mxu0
        %v6520 = vadd.f32 0.0, %v6519
        %v6521 = vpop.f32.mrf.mxu0
        %v6522 = vadd.f32 0.0, %v6521
        %6523 = vmatprep.mubr.f32.mxu0 0.0
        %6524 = vmatmul.mubr.f32.gmra.mxu0 %v6127
        %v6525 = vpop.f32.mrf.mxu0
        %v6526 = vadd.f32 0.0, %v6525
        %v6527 = vpop.f32.mrf.mxu0
        %v6528 = vadd.f32 0.0, %v6527
        %6529 = vmatprep.mubr.f32.mxu0 0.0
        %6530 = vmatmul.mubr.f32.gmra.mxu0 %v6130
        %v6531 = vpop.f32.mrf.mxu0
        %v6532 = vadd.f32 0.0, %v6531
        %v6533 = vpop.f32.mrf.mxu0
        %v6534 = vadd.f32 0.0, %v6533
        %6535 = vmatprep.mubr.f32.mxu0 0.0
        %6536 = vmatmul.mubr.f32.gmra.mxu0 %v6133
        %v6537 = vpop.f32.mrf.mxu0
        %v6538 = vadd.f32 0.0, %v6537
        %v6539 = vpop.f32.mrf.mxu0
        %v6540 = vadd.f32 0.0, %v6539
        %6541 = vmatprep.mubr.f32.mxu0 0.0
        %6542 = vmatmul.mubr.f32.gmra.mxu0 %v6136
        %v6543 = vpop.f32.mrf.mxu0
        %v6544 = vadd.f32 0.0, %v6543
        %v6545 = vpop.f32.mrf.mxu0
        %v6546 = vadd.f32 0.0, %v6545
        %6547 = vmatprep.mubr.f32.mxu0 0.0
        %6548 = vmatmul.mubr.f32.gmra.mxu0 %v6139
        %v6549 = vpop.f32.mrf.mxu0
        %v6550 = vadd.f32 0.0, %v6549
        %v6551 = vpop.f32.mrf.mxu0
        %v6552 = vadd.f32 0.0, %v6551
        %6553 = vmatprep.mubr.f32.mxu0 0.0
        %6554 = vmatmul.mubr.f32.gmra.mxu0 %v6142
        %v6555 = vpop.f32.mrf.mxu0
        %v6556 = vadd.f32 0.0, %v6555
        %v6557 = vpop.f32.mrf.mxu0
        %v6558 = vadd.f32 0.0, %v6557
        %6559 = vmatprep.mubr.f32.mxu0 0.0
        %6560 = vmatmul.mubr.f32.gmra.mxu0 %v6145
        %v6561 = vpop.f32.mrf.mxu0
        %v6562 = vadd.f32 0.0, %v6561
        %v6563 = vpop.f32.mrf.mxu0
        %v6564 = vadd.f32 0.0, %v6563
        %6565 = vmatprep.mubr.f32.mxu0 0.0
        %6566 = vmatmul.mubr.f32.gmra.mxu0 %v6148
        %v6567 = vpop.f32.mrf.mxu0
        %v6568 = vadd.f32 0.0, %v6567
        %v6569 = vpop.f32.mrf.mxu0
        %v6570 = vadd.f32 0.0, %v6569
        %6571 = vmatprep.mubr.f32.mxu0 0.0
        %6572 = vmatmul.mubr.f32.gmra.mxu0 %v6151
        %v6573 = vpop.f32.mrf.mxu0
        %v6574 = vadd.f32 0.0, %v6573
        %v6575 = vpop.f32.mrf.mxu0
        %v6576 = vadd.f32 0.0, %v6575
        %6577 = vmatprep.mubr.f32.mxu0 0.0
        %6578 = vmatmul.mubr.f32.gmra.mxu0 %v6154
        %v6579 = vpop.f32.mrf.mxu0
        %v6580 = vadd.f32 0.0, %v6579
        %v6581 = vpop.f32.mrf.mxu0
        %v6582 = vadd.f32 0.0, %v6581
        %6583 = vmatprep.mubr.f32.mxu0 0.0
        %6584 = vmatmul.mubr.f32.gmra.mxu0 %v6157
        %v6585 = vpop.f32.mrf.mxu0
        %v6586 = vadd.f32 0.0, %v6585
        %v6587 = vpop.f32.mrf.mxu0
        %v6588 = vadd.f32 0.0, %v6587
        %6589 = vmatprep.mubr.f32.mxu0 0.0
        %6590 = vmatmul.mubr.f32.gmra.mxu0 %v6160
        %v6591 = vpop.f32.mrf.mxu0
        %v6592 = vadd.f32 0.0, %v6591
        %v6593 = vpop.f32.mrf.mxu0
        %v6594 = vadd.f32 0.0, %v6593
        %6595 = vmatprep.mubr.f32.mxu0 0.0
        %6596 = vmatmul.mubr.f32.gmra.mxu0 %v6163
        %v6597 = vpop.f32.mrf.mxu0
        %v6598 = vadd.f32 0.0, %v6597
        %v6599 = vpop.f32.mrf.mxu0
        %v6600 = vadd.f32 0.0, %v6599
        %6601 = vmatprep.mubr.f32.mxu0 0.0
        %6602 = vmatmul.mubr.f32.gmra.mxu0 %v6166
        %v6603 = vpop.f32.mrf.mxu0
        %v6604 = vadd.f32 0.0, %v6603
        %v6605 = vpop.f32.mrf.mxu0
        %v6606 = vadd.f32 0.0, %v6605
        %6607 = vmatprep.mubr.f32.mxu0 0.0
        %6608 = vmatmul.mubr.f32.gmra.mxu0 %v6169
        %v6609 = vpop.f32.mrf.mxu0
        %v6610 = vadd.f32 0.0, %v6609
        %v6611 = vpop.f32.mrf.mxu0
        %v6612 = vadd.f32 0.0, %v6611
        %6613 = vmatprep.mubr.f32.mxu0 0.0
        %6614 = vmatmul.mubr.f32.gmra.mxu0 %v6172
        %v6615 = vpop.f32.mrf.mxu0
        %v6616 = vadd.f32 0.0, %v6615
        %v6617 = vpop.f32.mrf.mxu0
        %v6618 = vadd.f32 0.0, %v6617
        %6619 = vmatprep.mubr.f32.mxu0 0.0
        %6620 = vmatmul.mubr.f32.gmra.mxu0 %v6175
        %v6621 = vpop.f32.mrf.mxu0
        %v6622 = vadd.f32 0.0, %v6621
        %v6623 = vpop.f32.mrf.mxu0
        %v6624 = vadd.f32 0.0, %v6623
        %6625 = vdwg.mxu0
        %v6626 = vmax.f32 %v6244, %v6256
        %v6627 = vmax.f32 %v6250, %v6262
        %v6628 = vmax.f32 %v6626, %v6268
        %v6629 = vmax.f32 %v6627, %v6274
        %v6630 = vmax.f32 %v6628, %v6280
        %v6631 = vmax.f32 %v6629, %v6286
        %v6632 = vmax.f32 %v6630, %v6292
        %v6633 = vmax.f32 %v6631, %v6298
        %v6634 = vmax.f32 %v6632, %v6304
        %v6635 = vmax.f32 %v6633, %v6310
        %v6636 = vmax.f32 %v6634, %v6316
        %v6637 = vmax.f32 %v6635, %v6322
        %v6638 = vmax.f32 %v6636, %v6328
        %v6639 = vmax.f32 %v6637, %v6334
        %v6640 = vmax.f32 %v6638, %v6340
        %v6641 = vmax.f32 %v6639, %v6346
        %v6642 = vmax.f32 %v6640, %v6352
        %v6643 = vmax.f32 %v6641, %v6358
        %v6644 = vmax.f32 %v6642, %v6364
        %v6645 = vmax.f32 %v6643, %v6370
        %v6646 = vmax.f32 %v6644, %v6376
        %v6647 = vmax.f32 %v6645, %v6382
        %v6648 = vmax.f32 %v6646, %v6388
        %v6649 = vmax.f32 %v6647, %v6394
        %v6650 = vmax.f32 %v6648, %v6400
        %v6651 = vmax.f32 %v6649, %v6406
        %v6652 = vmax.f32 %v6650, %v6412
        %v6653 = vmax.f32 %v6651, %v6418
        %v6654 = vmax.f32 %v6652, %v6424
        %v6655 = vmax.f32 %v6653, %v6430
        %v6656 = vmax.f32 %v6654, %v6436
        %v6657 = vmax.f32 %v6655, %v6442
        %v6658 = vmax.f32 %v6656, %v6448
        %v6659 = vmax.f32 %v6657, %v6454
        %v6660 = vmax.f32 %v6658, %v6460
        %v6661 = vmax.f32 %v6659, %v6466
        %v6662 = vmax.f32 %v6660, %v6472
        %v6663 = vmax.f32 %v6661, %v6478
        %v6664 = vmax.f32 %v6662, %v6484
        %v6665 = vmax.f32 %v6663, %v6490
        %v6666 = vmax.f32 %v6664, %v6496
        %v6667 = vmax.f32 %v6665, %v6502
        %v6668 = vmax.f32 %v6666, %v6508
        %v6669 = vmax.f32 %v6667, %v6514
        %v6670 = vmax.f32 %v6668, %v6520
        %v6671 = vmax.f32 %v6669, %v6526
        %v6672 = vmax.f32 %v6670, %v6532
        %v6673 = vmax.f32 %v6671, %v6538
        %v6674 = vmax.f32 %v6672, %v6544
        %v6675 = vmax.f32 %v6673, %v6550
        %v6676 = vmax.f32 %v6674, %v6556
        %v6677 = vmax.f32 %v6675, %v6562
        %v6678 = vmax.f32 %v6676, %v6568
        %v6679 = vmax.f32 %v6677, %v6574
        %v6680 = vmax.f32 %v6678, %v6580
        %v6681 = vmax.f32 %v6679, %v6586
        %v6682 = vmax.f32 %v6680, %v6592
        %v6683 = vmax.f32 %v6681, %v6598
        %v6684 = vmax.f32 %v6682, %v6604
        %v6685 = vmax.f32 %v6683, %v6610
        %v6686 = vmax.f32 %v6684, %v6616
        %v6687 = vmax.f32 %v6685, %v6622
        %v6688 = vmax.f32 %v6686, %v6687
        %v6689 = vrot.slane %v6688, 4
        %v6690 = vmax.f32 %v6688, %v6689
        %v6691 = vrot.slane %v6690, 2
        %v6692 = vmax.f32 %v6690, %v6691
        %v6693 = vrot.slane %v6692, 1
        %v6694 = vmax.f32 %v6692, %v6693
        %v6695 = vmax.f32 %v6246, %v6258
        %v6696 = vmax.f32 %v6252, %v6264
        %v6697 = vmax.f32 %v6695, %v6270
        %v6698 = vmax.f32 %v6696, %v6276
        %v6699 = vmax.f32 %v6697, %v6282
        %v6700 = vmax.f32 %v6698, %v6288
        %v6701 = vmax.f32 %v6699, %v6294
        %v6702 = vmax.f32 %v6700, %v6300
        %v6703 = vmax.f32 %v6701, %v6306
        %v6704 = vmax.f32 %v6702, %v6312
        %v6705 = vmax.f32 %v6703, %v6318
        %v6706 = vmax.f32 %v6704, %v6324
        %v6707 = vmax.f32 %v6705, %v6330
        %v6708 = vmax.f32 %v6706, %v6336
        %v6709 = vmax.f32 %v6707, %v6342
        %v6710 = vmax.f32 %v6708, %v6348
        %v6711 = vmax.f32 %v6709, %v6354
        %v6712 = vmax.f32 %v6710, %v6360
        %v6713 = vmax.f32 %v6711, %v6366
        %v6714 = vmax.f32 %v6712, %v6372
        %v6715 = vmax.f32 %v6713, %v6378
        %v6716 = vmax.f32 %v6714, %v6384
        %v6717 = vmax.f32 %v6715, %v6390
        %v6718 = vmax.f32 %v6716, %v6396
        %v6719 = vmax.f32 %v6717, %v6402
        %v6720 = vmax.f32 %v6718, %v6408
        %v6721 = vmax.f32 %v6719, %v6414
        %v6722 = vmax.f32 %v6720, %v6420
        %v6723 = vmax.f32 %v6721, %v6426
        %v6724 = vmax.f32 %v6722, %v6432
        %v6725 = vmax.f32 %v6723, %v6438
        %v6726 = vmax.f32 %v6724, %v6444
        %v6727 = vmax.f32 %v6725, %v6450
        %v6728 = vmax.f32 %v6726, %v6456
        %v6729 = vmax.f32 %v6727, %v6462
        %v6730 = vmax.f32 %v6728, %v6468
        %v6731 = vmax.f32 %v6729, %v6474
        %v6732 = vmax.f32 %v6730, %v6480
        %v6733 = vmax.f32 %v6731, %v6486
        %v6734 = vmax.f32 %v6732, %v6492
        %v6735 = vmax.f32 %v6733, %v6498
        %v6736 = vmax.f32 %v6734, %v6504
        %v6737 = vmax.f32 %v6735, %v6510
        %v6738 = vmax.f32 %v6736, %v6516
        %v6739 = vmax.f32 %v6737, %v6522
        %v6740 = vmax.f32 %v6738, %v6528
        %v6741 = vmax.f32 %v6739, %v6534
        %v6742 = vmax.f32 %v6740, %v6540
        %v6743 = vmax.f32 %v6741, %v6546
        %v6744 = vmax.f32 %v6742, %v6552
        %v6745 = vmax.f32 %v6743, %v6558
        %v6746 = vmax.f32 %v6744, %v6564
        %v6747 = vmax.f32 %v6745, %v6570
        %v6748 = vmax.f32 %v6746, %v6576
        %v6749 = vmax.f32 %v6747, %v6582
        %v6750 = vmax.f32 %v6748, %v6588
        %v6751 = vmax.f32 %v6749, %v6594
        %v6752 = vmax.f32 %v6750, %v6600
        %v6753 = vmax.f32 %v6751, %v6606
        %v6754 = vmax.f32 %v6752, %v6612
        %v6755 = vmax.f32 %v6753, %v6618
        %v6756 = vmax.f32 %v6754, %v6624
        %v6757 = vmax.f32 %v6755, %v6756
        %v6758 = vrot.slane %v6757, 4
        %v6759 = vmax.f32 %v6757, %v6758
        %v6760 = vrot.slane %v6759, 2
        %v6761 = vmax.f32 %v6759, %v6760
        %v6762 = vrot.slane %v6761, 1
        %v6763 = vmax.f32 %v6761, %v6762
        %v6764 = vsub.f32 %v6244, %v6694
        %v6765 = vsub.f32 %v6246, %v6763
        %v6766 = vsub.f32 %v6250, %v6694
        %v6767 = vsub.f32 %v6252, %v6763
        %v6768 = vsub.f32 %v6256, %v6694
        %v6769 = vsub.f32 %v6258, %v6763
        %v6770 = vsub.f32 %v6262, %v6694
        %v6771 = vsub.f32 %v6264, %v6763
        %v6772 = vsub.f32 %v6268, %v6694
        %v6773 = vsub.f32 %v6270, %v6763
        %v6774 = vsub.f32 %v6274, %v6694
        %v6775 = vsub.f32 %v6276, %v6763
        %v6776 = vsub.f32 %v6280, %v6694
        %v6777 = vsub.f32 %v6282, %v6763
        %v6778 = vsub.f32 %v6286, %v6694
        %v6779 = vsub.f32 %v6288, %v6763
        %v6780 = vsub.f32 %v6292, %v6694
        %v6781 = vsub.f32 %v6294, %v6763
        %v6782 = vsub.f32 %v6298, %v6694
        %v6783 = vsub.f32 %v6300, %v6763
        %v6784 = vsub.f32 %v6304, %v6694
        %v6785 = vsub.f32 %v6306, %v6763
        %v6786 = vsub.f32 %v6310, %v6694
        %v6787 = vsub.f32 %v6312, %v6763
        %v6788 = vsub.f32 %v6316, %v6694
        %v6789 = vsub.f32 %v6318, %v6763
        %v6790 = vsub.f32 %v6322, %v6694
        %v6791 = vsub.f32 %v6324, %v6763
        %v6792 = vsub.f32 %v6328, %v6694
        %v6793 = vsub.f32 %v6330, %v6763
        %v6794 = vsub.f32 %v6334, %v6694
        %v6795 = vsub.f32 %v6336, %v6763
        %v6796 = vsub.f32 %v6340, %v6694
        %v6797 = vsub.f32 %v6342, %v6763
        %v6798 = vsub.f32 %v6346, %v6694
        %v6799 = vsub.f32 %v6348, %v6763
        %v6800 = vsub.f32 %v6352, %v6694
        %v6801 = vsub.f32 %v6354, %v6763
        %v6802 = vsub.f32 %v6358, %v6694
        %v6803 = vsub.f32 %v6360, %v6763
        %v6804 = vsub.f32 %v6364, %v6694
        %v6805 = vsub.f32 %v6366, %v6763
        %v6806 = vsub.f32 %v6370, %v6694
        %v6807 = vsub.f32 %v6372, %v6763
        %v6808 = vsub.f32 %v6376, %v6694
        %v6809 = vsub.f32 %v6378, %v6763
        %v6810 = vsub.f32 %v6382, %v6694
        %v6811 = vsub.f32 %v6384, %v6763
        %v6812 = vsub.f32 %v6388, %v6694
        %v6813 = vsub.f32 %v6390, %v6763
        %v6814 = vsub.f32 %v6394, %v6694
        %v6815 = vsub.f32 %v6396, %v6763
        %v6816 = vsub.f32 %v6400, %v6694
        %v6817 = vsub.f32 %v6402, %v6763
        %v6818 = vsub.f32 %v6406, %v6694
        %v6819 = vsub.f32 %v6408, %v6763
        %v6820 = vsub.f32 %v6412, %v6694
        %v6821 = vsub.f32 %v6414, %v6763
        %v6822 = vsub.f32 %v6418, %v6694
        %v6823 = vsub.f32 %v6420, %v6763
        %v6824 = vsub.f32 %v6424, %v6694
        %v6825 = vsub.f32 %v6426, %v6763
        %v6826 = vsub.f32 %v6430, %v6694
        %v6827 = vsub.f32 %v6432, %v6763
        %v6828 = vsub.f32 %v6436, %v6694
        %v6829 = vsub.f32 %v6438, %v6763
        %v6830 = vsub.f32 %v6442, %v6694
        %v6831 = vsub.f32 %v6444, %v6763
        %v6832 = vsub.f32 %v6448, %v6694
        %v6833 = vsub.f32 %v6450, %v6763
        %v6834 = vsub.f32 %v6454, %v6694
        %v6835 = vsub.f32 %v6456, %v6763
        %v6836 = vsub.f32 %v6460, %v6694
        %v6837 = vsub.f32 %v6462, %v6763
        %v6838 = vsub.f32 %v6466, %v6694
        %v6839 = vsub.f32 %v6468, %v6763
        %v6840 = vsub.f32 %v6472, %v6694
        %v6841 = vsub.f32 %v6474, %v6763
        %v6842 = vsub.f32 %v6478, %v6694
        %v6843 = vsub.f32 %v6480, %v6763
        %v6844 = vsub.f32 %v6484, %v6694
        %v6845 = vsub.f32 %v6486, %v6763
        %v6846 = vsub.f32 %v6490, %v6694
        %v6847 = vsub.f32 %v6492, %v6763
        %v6848 = vsub.f32 %v6496, %v6694
        %v6849 = vsub.f32 %v6498, %v6763
        %v6850 = vsub.f32 %v6502, %v6694
        %v6851 = vsub.f32 %v6504, %v6763
        %v6852 = vsub.f32 %v6508, %v6694
        %v6853 = vsub.f32 %v6510, %v6763
        %v6854 = vsub.f32 %v6514, %v6694
        %v6855 = vsub.f32 %v6516, %v6763
        %v6856 = vsub.f32 %v6520, %v6694
        %v6857 = vsub.f32 %v6522, %v6763
        %v6858 = vsub.f32 %v6526, %v6694
        %v6859 = vsub.f32 %v6528, %v6763
        %v6860 = vsub.f32 %v6532, %v6694
        %v6861 = vsub.f32 %v6534, %v6763
        %v6862 = vsub.f32 %v6538, %v6694
        %v6863 = vsub.f32 %v6540, %v6763
        %v6864 = vsub.f32 %v6544, %v6694
        %v6865 = vsub.f32 %v6546, %v6763
        %v6866 = vsub.f32 %v6550, %v6694
        %v6867 = vsub.f32 %v6552, %v6763
        %v6868 = vsub.f32 %v6556, %v6694
        %v6869 = vsub.f32 %v6558, %v6763
        %v6870 = vsub.f32 %v6562, %v6694
        %v6871 = vsub.f32 %v6564, %v6763
        %v6872 = vsub.f32 %v6568, %v6694
        %v6873 = vsub.f32 %v6570, %v6763
        %v6874 = vsub.f32 %v6574, %v6694
        %v6875 = vsub.f32 %v6576, %v6763
        %v6876 = vsub.f32 %v6580, %v6694
        %v6877 = vsub.f32 %v6582, %v6763
        %v6878 = vsub.f32 %v6586, %v6694
        %v6879 = vsub.f32 %v6588, %v6763
        %v6880 = vsub.f32 %v6592, %v6694
        %v6881 = vsub.f32 %v6594, %v6763
        %v6882 = vsub.f32 %v6598, %v6694
        %v6883 = vsub.f32 %v6600, %v6763
        %v6884 = vsub.f32 %v6604, %v6694
        %v6885 = vsub.f32 %v6606, %v6763
        %v6886 = vsub.f32 %v6610, %v6694
        %v6887 = vsub.f32 %v6612, %v6763
        %v6888 = vsub.f32 %v6616, %v6694
        %v6889 = vsub.f32 %v6618, %v6763
        %v6890 = vsub.f32 %v6622, %v6694
        %v6891 = vsub.f32 %v6624, %v6763
        %v6892 = vmul.f32 %v6764, 1.442695
        %v6893 = vpow.pop %v6892
        %v6894 = vmul.f32 %v6765, 1.442695
        %v6895 = vpow.pop %v6894
        %v6896 = vmul.f32 %v6766, 1.442695
        %v6897 = vpow.pop %v6896
        %v6898 = vmul.f32 %v6767, 1.442695
        %v6899 = vpow.pop %v6898
        %v6900 = vmul.f32 %v6768, 1.442695
        %v6901 = vpow.pop %v6900
        %v6902 = vmul.f32 %v6769, 1.442695
        %v6903 = vpow.pop %v6902
        %v6904 = vmul.f32 %v6770, 1.442695
        %v6905 = vpow.pop %v6904
        %v6906 = vmul.f32 %v6771, 1.442695
        %v6907 = vpow.pop %v6906
        %v6908 = vmul.f32 %v6772, 1.442695
        %v6909 = vpow.pop %v6908
        %v6910 = vmul.f32 %v6773, 1.442695
        %v6911 = vpow.pop %v6910
        %v6912 = vmul.f32 %v6774, 1.442695
        %v6913 = vpow.pop %v6912
        %v6914 = vmul.f32 %v6775, 1.442695
        %v6915 = vpow.pop %v6914
        %v6916 = vmul.f32 %v6776, 1.442695
        %v6917 = vpow.pop %v6916
        %v6918 = vmul.f32 %v6777, 1.442695
        %v6919 = vpow.pop %v6918
        %v6920 = vmul.f32 %v6778, 1.442695
        %v6921 = vpow.pop %v6920
        %v6922 = vmul.f32 %v6779, 1.442695
        %v6923 = vpow.pop %v6922
        %v6924 = vmul.f32 %v6780, 1.442695
        %v6925 = vpow.pop %v6924
        %v6926 = vmul.f32 %v6781, 1.442695
        %v6927 = vpow.pop %v6926
        %v6928 = vmul.f32 %v6782, 1.442695
        %v6929 = vpow.pop %v6928
        %v6930 = vmul.f32 %v6783, 1.442695
        %v6931 = vpow.pop %v6930
        %v6932 = vmul.f32 %v6784, 1.442695
        %v6933 = vpow.pop %v6932
        %v6934 = vmul.f32 %v6785, 1.442695
        %v6935 = vpow.pop %v6934
        %v6936 = vmul.f32 %v6786, 1.442695
        %v6937 = vpow.pop %v6936
        %v6938 = vmul.f32 %v6787, 1.442695
        %v6939 = vpow.pop %v6938
        %v6940 = vmul.f32 %v6788, 1.442695
        %v6941 = vpow.pop %v6940
        %v6942 = vmul.f32 %v6789, 1.442695
        %v6943 = vpow.pop %v6942
        %v6944 = vmul.f32 %v6790, 1.442695
        %v6945 = vpow.pop %v6944
        %v6946 = vmul.f32 %v6791, 1.442695
        %v6947 = vpow.pop %v6946
        %v6948 = vmul.f32 %v6792, 1.442695
        %v6949 = vpow.pop %v6948
        %v6950 = vmul.f32 %v6793, 1.442695
        %v6951 = vpow.pop %v6950
        %v6952 = vmul.f32 %v6794, 1.442695
        %v6953 = vpow.pop %v6952
        %v6954 = vmul.f32 %v6795, 1.442695
        %v6955 = vpow.pop %v6954
        %v6956 = vmul.f32 %v6796, 1.442695
        %v6957 = vpow.pop %v6956
        %v6958 = vmul.f32 %v6797, 1.442695
        %v6959 = vpow.pop %v6958
        %v6960 = vmul.f32 %v6798, 1.442695
        %v6961 = vpow.pop %v6960
        %v6962 = vmul.f32 %v6799, 1.442695
        %v6963 = vpow.pop %v6962
        %v6964 = vmul.f32 %v6800, 1.442695
        %v6965 = vpow.pop %v6964
        %v6966 = vmul.f32 %v6801, 1.442695
        %v6967 = vpow.pop %v6966
        %v6968 = vmul.f32 %v6802, 1.442695
        %v6969 = vpow.pop %v6968
        %v6970 = vmul.f32 %v6803, 1.442695
        %v6971 = vpow.pop %v6970
        %v6972 = vmul.f32 %v6804, 1.442695
        %v6973 = vpow.pop %v6972
        %v6974 = vmul.f32 %v6805, 1.442695
        %v6975 = vpow.pop %v6974
        %v6976 = vmul.f32 %v6806, 1.442695
        %v6977 = vpow.pop %v6976
        %v6978 = vmul.f32 %v6807, 1.442695
        %v6979 = vpow.pop %v6978
        %v6980 = vmul.f32 %v6808, 1.442695
        %v6981 = vpow.pop %v6980
        %v6982 = vmul.f32 %v6809, 1.442695
        %v6983 = vpow.pop %v6982
        %v6984 = vmul.f32 %v6810, 1.442695
        %v6985 = vpow.pop %v6984
        %v6986 = vmul.f32 %v6811, 1.442695
        %v6987 = vpow.pop %v6986
        %v6988 = vmul.f32 %v6812, 1.442695
        %v6989 = vpow.pop %v6988
        %v6990 = vmul.f32 %v6813, 1.442695
        %v6991 = vpow.pop %v6990
        %v6992 = vmul.f32 %v6814, 1.442695
        %v6993 = vpow.pop %v6992
        %v6994 = vmul.f32 %v6815, 1.442695
        %v6995 = vpow.pop %v6994
        %v6996 = vmul.f32 %v6816, 1.442695
        %v6997 = vpow.pop %v6996
        %v6998 = vmul.f32 %v6817, 1.442695
        %v6999 = vpow.pop %v6998
        %v7000 = vmul.f32 %v6818, 1.442695
        %v7001 = vpow.pop %v7000
        %v7002 = vmul.f32 %v6819, 1.442695
        %v7003 = vpow.pop %v7002
        %v7004 = vmul.f32 %v6820, 1.442695
        %v7005 = vpow.pop %v7004
        %v7006 = vmul.f32 %v6821, 1.442695
        %v7007 = vpow.pop %v7006
        %v7008 = vmul.f32 %v6822, 1.442695
        %v7009 = vpow.pop %v7008
        %v7010 = vmul.f32 %v6823, 1.442695
        %v7011 = vpow.pop %v7010
        %v7012 = vmul.f32 %v6824, 1.442695
        %v7013 = vpow.pop %v7012
        %v7014 = vmul.f32 %v6825, 1.442695
        %v7015 = vpow.pop %v7014
        %v7016 = vmul.f32 %v6826, 1.442695
        %v7017 = vpow.pop %v7016
        %v7018 = vmul.f32 %v6827, 1.442695
        %v7019 = vpow.pop %v7018
        %v7020 = vmul.f32 %v6828, 1.442695
        %v7021 = vpow.pop %v7020
        %v7022 = vmul.f32 %v6829, 1.442695
        %v7023 = vpow.pop %v7022
        %v7024 = vmul.f32 %v6830, 1.442695
        %v7025 = vpow.pop %v7024
        %v7026 = vmul.f32 %v6831, 1.442695
        %v7027 = vpow.pop %v7026
        %v7028 = vmul.f32 %v6832, 1.442695
        %v7029 = vpow.pop %v7028
        %v7030 = vmul.f32 %v6833, 1.442695
        %v7031 = vpow.pop %v7030
        %v7032 = vmul.f32 %v6834, 1.442695
        %v7033 = vpow.pop %v7032
        %v7034 = vmul.f32 %v6835, 1.442695
        %v7035 = vpow.pop %v7034
        %v7036 = vmul.f32 %v6836, 1.442695
        %v7037 = vpow.pop %v7036
        %v7038 = vmul.f32 %v6837, 1.442695
        %v7039 = vpow.pop %v7038
        %v7040 = vmul.f32 %v6838, 1.442695
        %v7041 = vpow.pop %v7040
        %v7042 = vmul.f32 %v6839, 1.442695
        %v7043 = vpow.pop %v7042
        %v7044 = vmul.f32 %v6840, 1.442695
        %v7045 = vpow.pop %v7044
        %v7046 = vmul.f32 %v6841, 1.442695
        %v7047 = vpow.pop %v7046
        %v7048 = vmul.f32 %v6842, 1.442695
        %v7049 = vpow.pop %v7048
        %v7050 = vmul.f32 %v6843, 1.442695
        %v7051 = vpow.pop %v7050
        %v7052 = vmul.f32 %v6844, 1.442695
        %v7053 = vpow.pop %v7052
        %v7054 = vmul.f32 %v6845, 1.442695
        %v7055 = vpow.pop %v7054
        %v7056 = vmul.f32 %v6846, 1.442695
        %v7057 = vpow.pop %v7056
        %v7058 = vmul.f32 %v6847, 1.442695
        %v7059 = vpow.pop %v7058
        %v7060 = vmul.f32 %v6848, 1.442695
        %v7061 = vpow.pop %v7060
        %v7062 = vmul.f32 %v6849, 1.442695
        %v7063 = vpow.pop %v7062
        %v7064 = vmul.f32 %v6850, 1.442695
        %v7065 = vpow.pop %v7064
        %v7066 = vmul.f32 %v6851, 1.442695
        %v7067 = vpow.pop %v7066
        %v7068 = vmul.f32 %v6852, 1.442695
        %v7069 = vpow.pop %v7068
        %v7070 = vmul.f32 %v6853, 1.442695
        %v7071 = vpow.pop %v7070
        %v7072 = vmul.f32 %v6854, 1.442695
        %v7073 = vpow.pop %v7072
        %v7074 = vmul.f32 %v6855, 1.442695
        %v7075 = vpow.pop %v7074
        %v7076 = vmul.f32 %v6856, 1.442695
        %v7077 = vpow.pop %v7076
        %v7078 = vmul.f32 %v6857, 1.442695
        %v7079 = vpow.pop %v7078
        %v7080 = vmul.f32 %v6858, 1.442695
        %v7081 = vpow.pop %v7080
        %v7082 = vmul.f32 %v6859, 1.442695
        %v7083 = vpow.pop %v7082
        %v7084 = vmul.f32 %v6860, 1.442695
        %v7085 = vpow.pop %v7084
        %v7086 = vmul.f32 %v6861, 1.442695
        %v7087 = vpow.pop %v7086
        %v7088 = vmul.f32 %v6862, 1.442695
        %v7089 = vpow.pop %v7088
        %v7090 = vmul.f32 %v6863, 1.442695
        %v7091 = vpow.pop %v7090
        %v7092 = vmul.f32 %v6864, 1.442695
        %v7093 = vpow.pop %v7092
        %v7094 = vmul.f32 %v6865, 1.442695
        %v7095 = vpow.pop %v7094
        %v7096 = vmul.f32 %v6866, 1.442695
        %v7097 = vpow.pop %v7096
        %v7098 = vmul.f32 %v6867, 1.442695
        %v7099 = vpow.pop %v7098
        %v7100 = vmul.f32 %v6868, 1.442695
        %v7101 = vpow.pop %v7100
        %v7102 = vmul.f32 %v6869, 1.442695
        %v7103 = vpow.pop %v7102
        %v7104 = vmul.f32 %v6870, 1.442695
        %v7105 = vpow.pop %v7104
        %v7106 = vmul.f32 %v6871, 1.442695
        %v7107 = vpow.pop %v7106
        %v7108 = vmul.f32 %v6872, 1.442695
        %v7109 = vpow.pop %v7108
        %v7110 = vmul.f32 %v6873, 1.442695
        %v7111 = vpow.pop %v7110
        %v7112 = vmul.f32 %v6874, 1.442695
        %v7113 = vpow.pop %v7112
        %v7114 = vmul.f32 %v6875, 1.442695
        %v7115 = vpow.pop %v7114
        %v7116 = vmul.f32 %v6876, 1.442695
        %v7117 = vpow.pop %v7116
        %v7118 = vmul.f32 %v6877, 1.442695
        %v7119 = vpow.pop %v7118
        %v7120 = vmul.f32 %v6878, 1.442695
        %v7121 = vpow.pop %v7120
        %v7122 = vmul.f32 %v6879, 1.442695
        %v7123 = vpow.pop %v7122
        %v7124 = vmul.f32 %v6880, 1.442695
        %v7125 = vpow.pop %v7124
        %v7126 = vmul.f32 %v6881, 1.442695
        %v7127 = vpow.pop %v7126
        %v7128 = vmul.f32 %v6882, 1.442695
        %v7129 = vpow.pop %v7128
        %v7130 = vmul.f32 %v6883, 1.442695
        %v7131 = vpow.pop %v7130
        %v7132 = vmul.f32 %v6884, 1.442695
        %v7133 = vpow.pop %v7132
        %v7134 = vmul.f32 %v6885, 1.442695
        %v7135 = vpow.pop %v7134
        %v7136 = vmul.f32 %v6886, 1.442695
        %v7137 = vpow.pop %v7136
        %v7138 = vmul.f32 %v6887, 1.442695
        %v7139 = vpow.pop %v7138
        %v7140 = vmul.f32 %v6888, 1.442695
        %v7141 = vpow.pop %v7140
        %v7142 = vmul.f32 %v6889, 1.442695
        %v7143 = vpow.pop %v7142
        %v7144 = vmul.f32 %v6890, 1.442695
        %v7145 = vpow.pop %v7144
        %v7146 = vmul.f32 %v6891, 1.442695
        %v7147 = vpow.pop %v7146
        %v7148 = vadd.f32 %v6893, %v6897
        %v7149 = vadd.f32 %v7148, %v6901
        %v7150 = vadd.f32 %v7149, %v6905
        %v7151 = vadd.f32 %v7150, %v6909
        %v7152 = vadd.f32 %v7151, %v6913
        %v7153 = vadd.f32 %v7152, %v6917
        %v7154 = vadd.f32 %v7153, %v6921
        %v7155 = vadd.f32 %v7154, %v6925
        %v7156 = vadd.f32 %v7155, %v6929
        %v7157 = vadd.f32 %v7156, %v6933
        %v7158 = vadd.f32 %v7157, %v6937
        %v7159 = vadd.f32 %v7158, %v6941
        %v7160 = vadd.f32 %v7159, %v6945
        %v7161 = vadd.f32 %v7160, %v6949
        %v7162 = vadd.f32 %v7161, %v6953
        %v7163 = vadd.f32 %v7162, %v6957
        %v7164 = vadd.f32 %v7163, %v6961
        %v7165 = vadd.f32 %v7164, %v6965
        %v7166 = vadd.f32 %v7165, %v6969
        %v7167 = vadd.f32 %v7166, %v6973
        %v7168 = vadd.f32 %v7167, %v6977
        %v7169 = vadd.f32 %v7168, %v6981
        %v7170 = vadd.f32 %v7169, %v6985
        %v7171 = vadd.f32 %v7170, %v6989
        %v7172 = vadd.f32 %v7171, %v6993
        %v7173 = vadd.f32 %v7172, %v6997
        %v7174 = vadd.f32 %v7173, %v7001
        %v7175 = vadd.f32 %v7174, %v7005
        %v7176 = vadd.f32 %v7175, %v7009
        %v7177 = vadd.f32 %v7176, %v7013
        %v7178 = vadd.f32 %v7177, %v7017
        %v7179 = vadd.f32 %v7178, %v7021
        %v7180 = vadd.f32 %v7179, %v7025
        %v7181 = vadd.f32 %v7180, %v7029
        %v7182 = vadd.f32 %v7181, %v7033
        %v7183 = vadd.f32 %v7182, %v7037
        %v7184 = vadd.f32 %v7183, %v7041
        %v7185 = vadd.f32 %v7184, %v7045
        %v7186 = vadd.f32 %v7185, %v7049
        %v7187 = vadd.f32 %v7186, %v7053
        %v7188 = vadd.f32 %v7187, %v7057
        %v7189 = vadd.f32 %v7188, %v7061
        %v7190 = vadd.f32 %v7189, %v7065
        %v7191 = vadd.f32 %v7190, %v7069
        %v7192 = vadd.f32 %v7191, %v7073
        %v7193 = vadd.f32 %v7192, %v7077
        %v7194 = vadd.f32 %v7193, %v7081
        %v7195 = vadd.f32 %v7194, %v7085
        %v7196 = vadd.f32 %v7195, %v7089
        %v7197 = vadd.f32 %v7196, %v7093
        %v7198 = vadd.f32 %v7197, %v7097
        %v7199 = vadd.f32 %v7198, %v7101
        %v7200 = vadd.f32 %v7199, %v7105
        %v7201 = vadd.f32 %v7200, %v7109
        %v7202 = vadd.f32 %v7201, %v7113
        %v7203 = vadd.f32 %v7202, %v7117
        %v7204 = vadd.f32 %v7203, %v7121
        %v7205 = vadd.f32 %v7204, %v7125
        %v7206 = vadd.f32 %v7205, %v7129
        %v7207 = vadd.f32 %v7206, %v7133
        %v7208 = vadd.f32 %v7207, %v7137
        %v7209 = vadd.f32 %v7208, %v7141
        %v7210 = vadd.f32 %v7209, %v7145
        %v7211 = vrot.slane %v7210, 4
        %v7212 = vadd.f32 %v7210, %v7211
        %v7213 = vrot.slane %v7212, 2
        %v7214 = vadd.f32 %v7212, %v7213
        %v7215 = vrot.slane %v7214, 1
        %v7216 = vadd.f32 %v7214, %v7215
        %v7217 = vadd.f32 %v6895, %v6899
        %v7218 = vadd.f32 %v7217, %v6903
        %v7219 = vadd.f32 %v7218, %v6907
        %v7220 = vadd.f32 %v7219, %v6911
        %v7221 = vadd.f32 %v7220, %v6915
        %v7222 = vadd.f32 %v7221, %v6919
        %v7223 = vadd.f32 %v7222, %v6923
        %v7224 = vadd.f32 %v7223, %v6927
        %v7225 = vadd.f32 %v7224, %v6931
        %v7226 = vadd.f32 %v7225, %v6935
        %v7227 = vadd.f32 %v7226, %v6939
        %v7228 = vadd.f32 %v7227, %v6943
        %v7229 = vadd.f32 %v7228, %v6947
        %v7230 = vadd.f32 %v7229, %v6951
        %v7231 = vadd.f32 %v7230, %v6955
        %v7232 = vadd.f32 %v7231, %v6959
        %v7233 = vadd.f32 %v7232, %v6963
        %v7234 = vadd.f32 %v7233, %v6967
        %v7235 = vadd.f32 %v7234, %v6971
        %v7236 = vadd.f32 %v7235, %v6975
        %v7237 = vadd.f32 %v7236, %v6979
        %v7238 = vadd.f32 %v7237, %v6983
        %v7239 = vadd.f32 %v7238, %v6987
        %v7240 = vadd.f32 %v7239, %v6991
        %v7241 = vadd.f32 %v7240, %v6995
        %v7242 = vadd.f32 %v7241, %v6999
        %v7243 = vadd.f32 %v7242, %v7003
        %v7244 = vadd.f32 %v7243, %v7007
        %v7245 = vadd.f32 %v7244, %v7011
        %v7246 = vadd.f32 %v7245, %v7015
        %v7247 = vadd.f32 %v7246, %v7019
        %v7248 = vadd.f32 %v7247, %v7023
        %v7249 = vadd.f32 %v7248, %v7027
        %v7250 = vadd.f32 %v7249, %v7031
        %v7251 = vadd.f32 %v7250, %v7035
        %v7252 = vadd.f32 %v7251, %v7039
        %v7253 = vadd.f32 %v7252, %v7043
        %v7254 = vadd.f32 %v7253, %v7047
        %v7255 = vadd.f32 %v7254, %v7051
        %v7256 = vadd.f32 %v7255, %v7055
        %v7257 = vadd.f32 %v7256, %v7059
        %v7258 = vadd.f32 %v7257, %v7063
        %v7259 = vadd.f32 %v7258, %v7067
        %v7260 = vadd.f32 %v7259, %v7071
        %v7261 = vadd.f32 %v7260, %v7075
        %v7262 = vadd.f32 %v7261, %v7079
        %v7263 = vadd.f32 %v7262, %v7083
        %v7264 = vadd.f32 %v7263, %v7087
        %v7265 = vadd.f32 %v7264, %v7091
        %v7266 = vadd.f32 %v7265, %v7095
        %v7267 = vadd.f32 %v7266, %v7099
        %v7268 = vadd.f32 %v7267, %v7103
        %v7269 = vadd.f32 %v7268, %v7107
        %v7270 = vadd.f32 %v7269, %v7111
        %v7271 = vadd.f32 %v7270, %v7115
        %v7272 = vadd.f32 %v7271, %v7119
        %v7273 = vadd.f32 %v7272, %v7123
        %v7274 = vadd.f32 %v7273, %v7127
        %v7275 = vadd.f32 %v7274, %v7131
        %v7276 = vadd.f32 %v7275, %v7135
        %v7277 = vadd.f32 %v7276, %v7139
        %v7278 = vadd.f32 %v7277, %v7143
        %v7279 = vadd.f32 %v7278, %v7147
        %v7280 = vrot.slane %v7279, 4
        %v7281 = vadd.f32 %v7279, %v7280
        %v7282 = vrot.slane %v7281, 2
        %v7283 = vadd.f32 %v7281, %v7282
        %v7284 = vrot.slane %v7283, 1
        %v7285 = vadd.f32 %v7283, %v7284
        %v7286 = vrcp.pop %v7216
        %v7287 = vrcp.pop %v7285
        %v7288 = vmul.f32 %v6893, %v7286
        %v7289 = vmul.f32 %v6895, %v7287
        %v7290 = vmul.f32 %v6897, %v7286
        %v7291 = vmul.f32 %v6899, %v7287
        %v7292 = vmul.f32 %v6901, %v7286
        %v7293 = vmul.f32 %v6903, %v7287
        %v7294 = vmul.f32 %v6905, %v7286
        %v7295 = vmul.f32 %v6907, %v7287
        %v7296 = vmul.f32 %v6909, %v7286
        %v7297 = vmul.f32 %v6911, %v7287
        %v7298 = vmul.f32 %v6913, %v7286
        %v7299 = vmul.f32 %v6915, %v7287
        %v7300 = vmul.f32 %v6917, %v7286
        %v7301 = vmul.f32 %v6919, %v7287
        %v7302 = vmul.f32 %v6921, %v7286
        %v7303 = vmul.f32 %v6923, %v7287
        %v7304 = vmul.f32 %v6925, %v7286
        %v7305 = vmul.f32 %v6927, %v7287
        %v7306 = vmul.f32 %v6929, %v7286
        %v7307 = vmul.f32 %v6931, %v7287
        %v7308 = vmul.f32 %v6933, %v7286
        %v7309 = vmul.f32 %v6935, %v7287
        %v7310 = vmul.f32 %v6937, %v7286
        %v7311 = vmul.f32 %v6939, %v7287
        %v7312 = vmul.f32 %v6941, %v7286
        %v7313 = vmul.f32 %v6943, %v7287
        %v7314 = vmul.f32 %v6945, %v7286
        %v7315 = vmul.f32 %v6947, %v7287
        %v7316 = vmul.f32 %v6949, %v7286
        %v7317 = vmul.f32 %v6951, %v7287
        %v7318 = vmul.f32 %v6953, %v7286
        %v7319 = vmul.f32 %v6955, %v7287
        %v7320 = vmul.f32 %v6957, %v7286
        %v7321 = vmul.f32 %v6959, %v7287
        %v7322 = vmul.f32 %v6961, %v7286
        %v7323 = vmul.f32 %v6963, %v7287
        %v7324 = vmul.f32 %v6965, %v7286
        %v7325 = vmul.f32 %v6967, %v7287
        %v7326 = vmul.f32 %v6969, %v7286
        %v7327 = vmul.f32 %v6971, %v7287
        %v7328 = vmul.f32 %v6973, %v7286
        %v7329 = vmul.f32 %v6975, %v7287
        %v7330 = vmul.f32 %v6977, %v7286
        %v7331 = vmul.f32 %v6979, %v7287
        %v7332 = vmul.f32 %v6981, %v7286
        %v7333 = vmul.f32 %v6983, %v7287
        %v7334 = vmul.f32 %v6985, %v7286
        %v7335 = vmul.f32 %v6987, %v7287
        %v7336 = vmul.f32 %v6989, %v7286
        %v7337 = vmul.f32 %v6991, %v7287
        %v7338 = vmul.f32 %v6993, %v7286
        %v7339 = vmul.f32 %v6995, %v7287
        %v7340 = vmul.f32 %v6997, %v7286
        %v7341 = vmul.f32 %v6999, %v7287
        %v7342 = vmul.f32 %v7001, %v7286
        %v7343 = vmul.f32 %v7003, %v7287
        %v7344 = vmul.f32 %v7005, %v7286
        %v7345 = vmul.f32 %v7007, %v7287
        %v7346 = vmul.f32 %v7009, %v7286
        %v7347 = vmul.f32 %v7011, %v7287
        %v7348 = vmul.f32 %v7013, %v7286
        %v7349 = vmul.f32 %v7015, %v7287
        %v7350 = vmul.f32 %v7017, %v7286
        %v7351 = vmul.f32 %v7019, %v7287
        %v7352 = vmul.f32 %v7021, %v7286
        %v7353 = vmul.f32 %v7023, %v7287
        %v7354 = vmul.f32 %v7025, %v7286
        %v7355 = vmul.f32 %v7027, %v7287
        %v7356 = vmul.f32 %v7029, %v7286
        %v7357 = vmul.f32 %v7031, %v7287
        %v7358 = vmul.f32 %v7033, %v7286
        %v7359 = vmul.f32 %v7035, %v7287
        %v7360 = vmul.f32 %v7037, %v7286
        %v7361 = vmul.f32 %v7039, %v7287
        %v7362 = vmul.f32 %v7041, %v7286
        %v7363 = vmul.f32 %v7043, %v7287
        %v7364 = vmul.f32 %v7045, %v7286
        %v7365 = vmul.f32 %v7047, %v7287
        %v7366 = vmul.f32 %v7049, %v7286
        %v7367 = vmul.f32 %v7051, %v7287
        %v7368 = vmul.f32 %v7053, %v7286
        %v7369 = vmul.f32 %v7055, %v7287
        %v7370 = vmul.f32 %v7057, %v7286
        %v7371 = vmul.f32 %v7059, %v7287
        %v7372 = vmul.f32 %v7061, %v7286
        %v7373 = vmul.f32 %v7063, %v7287
        %v7374 = vmul.f32 %v7065, %v7286
        %v7375 = vmul.f32 %v7067, %v7287
        %v7376 = vmul.f32 %v7069, %v7286
        %v7377 = vmul.f32 %v7071, %v7287
        %v7378 = vmul.f32 %v7073, %v7286
        %v7379 = vmul.f32 %v7075, %v7287
        %v7380 = vmul.f32 %v7077, %v7286
        %v7381 = vmul.f32 %v7079, %v7287
        %v7382 = vmul.f32 %v7081, %v7286
        %v7383 = vmul.f32 %v7083, %v7287
        %v7384 = vmul.f32 %v7085, %v7286
        %v7385 = vmul.f32 %v7087, %v7287
        %v7386 = vmul.f32 %v7089, %v7286
        %v7387 = vmul.f32 %v7091, %v7287
        %v7388 = vmul.f32 %v7093, %v7286
        %v7389 = vmul.f32 %v7095, %v7287
        %v7390 = vmul.f32 %v7097, %v7286
        %v7391 = vmul.f32 %v7099, %v7287
        %v7392 = vmul.f32 %v7101, %v7286
        %v7393 = vmul.f32 %v7103, %v7287
        %v7394 = vmul.f32 %v7105, %v7286
        %v7395 = vmul.f32 %v7107, %v7287
        %v7396 = vmul.f32 %v7109, %v7286
        %v7397 = vmul.f32 %v7111, %v7287
        %v7398 = vmul.f32 %v7113, %v7286
        %v7399 = vmul.f32 %v7115, %v7287
        %v7400 = vmul.f32 %v7117, %v7286
        %v7401 = vmul.f32 %v7119, %v7287
        %v7402 = vmul.f32 %v7121, %v7286
        %v7403 = vmul.f32 %v7123, %v7287
        %v7404 = vmul.f32 %v7125, %v7286
        %v7405 = vmul.f32 %v7127, %v7287
        %v7406 = vmul.f32 %v7129, %v7286
        %v7407 = vmul.f32 %v7131, %v7287
        %v7408 = vmul.f32 %v7133, %v7286
        %v7409 = vmul.f32 %v7135, %v7287
        %v7410 = vmul.f32 %v7137, %v7286
        %v7411 = vmul.f32 %v7139, %v7287
        %v7412 = vmul.f32 %v7141, %v7286
        %v7413 = vmul.f32 %v7143, %v7287
        %v7414 = vmul.f32 %v7145, %v7286
        %v7415 = vmul.f32 %v7147, %v7287
        %7416 = vmatprep.subr.mxu0 %v7319
        %7417 = vmatpush1.msra.mxu0 %v7318
        %7418 = vmatprep.subr.mxu0 %v7317
        %7419 = vmatpush1.msra.mxu0 %v7316
        %7420 = vmatprep.subr.mxu0 %v7315
        %7421 = vmatpush1.msra.mxu0 %v7314
        %7422 = vmatprep.subr.mxu0 %v7313
        %7423 = vmatpush1.msra.mxu0 %v7312
        %7424 = vmatprep.subr.mxu0 %v7311
        %7425 = vmatpush1.msra.mxu0 %v7310
        %7426 = vmatprep.subr.mxu0 %v7309
        %7427 = vmatpush1.msra.mxu0 %v7308
        %7428 = vmatprep.subr.mxu0 %v7307
        %7429 = vmatpush1.msra.mxu0 %v7306
        %7430 = vmatprep.subr.mxu0 %v7305
        %7431 = vmatpush1.msra.mxu0 %v7304
        %7432 = vmatprep.subr.mxu0 %v7303
        %7433 = vmatpush1.msra.mxu0 %v7302
        %7434 = vmatprep.subr.mxu0 %v7301
        %7435 = vmatpush1.msra.mxu0 %v7300
        %7436 = vmatprep.subr.mxu0 %v7299
        %7437 = vmatpush1.msra.mxu0 %v7298
        %7438 = vmatprep.subr.mxu0 %v7297
        %7439 = vmatpush1.msra.mxu0 %v7296
        %7440 = vmatprep.subr.mxu0 %v7295
        %7441 = vmatpush1.msra.mxu0 %v7294
        %7442 = vmatprep.subr.mxu0 %v7293
        %7443 = vmatpush1.msra.mxu0 %v7292
        %7444 = vmatprep.subr.mxu0 %v7291
        %7445 = vmatpush1.msra.mxu0 %v7290
        %7446 = vmatprep.subr.mxu0 %v7289
        %7447 = vmatpush1.msra.mxu0 %v7288
        %7448 = vmatprep.subr.mxu0 %v7351
        %7449 = vmatpush2.msra.mxu0 %v7350
        %7450 = vmatprep.subr.mxu0 %v7349
        %7451 = vmatpush2.msra.mxu0 %v7348
        %7452 = vmatprep.subr.mxu0 %v7347
        %7453 = vmatpush2.msra.mxu0 %v7346
        %7454 = vmatprep.subr.mxu0 %v7345
        %7455 = vmatpush2.msra.mxu0 %v7344
        %7456 = vmatprep.subr.mxu0 %v7343
        %7457 = vmatpush2.msra.mxu0 %v7342
        %7458 = vmatprep.subr.mxu0 %v7341
        %7459 = vmatpush2.msra.mxu0 %v7340
        %7460 = vmatprep.subr.mxu0 %v7339
        %7461 = vmatpush2.msra.mxu0 %v7338
        %7462 = vmatprep.subr.mxu0 %v7337
        %7463 = vmatpush2.msra.mxu0 %v7336
        %7464 = vmatprep.subr.mxu0 %v7335
        %7465 = vmatpush2.msra.mxu0 %v7334
        %7466 = vmatprep.subr.mxu0 %v7333
        %7467 = vmatpush2.msra.mxu0 %v7332
        %7468 = vmatprep.subr.mxu0 %v7331
        %7469 = vmatpush2.msra.mxu0 %v7330
        %7470 = vmatprep.subr.mxu0 %v7329
        %7471 = vmatpush2.msra.mxu0 %v7328
        %7472 = vmatprep.subr.mxu0 %v7327
        %7473 = vmatpush2.msra.mxu0 %v7326
        %7474 = vmatprep.subr.mxu0 %v7325
        %7475 = vmatpush2.msra.mxu0 %v7324
        %7476 = vmatprep.subr.mxu0 %v7323
        %7477 = vmatpush2.msra.mxu0 %v7322
        %7478 = vmatprep.subr.mxu0 %v7321
        %7479 = vmatpush2.msra.mxu0 %v7320
        %7480 = vmatprep.mubr.f32.mxu0 %v750
        %7481 = vmatmul.mubr.f32.gmra.mxu0 %v749
        %v7482 = vpop.f32.mrf.mxu0
        %v7483 = vadd.f32 0.0, %v7482
        %v7484 = vpop.f32.mrf.mxu0
        %v7485 = vadd.f32 0.0, %v7484
        %7486 = vdwg.mxu0
        %7487 = vmatprep.subr.mxu0 %v7383
        %7488 = vmatpush1.msra.mxu0 %v7382
        %7489 = vmatprep.subr.mxu0 %v7381
        %7490 = vmatpush1.msra.mxu0 %v7380
        %7491 = vmatprep.subr.mxu0 %v7379
        %7492 = vmatpush1.msra.mxu0 %v7378
        %7493 = vmatprep.subr.mxu0 %v7377
        %7494 = vmatpush1.msra.mxu0 %v7376
        %7495 = vmatprep.subr.mxu0 %v7375
        %7496 = vmatpush1.msra.mxu0 %v7374
        %7497 = vmatprep.subr.mxu0 %v7373
        %7498 = vmatpush1.msra.mxu0 %v7372
        %7499 = vmatprep.subr.mxu0 %v7371
        %7500 = vmatpush1.msra.mxu0 %v7370
        %7501 = vmatprep.subr.mxu0 %v7369
        %7502 = vmatpush1.msra.mxu0 %v7368
        %7503 = vmatprep.subr.mxu0 %v7367
        %7504 = vmatpush1.msra.mxu0 %v7366
        %7505 = vmatprep.subr.mxu0 %v7365
        %7506 = vmatpush1.msra.mxu0 %v7364
        %7507 = vmatprep.subr.mxu0 %v7363
        %7508 = vmatpush1.msra.mxu0 %v7362
        %7509 = vmatprep.subr.mxu0 %v7361
        %7510 = vmatpush1.msra.mxu0 %v7360
        %7511 = vmatprep.subr.mxu0 %v7359
        %7512 = vmatpush1.msra.mxu0 %v7358
        %7513 = vmatprep.subr.mxu0 %v7357
        %7514 = vmatpush1.msra.mxu0 %v7356
        %7515 = vmatprep.subr.mxu0 %v7355
        %7516 = vmatpush1.msra.mxu0 %v7354
        %7517 = vmatprep.subr.mxu0 %v7353
        %7518 = vmatpush1.msra.mxu0 %v7352
        %7519 = vmatprep.subr.mxu0 %v7415
        %7520 = vmatpush2.msra.mxu0 %v7414
        %7521 = vmatprep.subr.mxu0 %v7413
        %7522 = vmatpush2.msra.mxu0 %v7412
        %7523 = vmatprep.subr.mxu0 %v7411
        %7524 = vmatpush2.msra.mxu0 %v7410
        %7525 = vmatprep.subr.mxu0 %v7409
        %7526 = vmatpush2.msra.mxu0 %v7408
        %7527 = vmatprep.subr.mxu0 %v7407
        %7528 = vmatpush2.msra.mxu0 %v7406
        %7529 = vmatprep.subr.mxu0 %v7405
        %7530 = vmatpush2.msra.mxu0 %v7404
        %7531 = vmatprep.subr.mxu0 %v7403
        %7532 = vmatpush2.msra.mxu0 %v7402
        %7533 = vmatprep.subr.mxu0 %v7401
        %7534 = vmatpush2.msra.mxu0 %v7400
        %7535 = vmatprep.subr.mxu0 %v7399
        %7536 = vmatpush2.msra.mxu0 %v7398
        %7537 = vmatprep.subr.mxu0 %v7397
        %7538 = vmatpush2.msra.mxu0 %v7396
        %7539 = vmatprep.subr.mxu0 %v7395
        %7540 = vmatpush2.msra.mxu0 %v7394
        %7541 = vmatprep.subr.mxu0 %v7393
        %7542 = vmatpush2.msra.mxu0 %v7392
        %7543 = vmatprep.subr.mxu0 %v7391
        %7544 = vmatpush2.msra.mxu0 %v7390
        %7545 = vmatprep.subr.mxu0 %v7389
        %7546 = vmatpush2.msra.mxu0 %v7388
        %7547 = vmatprep.subr.mxu0 %v7387
        %7548 = vmatpush2.msra.mxu0 %v7386
        %7549 = vmatprep.subr.mxu0 %v7385
        %7550 = vmatpush2.msra.mxu0 %v7384
        %7551 = vmatprep.mubr.f32.mxu0 %v752
        %7552 = vmatmul.mubr.f32.gmra.mxu0 %v751
        %v7553 = vpop.f32.mrf.mxu0
        %v7554 = vadd.f32 %v7483, %v7553
        %v7555 = vpop.f32.mrf.mxu0
        %v7556 = vadd.f32 %v7485, %v7555
        %7557 = vdwg.mxu0
        %v7558 = vld [vmem:[#allocation12] sm:$0xf]
        %v7559 = vld [vmem:[#allocation12 + $0x4] sm:$0xf]
        %v7560 = vld [vmem:[#allocation12 + $0x8] sm:$0xf]
        %v7561 = vld [vmem:[#allocation12 + $0xc] sm:$0xf]
        %v7562 = vunpack.c.l.bf16 %v7558
        %v7563 = vunpack.c.l.bf16 %v7559
        %v7564 = vunpack.c.l.bf16 %v7560
        %v7565 = vunpack.c.l.bf16 %v7561
        %v7567 = vsel %vm661, %v7562, 0
        %v7570 = vsel %vm661, %v7563, 0
        %v7573 = vsel %vm661, %v7564, 0
        %v7576 = vsel %vm661, %v7565, 0
        %7578 = vmatprep.subr.mxu0 0.0
        %7579 = vmatpush1.msra.mxu0 0.0
        %7580 = vmatprep.subr.mxu0 0.0
        %7581 = vmatpush1.msra.mxu0 0.0
        %7582 = vmatprep.subr.mxu0 0.0
        %7583 = vmatpush1.msra.mxu0 0.0
        %7584 = vmatprep.subr.mxu0 0.0
        %7585 = vmatpush1.msra.mxu0 0.0
        %7586 = vmatprep.subr.mxu0 0.0
        %7587 = vmatpush1.msra.mxu0 0.0
        %7588 = vmatprep.subr.mxu0 0.0
        %7589 = vmatpush1.msra.mxu0 0.0
        %7590 = vmatprep.subr.mxu0 0.0
        %7591 = vmatpush1.msra.mxu0 0.0
        %7592 = vmatprep.subr.mxu0 0.0
        %7593 = vmatpush1.msra.mxu0 0.0
        %7594 = vmatprep.subr.mxu0 0.0
        %7595 = vmatpush1.msra.mxu0 0.0
        %7596 = vmatprep.subr.mxu0 0.0
        %7597 = vmatpush1.msra.mxu0 0.0
        %7598 = vmatprep.subr.mxu0 0.0
        %7599 = vmatpush1.msra.mxu0 0.0
        %7600 = vmatprep.subr.mxu0 0.0
        %7601 = vmatpush1.msra.mxu0 0.0
        %7602 = vmatprep.subr.mxu0 %v7556
        %7603 = vmatpush1.msra.mxu0 %v7554
        %7604 = vmatprep.subr.mxu0 %v5855
        %7605 = vmatpush1.msra.mxu0 %v5853
        %7606 = vmatprep.subr.mxu0 %v4154
        %7607 = vmatpush1.msra.mxu0 %v4152
        %7608 = vmatprep.subr.mxu0 %v2453
        %7609 = vmatpush1.msra.mxu0 %v2451
        %7610 = vmatprep.subr.mxu0 0.0
        %7611 = vmatpush2.msra.mxu0 0.0
        %7612 = vmatprep.subr.mxu0 0.0
        %7613 = vmatpush2.msra.mxu0 0.0
        %7614 = vmatprep.subr.mxu0 0.0
        %7615 = vmatpush2.msra.mxu0 0.0
        %7616 = vmatprep.subr.mxu0 0.0
        %7617 = vmatpush2.msra.mxu0 0.0
        %7618 = vmatprep.subr.mxu0 0.0
        %7619 = vmatpush2.msra.mxu0 0.0
        %7620 = vmatprep.subr.mxu0 0.0
        %7621 = vmatpush2.msra.mxu0 0.0
        %7622 = vmatprep.subr.mxu0 0.0
        %7623 = vmatpush2.msra.mxu0 0.0
        %7624 = vmatprep.subr.mxu0 0.0
        %7625 = vmatpush2.msra.mxu0 0.0
        %7626 = vmatprep.subr.mxu0 0.0
        %7627 = vmatpush2.msra.mxu0 0.0
        %7628 = vmatprep.subr.mxu0 0.0
        %7629 = vmatpush2.msra.mxu0 0.0
        %7630 = vmatprep.subr.mxu0 0.0
        %7631 = vmatpush2.msra.mxu0 0.0
        %7632 = vmatprep.subr.mxu0 0.0
        %7633 = vmatpush2.msra.mxu0 0.0
        %7634 = vmatprep.subr.mxu0 0.0
        %7635 = vmatpush2.msra.mxu0 0.0
        %7636 = vmatprep.subr.mxu0 0.0
        %7637 = vmatpush2.msra.mxu0 0.0
        %7638 = vmatprep.subr.mxu0 0.0
        %7639 = vmatpush2.msra.mxu0 0.0
        %7640 = vmatprep.subr.mxu0 0.0
        %7641 = vmatpush2.msra.mxu0 0.0
        %7642 = vmatprep.mubr.f32.mxu0 0.0
        %7643 = vmatmul.mubr.f32.gmra.mxu0 %v7567
        %v7644 = vpop.f32.mrf.mxu0
        %v7645 = vadd.f32 0.0, %v7644
        %v7646 = vpop.f32.mrf.mxu0
        %v7647 = vadd.f32 0.0, %v7646
        %7648 = vmatprep.mubr.f32.mxu0 0.0
        %7649 = vmatmul.mubr.f32.gmra.mxu0 %v7570
        %v7650 = vpop.f32.mrf.mxu0
        %v7651 = vadd.f32 0.0, %v7650
        %v7652 = vpop.f32.mrf.mxu0
        %v7653 = vadd.f32 0.0, %v7652
        %7654 = vmatprep.mubr.f32.mxu0 0.0
        %7655 = vmatmul.mubr.f32.gmra.mxu0 %v7573
        %v7656 = vpop.f32.mrf.mxu0
        %v7657 = vadd.f32 0.0, %v7656
        %v7658 = vpop.f32.mrf.mxu0
        %v7659 = vadd.f32 0.0, %v7658
        %7660 = vmatprep.mubr.f32.mxu0 0.0
        %7661 = vmatmul.mubr.f32.gmra.mxu0 %v7576
        %v7662 = vpop.f32.mrf.mxu0
        %v7663 = vadd.f32 0.0, %v7662
        %v7664 = vpop.f32.mrf.mxu0
        %v7665 = vadd.f32 0.0, %v7664
        %7666 = vdwg.mxu0
        %7667 = vst [vmem:[%s314] sm:$0xff] %v7645
        %7668 = vst [vmem:[%s314 + $0x8] sm:$0xff] %v7647
        %7669 = vst [vmem:[%s314 + $0x10] sm:$0xff] %v7651
        %7670 = vst [vmem:[%s314 + $0x18] sm:$0xff] %v7653
        %7671 = vst [vmem:[%s314 + $0x20] sm:$0xff] %v7657
        %7672 = vst [vmem:[%s314 + $0x28] sm:$0xff] %v7659
        %7673 = vst [vmem:[%s314 + $0x30] sm:$0xff] %v7663
        %7674 = vst [vmem:[%s314 + $0x38] sm:$0xff] %v7665
        %s7675 = sand.u32 %s156, 1
        %s7676 = scalar_lea.sflag [#allocation6], %s7675
        %s7677 = sand.u32 %s156, 1
        %s7678 = smul.addr %s7677, 64
        %s7679 = scalar_lea.vmem [#allocation13], %s7678
        // Predicated region
        $region65: #{tpu_custom_call.1} parent=39 // pred_check
          %p7680 = pneg %p166
        $region66: #{tpu_custom_call.1} parent=39 // pred_check_branch
          %7682 = sbr.rel (%p7680) target = $region68
        $region67: #{tpu_custom_call.1} parent=39 // pred_region
          %s7683 = smul.u32 2, %s29
          %s7685 = ssub.s32 1024, 1024
          %7686 = vsyncadd %s7676, %s7685
          %s7687 = smul.addr %s28, 16
          %s7688 = sadd.s32 %s7683, %s7687
          %s7689 = smul.addr %s7688, 128
          %s7690 = scalar_lea.hbm %s5, %s7689
          %s7691 = sshll.u32 %s7679, 4
          %s7692 = int_to_ptr.vmem [resolvable:$true] %s7691
          %7697 = dma.vmem_to_hbm [thread:$0]  %s7692, 1024, %s7690, %s7676, 256, 512, 16
        $region68: #{tpu_custom_call.1} parent=39 // pred_fallthru
          _
      $region40: #{tpu_custom_call.1} parent=5 // pred_fallthru
        _
      %p7698 = scmp.le.s32.totalorder 2, %s19
      // Predicated region
      $region69: #{tpu_custom_call.1} parent=5 // pred_check
        %p7699 = pneg %p7698
      $region70: #{tpu_custom_call.1} parent=5 // pred_check_branch
        %7701 = sbr.rel (%p7699) target = $region72
      $region71: #{tpu_custom_call.1} parent=5 // pred_region
        %s7702 = ssub.s32 %s19, 2
        // Predicated region
        $region73: #{tpu_custom_call.1} parent=71 // pred_check
          %p7703 = pneg %p172
        $region74: #{tpu_custom_call.1} parent=71 // pred_check_branch
          %7705 = sbr.rel (%p7703) target = $region76
        $region75: #{tpu_custom_call.1} parent=71 // pred_region
          %s7706 = sand.u32 %s157, 1
          %s7707 = scalar_lea.sflag [#allocation6], %s7706
          %s7708 = sand.u32 %s157, 1
          %s7709 = smul.addr %s7708, 64
          %s7710 = scalar_lea.vmem [#allocation13], %s7709
          %7711 = dma.done %s7707, 1024
        $region76: #{tpu_custom_call.1} parent=71 // pred_fallthru
          _
      $region72: #{tpu_custom_call.1} parent=5 // pred_fallthru
        _
    $region6: #{tpu_custom_call.1} parent=1 // loop_footer
      %s23 = sadd.s32 1, %s19
    $region7: #{tpu_custom_call.1} parent=1 // loop_footer_branch
      %18 = sbr.rel target = $region3
    $region8: #{tpu_custom_call.1} parent=1 // loop_exit
      _
    %7712 = vsyncpa [#allocation5], 1
    %s7713 = scalar_lea.sflag [#allocation5], 1
    %7714 = vsyncpa %s7713, 1
    %7715 = vsyncpa [#allocation8], 1
    %7716 = vsyncpa [#allocation11], 1
    %7717 = vsyncpa [#allocation6], 1
    %s7718 = scalar_lea.sflag [#allocation6], 1
    %7719 = vsyncpa %s7718, 1

</llo_original>
